<compile_context>
chip_gen: v7x
topology: tpu7x:2x2x1
jax: 0.10.0
libtpu: 0.0.40
codegen_flags: <defaults>
</compile_context>

<pallas_src>
import functools

import jax
import jax.numpy as jnp
from jax import lax
from jax.experimental import pallas as pl
from jax.experimental.pallas import tpu as pltpu

K = 7     # conv kernel size
PAD = 3   # conv padding (7x7, stride 1, 'same')


def _round_up(x, m):
    return (x + m - 1) // m * m


# --------------------------- Pallas kernels ---------------------------------

def _fam_fused_kernel(x_ref, mask_ref, w0_ref, s0_ref, t0_ref,
                      w1_ref, s1_ref, t1_ref, out_ref,
                      xf_ref, y0f_ref, im0_ref, im1_ref, *, img_w, padf):
    """conv0+bn0+relu -> conv1+bn1+relu -> spatial-mean gate -> channel sum -> clamp.

    Lane-dense layout: every activation is (C, HW) with HW on lanes.

    x_ref   : (1, Cin, HW)        input sample, f32
    mask_ref: (K, HW)             per-dx column-wrap masks (1.0 valid / 0.0), f32
    w0_ref  : (Cout, K*K*Cin)     conv0 weights, tap-major / channel-minor, f32
    w1_ref  : (Cin, K*K*Cout)     conv1 weights, f32
    s*/t*   : (C, 1)              folded BatchNorm scale / shift, f32
    out_ref : (1, 1, HW)          clamped gate map (lane-dense), f32
    xf_ref  : (Cin,  HW+2*padf)   flat zero-border-padded x        (VMEM scratch)
    y0f_ref : (Cout, HW+2*padf)   flat zero-border-padded y0       (VMEM scratch)
    im0_ref : (K*K*Cin,  HW)      conv0 im2col operand             (VMEM scratch)
    im1_ref : (K*K*Cout, HW)      conv1 im2col operand             (VMEM scratch)
    """
    _, cin, hw = x_ref.shape
    cout = w0_ref.shape[0]

    # Zero the flat-pad borders (lane-aligned, a handful of vregs).  Redone
    # every step so correctness does not depend on which core ran step 0.
    xf_ref[:, :padf] = jnp.zeros((cin, padf), jnp.float32)
    xf_ref[:, padf + hw:] = jnp.zeros((cin, padf), jnp.float32)
    y0f_ref[:, :padf] = jnp.zeros((cout, padf), jnp.float32)
    y0f_ref[:, padf + hw:] = jnp.zeros((cout, padf), jnp.float32)

    # Pad x inside VMEM (interior store at a lane-aligned offset).
    xf_ref[:, padf:padf + hw] = x_ref[0]

    def build_im2col(src_ref, dst_ref, nch):
        # Tap (dy, dx) of a 'same' 7x7 conv == flat shift by (dy-3)*W + (dx-3)
        # plus a column-wrap mask that depends only on dx (precomputed input).
        for dy in range(K):
            row_shift = (dy - PAD) * img_w
            for dx in range(K):
                start = padf + row_shift + (dx - PAD)
                win = src_ref[:, start:start + hw]          # (nch, HW) lane shift
                if dx != PAD:
                    win = win * mask_ref[dx:dx + 1, :]      # zero wrapped columns
                t = dy * K + dx
                dst_ref[t * nch:(t + 1) * nch, :] = win

    # ---- conv0 (7x7) + bn0 + relu : one matmul, contraction K*K*Cin = 196 ----
    build_im2col(xf_ref, im0_ref, cin)
    y0 = jnp.dot(w0_ref[...], im0_ref[...],
                 preferred_element_type=jnp.float32)         # (Cout, HW)
    y0 = jnp.maximum(y0 * s0_ref[...] + t0_ref[...], 0.0)

    # ---- conv1 (7x7) + bn1 + relu : one matmul, contraction K*K*Cout = 294 ----
    y0f_ref[:, padf:padf + hw] = y0
    build_im2col(y0f_ref, im1_ref, cout)
    y1 = jnp.dot(w1_ref[...], im1_ref[...],
                 preferred_element_type=jnp.float32)         # (Cin, HW)
    y1 = jnp.maximum(y1 * s1_ref[...] + t1_ref[...], 0.0)

    # ---- spatial mean -> channel gate of x (already in VMEM) -> sum -> clamp ----
    m = jnp.mean(y1, axis=1, keepdims=True)                  # (Cin, 1)
    gate = jnp.sum(x_ref[0] * m, axis=0, keepdims=True)      # (1, HW)
    out_ref[0] = jnp.maximum(gate, 0.0)                      # out[out < 0] = 0


def _norm_upsample_kernel(mnsc_ref, g_ref, a_ref, bt_ref, out_ref, up_ref):
    """Per-sample global min-max normalization + bilinear upsample.

    mnsc_ref: (2,) SMEM — [global min, 1/(1e-7 + global max)]
    g_ref   : (H, W)     clamped gate map for this sample
    a_ref   : (OH, H)    row interpolation matrix (align_corners=True)
    bt_ref  : (W, OW)    column interpolation matrix (transposed)
    out_ref : (H, W)     normalized map
    up_ref  : (OH, OW)   upsampled map
    """
    gn = (g_ref[...] - mnsc_ref[0]) * mnsc_ref[1]
    out_ref[...] = gn
    rows = jnp.dot(a_ref[...], gn, preferred_element_type=jnp.float32)        # (OH, W)
    up_ref[...] = jnp.dot(rows, bt_ref[...], preferred_element_type=jnp.float32)


# ------------------------------ JAX glue -------------------------------------

def _fold_bn(conv_bias, gamma, beta, mean, var, eps=1e-5):
    """Fold conv bias + BatchNorm (inference) into per-channel (C,1) scale/shift."""
    scale = gamma / jnp.sqrt(var + eps)
    shift = beta + (conv_bias - mean) * scale
    return scale[:, None].astype(jnp.float32), shift[:, None].astype(jnp.float32)


def _bilinear_matrix(out_size, in_size):
    """Interpolation matrix for 1-D bilinear resize with align_corners=True."""
    i = jnp.arange(out_size, dtype=jnp.float32)
    src = i * (in_size - 1) / (out_size - 1)
    lo = jnp.clip(jnp.floor(src).astype(jnp.int32), 0, in_size - 2)
    frac = src - lo.astype(jnp.float32)
    rows = jnp.arange(out_size)
    m = jnp.zeros((out_size, in_size), jnp.float32)
    m = m.at[rows, lo].add(1.0 - frac)
    m = m.at[rows, lo + 1].add(frac)
    return m


# ------------------------------ FAM forward ----------------------------------

def fam_forward(x_nchw, params, out_hw=(224, 224)):
    n, cin, h, w = x_nchw.shape
    cout = params["w0"].shape[0]          # num_classes
    hw = h * w
    oh, ow = out_hw
    padf = _round_up(PAD * w + PAD, 128)  # flat halo width, lane-aligned
    hwp = hw + 2 * padf

    x3 = x_nchw.reshape(n, cin, hw).astype(jnp.float32)       # (N, Cin, HW)

    # Conv weights with a tap-major / channel-minor fused contraction axis.
    w0m = jnp.transpose(params["w0"], (0, 2, 3, 1)).reshape(cout, K * K * cin)
    w0m = w0m.astype(jnp.float32)
    w1m = jnp.transpose(params["w1"], (0, 2, 3, 1)).reshape(cin, K * K * cout)
    w1m = w1m.astype(jnp.float32)
    s0, t0 = _fold_bn(params["b0"], params["g0"], params["be0"],
                      params["m0"], params["v0"])
    s1, t1 = _fold_bn(params["b1"], params["g1"], params["be1"],
                      params["m1"], params["v1"])

    # Column-wrap masks for the flat-shift im2col (depend only on dx).
    col = jnp.arange(hw, dtype=jnp.int32) % w                 # (HW,)
    dxs = jnp.arange(K, dtype=jnp.int32)[:, None] - PAD       # (K, 1)
    masks = ((col[None, :] + dxs >= 0)
             & (col[None, :] + dxs < w)).astype(jnp.float32)  # (K, HW)

    # ---- fused conv0/bn0/relu -> conv1/bn1/relu -> mean-gate -> sum -> clamp ----
    kernel1 = functools.partial(_fam_fused_kernel, img_w=w, padf=padf)
    gate_raw = pl.pallas_call(
        kernel1,
        out_shape=jax.ShapeDtypeStruct((n, 1, hw), jnp.float32),
        grid=(n,),
        in_specs=[
            pl.BlockSpec((1, cin, hw), lambda i: (i, 0, 0)),
            pl.BlockSpec((K, hw), lambda i: (0, 0)),
            pl.BlockSpec((cout, K * K * cin), lambda i: (0, 0)),
            pl.BlockSpec((cout, 1), lambda i: (0, 0)),
            pl.BlockSpec((cout, 1), lambda i: (0, 0)),
            pl.BlockSpec((cin, K * K * cout), lambda i: (0, 0)),
            pl.BlockSpec((cin, 1), lambda i: (0, 0)),
            pl.BlockSpec((cin, 1), lambda i: (0, 0)),
        ],
        out_specs=pl.BlockSpec((1, 1, hw), lambda i: (i, 0, 0)),
        scratch_shapes=[
            pltpu.VMEM((cin, hwp), jnp.float32),
            pltpu.VMEM((cout, hwp), jnp.float32),
            pltpu.VMEM((K * K * cin, hw), jnp.float32),
            pltpu.VMEM((K * K * cout, hw), jnp.float32),
        ],
        compiler_params=pltpu.CompilerParams(dimension_semantics=("parallel",)),
    )(x3, masks, w0m, s0, t0, w1m, s1, t1)

    # Global (whole-batch) min / max on the tiny clamped gate, reduced in JAX,
    # fed to kernel 2 as two SMEM scalars.
    gmin = jnp.min(gate_raw)
    gmax = jnp.max(gate_raw)
    mnsc = jnp.stack([gmin, 1.0 / (1e-07 + gmax)]).astype(jnp.float32)   # (2,)

    g2d = gate_raw.reshape(n * h, w)       # free contiguous reshape
    a_m = _bilinear_matrix(oh, h)          # (OH, H) shared row matrix
    bt_m = _bilinear_matrix(ow, w).T       # (W, OW) shared column matrix

    out_norm, up = pl.pallas_call(
        _norm_upsample_kernel,
        out_shape=(jax.ShapeDtypeStruct((n * h, w), jnp.float32),
                   jax.ShapeDtypeStruct((n * oh, ow), jnp.float32)),
        grid=(n,),
        in_specs=[
            pl.BlockSpec(memory_space=pltpu.MemorySpace.SMEM),
            pl.BlockSpec((h, w), lambda i: (i, 0)),
            pl.BlockSpec((oh, h), lambda i: (0, 0)),
            pl.BlockSpec((w, ow), lambda i: (0, 0)),
        ],
        out_specs=(pl.BlockSpec((h, w), lambda i: (i, 0)),
                   pl.BlockSpec((oh, ow), lambda i: (i, 0))),
        compiler_params=pltpu.CompilerParams(dimension_semantics=("parallel",)),
    )(mnsc, g2d, a_m, bt_m)

    out = out_norm.reshape(n, 1, h, w)
    out_up = up.reshape(n, 1, oh, ow)
    return out, out_up


# --------------------------- pure-JAX reference -------------------------------

def fam_reference(x, params, out_hw=(224, 224)):
    eps = 1e-5

    def bn(z, b, g, be, m, v):
        z = z + b[None, :, None, None]
        return ((z - m[None, :, None, None]) / jnp.sqrt(v[None, :, None, None] + eps)
                * g[None, :, None, None] + be[None, :, None, None])

    y = lax.conv_general_dilated(x, params["w0"], (1, 1), ((PAD, PAD), (PAD, PAD)),
                                 dimension_numbers=("NCHW", "OIHW", "NCHW"),
                                 precision=lax.Precision.HIGHEST)
    y = jnp.maximum(bn(y, params["b0"], params["g0"], params["be0"],
                       params["m0"], params["v0"]), 0.0)
    z = lax.conv_general_dilated(y, params["w1"], (1, 1), ((PAD, PAD), (PAD, PAD)),
                                 dimension_numbers=("NCHW", "OIHW", "NCHW"),
                                 precision=lax.Precision.HIGHEST)
    z = jnp.maximum(bn(z, params["b1"], params["g1"], params["be1"],
                       params["m1"], params["v1"]), 0.0)
    out = (z.mean(axis=(2, 3), keepdims=True) * x).sum(axis=1, keepdims=True)
    out = jnp.maximum(out, 0.0)
    out = (out - out.min()) / (1e-07 + out.max())
    a_m = _bilinear_matrix(out_hw[0], x.shape[2])
    b_m = _bilinear_matrix(out_hw[1], x.shape[3])
    up = jnp.einsum("oh,nchw,pw->ncop", a_m, out, b_m,
                    precision=lax.Precision.HIGHEST)
    return out, up


# --------------------------- parameter init ----------------------------------

def init_params(key, in_channels, num_classes):
    ks = jax.random.split(key, 12)
    p = {}
    # conv0: (num_classes, in_channels, 7, 7), conv1: (in_channels, num_classes, 7, 7)
    p["w0"] = 0.05 * jax.random.normal(ks[0], (num_classes, in_channels, K, K), jnp.float32)
    p["b0"] = 0.05 * jax.random.normal(ks[1], (num_classes,), jnp.float32)
    p["w1"] = 0.05 * jax.random.normal(ks[2], (in_channels, num_classes, K, K), jnp.float32)
    p["b1"] = 0.05 * jax.random.normal(ks[3], (in_channels,), jnp.float32)
    # BatchNorm params, applied in inference mode (folded scale/shift).
    # TODO(synk): training-mode BatchNorm (per-batch statistics) is not replicated;
    # the kernel uses running-statistics (inference) semantics.
    p["g0"] = 1.0 + 0.1 * jax.random.normal(ks[4], (num_classes,), jnp.float32)
    p["be0"] = 0.1 * jax.random.normal(ks[5], (num_classes,), jnp.float32)
    p["m0"] = 0.1 * jax.random.normal(ks[6], (num_classes,), jnp.float32)
    p["v0"] = 0.5 + jax.random.uniform(ks[7], (num_classes,), jnp.float32)
    p["g1"] = 1.0 + 0.1 * jax.random.normal(ks[8], (in_channels,), jnp.float32)
    p["be1"] = 0.1 * jax.random.normal(ks[9], (in_channels,), jnp.float32)
    p["m1"] = 0.1 * jax.random.normal(ks[10], (in_channels,), jnp.float32)
    p["v1"] = 0.5 + jax.random.uniform(ks[11], (in_channels,), jnp.float32)
    return p


# ------------------------------- main -----------------------------------------

if __name__ == "__main__":
    N, CIN, NUM_CLASSES, H, W = 2, 4, 6, 16, 16
    key = jax.random.PRNGKey(0)
    kx, kp = jax.random.split(key)
    x = jax.random.normal(kx, (N, CIN, H, W), jnp.float32)
    params = init_params(kp, CIN, NUM_CLASSES)

    fwd = jax.jit(functools.partial(fam_forward, out_hw=(224, 224)))
    out, out_up = fwd(x, params)
    jax.block_until_ready((out, out_up))

    assert out.shape == (N, 1, H, W)
    assert out_up.shape == (N, 1, 224, 224)
    assert bool(jnp.all(jnp.isfinite(out))) and bool(jnp.all(jnp.isfinite(out_up)))

    # Pure-JAX reference check (inference-mode BN; loose tol for MXU rounding).
    ref_out, ref_up = jax.jit(fam_reference)(x, params)
    assert bool(jnp.allclose(out, ref_out, atol=3e-2, rtol=0.0)), "out mismatch vs reference"
    assert bool(jnp.allclose(out_up, ref_up, atol=3e-2, rtol=0.0)), "out_up mismatch vs reference"

    print("KERNEL_OK")
</pallas_src>

<mosaic_0001>
module attributes {stable_mosaic.version = 11 : i64} {
  func.func private @main(%arg0: i32) attributes {dimension_semantics = [#tpu.dimension_semantics<core_parallel>], iteration_bounds = array<i64: 2>, tpu.core_type = #tpu.core_type<sc_scalar_subcore>, window_params = []} {
    return
  }
}

module attributes {stable_mosaic.version = 11 : i64} {
  func.func private @main(%arg0: i32) attributes {dimension_semantics = [#tpu.dimension_semantics<core_parallel>], iteration_bounds = array<i64: 2>, tpu.core_type = #tpu.core_type<sc_scalar_subcore>, window_params = []} {
    return
  }
}

module attributes {stable_mosaic.version = 11 : i64} {
  func.func @_norm_upsample_kernel(%arg0: i32, %arg1: memref<2xf32, #tpu.memory_space<smem>>, %arg2: memref<16x16xf32, #tpu.memory_space<vmem>>, %arg3: memref<224x16xf32, #tpu.memory_space<vmem>>, %arg4: memref<16x224xf32, #tpu.memory_space<vmem>>, %arg5: memref<16x16xf32, #tpu.memory_space<vmem>>, %arg6: memref<224x224xf32, #tpu.memory_space<vmem>>) attributes {dimension_semantics = [#tpu.dimension_semantics<parallel>], iteration_bounds = array<i64: 2>, scalar_prefetch = 0 : i64, scratch_operands = 0 : i64, tpu.core_type = #tpu.core_type<tc>, window_params = [{transform_indices = @transform_0, window_bounds = array<i64: 2>}, {transform_indices = @transform_1, window_bounds = array<i64: 16, 16>}, {pipeline_mode = #tpu.pipeline_mode<synchronous>, transform_indices = @transform_2, window_bounds = array<i64: 224, 16>}, {pipeline_mode = #tpu.pipeline_mode<synchronous>, transform_indices = @transform_3, window_bounds = array<i64: 16, 224>}, {transform_indices = @transform_4, window_bounds = array<i64: 16, 16>}, {transform_indices = @transform_5, window_bounds = array<i64: 224, 224>}]} {
    %c0 = arith.constant 0 : index
    %c0_0 = arith.constant 0 : index
    %0 = vector.load %arg2[%c0, %c0_0] : memref<16x16xf32, #tpu.memory_space<vmem>>, vector<16x16xf32>
    %c0_1 = arith.constant 0 : index
    %1 = memref.load %arg1[%c0_1] : memref<2xf32, #tpu.memory_space<smem>>
    %2 = vector.broadcast %1 : f32 to vector<16x16xf32>
    %3 = arith.subf %0, %2 : vector<16x16xf32>
    %c1 = arith.constant 1 : index
    %4 = memref.load %arg1[%c1] : memref<2xf32, #tpu.memory_space<smem>>
    %5 = vector.broadcast %4 : f32 to vector<16x16xf32>
    %6 = arith.mulf %3, %5 : vector<16x16xf32>
    %c0_2 = arith.constant 0 : index
    %c0_3 = arith.constant 0 : index
    %7 = vector.load %arg5[%c0_2, %c0_3] : memref<16x16xf32, #tpu.memory_space<vmem>>, vector<16x16xf32>
    tpu.vector_store %arg5[%c0_2, %c0_3], %6 {strides = array<i32>} : memref<16x16xf32, #tpu.memory_space<vmem>>, vector<16x16xf32>,
    %c0_4 = arith.constant 0 : index
    %c0_5 = arith.constant 0 : index
    %8 = vector.load %arg3[%c0_4, %c0_5] : memref<224x16xf32, #tpu.memory_space<vmem>>, vector<224x16xf32>
    %cst = arith.constant dense<0.000000e+00> : vector<224x16xf32>
    %9 = tpu.matmul %8, %6, %cst {dimension_numbers = #tpu.dot_dimension_numbers<[1], [0], [0], [1], [0, 0, 1, 1], [], []>} : vector<224x16xf32>, vector<16x16xf32>, vector<224x16xf32> -> vector<224x16xf32>
    %c0_6 = arith.constant 0 : index
    %c0_7 = arith.constant 0 : index
    %10 = vector.load %arg4[%c0_6, %c0_7] : memref<16x224xf32, #tpu.memory_space<vmem>>, vector<16x224xf32>
    %cst_8 = arith.constant dense<0.000000e+00> : vector<224x224xf32>
    %11 = tpu.matmul %9, %10, %cst_8 {dimension_numbers = #tpu.dot_dimension_numbers<[1], [0], [0], [1], [0, 0, 1, 1], [], []>} : vector<224x16xf32>, vector<16x224xf32>, vector<224x224xf32> -> vector<224x224xf32>
    %c0_9 = arith.constant 0 : index
    %c0_10 = arith.constant 0 : index
    %12 = vector.load %arg6[%c0_9, %c0_10] : memref<224x224xf32, #tpu.memory_space<vmem>>, vector<224x224xf32>
    tpu.vector_store %arg6[%c0_9, %c0_10], %11 {strides = array<i32>} : memref<224x224xf32, #tpu.memory_space<vmem>>, vector<224x224xf32>,
    return
  }
  func.func @transform_0(%arg0: i32) -> i32 {
    %c0_i32 = arith.constant 0 : i32
    %c0_i32_0 = arith.constant 0 : i32
    return %c0_i32 : i32
  }
  func.func @transform_1(%arg0: i32) -> (i32, i32) {
    %c0_i32 = arith.constant 0 : i32
    %c0_i32_0 = arith.constant 0 : i32
    return %arg0, %c0_i32 : i32, i32
  }
  func.func @transform_2(%arg0: i32) -> (i32, i32) {
    %c0_i32 = arith.constant 0 : i32
    %c0_i32_0 = arith.constant 0 : i32
    %c0_i32_1 = arith.constant 0 : i32
    return %c0_i32, %c0_i32_0 : i32, i32
  }
  func.func @transform_3(%arg0: i32) -> (i32, i32) {
    %c0_i32 = arith.constant 0 : i32
    %c0_i32_0 = arith.constant 0 : i32
    %c0_i32_1 = arith.constant 0 : i32
    return %c0_i32, %c0_i32_0 : i32, i32
  }
  func.func @transform_4(%arg0: i32) -> (i32, i32) {
    %c0_i32 = arith.constant 0 : i32
    %c0_i32_0 = arith.constant 0 : i32
    return %arg0, %c0_i32 : i32, i32
  }
  func.func @transform_5(%arg0: i32) -> (i32, i32) {
    %c0_i32 = arith.constant 0 : i32
    %c0_i32_0 = arith.constant 0 : i32
    return %arg0, %c0_i32 : i32, i32
  }
}

module attributes {stable_mosaic.version = 11 : i64} {
  func.func @_fam_fused_kernel(%arg0: i32, %arg1: memref<1x4x256xf32, #tpu.memory_space<vmem>>, %arg2: memref<7x256xf32, #tpu.memory_space<vmem>>, %arg3: memref<6x196xf32, #tpu.memory_space<vmem>>, %arg4: memref<6x1xf32, #tpu.memory_space<vmem>>, %arg5: memref<6x1xf32, #tpu.memory_space<vmem>>, %arg6: memref<4x294xf32, #tpu.memory_space<vmem>>, %arg7: memref<4x1xf32, #tpu.memory_space<vmem>>, %arg8: memref<4x1xf32, #tpu.memory_space<vmem>>, %arg9: memref<1x1x256xf32, #tpu.memory_space<vmem>>, %arg10: memref<4x512xf32, #tpu.memory_space<vmem>>, %arg11: memref<6x512xf32, #tpu.memory_space<vmem>>, %arg12: memref<196x256xf32, #tpu.memory_space<vmem>>, %arg13: memref<294x256xf32, #tpu.memory_space<vmem>>) attributes {dimension_semantics = [#tpu.dimension_semantics<parallel>], iteration_bounds = array<i64: 2>, scalar_prefetch = 0 : i64, scratch_operands = 4 : i64, tpu.core_type = #tpu.core_type<tc>, window_params = [{transform_indices = @transform_0, window_bounds = array<i64: 1, 4, 256>}, {pipeline_mode = #tpu.pipeline_mode<synchronous>, transform_indices = @transform_1, window_bounds = array<i64: 7, 256>}, {pipeline_mode = #tpu.pipeline_mode<synchronous>, transform_indices = @transform_2, window_bounds = array<i64: 6, 196>}, {pipeline_mode = #tpu.pipeline_mode<synchronous>, transform_indices = @transform_3, window_bounds = array<i64: 6, 1>}, {pipeline_mode = #tpu.pipeline_mode<synchronous>, transform_indices = @transform_4, window_bounds = array<i64: 6, 1>}, {pipeline_mode = #tpu.pipeline_mode<synchronous>, transform_indices = @transform_5, window_bounds = array<i64: 4, 294>}, {pipeline_mode = #tpu.pipeline_mode<synchronous>, transform_indices = @transform_6, window_bounds = array<i64: 4, 1>}, {pipeline_mode = #tpu.pipeline_mode<synchronous>, transform_indices = @transform_7, window_bounds = array<i64: 4, 1>}, {transform_indices = @transform_8, window_bounds = array<i64: 1, 1, 256>}]} {
    %cst = arith.constant 0.000000e+00 : f32
    %0 = vector.broadcast %cst : f32 to vector<4x128xf32>
    %c0 = arith.constant 0 : index
    %c0_0 = arith.constant 0 : index
    %1 = vector.load %arg10[%c0, %c0_0] : memref<4x512xf32, #tpu.memory_space<vmem>>, vector<4x128xf32>
    tpu.vector_store %arg10[%c0, %c0_0], %0 {strides = array<i32>} : memref<4x512xf32, #tpu.memory_space<vmem>>, vector<4x128xf32>,
    %cst_1 = arith.constant 0.000000e+00 : f32
    %2 = vector.broadcast %cst_1 : f32 to vector<4x128xf32>
    %c0_2 = arith.constant 0 : index
    %c384 = arith.constant 384 : index
    %3 = vector.load %arg10[%c0_2, %c384] : memref<4x512xf32, #tpu.memory_space<vmem>>, vector<4x128xf32>
    tpu.vector_store %arg10[%c0_2, %c384], %2 {strides = array<i32>} : memref<4x512xf32, #tpu.memory_space<vmem>>, vector<4x128xf32>,
    %cst_3 = arith.constant 0.000000e+00 : f32
    %4 = vector.broadcast %cst_3 : f32 to vector<6x128xf32>
    %c0_4 = arith.constant 0 : index
    %c0_5 = arith.constant 0 : index
    %5 = vector.load %arg11[%c0_4, %c0_5] : memref<6x512xf32, #tpu.memory_space<vmem>>, vector<6x128xf32>
    tpu.vector_store %arg11[%c0_4, %c0_5], %4 {strides = array<i32>} : memref<6x512xf32, #tpu.memory_space<vmem>>, vector<6x128xf32>,
    %cst_6 = arith.constant 0.000000e+00 : f32
    %6 = vector.broadcast %cst_6 : f32 to vector<6x128xf32>
    %c0_7 = arith.constant 0 : index
    %c384_8 = arith.constant 384 : index
    %7 = vector.load %arg11[%c0_7, %c384_8] : memref<6x512xf32, #tpu.memory_space<vmem>>, vector<6x128xf32>
    tpu.vector_store %arg11[%c0_7, %c384_8], %6 {strides = array<i32>} : memref<6x512xf32, #tpu.memory_space<vmem>>, vector<6x128xf32>,
    %c0_9 = arith.constant 0 : index
    %c0_10 = arith.constant 0 : index
    %c0_11 = arith.constant 0 : index
    %8 = vector.load %arg1[%c0_9, %c0_10, %c0_11] : memref<1x4x256xf32, #tpu.memory_space<vmem>>, vector<1x4x256xf32>
    %9 = vector.shape_cast %8 : vector<1x4x256xf32> to vector<4x256xf32>
    %c0_12 = arith.constant 0 : index
    %c128 = arith.constant 128 : index
    %10 = vector.load %arg10[%c0_12, %c128] : memref<4x512xf32, #tpu.memory_space<vmem>>, vector<4x256xf32>
    tpu.vector_store %arg10[%c0_12, %c128], %9 {strides = array<i32>} : memref<4x512xf32, #tpu.memory_space<vmem>>, vector<4x256xf32>,
    %c0_13 = arith.constant 0 : index
    %c77 = arith.constant 77 : index
    %11 = vector.load %arg10[%c0_13, %c77] : memref<4x512xf32, #tpu.memory_space<vmem>>, vector<4x256xf32>
    %c0_14 = arith.constant 0 : index
    %c0_15 = arith.constant 0 : index
    %12 = vector.load %arg2[%c0_14, %c0_15] : memref<7x256xf32, #tpu.memory_space<vmem>>, vector<1x256xf32>
    %13 = vector.broadcast %12 : vector<1x256xf32> to vector<4x256xf32>
    %14 = arith.mulf %11, %13 : vector<4x256xf32>
    %c0_16 = arith.constant 0 : index
    %c0_17 = arith.constant 0 : index
    %15 = vector.load %arg12[%c0_16, %c0_17] : memref<196x256xf32, #tpu.memory_space<vmem>>, vector<4x256xf32>
    tpu.vector_store %arg12[%c0_16, %c0_17], %14 {strides = array<i32>} : memref<196x256xf32, #tpu.memory_space<vmem>>, vector<4x256xf32>,
    %c0_18 = arith.constant 0 : index
    %c78 = arith.constant 78 : index
    %16 = vector.load %arg10[%c0_18, %c78] : memref<4x512xf32, #tpu.memory_space<vmem>>, vector<4x256xf32>
    %c1 = arith.constant 1 : index
    %c0_19 = arith.constant 0 : index
    %17 = vector.load %arg2[%c1, %c0_19] : memref<7x256xf32, #tpu.memory_space<vmem>>, vector<1x256xf32>
    %18 = vector.broadcast %17 : vector<1x256xf32> to vector<4x256xf32>
    %19 = arith.mulf %16, %18 : vector<4x256xf32>
    %c4 = arith.constant 4 : index
    %c0_20 = arith.constant 0 : index
    %20 = vector.load %arg12[%c4, %c0_20] : memref<196x256xf32, #tpu.memory_space<vmem>>, vector<4x256xf32>
    tpu.vector_store %arg12[%c4, %c0_20], %19 {strides = array<i32>} : memref<196x256xf32, #tpu.memory_space<vmem>>, vector<4x256xf32>,
    %c0_21 = arith.constant 0 : index
    %c79 = arith.constant 79 : index
    %21 = vector.load %arg10[%c0_21, %c79] : memref<4x512xf32, #tpu.memory_space<vmem>>, vector<4x256xf32>
    %c2 = arith.constant 2 : index
    %c0_22 = arith.constant 0 : index
    %22 = vector.load %arg2[%c2, %c0_22] : memref<7x256xf32, #tpu.memory_space<vmem>>, vector<1x256xf32>
    %23 = vector.broadcast %22 : vector<1x256xf32> to vector<4x256xf32>
    %24 = arith.mulf %21, %23 : vector<4x256xf32>
    %c8 = arith.constant 8 : index
    %c0_23 = arith.constant 0 : index
    %25 = vector.load %arg12[%c8, %c0_23] : memref<196x256xf32, #tpu.memory_space<vmem>>, vector<4x256xf32>
    tpu.vector_store %arg12[%c8, %c0_23], %24 {strides = array<i32>} : memref<196x256xf32, #tpu.memory_space<vmem>>, vector<4x256xf32>,
    %c0_24 = arith.constant 0 : index
    %c80 = arith.constant 80 : index
    %26 = vector.load %arg10[%c0_24, %c80] : memref<4x512xf32, #tpu.memory_space<vmem>>, vector<4x256xf32>
    %c12 = arith.constant 12 : index
    %c0_25 = arith.constant 0 : index
    %27 = vector.load %arg12[%c12, %c0_25] : memref<196x256xf32, #tpu.memory_space<vmem>>, vector<4x256xf32>
    tpu.vector_store %arg12[%c12, %c0_25], %26 {strides = array<i32>} : memref<196x256xf32, #tpu.memory_space<vmem>>, vector<4x256xf32>,
    %c0_26 = arith.constant 0 : index
    %c81 = arith.constant 81 : index
    %28 = vector.load %arg10[%c0_26, %c81] : memref<4x512xf32, #tpu.memory_space<vmem>>, vector<4x256xf32>
    %c4_27 = arith.constant 4 : index
    %c0_28 = arith.constant 0 : index
    %29 = vector.load %arg2[%c4_27, %c0_28] : memref<7x256xf32, #tpu.memory_space<vmem>>, vector<1x256xf32>
    %30 = vector.broadcast %29 : vector<1x256xf32> to vector<4x256xf32>
    %31 = arith.mulf %28, %30 : vector<4x256xf32>
    %c16 = arith.constant 16 : index
    %c0_29 = arith.constant 0 : index
    %32 = vector.load %arg12[%c16, %c0_29] : memref<196x256xf32, #tpu.memory_space<vmem>>, vector<4x256xf32>
    tpu.vector_store %arg12[%c16, %c0_29], %31 {strides = array<i32>} : memref<196x256xf32, #tpu.memory_space<vmem>>, vector<4x256xf32>,
    %c0_30 = arith.constant 0 : index
    %c82 = arith.constant 82 : index
    %33 = vector.load %arg10[%c0_30, %c82] : memref<4x512xf32, #tpu.memory_space<vmem>>, vector<4x256xf32>
    %c5 = arith.constant 5 : index
    %c0_31 = arith.constant 0 : index
    %34 = vector.load %arg2[%c5, %c0_31] : memref<7x256xf32, #tpu.memory_space<vmem>>, vector<1x256xf32>
    %35 = vector.broadcast %34 : vector<1x256xf32> to vector<4x256xf32>
    %36 = arith.mulf %33, %35 : vector<4x256xf32>
    %c20 = arith.constant 20 : index
    %c0_32 = arith.constant 0 : index
    %37 = vector.load %arg12[%c20, %c0_32] : memref<196x256xf32, #tpu.memory_space<vmem>>, vector<4x256xf32>
    tpu.vector_store %arg12[%c20, %c0_32], %36 {strides = array<i32>} : memref<196x256xf32, #tpu.memory_space<vmem>>, vector<4x256xf32>,
    %c0_33 = arith.constant 0 : index
    %c83 = arith.constant 83 : index
    %38 = vector.load %arg10[%c0_33, %c83] : memref<4x512xf32, #tpu.memory_space<vmem>>, vector<4x256xf32>
    %c6 = arith.constant 6 : index
    %c0_34 = arith.constant 0 : index
    %39 = vector.load %arg2[%c6, %c0_34] : memref<7x256xf32, #tpu.memory_space<vmem>>, vector<1x256xf32>
    %40 = vector.broadcast %39 : vector<1x256xf32> to vector<4x256xf32>
    %41 = arith.mulf %38, %40 : vector<4x256xf32>
    %c24 = arith.constant 24 : index
    %c0_35 = arith.constant 0 : index
    %42 = vector.load %arg12[%c24, %c0_35] : memref<196x256xf32, #tpu.memory_space<vmem>>, vector<4x256xf32>
    tpu.vector_store %arg12[%c24, %c0_35], %41 {strides = array<i32>} : memref<196x256xf32, #tpu.memory_space<vmem>>, vector<4x256xf32>,
    %c0_36 = arith.constant 0 : index
    %c93 = arith.constant 93 : index
    %43 = vector.load %arg10[%c0_36, %c93] : memref<4x512xf32, #tpu.memory_space<vmem>>, vector<4x256xf32>
    %c0_37 = arith.constant 0 : index
    %c0_38 = arith.constant 0 : index
    %44 = vector.load %arg2[%c0_37, %c0_38] : memref<7x256xf32, #tpu.memory_space<vmem>>, vector<1x256xf32>
    %45 = vector.broadcast %44 : vector<1x256xf32> to vector<4x256xf32>
    %46 = arith.mulf %43, %45 : vector<4x256xf32>
    %c28 = arith.constant 28 : index
    %c0_39 = arith.constant 0 : index
    %47 = vector.load %arg12[%c28, %c0_39] : memref<196x256xf32, #tpu.memory_space<vmem>>, vector<4x256xf32>
    tpu.vector_store %arg12[%c28, %c0_39], %46 {strides = array<i32>} : memref<196x256xf32, #tpu.memory_space<vmem>>, vector<4x256xf32>,
    %c0_40 = arith.constant 0 : index
    %c94 = arith.constant 94 : index
    %48 = vector.load %arg10[%c0_40, %c94] : memref<4x512xf32, #tpu.memory_space<vmem>>, vector<4x256xf32>
    %c1_41 = arith.constant 1 : index
    %c0_42 = arith.constant 0 : index
    %49 = vector.load %arg2[%c1_41, %c0_42] : memref<7x256xf32, #tpu.memory_space<vmem>>, vector<1x256xf32>
    %50 = vector.broadcast %49 : vector<1x256xf32> to vector<4x256xf32>
    %51 = arith.mulf %48, %50 : vector<4x256xf32>
    %c32 = arith.constant 32 : index
    %c0_43 = arith.constant 0 : index
    %52 = vector.load %arg12[%c32, %c0_43] : memref<196x256xf32, #tpu.memory_space<vmem>>, vector<4x256xf32>
    tpu.vector_store %arg12[%c32, %c0_43], %51 {strides = array<i32>} : memref<196x256xf32, #tpu.memory_space<vmem>>, vector<4x256xf32>,
    %c0_44 = arith.constant 0 : index
    %c95 = arith.constant 95 : index
    %53 = vector.load %arg10[%c0_44, %c95] : memref<4x512xf32, #tpu.memory_space<vmem>>, vector<4x256xf32>
    %c2_45 = arith.constant 2 : index
    %c0_46 = arith.constant 0 : index
    %54 = vector.load %arg2[%c2_45, %c0_46] : memref<7x256xf32, #tpu.memory_space<vmem>>, vector<1x256xf32>
    %55 = vector.broadcast %54 : vector<1x256xf32> to vector<4x256xf32>
    %56 = arith.mulf %53, %55 : vector<4x256xf32>
    %c36 = arith.constant 36 : index
    %c0_47 = arith.constant 0 : index
    %57 = vector.load %arg12[%c36, %c0_47] : memref<196x256xf32, #tpu.memory_space<vmem>>, vector<4x256xf32>
    tpu.vector_store %arg12[%c36, %c0_47], %56 {strides = array<i32>} : memref<196x256xf32, #tpu.memory_space<vmem>>, vector<4x256xf32>,
    %c0_48 = arith.constant 0 : index
    %c96 = arith.constant 96 : index
    %58 = vector.load %arg10[%c0_48, %c96] : memref<4x512xf32, #tpu.memory_space<vmem>>, vector<4x256xf32>
    %c40 = arith.constant 40 : index
    %c0_49 = arith.constant 0 : index
    %59 = vector.load %arg12[%c40, %c0_49] : memref<196x256xf32, #tpu.memory_space<vmem>>, vector<4x256xf32>
    tpu.vector_store %arg12[%c40, %c0_49], %58 {strides = array<i32>} : memref<196x256xf32, #tpu.memory_space<vmem>>, vector<4x256xf32>,
    %c0_50 = arith.constant 0 : index
    %c97 = arith.constant 97 : index
    %60 = vector.load %arg10[%c0_50, %c97] : memref<4x512xf32, #tpu.memory_space<vmem>>, vector<4x256xf32>
    %c4_51 = arith.constant 4 : index
    %c0_52 = arith.constant 0 : index
    %61 = vector.load %arg2[%c4_51, %c0_52] : memref<7x256xf32, #tpu.memory_space<vmem>>, vector<1x256xf32>
    %62 = vector.broadcast %61 : vector<1x256xf32> to vector<4x256xf32>
    %63 = arith.mulf %60, %62 : vector<4x256xf32>
    %c44 = arith.constant 44 : index
    %c0_53 = arith.constant 0 : index
    %64 = vector.load %arg12[%c44, %c0_53] : memref<196x256xf32, #tpu.memory_space<vmem>>, vector<4x256xf32>
    tpu.vector_store %arg12[%c44, %c0_53], %63 {strides = array<i32>} : memref<196x256xf32, #tpu.memory_space<vmem>>, vector<4x256xf32>,
    %c0_54 = arith.constant 0 : index
    %c98 = arith.constant 98 : index
    %65 = vector.load %arg10[%c0_54, %c98] : memref<4x512xf32, #tpu.memory_space<vmem>>, vector<4x256xf32>
    %c5_55 = arith.constant 5 : index
    %c0_56 = arith.constant 0 : index
    %66 = vector.load %arg2[%c5_55, %c0_56] : memref<7x256xf32, #tpu.memory_space<vmem>>, vector<1x256xf32>
    %67 = vector.broadcast %66 : vector<1x256xf32> to vector<4x256xf32>
    %68 = arith.mulf %65, %67 : vector<4x256xf32>
    %c48 = arith.constant 48 : index
    %c0_57 = arith.constant 0 : index
    %69 = vector.load %arg12[%c48, %c0_57] : memref<196x256xf32, #tpu.memory_space<vmem>>, vector<4x256xf32>
    tpu.vector_store %arg12[%c48, %c0_57], %68 {strides = array<i32>} : memref<196x256xf32, #tpu.memory_space<vmem>>, vector<4x256xf32>,
    %c0_58 = arith.constant 0 : index
    %c99 = arith.constant 99 : index
    %70 = vector.load %arg10[%c0_58, %c99] : memref<4x512xf32, #tpu.memory_space<vmem>>, vector<4x256xf32>
    %c6_59 = arith.constant 6 : index
    %c0_60 = arith.constant 0 : index
    %71 = vector.load %arg2[%c6_59, %c0_60] : memref<7x256xf32, #tpu.memory_space<vmem>>, vector<1x256xf32>
    %72 = vector.broadcast %71 : vector<1x256xf32> to vector<4x256xf32>
    %73 = arith.mulf %70, %72 : vector<4x256xf32>
    %c52 = arith.constant 52 : index
    %c0_61 = arith.constant 0 : index
    %74 = vector.load %arg12[%c52, %c0_61] : memref<196x256xf32, #tpu.memory_space<vmem>>, vector<4x256xf32>
    tpu.vector_store %arg12[%c52, %c0_61], %73 {strides = array<i32>} : memref<196x256xf32, #tpu.memory_space<vmem>>, vector<4x256xf32>,
    %c0_62 = arith.constant 0 : index
    %c109 = arith.constant 109 : index
    %75 = vector.load %arg10[%c0_62, %c109] : memref<4x512xf32, #tpu.memory_space<vmem>>, vector<4x256xf32>
    %c0_63 = arith.constant 0 : index
    %c0_64 = arith.constant 0 : index
    %76 = vector.load %arg2[%c0_63, %c0_64] : memref<7x256xf32, #tpu.memory_space<vmem>>, vector<1x256xf32>
    %77 = vector.broadcast %76 : vector<1x256xf32> to vector<4x256xf32>
    %78 = arith.mulf %75, %77 : vector<4x256xf32>
    %c56 = arith.constant 56 : index
    %c0_65 = arith.constant 0 : index
    %79 = vector.load %arg12[%c56, %c0_65] : memref<196x256xf32, #tpu.memory_space<vmem>>, vector<4x256xf32>
    tpu.vector_store %arg12[%c56, %c0_65], %78 {strides = array<i32>} : memref<196x256xf32, #tpu.memory_space<vmem>>, vector<4x256xf32>,
    %c0_66 = arith.constant 0 : index
    %c110 = arith.constant 110 : index
    %80 = vector.load %arg10[%c0_66, %c110] : memref<4x512xf32, #tpu.memory_space<vmem>>, vector<4x256xf32>
    %c1_67 = arith.constant 1 : index
    %c0_68 = arith.constant 0 : index
    %81 = vector.load %arg2[%c1_67, %c0_68] : memref<7x256xf32, #tpu.memory_space<vmem>>, vector<1x256xf32>
    %82 = vector.broadcast %81 : vector<1x256xf32> to vector<4x256xf32>
    %83 = arith.mulf %80, %82 : vector<4x256xf32>
    %c60 = arith.constant 60 : index
    %c0_69 = arith.constant 0 : index
    %84 = vector.load %arg12[%c60, %c0_69] : memref<196x256xf32, #tpu.memory_space<vmem>>, vector<4x256xf32>
    tpu.vector_store %arg12[%c60, %c0_69], %83 {strides = array<i32>} : memref<196x256xf32, #tpu.memory_space<vmem>>, vector<4x256xf32>,
    %c0_70 = arith.constant 0 : index
    %c111 = arith.constant 111 : index
    %85 = vector.load %arg10[%c0_70, %c111] : memref<4x512xf32, #tpu.memory_space<vmem>>, vector<4x256xf32>
    %c2_71 = arith.constant 2 : index
    %c0_72 = arith.constant 0 : index
    %86 = vector.load %arg2[%c2_71, %c0_72] : memref<7x256xf32, #tpu.memory_space<vmem>>, vector<1x256xf32>
    %87 = vector.broadcast %86 : vector<1x256xf32> to vector<4x256xf32>
    %88 = arith.mulf %85, %87 : vector<4x256xf32>
    %c64 = arith.constant 64 : index
    %c0_73 = arith.constant 0 : index
    %89 = vector.load %arg12[%c64, %c0_73] : memref<196x256xf32, #tpu.memory_space<vmem>>, vector<4x256xf32>
    tpu.vector_store %arg12[%c64, %c0_73], %88 {strides = array<i32>} : memref<196x256xf32, #tpu.memory_space<vmem>>, vector<4x256xf32>,
    %c0_74 = arith.constant 0 : index
    %c112 = arith.constant 112 : index
    %90 = vector.load %arg10[%c0_74, %c112] : memref<4x512xf32, #tpu.memory_space<vmem>>, vector<4x256xf32>
    %c68 = arith.constant 68 : index
    %c0_75 = arith.constant 0 : index
    %91 = vector.load %arg12[%c68, %c0_75] : memref<196x256xf32, #tpu.memory_space<vmem>>, vector<4x256xf32>
    tpu.vector_store %arg12[%c68, %c0_75], %90 {strides = array<i32>} : memref<196x256xf32, #tpu.memory_space<vmem>>, vector<4x256xf32>,
    %c0_76 = arith.constant 0 : index
    %c113 = arith.constant 113 : index
    %92 = vector.load %arg10[%c0_76, %c113] : memref<4x512xf32, #tpu.memory_space<vmem>>, vector<4x256xf32>
    %c4_77 = arith.constant 4 : index
    %c0_78 = arith.constant 0 : index
    %93 = vector.load %arg2[%c4_77, %c0_78] : memref<7x256xf32, #tpu.memory_space<vmem>>, vector<1x256xf32>
    %94 = vector.broadcast %93 : vector<1x256xf32> to vector<4x256xf32>
    %95 = arith.mulf %92, %94 : vector<4x256xf32>
    %c72 = arith.constant 72 : index
    %c0_79 = arith.constant 0 : index
    %96 = vector.load %arg12[%c72, %c0_79] : memref<196x256xf32, #tpu.memory_space<vmem>>, vector<4x256xf32>
    tpu.vector_store %arg12[%c72, %c0_79], %95 {strides = array<i32>} : memref<196x256xf32, #tpu.memory_space<vmem>>, vector<4x256xf32>,
    %c0_80 = arith.constant 0 : index
    %c114 = arith.constant 114 : index
    %97 = vector.load %arg10[%c0_80, %c114] : memref<4x512xf32, #tpu.memory_space<vmem>>, vector<4x256xf32>
    %c5_81 = arith.constant 5 : index
    %c0_82 = arith.constant 0 : index
    %98 = vector.load %arg2[%c5_81, %c0_82] : memref<7x256xf32, #tpu.memory_space<vmem>>, vector<1x256xf32>
    %99 = vector.broadcast %98 : vector<1x256xf32> to vector<4x256xf32>
    %100 = arith.mulf %97, %99 : vector<4x256xf32>
    %c76 = arith.constant 76 : index
    %c0_83 = arith.constant 0 : index
    %101 = vector.load %arg12[%c76, %c0_83] : memref<196x256xf32, #tpu.memory_space<vmem>>, vector<4x256xf32>
    tpu.vector_store %arg12[%c76, %c0_83], %100 {strides = array<i32>} : memref<196x256xf32, #tpu.memory_space<vmem>>, vector<4x256xf32>,
    %c0_84 = arith.constant 0 : index
    %c115 = arith.constant 115 : index
    %102 = vector.load %arg10[%c0_84, %c115] : memref<4x512xf32, #tpu.memory_space<vmem>>, vector<4x256xf32>
    %c6_85 = arith.constant 6 : index
    %c0_86 = arith.constant 0 : index
    %103 = vector.load %arg2[%c6_85, %c0_86] : memref<7x256xf32, #tpu.memory_space<vmem>>, vector<1x256xf32>
    %104 = vector.broadcast %103 : vector<1x256xf32> to vector<4x256xf32>
    %105 = arith.mulf %102, %104 : vector<4x256xf32>
    %c80_87 = arith.constant 80 : index
    %c0_88 = arith.constant 0 : index
    %106 = vector.load %arg12[%c80_87, %c0_88] : memref<196x256xf32, #tpu.memory_space<vmem>>, vector<4x256xf32>
    tpu.vector_store %arg12[%c80_87, %c0_88], %105 {strides = array<i32>} : memref<196x256xf32, #tpu.memory_space<vmem>>, vector<4x256xf32>,
    %c0_89 = arith.constant 0 : index
    %c125 = arith.constant 125 : index
    %107 = vector.load %arg10[%c0_89, %c125] : memref<4x512xf32, #tpu.memory_space<vmem>>, vector<4x256xf32>
    %c0_90 = arith.constant 0 : index
    %c0_91 = arith.constant 0 : index
    %108 = vector.load %arg2[%c0_90, %c0_91] : memref<7x256xf32, #tpu.memory_space<vmem>>, vector<1x256xf32>
    %109 = vector.broadcast %108 : vector<1x256xf32> to vector<4x256xf32>
    %110 = arith.mulf %107, %109 : vector<4x256xf32>
    %c84 = arith.constant 84 : index
    %c0_92 = arith.constant 0 : index
    %111 = vector.load %arg12[%c84, %c0_92] : memref<196x256xf32, #tpu.memory_space<vmem>>, vector<4x256xf32>
    tpu.vector_store %arg12[%c84, %c0_92], %110 {strides = array<i32>} : memref<196x256xf32, #tpu.memory_space<vmem>>, vector<4x256xf32>,
    %c0_93 = arith.constant 0 : index
    %c126 = arith.constant 126 : index
    %112 = vector.load %arg10[%c0_93, %c126] : memref<4x512xf32, #tpu.memory_space<vmem>>, vector<4x256xf32>
    %c1_94 = arith.constant 1 : index
    %c0_95 = arith.constant 0 : index
    %113 = vector.load %arg2[%c1_94, %c0_95] : memref<7x256xf32, #tpu.memory_space<vmem>>, vector<1x256xf32>
    %114 = vector.broadcast %113 : vector<1x256xf32> to vector<4x256xf32>
    %115 = arith.mulf %112, %114 : vector<4x256xf32>
    %c88 = arith.constant 88 : index
    %c0_96 = arith.constant 0 : index
    %116 = vector.load %arg12[%c88, %c0_96] : memref<196x256xf32, #tpu.memory_space<vmem>>, vector<4x256xf32>
    tpu.vector_store %arg12[%c88, %c0_96], %115 {strides = array<i32>} : memref<196x256xf32, #tpu.memory_space<vmem>>, vector<4x256xf32>,
    %c0_97 = arith.constant 0 : index
    %c127 = arith.constant 127 : index
    %117 = vector.load %arg10[%c0_97, %c127] : memref<4x512xf32, #tpu.memory_space<vmem>>, vector<4x256xf32>
    %c2_98 = arith.constant 2 : index
    %c0_99 = arith.constant 0 : index
    %118 = vector.load %arg2[%c2_98, %c0_99] : memref<7x256xf32, #tpu.memory_space<vmem>>, vector<1x256xf32>
    %119 = vector.broadcast %118 : vector<1x256xf32> to vector<4x256xf32>
    %120 = arith.mulf %117, %119 : vector<4x256xf32>
    %c92 = arith.constant 92 : index
    %c0_100 = arith.constant 0 : index
    %121 = vector.load %arg12[%c92, %c0_100] : memref<196x256xf32, #tpu.memory_space<vmem>>, vector<4x256xf32>
    tpu.vector_store %arg12[%c92, %c0_100], %120 {strides = array<i32>} : memref<196x256xf32, #tpu.memory_space<vmem>>, vector<4x256xf32>,
    %c0_101 = arith.constant 0 : index
    %c128_102 = arith.constant 128 : index
    %122 = vector.load %arg10[%c0_101, %c128_102] : memref<4x512xf32, #tpu.memory_space<vmem>>, vector<4x256xf32>
    %c96_103 = arith.constant 96 : index
    %c0_104 = arith.constant 0 : index
    %123 = vector.load %arg12[%c96_103, %c0_104] : memref<196x256xf32, #tpu.memory_space<vmem>>, vector<4x256xf32>
    tpu.vector_store %arg12[%c96_103, %c0_104], %122 {strides = array<i32>} : memref<196x256xf32, #tpu.memory_space<vmem>>, vector<4x256xf32>,
    %c0_105 = arith.constant 0 : index
    %c129 = arith.constant 129 : index
    %124 = vector.load %arg10[%c0_105, %c129] : memref<4x512xf32, #tpu.memory_space<vmem>>, vector<4x256xf32>
    %c4_106 = arith.constant 4 : index
    %c0_107 = arith.constant 0 : index
    %125 = vector.load %arg2[%c4_106, %c0_107] : memref<7x256xf32, #tpu.memory_space<vmem>>, vector<1x256xf32>
    %126 = vector.broadcast %125 : vector<1x256xf32> to vector<4x256xf32>
    %127 = arith.mulf %124, %126 : vector<4x256xf32>
    %c100 = arith.constant 100 : index
    %c0_108 = arith.constant 0 : index
    %128 = vector.load %arg12[%c100, %c0_108] : memref<196x256xf32, #tpu.memory_space<vmem>>, vector<4x256xf32>
    tpu.vector_store %arg12[%c100, %c0_108], %127 {strides = array<i32>} : memref<196x256xf32, #tpu.memory_space<vmem>>, vector<4x256xf32>,
    %c0_109 = arith.constant 0 : index
    %c130 = arith.constant 130 : index
    %129 = vector.load %arg10[%c0_109, %c130] : memref<4x512xf32, #tpu.memory_space<vmem>>, vector<4x256xf32>
    %c5_110 = arith.constant 5 : index
    %c0_111 = arith.constant 0 : index
    %130 = vector.load %arg2[%c5_110, %c0_111] : memref<7x256xf32, #tpu.memory_space<vmem>>, vector<1x256xf32>
    %131 = vector.broadcast %130 : vector<1x256xf32> to vector<4x256xf32>
    %132 = arith.mulf %129, %131 : vector<4x256xf32>
    %c104 = arith.constant 104 : index
    %c0_112 = arith.constant 0 : index
    %133 = vector.load %arg12[%c104, %c0_112] : memref<196x256xf32, #tpu.memory_space<vmem>>, vector<4x256xf32>
    tpu.vector_store %arg12[%c104, %c0_112], %132 {strides = array<i32>} : memref<196x256xf32, #tpu.memory_space<vmem>>, vector<4x256xf32>,
    %c0_113 = arith.constant 0 : index
    %c131 = arith.constant 131 : index
    %134 = vector.load %arg10[%c0_113, %c131] : memref<4x512xf32, #tpu.memory_space<vmem>>, vector<4x256xf32>
    %c6_114 = arith.constant 6 : index
    %c0_115 = arith.constant 0 : index
    %135 = vector.load %arg2[%c6_114, %c0_115] : memref<7x256xf32, #tpu.memory_space<vmem>>, vector<1x256xf32>
    %136 = vector.broadcast %135 : vector<1x256xf32> to vector<4x256xf32>
    %137 = arith.mulf %134, %136 : vector<4x256xf32>
    %c108 = arith.constant 108 : index
    %c0_116 = arith.constant 0 : index
    %138 = vector.load %arg12[%c108, %c0_116] : memref<196x256xf32, #tpu.memory_space<vmem>>, vector<4x256xf32>
    tpu.vector_store %arg12[%c108, %c0_116], %137 {strides = array<i32>} : memref<196x256xf32, #tpu.memory_space<vmem>>, vector<4x256xf32>,
    %c0_117 = arith.constant 0 : index
    %c141 = arith.constant 141 : index
    %139 = vector.load %arg10[%c0_117, %c141] : memref<4x512xf32, #tpu.memory_space<vmem>>, vector<4x256xf32>
    %c0_118 = arith.constant 0 : index
    %c0_119 = arith.constant 0 : index
    %140 = vector.load %arg2[%c0_118, %c0_119] : memref<7x256xf32, #tpu.memory_space<vmem>>, vector<1x256xf32>
    %141 = vector.broadcast %140 : vector<1x256xf32> to vector<4x256xf32>
    %142 = arith.mulf %139, %141 : vector<4x256xf32>
    %c112_120 = arith.constant 112 : index
    %c0_121 = arith.constant 0 : index
    %143 = vector.load %arg12[%c112_120, %c0_121] : memref<196x256xf32, #tpu.memory_space<vmem>>, vector<4x256xf32>
    tpu.vector_store %arg12[%c112_120, %c0_121], %142 {strides = array<i32>} : memref<196x256xf32, #tpu.memory_space<vmem>>, vector<4x256xf32>,
    %c0_122 = arith.constant 0 : index
    %c142 = arith.constant 142 : index
    %144 = vector.load %arg10[%c0_122, %c142] : memref<4x512xf32, #tpu.memory_space<vmem>>, vector<4x256xf32>
    %c1_123 = arith.constant 1 : index
    %c0_124 = arith.constant 0 : index
    %145 = vector.load %arg2[%c1_123, %c0_124] : memref<7x256xf32, #tpu.memory_space<vmem>>, vector<1x256xf32>
    %146 = vector.broadcast %145 : vector<1x256xf32> to vector<4x256xf32>
    %147 = arith.mulf %144, %146 : vector<4x256xf32>
    %c116 = arith.constant 116 : index
    %c0_125 = arith.constant 0 : index
    %148 = vector.load %arg12[%c116, %c0_125] : memref<196x256xf32, #tpu.memory_space<vmem>>, vector<4x256xf32>
    tpu.vector_store %arg12[%c116, %c0_125], %147 {strides = array<i32>} : memref<196x256xf32, #tpu.memory_space<vmem>>, vector<4x256xf32>,
    %c0_126 = arith.constant 0 : index
    %c143 = arith.constant 143 : index
    %149 = vector.load %arg10[%c0_126, %c143] : memref<4x512xf32, #tpu.memory_space<vmem>>, vector<4x256xf32>
    %c2_127 = arith.constant 2 : index
    %c0_128 = arith.constant 0 : index
    %150 = vector.load %arg2[%c2_127, %c0_128] : memref<7x256xf32, #tpu.memory_space<vmem>>, vector<1x256xf32>
    %151 = vector.broadcast %150 : vector<1x256xf32> to vector<4x256xf32>
    %152 = arith.mulf %149, %151 : vector<4x256xf32>
    %c120 = arith.constant 120 : index
    %c0_129 = arith.constant 0 : index
    %153 = vector.load %arg12[%c120, %c0_129] : memref<196x256xf32, #tpu.memory_space<vmem>>, vector<4x256xf32>
    tpu.vector_store %arg12[%c120, %c0_129], %152 {strides = array<i32>} : memref<196x256xf32, #tpu.memory_space<vmem>>, vector<4x256xf32>,
    %c0_130 = arith.constant 0 : index
    %c144 = arith.constant 144 : index
    %154 = vector.load %arg10[%c0_130, %c144] : memref<4x512xf32, #tpu.memory_space<vmem>>, vector<4x256xf32>
    %c124 = arith.constant 124 : index
    %c0_131 = arith.constant 0 : index
    %155 = vector.load %arg12[%c124, %c0_131] : memref<196x256xf32, #tpu.memory_space<vmem>>, vector<4x256xf32>
    tpu.vector_store %arg12[%c124, %c0_131], %154 {strides = array<i32>} : memref<196x256xf32, #tpu.memory_space<vmem>>, vector<4x256xf32>,
    %c0_132 = arith.constant 0 : index
    %c145 = arith.constant 145 : index
    %156 = vector.load %arg10[%c0_132, %c145] : memref<4x512xf32, #tpu.memory_space<vmem>>, vector<4x256xf32>
    %c4_133 = arith.constant 4 : index
    %c0_134 = arith.constant 0 : index
    %157 = vector.load %arg2[%c4_133, %c0_134] : memref<7x256xf32, #tpu.memory_space<vmem>>, vector<1x256xf32>
    %158 = vector.broadcast %157 : vector<1x256xf32> to vector<4x256xf32>
    %159 = arith.mulf %156, %158 : vector<4x256xf32>
    %c128_135 = arith.constant 128 : index
    %c0_136 = arith.constant 0 : index
    %160 = vector.load %arg12[%c128_135, %c0_136] : memref<196x256xf32, #tpu.memory_space<vmem>>, vector<4x256xf32>
    tpu.vector_store %arg12[%c128_135, %c0_136], %159 {strides = array<i32>} : memref<196x256xf32, #tpu.memory_space<vmem>>, vector<4x256xf32>,
    %c0_137 = arith.constant 0 : index
    %c146 = arith.constant 146 : index
    %161 = vector.load %arg10[%c0_137, %c146] : memref<4x512xf32, #tpu.memory_space<vmem>>, vector<4x256xf32>
    %c5_138 = arith.constant 5 : index
    %c0_139 = arith.constant 0 : index
    %162 = vector.load %arg2[%c5_138, %c0_139] : memref<7x256xf32, #tpu.memory_space<vmem>>, vector<1x256xf32>
    %163 = vector.broadcast %162 : vector<1x256xf32> to vector<4x256xf32>
    %164 = arith.mulf %161, %163 : vector<4x256xf32>
    %c132 = arith.constant 132 : index
    %c0_140 = arith.constant 0 : index
    %165 = vector.load %arg12[%c132, %c0_140] : memref<196x256xf32, #tpu.memory_space<vmem>>, vector<4x256xf32>
    tpu.vector_store %arg12[%c132, %c0_140], %164 {strides = array<i32>} : memref<196x256xf32, #tpu.memory_space<vmem>>, vector<4x256xf32>,
    %c0_141 = arith.constant 0 : index
    %c147 = arith.constant 147 : index
    %166 = vector.load %arg10[%c0_141, %c147] : memref<4x512xf32, #tpu.memory_space<vmem>>, vector<4x256xf32>
    %c6_142 = arith.constant 6 : index
    %c0_143 = arith.constant 0 : index
    %167 = vector.load %arg2[%c6_142, %c0_143] : memref<7x256xf32, #tpu.memory_space<vmem>>, vector<1x256xf32>
    %168 = vector.broadcast %167 : vector<1x256xf32> to vector<4x256xf32>
    %169 = arith.mulf %166, %168 : vector<4x256xf32>
    %c136 = arith.constant 136 : index
    %c0_144 = arith.constant 0 : index
    %170 = vector.load %arg12[%c136, %c0_144] : memref<196x256xf32, #tpu.memory_space<vmem>>, vector<4x256xf32>
    tpu.vector_store %arg12[%c136, %c0_144], %169 {strides = array<i32>} : memref<196x256xf32, #tpu.memory_space<vmem>>, vector<4x256xf32>,
    %c0_145 = arith.constant 0 : index
    %c157 = arith.constant 157 : index
    %171 = vector.load %arg10[%c0_145, %c157] : memref<4x512xf32, #tpu.memory_space<vmem>>, vector<4x256xf32>
    %c0_146 = arith.constant 0 : index
    %c0_147 = arith.constant 0 : index
    %172 = vector.load %arg2[%c0_146, %c0_147] : memref<7x256xf32, #tpu.memory_space<vmem>>, vector<1x256xf32>
    %173 = vector.broadcast %172 : vector<1x256xf32> to vector<4x256xf32>
    %174 = arith.mulf %171, %173 : vector<4x256xf32>
    %c140 = arith.constant 140 : index
    %c0_148 = arith.constant 0 : index
    %175 = vector.load %arg12[%c140, %c0_148] : memref<196x256xf32, #tpu.memory_space<vmem>>, vector<4x256xf32>
    tpu.vector_store %arg12[%c140, %c0_148], %174 {strides = array<i32>} : memref<196x256xf32, #tpu.memory_space<vmem>>, vector<4x256xf32>,
    %c0_149 = arith.constant 0 : index
    %c158 = arith.constant 158 : index
    %176 = vector.load %arg10[%c0_149, %c158] : memref<4x512xf32, #tpu.memory_space<vmem>>, vector<4x256xf32>
    %c1_150 = arith.constant 1 : index
    %c0_151 = arith.constant 0 : index
    %177 = vector.load %arg2[%c1_150, %c0_151] : memref<7x256xf32, #tpu.memory_space<vmem>>, vector<1x256xf32>
    %178 = vector.broadcast %177 : vector<1x256xf32> to vector<4x256xf32>
    %179 = arith.mulf %176, %178 : vector<4x256xf32>
    %c144_152 = arith.constant 144 : index
    %c0_153 = arith.constant 0 : index
    %180 = vector.load %arg12[%c144_152, %c0_153] : memref<196x256xf32, #tpu.memory_space<vmem>>, vector<4x256xf32>
    tpu.vector_store %arg12[%c144_152, %c0_153], %179 {strides = array<i32>} : memref<196x256xf32, #tpu.memory_space<vmem>>, vector<4x256xf32>,
    %c0_154 = arith.constant 0 : index
    %c159 = arith.constant 159 : index
    %181 = vector.load %arg10[%c0_154, %c159] : memref<4x512xf32, #tpu.memory_space<vmem>>, vector<4x256xf32>
    %c2_155 = arith.constant 2 : index
    %c0_156 = arith.constant 0 : index
    %182 = vector.load %arg2[%c2_155, %c0_156] : memref<7x256xf32, #tpu.memory_space<vmem>>, vector<1x256xf32>
    %183 = vector.broadcast %182 : vector<1x256xf32> to vector<4x256xf32>
    %184 = arith.mulf %181, %183 : vector<4x256xf32>
    %c148 = arith.constant 148 : index
    %c0_157 = arith.constant 0 : index
    %185 = vector.load %arg12[%c148, %c0_157] : memref<196x256xf32, #tpu.memory_space<vmem>>, vector<4x256xf32>
    tpu.vector_store %arg12[%c148, %c0_157], %184 {strides = array<i32>} : memref<196x256xf32, #tpu.memory_space<vmem>>, vector<4x256xf32>,
    %c0_158 = arith.constant 0 : index
    %c160 = arith.constant 160 : index
    %186 = vector.load %arg10[%c0_158, %c160] : memref<4x512xf32, #tpu.memory_space<vmem>>, vector<4x256xf32>
    %c152 = arith.constant 152 : index
    %c0_159 = arith.constant 0 : index
    %187 = vector.load %arg12[%c152, %c0_159] : memref<196x256xf32, #tpu.memory_space<vmem>>, vector<4x256xf32>
    tpu.vector_store %arg12[%c152, %c0_159], %186 {strides = array<i32>} : memref<196x256xf32, #tpu.memory_space<vmem>>, vector<4x256xf32>,
    %c0_160 = arith.constant 0 : index
    %c161 = arith.constant 161 : index
    %188 = vector.load %arg10[%c0_160, %c161] : memref<4x512xf32, #tpu.memory_space<vmem>>, vector<4x256xf32>
    %c4_161 = arith.constant 4 : index
    %c0_162 = arith.constant 0 : index
    %189 = vector.load %arg2[%c4_161, %c0_162] : memref<7x256xf32, #tpu.memory_space<vmem>>, vector<1x256xf32>
    %190 = vector.broadcast %189 : vector<1x256xf32> to vector<4x256xf32>
    %191 = arith.mulf %188, %190 : vector<4x256xf32>
    %c156 = arith.constant 156 : index
    %c0_163 = arith.constant 0 : index
    %192 = vector.load %arg12[%c156, %c0_163] : memref<196x256xf32, #tpu.memory_space<vmem>>, vector<4x256xf32>
    tpu.vector_store %arg12[%c156, %c0_163], %191 {strides = array<i32>} : memref<196x256xf32, #tpu.memory_space<vmem>>, vector<4x256xf32>,
    %c0_164 = arith.constant 0 : index
    %c162 = arith.constant 162 : index
    %193 = vector.load %arg10[%c0_164, %c162] : memref<4x512xf32, #tpu.memory_space<vmem>>, vector<4x256xf32>
    %c5_165 = arith.constant 5 : index
    %c0_166 = arith.constant 0 : index
    %194 = vector.load %arg2[%c5_165, %c0_166] : memref<7x256xf32, #tpu.memory_space<vmem>>, vector<1x256xf32>
    %195 = vector.broadcast %194 : vector<1x256xf32> to vector<4x256xf32>
    %196 = arith.mulf %193, %195 : vector<4x256xf32>
    %c160_167 = arith.constant 160 : index
    %c0_168 = arith.constant 0 : index
    %197 = vector.load %arg12[%c160_167, %c0_168] : memref<196x256xf32, #tpu.memory_space<vmem>>, vector<4x256xf32>
    tpu.vector_store %arg12[%c160_167, %c0_168], %196 {strides = array<i32>} : memref<196x256xf32, #tpu.memory_space<vmem>>, vector<4x256xf32>,
    %c0_169 = arith.constant 0 : index
    %c163 = arith.constant 163 : index
    %198 = vector.load %arg10[%c0_169, %c163] : memref<4x512xf32, #tpu.memory_space<vmem>>, vector<4x256xf32>
    %c6_170 = arith.constant 6 : index
    %c0_171 = arith.constant 0 : index
    %199 = vector.load %arg2[%c6_170, %c0_171] : memref<7x256xf32, #tpu.memory_space<vmem>>, vector<1x256xf32>
    %200 = vector.broadcast %199 : vector<1x256xf32> to vector<4x256xf32>
    %201 = arith.mulf %198, %200 : vector<4x256xf32>
    %c164 = arith.constant 164 : index
    %c0_172 = arith.constant 0 : index
    %202 = vector.load %arg12[%c164, %c0_172] : memref<196x256xf32, #tpu.memory_space<vmem>>, vector<4x256xf32>
    tpu.vector_store %arg12[%c164, %c0_172], %201 {strides = array<i32>} : memref<196x256xf32, #tpu.memory_space<vmem>>, vector<4x256xf32>,
    %c0_173 = arith.constant 0 : index
    %c173 = arith.constant 173 : index
    %203 = vector.load %arg10[%c0_173, %c173] : memref<4x512xf32, #tpu.memory_space<vmem>>, vector<4x256xf32>
    %c0_174 = arith.constant 0 : index
    %c0_175 = arith.constant 0 : index
    %204 = vector.load %arg2[%c0_174, %c0_175] : memref<7x256xf32, #tpu.memory_space<vmem>>, vector<1x256xf32>
    %205 = vector.broadcast %204 : vector<1x256xf32> to vector<4x256xf32>
    %206 = arith.mulf %203, %205 : vector<4x256xf32>
    %c168 = arith.constant 168 : index
    %c0_176 = arith.constant 0 : index
    %207 = vector.load %arg12[%c168, %c0_176] : memref<196x256xf32, #tpu.memory_space<vmem>>, vector<4x256xf32>
    tpu.vector_store %arg12[%c168, %c0_176], %206 {strides = array<i32>} : memref<196x256xf32, #tpu.memory_space<vmem>>, vector<4x256xf32>,
    %c0_177 = arith.constant 0 : index
    %c174 = arith.constant 174 : index
    %208 = vector.load %arg10[%c0_177, %c174] : memref<4x512xf32, #tpu.memory_space<vmem>>, vector<4x256xf32>
    %c1_178 = arith.constant 1 : index
    %c0_179 = arith.constant 0 : index
    %209 = vector.load %arg2[%c1_178, %c0_179] : memref<7x256xf32, #tpu.memory_space<vmem>>, vector<1x256xf32>
    %210 = vector.broadcast %209 : vector<1x256xf32> to vector<4x256xf32>
    %211 = arith.mulf %208, %210 : vector<4x256xf32>
    %c172 = arith.constant 172 : index
    %c0_180 = arith.constant 0 : index
    %212 = vector.load %arg12[%c172, %c0_180] : memref<196x256xf32, #tpu.memory_space<vmem>>, vector<4x256xf32>
    tpu.vector_store %arg12[%c172, %c0_180], %211 {strides = array<i32>} : memref<196x256xf32, #tpu.memory_space<vmem>>, vector<4x256xf32>,
    %c0_181 = arith.constant 0 : index
    %c175 = arith.constant 175 : index
    %213 = vector.load %arg10[%c0_181, %c175] : memref<4x512xf32, #tpu.memory_space<vmem>>, vector<4x256xf32>
    %c2_182 = arith.constant 2 : index
    %c0_183 = arith.constant 0 : index
    %214 = vector.load %arg2[%c2_182, %c0_183] : memref<7x256xf32, #tpu.memory_space<vmem>>, vector<1x256xf32>
    %215 = vector.broadcast %214 : vector<1x256xf32> to vector<4x256xf32>
    %216 = arith.mulf %213, %215 : vector<4x256xf32>
    %c176 = arith.constant 176 : index
    %c0_184 = arith.constant 0 : index
    %217 = vector.load %arg12[%c176, %c0_184] : memref<196x256xf32, #tpu.memory_space<vmem>>, vector<4x256xf32>
    tpu.vector_store %arg12[%c176, %c0_184], %216 {strides = array<i32>} : memref<196x256xf32, #tpu.memory_space<vmem>>, vector<4x256xf32>,
    %c0_185 = arith.constant 0 : index
    %c176_186 = arith.constant 176 : index
    %218 = vector.load %arg10[%c0_185, %c176_186] : memref<4x512xf32, #tpu.memory_space<vmem>>, vector<4x256xf32>
    %c180 = arith.constant 180 : index
    %c0_187 = arith.constant 0 : index
    %219 = vector.load %arg12[%c180, %c0_187] : memref<196x256xf32, #tpu.memory_space<vmem>>, vector<4x256xf32>
    tpu.vector_store %arg12[%c180, %c0_187], %218 {strides = array<i32>} : memref<196x256xf32, #tpu.memory_space<vmem>>, vector<4x256xf32>,
    %c0_188 = arith.constant 0 : index
    %c177 = arith.constant 177 : index
    %220 = vector.load %arg10[%c0_188, %c177] : memref<4x512xf32, #tpu.memory_space<vmem>>, vector<4x256xf32>
    %c4_189 = arith.constant 4 : index
    %c0_190 = arith.constant 0 : index
    %221 = vector.load %arg2[%c4_189, %c0_190] : memref<7x256xf32, #tpu.memory_space<vmem>>, vector<1x256xf32>
    %222 = vector.broadcast %221 : vector<1x256xf32> to vector<4x256xf32>
    %223 = arith.mulf %220, %222 : vector<4x256xf32>
    %c184 = arith.constant 184 : index
    %c0_191 = arith.constant 0 : index
    %224 = vector.load %arg12[%c184, %c0_191] : memref<196x256xf32, #tpu.memory_space<vmem>>, vector<4x256xf32>
    tpu.vector_store %arg12[%c184, %c0_191], %223 {strides = array<i32>} : memref<196x256xf32, #tpu.memory_space<vmem>>, vector<4x256xf32>,
    %c0_192 = arith.constant 0 : index
    %c178 = arith.constant 178 : index
    %225 = vector.load %arg10[%c0_192, %c178] : memref<4x512xf32, #tpu.memory_space<vmem>>, vector<4x256xf32>
    %c5_193 = arith.constant 5 : index
    %c0_194 = arith.constant 0 : index
    %226 = vector.load %arg2[%c5_193, %c0_194] : memref<7x256xf32, #tpu.memory_space<vmem>>, vector<1x256xf32>
    %227 = vector.broadcast %226 : vector<1x256xf32> to vector<4x256xf32>
    %228 = arith.mulf %225, %227 : vector<4x256xf32>
    %c188 = arith.constant 188 : index
    %c0_195 = arith.constant 0 : index
    %229 = vector.load %arg12[%c188, %c0_195] : memref<196x256xf32, #tpu.memory_space<vmem>>, vector<4x256xf32>
    tpu.vector_store %arg12[%c188, %c0_195], %228 {strides = array<i32>} : memref<196x256xf32, #tpu.memory_space<vmem>>, vector<4x256xf32>,
    %c0_196 = arith.constant 0 : index
    %c179 = arith.constant 179 : index
    %230 = vector.load %arg10[%c0_196, %c179] : memref<4x512xf32, #tpu.memory_space<vmem>>, vector<4x256xf32>
    %c6_197 = arith.constant 6 : index
    %c0_198 = arith.constant 0 : index
    %231 = vector.load %arg2[%c6_197, %c0_198] : memref<7x256xf32, #tpu.memory_space<vmem>>, vector<1x256xf32>
    %232 = vector.broadcast %231 : vector<1x256xf32> to vector<4x256xf32>
    %233 = arith.mulf %230, %232 : vector<4x256xf32>
    %c192 = arith.constant 192 : index
    %c0_199 = arith.constant 0 : index
    %234 = vector.load %arg12[%c192, %c0_199] : memref<196x256xf32, #tpu.memory_space<vmem>>, vector<4x256xf32>
    tpu.vector_store %arg12[%c192, %c0_199], %233 {strides = array<i32>} : memref<196x256xf32, #tpu.memory_space<vmem>>, vector<4x256xf32>,
    %c0_200 = arith.constant 0 : index
    %c0_201 = arith.constant 0 : index
    %235 = vector.load %arg3[%c0_200, %c0_201] : memref<6x196xf32, #tpu.memory_space<vmem>>, vector<6x196xf32>
    %c0_202 = arith.constant 0 : index
    %c0_203 = arith.constant 0 : index
    %236 = vector.load %arg12[%c0_202, %c0_203] : memref<196x256xf32, #tpu.memory_space<vmem>>, vector<196x256xf32>
    %cst_204 = arith.constant dense<0.000000e+00> : vector<6x256xf32>
    %237 = tpu.matmul %235, %236, %cst_204 {dimension_numbers = #tpu.dot_dimension_numbers<[1], [0], [0], [1], [0, 0, 1, 1], [], []>} : vector<6x196xf32>, vector<196x256xf32>, vector<6x256xf32> -> vector<6x256xf32>
    %c0_205 = arith.constant 0 : index
    %c0_206 = arith.constant 0 : index
    %238 = vector.load %arg4[%c0_205, %c0_206] : memref<6x1xf32, #tpu.memory_space<vmem>>, vector<6x1xf32>
    %239 = vector.broadcast %238 : vector<6x1xf32> to vector<6x256xf32>
    %240 = arith.mulf %237, %239 : vector<6x256xf32>
    %c0_207 = arith.constant 0 : index
    %c0_208 = arith.constant 0 : index
    %241 = vector.load %arg5[%c0_207, %c0_208] : memref<6x1xf32, #tpu.memory_space<vmem>>, vector<6x1xf32>
    %242 = vector.broadcast %241 : vector<6x1xf32> to vector<6x256xf32>
    %243 = arith.addf %240, %242 : vector<6x256xf32>
    %cst_209 = arith.constant 0.000000e+00 : f32
    %244 = vector.broadcast %cst_209 : f32 to vector<6x256xf32>
    %245 = arith.maximumf %243, %244 : vector<6x256xf32>
    %c0_210 = arith.constant 0 : index
    %c128_211 = arith.constant 128 : index
    %246 = vector.load %arg11[%c0_210, %c128_211] : memref<6x512xf32, #tpu.memory_space<vmem>>, vector<6x256xf32>
    tpu.vector_store %arg11[%c0_210, %c128_211], %245 {strides = array<i32>} : memref<6x512xf32, #tpu.memory_space<vmem>>, vector<6x256xf32>,
    %c0_212 = arith.constant 0 : index
    %c77_213 = arith.constant 77 : index
    %247 = vector.load %arg11[%c0_212, %c77_213] : memref<6x512xf32, #tpu.memory_space<vmem>>, vector<6x256xf32>
    %c0_214 = arith.constant 0 : index
    %c0_215 = arith.constant 0 : index
    %248 = vector.load %arg2[%c0_214, %c0_215] : memref<7x256xf32, #tpu.memory_space<vmem>>, vector<1x256xf32>
    %249 = vector.broadcast %248 : vector<1x256xf32> to vector<6x256xf32>
    %250 = arith.mulf %247, %249 : vector<6x256xf32>
    %c0_216 = arith.constant 0 : index
    %c0_217 = arith.constant 0 : index
    %251 = vector.load %arg13[%c0_216, %c0_217] : memref<294x256xf32, #tpu.memory_space<vmem>>, vector<6x256xf32>
    tpu.vector_store %arg13[%c0_216, %c0_217], %250 {strides = array<i32>} : memref<294x256xf32, #tpu.memory_space<vmem>>, vector<6x256xf32>,
    %c0_218 = arith.constant 0 : index
    %c78_219 = arith.constant 78 : index
    %252 = vector.load %arg11[%c0_218, %c78_219] : memref<6x512xf32, #tpu.memory_space<vmem>>, vector<6x256xf32>
    %c1_220 = arith.constant 1 : index
    %c0_221 = arith.constant 0 : index
    %253 = vector.load %arg2[%c1_220, %c0_221] : memref<7x256xf32, #tpu.memory_space<vmem>>, vector<1x256xf32>
    %254 = vector.broadcast %253 : vector<1x256xf32> to vector<6x256xf32>
    %255 = arith.mulf %252, %254 : vector<6x256xf32>
    %c6_222 = arith.constant 6 : index
    %c0_223 = arith.constant 0 : index
    %256 = vector.load %arg13[%c6_222, %c0_223] : memref<294x256xf32, #tpu.memory_space<vmem>>, vector<6x256xf32>
    tpu.vector_store %arg13[%c6_222, %c0_223], %255 {strides = array<i32>} : memref<294x256xf32, #tpu.memory_space<vmem>>, vector<6x256xf32>,
    %c0_224 = arith.constant 0 : index
    %c79_225 = arith.constant 79 : index
    %257 = vector.load %arg11[%c0_224, %c79_225] : memref<6x512xf32, #tpu.memory_space<vmem>>, vector<6x256xf32>
    %c2_226 = arith.constant 2 : index
    %c0_227 = arith.constant 0 : index
    %258 = vector.load %arg2[%c2_226, %c0_227] : memref<7x256xf32, #tpu.memory_space<vmem>>, vector<1x256xf32>
    %259 = vector.broadcast %258 : vector<1x256xf32> to vector<6x256xf32>
    %260 = arith.mulf %257, %259 : vector<6x256xf32>
    %c12_228 = arith.constant 12 : index
    %c0_229 = arith.constant 0 : index
    %261 = vector.load %arg13[%c12_228, %c0_229] : memref<294x256xf32, #tpu.memory_space<vmem>>, vector<6x256xf32>
    tpu.vector_store %arg13[%c12_228, %c0_229], %260 {strides = array<i32>} : memref<294x256xf32, #tpu.memory_space<vmem>>, vector<6x256xf32>,
    %c0_230 = arith.constant 0 : index
    %c80_231 = arith.constant 80 : index
    %262 = vector.load %arg11[%c0_230, %c80_231] : memref<6x512xf32, #tpu.memory_space<vmem>>, vector<6x256xf32>
    %c18 = arith.constant 18 : index
    %c0_232 = arith.constant 0 : index
    %263 = vector.load %arg13[%c18, %c0_232] : memref<294x256xf32, #tpu.memory_space<vmem>>, vector<6x256xf32>
    tpu.vector_store %arg13[%c18, %c0_232], %262 {strides = array<i32>} : memref<294x256xf32, #tpu.memory_space<vmem>>, vector<6x256xf32>,
    %c0_233 = arith.constant 0 : index
    %c81_234 = arith.constant 81 : index
    %264 = vector.load %arg11[%c0_233, %c81_234] : memref<6x512xf32, #tpu.memory_space<vmem>>, vector<6x256xf32>
    %c4_235 = arith.constant 4 : index
    %c0_236 = arith.constant 0 : index
    %265 = vector.load %arg2[%c4_235, %c0_236] : memref<7x256xf32, #tpu.memory_space<vmem>>, vector<1x256xf32>
    %266 = vector.broadcast %265 : vector<1x256xf32> to vector<6x256xf32>
    %267 = arith.mulf %264, %266 : vector<6x256xf32>
    %c24_237 = arith.constant 24 : index
    %c0_238 = arith.constant 0 : index
    %268 = vector.load %arg13[%c24_237, %c0_238] : memref<294x256xf32, #tpu.memory_space<vmem>>, vector<6x256xf32>
    tpu.vector_store %arg13[%c24_237, %c0_238], %267 {strides = array<i32>} : memref<294x256xf32, #tpu.memory_space<vmem>>, vector<6x256xf32>,
    %c0_239 = arith.constant 0 : index
    %c82_240 = arith.constant 82 : index
    %269 = vector.load %arg11[%c0_239, %c82_240] : memref<6x512xf32, #tpu.memory_space<vmem>>, vector<6x256xf32>
    %c5_241 = arith.constant 5 : index
    %c0_242 = arith.constant 0 : index
    %270 = vector.load %arg2[%c5_241, %c0_242] : memref<7x256xf32, #tpu.memory_space<vmem>>, vector<1x256xf32>
    %271 = vector.broadcast %270 : vector<1x256xf32> to vector<6x256xf32>
    %272 = arith.mulf %269, %271 : vector<6x256xf32>
    %c30 = arith.constant 30 : index
    %c0_243 = arith.constant 0 : index
    %273 = vector.load %arg13[%c30, %c0_243] : memref<294x256xf32, #tpu.memory_space<vmem>>, vector<6x256xf32>
    tpu.vector_store %arg13[%c30, %c0_243], %272 {strides = array<i32>} : memref<294x256xf32, #tpu.memory_space<vmem>>, vector<6x256xf32>,
    %c0_244 = arith.constant 0 : index
    %c83_245 = arith.constant 83 : index
    %274 = vector.load %arg11[%c0_244, %c83_245] : memref<6x512xf32, #tpu.memory_space<vmem>>, vector<6x256xf32>
    %c6_246 = arith.constant 6 : index
    %c0_247 = arith.constant 0 : index
    %275 = vector.load %arg2[%c6_246, %c0_247] : memref<7x256xf32, #tpu.memory_space<vmem>>, vector<1x256xf32>
    %276 = vector.broadcast %275 : vector<1x256xf32> to vector<6x256xf32>
    %277 = arith.mulf %274, %276 : vector<6x256xf32>
    %c36_248 = arith.constant 36 : index
    %c0_249 = arith.constant 0 : index
    %278 = vector.load %arg13[%c36_248, %c0_249] : memref<294x256xf32, #tpu.memory_space<vmem>>, vector<6x256xf32>
    tpu.vector_store %arg13[%c36_248, %c0_249], %277 {strides = array<i32>} : memref<294x256xf32, #tpu.memory_space<vmem>>, vector<6x256xf32>,
    %c0_250 = arith.constant 0 : index
    %c93_251 = arith.constant 93 : index
    %279 = vector.load %arg11[%c0_250, %c93_251] : memref<6x512xf32, #tpu.memory_space<vmem>>, vector<6x256xf32>
    %c0_252 = arith.constant 0 : index
    %c0_253 = arith.constant 0 : index
    %280 = vector.load %arg2[%c0_252, %c0_253] : memref<7x256xf32, #tpu.memory_space<vmem>>, vector<1x256xf32>
    %281 = vector.broadcast %280 : vector<1x256xf32> to vector<6x256xf32>
    %282 = arith.mulf %279, %281 : vector<6x256xf32>
    %c42 = arith.constant 42 : index
    %c0_254 = arith.constant 0 : index
    %283 = vector.load %arg13[%c42, %c0_254] : memref<294x256xf32, #tpu.memory_space<vmem>>, vector<6x256xf32>
    tpu.vector_store %arg13[%c42, %c0_254], %282 {strides = array<i32>} : memref<294x256xf32, #tpu.memory_space<vmem>>, vector<6x256xf32>,
    %c0_255 = arith.constant 0 : index
    %c94_256 = arith.constant 94 : index
    %284 = vector.load %arg11[%c0_255, %c94_256] : memref<6x512xf32, #tpu.memory_space<vmem>>, vector<6x256xf32>
    %c1_257 = arith.constant 1 : index
    %c0_258 = arith.constant 0 : index
    %285 = vector.load %arg2[%c1_257, %c0_258] : memref<7x256xf32, #tpu.memory_space<vmem>>, vector<1x256xf32>
    %286 = vector.broadcast %285 : vector<1x256xf32> to vector<6x256xf32>
    %287 = arith.mulf %284, %286 : vector<6x256xf32>
    %c48_259 = arith.constant 48 : index
    %c0_260 = arith.constant 0 : index
    %288 = vector.load %arg13[%c48_259, %c0_260] : memref<294x256xf32, #tpu.memory_space<vmem>>, vector<6x256xf32>
    tpu.vector_store %arg13[%c48_259, %c0_260], %287 {strides = array<i32>} : memref<294x256xf32, #tpu.memory_space<vmem>>, vector<6x256xf32>,
    %c0_261 = arith.constant 0 : index
    %c95_262 = arith.constant 95 : index
    %289 = vector.load %arg11[%c0_261, %c95_262] : memref<6x512xf32, #tpu.memory_space<vmem>>, vector<6x256xf32>
    %c2_263 = arith.constant 2 : index
    %c0_264 = arith.constant 0 : index
    %290 = vector.load %arg2[%c2_263, %c0_264] : memref<7x256xf32, #tpu.memory_space<vmem>>, vector<1x256xf32>
    %291 = vector.broadcast %290 : vector<1x256xf32> to vector<6x256xf32>
    %292 = arith.mulf %289, %291 : vector<6x256xf32>
    %c54 = arith.constant 54 : index
    %c0_265 = arith.constant 0 : index
    %293 = vector.load %arg13[%c54, %c0_265] : memref<294x256xf32, #tpu.memory_space<vmem>>, vector<6x256xf32>
    tpu.vector_store %arg13[%c54, %c0_265], %292 {strides = array<i32>} : memref<294x256xf32, #tpu.memory_space<vmem>>, vector<6x256xf32>,
    %c0_266 = arith.constant 0 : index
    %c96_267 = arith.constant 96 : index
    %294 = vector.load %arg11[%c0_266, %c96_267] : memref<6x512xf32, #tpu.memory_space<vmem>>, vector<6x256xf32>
    %c60_268 = arith.constant 60 : index
    %c0_269 = arith.constant 0 : index
    %295 = vector.load %arg13[%c60_268, %c0_269] : memref<294x256xf32, #tpu.memory_space<vmem>>, vector<6x256xf32>
    tpu.vector_store %arg13[%c60_268, %c0_269], %294 {strides = array<i32>} : memref<294x256xf32, #tpu.memory_space<vmem>>, vector<6x256xf32>,
    %c0_270 = arith.constant 0 : index
    %c97_271 = arith.constant 97 : index
    %296 = vector.load %arg11[%c0_270, %c97_271] : memref<6x512xf32, #tpu.memory_space<vmem>>, vector<6x256xf32>
    %c4_272 = arith.constant 4 : index
    %c0_273 = arith.constant 0 : index
    %297 = vector.load %arg2[%c4_272, %c0_273] : memref<7x256xf32, #tpu.memory_space<vmem>>, vector<1x256xf32>
    %298 = vector.broadcast %297 : vector<1x256xf32> to vector<6x256xf32>
    %299 = arith.mulf %296, %298 : vector<6x256xf32>
    %c66 = arith.constant 66 : index
    %c0_274 = arith.constant 0 : index
    %300 = vector.load %arg13[%c66, %c0_274] : memref<294x256xf32, #tpu.memory_space<vmem>>, vector<6x256xf32>
    tpu.vector_store %arg13[%c66, %c0_274], %299 {strides = array<i32>} : memref<294x256xf32, #tpu.memory_space<vmem>>, vector<6x256xf32>,
    %c0_275 = arith.constant 0 : index
    %c98_276 = arith.constant 98 : index
    %301 = vector.load %arg11[%c0_275, %c98_276] : memref<6x512xf32, #tpu.memory_space<vmem>>, vector<6x256xf32>
    %c5_277 = arith.constant 5 : index
    %c0_278 = arith.constant 0 : index
    %302 = vector.load %arg2[%c5_277, %c0_278] : memref<7x256xf32, #tpu.memory_space<vmem>>, vector<1x256xf32>
    %303 = vector.broadcast %302 : vector<1x256xf32> to vector<6x256xf32>
    %304 = arith.mulf %301, %303 : vector<6x256xf32>
    %c72_279 = arith.constant 72 : index
    %c0_280 = arith.constant 0 : index
    %305 = vector.load %arg13[%c72_279, %c0_280] : memref<294x256xf32, #tpu.memory_space<vmem>>, vector<6x256xf32>
    tpu.vector_store %arg13[%c72_279, %c0_280], %304 {strides = array<i32>} : memref<294x256xf32, #tpu.memory_space<vmem>>, vector<6x256xf32>,
    %c0_281 = arith.constant 0 : index
    %c99_282 = arith.constant 99 : index
    %306 = vector.load %arg11[%c0_281, %c99_282] : memref<6x512xf32, #tpu.memory_space<vmem>>, vector<6x256xf32>
    %c6_283 = arith.constant 6 : index
    %c0_284 = arith.constant 0 : index
    %307 = vector.load %arg2[%c6_283, %c0_284] : memref<7x256xf32, #tpu.memory_space<vmem>>, vector<1x256xf32>
    %308 = vector.broadcast %307 : vector<1x256xf32> to vector<6x256xf32>
    %309 = arith.mulf %306, %308 : vector<6x256xf32>
    %c78_285 = arith.constant 78 : index
    %c0_286 = arith.constant 0 : index
    %310 = vector.load %arg13[%c78_285, %c0_286] : memref<294x256xf32, #tpu.memory_space<vmem>>, vector<6x256xf32>
    tpu.vector_store %arg13[%c78_285, %c0_286], %309 {strides = array<i32>} : memref<294x256xf32, #tpu.memory_space<vmem>>, vector<6x256xf32>,
    %c0_287 = arith.constant 0 : index
    %c109_288 = arith.constant 109 : index
    %311 = vector.load %arg11[%c0_287, %c109_288] : memref<6x512xf32, #tpu.memory_space<vmem>>, vector<6x256xf32>
    %c0_289 = arith.constant 0 : index
    %c0_290 = arith.constant 0 : index
    %312 = vector.load %arg2[%c0_289, %c0_290] : memref<7x256xf32, #tpu.memory_space<vmem>>, vector<1x256xf32>
    %313 = vector.broadcast %312 : vector<1x256xf32> to vector<6x256xf32>
    %314 = arith.mulf %311, %313 : vector<6x256xf32>
    %c84_291 = arith.constant 84 : index
    %c0_292 = arith.constant 0 : index
    %315 = vector.load %arg13[%c84_291, %c0_292] : memref<294x256xf32, #tpu.memory_space<vmem>>, vector<6x256xf32>
    tpu.vector_store %arg13[%c84_291, %c0_292], %314 {strides = array<i32>} : memref<294x256xf32, #tpu.memory_space<vmem>>, vector<6x256xf32>,
    %c0_293 = arith.constant 0 : index
    %c110_294 = arith.constant 110 : index
    %316 = vector.load %arg11[%c0_293, %c110_294] : memref<6x512xf32, #tpu.memory_space<vmem>>, vector<6x256xf32>
    %c1_295 = arith.constant 1 : index
    %c0_296 = arith.constant 0 : index
    %317 = vector.load %arg2[%c1_295, %c0_296] : memref<7x256xf32, #tpu.memory_space<vmem>>, vector<1x256xf32>
    %318 = vector.broadcast %317 : vector<1x256xf32> to vector<6x256xf32>
    %319 = arith.mulf %316, %318 : vector<6x256xf32>
    %c90 = arith.constant 90 : index
    %c0_297 = arith.constant 0 : index
    %320 = vector.load %arg13[%c90, %c0_297] : memref<294x256xf32, #tpu.memory_space<vmem>>, vector<6x256xf32>
    tpu.vector_store %arg13[%c90, %c0_297], %319 {strides = array<i32>} : memref<294x256xf32, #tpu.memory_space<vmem>>, vector<6x256xf32>,
    %c0_298 = arith.constant 0 : index
    %c111_299 = arith.constant 111 : index
    %321 = vector.load %arg11[%c0_298, %c111_299] : memref<6x512xf32, #tpu.memory_space<vmem>>, vector<6x256xf32>
    %c2_300 = arith.constant 2 : index
    %c0_301 = arith.constant 0 : index
    %322 = vector.load %arg2[%c2_300, %c0_301] : memref<7x256xf32, #tpu.memory_space<vmem>>, vector<1x256xf32>
    %323 = vector.broadcast %322 : vector<1x256xf32> to vector<6x256xf32>
    %324 = arith.mulf %321, %323 : vector<6x256xf32>
    %c96_302 = arith.constant 96 : index
    %c0_303 = arith.constant 0 : index
    %325 = vector.load %arg13[%c96_302, %c0_303] : memref<294x256xf32, #tpu.memory_space<vmem>>, vector<6x256xf32>
    tpu.vector_store %arg13[%c96_302, %c0_303], %324 {strides = array<i32>} : memref<294x256xf32, #tpu.memory_space<vmem>>, vector<6x256xf32>,
    %c0_304 = arith.constant 0 : index
    %c112_305 = arith.constant 112 : index
    %326 = vector.load %arg11[%c0_304, %c112_305] : memref<6x512xf32, #tpu.memory_space<vmem>>, vector<6x256xf32>
    %c102 = arith.constant 102 : index
    %c0_306 = arith.constant 0 : index
    %327 = vector.load %arg13[%c102, %c0_306] : memref<294x256xf32, #tpu.memory_space<vmem>>, vector<6x256xf32>
    tpu.vector_store %arg13[%c102, %c0_306], %326 {strides = array<i32>} : memref<294x256xf32, #tpu.memory_space<vmem>>, vector<6x256xf32>,
    %c0_307 = arith.constant 0 : index
    %c113_308 = arith.constant 113 : index
    %328 = vector.load %arg11[%c0_307, %c113_308] : memref<6x512xf32, #tpu.memory_space<vmem>>, vector<6x256xf32>
    %c4_309 = arith.constant 4 : index
    %c0_310 = arith.constant 0 : index
    %329 = vector.load %arg2[%c4_309, %c0_310] : memref<7x256xf32, #tpu.memory_space<vmem>>, vector<1x256xf32>
    %330 = vector.broadcast %329 : vector<1x256xf32> to vector<6x256xf32>
    %331 = arith.mulf %328, %330 : vector<6x256xf32>
    %c108_311 = arith.constant 108 : index
    %c0_312 = arith.constant 0 : index
    %332 = vector.load %arg13[%c108_311, %c0_312] : memref<294x256xf32, #tpu.memory_space<vmem>>, vector<6x256xf32>
    tpu.vector_store %arg13[%c108_311, %c0_312], %331 {strides = array<i32>} : memref<294x256xf32, #tpu.memory_space<vmem>>, vector<6x256xf32>,
    %c0_313 = arith.constant 0 : index
    %c114_314 = arith.constant 114 : index
    %333 = vector.load %arg11[%c0_313, %c114_314] : memref<6x512xf32, #tpu.memory_space<vmem>>, vector<6x256xf32>
    %c5_315 = arith.constant 5 : index
    %c0_316 = arith.constant 0 : index
    %334 = vector.load %arg2[%c5_315, %c0_316] : memref<7x256xf32, #tpu.memory_space<vmem>>, vector<1x256xf32>
    %335 = vector.broadcast %334 : vector<1x256xf32> to vector<6x256xf32>
    %336 = arith.mulf %333, %335 : vector<6x256xf32>
    %c114_317 = arith.constant 114 : index
    %c0_318 = arith.constant 0 : index
    %337 = vector.load %arg13[%c114_317, %c0_318] : memref<294x256xf32, #tpu.memory_space<vmem>>, vector<6x256xf32>
    tpu.vector_store %arg13[%c114_317, %c0_318], %336 {strides = array<i32>} : memref<294x256xf32, #tpu.memory_space<vmem>>, vector<6x256xf32>,
    %c0_319 = arith.constant 0 : index
    %c115_320 = arith.constant 115 : index
    %338 = vector.load %arg11[%c0_319, %c115_320] : memref<6x512xf32, #tpu.memory_space<vmem>>, vector<6x256xf32>
    %c6_321 = arith.constant 6 : index
    %c0_322 = arith.constant 0 : index
    %339 = vector.load %arg2[%c6_321, %c0_322] : memref<7x256xf32, #tpu.memory_space<vmem>>, vector<1x256xf32>
    %340 = vector.broadcast %339 : vector<1x256xf32> to vector<6x256xf32>
    %341 = arith.mulf %338, %340 : vector<6x256xf32>
    %c120_323 = arith.constant 120 : index
    %c0_324 = arith.constant 0 : index
    %342 = vector.load %arg13[%c120_323, %c0_324] : memref<294x256xf32, #tpu.memory_space<vmem>>, vector<6x256xf32>
    tpu.vector_store %arg13[%c120_323, %c0_324], %341 {strides = array<i32>} : memref<294x256xf32, #tpu.memory_space<vmem>>, vector<6x256xf32>,
    %c0_325 = arith.constant 0 : index
    %c125_326 = arith.constant 125 : index
    %343 = vector.load %arg11[%c0_325, %c125_326] : memref<6x512xf32, #tpu.memory_space<vmem>>, vector<6x256xf32>
    %c0_327 = arith.constant 0 : index
    %c0_328 = arith.constant 0 : index
    %344 = vector.load %arg2[%c0_327, %c0_328] : memref<7x256xf32, #tpu.memory_space<vmem>>, vector<1x256xf32>
    %345 = vector.broadcast %344 : vector<1x256xf32> to vector<6x256xf32>
    %346 = arith.mulf %343, %345 : vector<6x256xf32>
    %c126_329 = arith.constant 126 : index
    %c0_330 = arith.constant 0 : index
    %347 = vector.load %arg13[%c126_329, %c0_330] : memref<294x256xf32, #tpu.memory_space<vmem>>, vector<6x256xf32>
    tpu.vector_store %arg13[%c126_329, %c0_330], %346 {strides = array<i32>} : memref<294x256xf32, #tpu.memory_space<vmem>>, vector<6x256xf32>,
    %c0_331 = arith.constant 0 : index
    %c126_332 = arith.constant 126 : index
    %348 = vector.load %arg11[%c0_331, %c126_332] : memref<6x512xf32, #tpu.memory_space<vmem>>, vector<6x256xf32>
    %c1_333 = arith.constant 1 : index
    %c0_334 = arith.constant 0 : index
    %349 = vector.load %arg2[%c1_333, %c0_334] : memref<7x256xf32, #tpu.memory_space<vmem>>, vector<1x256xf32>
    %350 = vector.broadcast %349 : vector<1x256xf32> to vector<6x256xf32>
    %351 = arith.mulf %348, %350 : vector<6x256xf32>
    %c132_335 = arith.constant 132 : index
    %c0_336 = arith.constant 0 : index
    %352 = vector.load %arg13[%c132_335, %c0_336] : memref<294x256xf32, #tpu.memory_space<vmem>>, vector<6x256xf32>
    tpu.vector_store %arg13[%c132_335, %c0_336], %351 {strides = array<i32>} : memref<294x256xf32, #tpu.memory_space<vmem>>, vector<6x256xf32>,
    %c0_337 = arith.constant 0 : index
    %c127_338 = arith.constant 127 : index
    %353 = vector.load %arg11[%c0_337, %c127_338] : memref<6x512xf32, #tpu.memory_space<vmem>>, vector<6x256xf32>
    %c2_339 = arith.constant 2 : index
    %c0_340 = arith.constant 0 : index
    %354 = vector.load %arg2[%c2_339, %c0_340] : memref<7x256xf32, #tpu.memory_space<vmem>>, vector<1x256xf32>
    %355 = vector.broadcast %354 : vector<1x256xf32> to vector<6x256xf32>
    %356 = arith.mulf %353, %355 : vector<6x256xf32>
    %c138 = arith.constant 138 : index
    %c0_341 = arith.constant 0 : index
    %357 = vector.load %arg13[%c138, %c0_341] : memref<294x256xf32, #tpu.memory_space<vmem>>, vector<6x256xf32>
    tpu.vector_store %arg13[%c138, %c0_341], %356 {strides = array<i32>} : memref<294x256xf32, #tpu.memory_space<vmem>>, vector<6x256xf32>,
    %c0_342 = arith.constant 0 : index
    %c128_343 = arith.constant 128 : index
    %358 = vector.load %arg11[%c0_342, %c128_343] : memref<6x512xf32, #tpu.memory_space<vmem>>, vector<6x256xf32>
    %c144_344 = arith.constant 144 : index
    %c0_345 = arith.constant 0 : index
    %359 = vector.load %arg13[%c144_344, %c0_345] : memref<294x256xf32, #tpu.memory_space<vmem>>, vector<6x256xf32>
    tpu.vector_store %arg13[%c144_344, %c0_345], %358 {strides = array<i32>} : memref<294x256xf32, #tpu.memory_space<vmem>>, vector<6x256xf32>,
    %c0_346 = arith.constant 0 : index
    %c129_347 = arith.constant 129 : index
    %360 = vector.load %arg11[%c0_346, %c129_347] : memref<6x512xf32, #tpu.memory_space<vmem>>, vector<6x256xf32>
    %c4_348 = arith.constant 4 : index
    %c0_349 = arith.constant 0 : index
    %361 = vector.load %arg2[%c4_348, %c0_349] : memref<7x256xf32, #tpu.memory_space<vmem>>, vector<1x256xf32>
    %362 = vector.broadcast %361 : vector<1x256xf32> to vector<6x256xf32>
    %363 = arith.mulf %360, %362 : vector<6x256xf32>
    %c150 = arith.constant 150 : index
    %c0_350 = arith.constant 0 : index
    %364 = vector.load %arg13[%c150, %c0_350] : memref<294x256xf32, #tpu.memory_space<vmem>>, vector<6x256xf32>
    tpu.vector_store %arg13[%c150, %c0_350], %363 {strides = array<i32>} : memref<294x256xf32, #tpu.memory_space<vmem>>, vector<6x256xf32>,
    %c0_351 = arith.constant 0 : index
    %c130_352 = arith.constant 130 : index
    %365 = vector.load %arg11[%c0_351, %c130_352] : memref<6x512xf32, #tpu.memory_space<vmem>>, vector<6x256xf32>
    %c5_353 = arith.constant 5 : index
    %c0_354 = arith.constant 0 : index
    %366 = vector.load %arg2[%c5_353, %c0_354] : memref<7x256xf32, #tpu.memory_space<vmem>>, vector<1x256xf32>
    %367 = vector.broadcast %366 : vector<1x256xf32> to vector<6x256xf32>
    %368 = arith.mulf %365, %367 : vector<6x256xf32>
    %c156_355 = arith.constant 156 : index
    %c0_356 = arith.constant 0 : index
    %369 = vector.load %arg13[%c156_355, %c0_356] : memref<294x256xf32, #tpu.memory_space<vmem>>, vector<6x256xf32>
    tpu.vector_store %arg13[%c156_355, %c0_356], %368 {strides = array<i32>} : memref<294x256xf32, #tpu.memory_space<vmem>>, vector<6x256xf32>,
    %c0_357 = arith.constant 0 : index
    %c131_358 = arith.constant 131 : index
    %370 = vector.load %arg11[%c0_357, %c131_358] : memref<6x512xf32, #tpu.memory_space<vmem>>, vector<6x256xf32>
    %c6_359 = arith.constant 6 : index
    %c0_360 = arith.constant 0 : index
    %371 = vector.load %arg2[%c6_359, %c0_360] : memref<7x256xf32, #tpu.memory_space<vmem>>, vector<1x256xf32>
    %372 = vector.broadcast %371 : vector<1x256xf32> to vector<6x256xf32>
    %373 = arith.mulf %370, %372 : vector<6x256xf32>
    %c162_361 = arith.constant 162 : index
    %c0_362 = arith.constant 0 : index
    %374 = vector.load %arg13[%c162_361, %c0_362] : memref<294x256xf32, #tpu.memory_space<vmem>>, vector<6x256xf32>
    tpu.vector_store %arg13[%c162_361, %c0_362], %373 {strides = array<i32>} : memref<294x256xf32, #tpu.memory_space<vmem>>, vector<6x256xf32>,
    %c0_363 = arith.constant 0 : index
    %c141_364 = arith.constant 141 : index
    %375 = vector.load %arg11[%c0_363, %c141_364] : memref<6x512xf32, #tpu.memory_space<vmem>>, vector<6x256xf32>
    %c0_365 = arith.constant 0 : index
    %c0_366 = arith.constant 0 : index
    %376 = vector.load %arg2[%c0_365, %c0_366] : memref<7x256xf32, #tpu.memory_space<vmem>>, vector<1x256xf32>
    %377 = vector.broadcast %376 : vector<1x256xf32> to vector<6x256xf32>
    %378 = arith.mulf %375, %377 : vector<6x256xf32>
    %c168_367 = arith.constant 168 : index
    %c0_368 = arith.constant 0 : index
    %379 = vector.load %arg13[%c168_367, %c0_368] : memref<294x256xf32, #tpu.memory_space<vmem>>, vector<6x256xf32>
    tpu.vector_store %arg13[%c168_367, %c0_368], %378 {strides = array<i32>} : memref<294x256xf32, #tpu.memory_space<vmem>>, vector<6x256xf32>,
    %c0_369 = arith.constant 0 : index
    %c142_370 = arith.constant 142 : index
    %380 = vector.load %arg11[%c0_369, %c142_370] : memref<6x512xf32, #tpu.memory_space<vmem>>, vector<6x256xf32>
    %c1_371 = arith.constant 1 : index
    %c0_372 = arith.constant 0 : index
    %381 = vector.load %arg2[%c1_371, %c0_372] : memref<7x256xf32, #tpu.memory_space<vmem>>, vector<1x256xf32>
    %382 = vector.broadcast %381 : vector<1x256xf32> to vector<6x256xf32>
    %383 = arith.mulf %380, %382 : vector<6x256xf32>
    %c174_373 = arith.constant 174 : index
    %c0_374 = arith.constant 0 : index
    %384 = vector.load %arg13[%c174_373, %c0_374] : memref<294x256xf32, #tpu.memory_space<vmem>>, vector<6x256xf32>
    tpu.vector_store %arg13[%c174_373, %c0_374], %383 {strides = array<i32>} : memref<294x256xf32, #tpu.memory_space<vmem>>, vector<6x256xf32>,
    %c0_375 = arith.constant 0 : index
    %c143_376 = arith.constant 143 : index
    %385 = vector.load %arg11[%c0_375, %c143_376] : memref<6x512xf32, #tpu.memory_space<vmem>>, vector<6x256xf32>
    %c2_377 = arith.constant 2 : index
    %c0_378 = arith.constant 0 : index
    %386 = vector.load %arg2[%c2_377, %c0_378] : memref<7x256xf32, #tpu.memory_space<vmem>>, vector<1x256xf32>
    %387 = vector.broadcast %386 : vector<1x256xf32> to vector<6x256xf32>
    %388 = arith.mulf %385, %387 : vector<6x256xf32>
    %c180_379 = arith.constant 180 : index
    %c0_380 = arith.constant 0 : index
    %389 = vector.load %arg13[%c180_379, %c0_380] : memref<294x256xf32, #tpu.memory_space<vmem>>, vector<6x256xf32>
    tpu.vector_store %arg13[%c180_379, %c0_380], %388 {strides = array<i32>} : memref<294x256xf32, #tpu.memory_space<vmem>>, vector<6x256xf32>,
    %c0_381 = arith.constant 0 : index
    %c144_382 = arith.constant 144 : index
    %390 = vector.load %arg11[%c0_381, %c144_382] : memref<6x512xf32, #tpu.memory_space<vmem>>, vector<6x256xf32>
    %c186 = arith.constant 186 : index
    %c0_383 = arith.constant 0 : index
    %391 = vector.load %arg13[%c186, %c0_383] : memref<294x256xf32, #tpu.memory_space<vmem>>, vector<6x256xf32>
    tpu.vector_store %arg13[%c186, %c0_383], %390 {strides = array<i32>} : memref<294x256xf32, #tpu.memory_space<vmem>>, vector<6x256xf32>,
    %c0_384 = arith.constant 0 : index
    %c145_385 = arith.constant 145 : index
    %392 = vector.load %arg11[%c0_384, %c145_385] : memref<6x512xf32, #tpu.memory_space<vmem>>, vector<6x256xf32>
    %c4_386 = arith.constant 4 : index
    %c0_387 = arith.constant 0 : index
    %393 = vector.load %arg2[%c4_386, %c0_387] : memref<7x256xf32, #tpu.memory_space<vmem>>, vector<1x256xf32>
    %394 = vector.broadcast %393 : vector<1x256xf32> to vector<6x256xf32>
    %395 = arith.mulf %392, %394 : vector<6x256xf32>
    %c192_388 = arith.constant 192 : index
    %c0_389 = arith.constant 0 : index
    %396 = vector.load %arg13[%c192_388, %c0_389] : memref<294x256xf32, #tpu.memory_space<vmem>>, vector<6x256xf32>
    tpu.vector_store %arg13[%c192_388, %c0_389], %395 {strides = array<i32>} : memref<294x256xf32, #tpu.memory_space<vmem>>, vector<6x256xf32>,
    %c0_390 = arith.constant 0 : index
    %c146_391 = arith.constant 146 : index
    %397 = vector.load %arg11[%c0_390, %c146_391] : memref<6x512xf32, #tpu.memory_space<vmem>>, vector<6x256xf32>
    %c5_392 = arith.constant 5 : index
    %c0_393 = arith.constant 0 : index
    %398 = vector.load %arg2[%c5_392, %c0_393] : memref<7x256xf32, #tpu.memory_space<vmem>>, vector<1x256xf32>
    %399 = vector.broadcast %398 : vector<1x256xf32> to vector<6x256xf32>
    %400 = arith.mulf %397, %399 : vector<6x256xf32>
    %c198 = arith.constant 198 : index
    %c0_394 = arith.constant 0 : index
    %401 = vector.load %arg13[%c198, %c0_394] : memref<294x256xf32, #tpu.memory_space<vmem>>, vector<6x256xf32>
    tpu.vector_store %arg13[%c198, %c0_394], %400 {strides = array<i32>} : memref<294x256xf32, #tpu.memory_space<vmem>>, vector<6x256xf32>,
    %c0_395 = arith.constant 0 : index
    %c147_396 = arith.constant 147 : index
    %402 = vector.load %arg11[%c0_395, %c147_396] : memref<6x512xf32, #tpu.memory_space<vmem>>, vector<6x256xf32>
    %c6_397 = arith.constant 6 : index
    %c0_398 = arith.constant 0 : index
    %403 = vector.load %arg2[%c6_397, %c0_398] : memref<7x256xf32, #tpu.memory_space<vmem>>, vector<1x256xf32>
    %404 = vector.broadcast %403 : vector<1x256xf32> to vector<6x256xf32>
    %405 = arith.mulf %402, %404 : vector<6x256xf32>
    %c204 = arith.constant 204 : index
    %c0_399 = arith.constant 0 : index
    %406 = vector.load %arg13[%c204, %c0_399] : memref<294x256xf32, #tpu.memory_space<vmem>>, vector<6x256xf32>
    tpu.vector_store %arg13[%c204, %c0_399], %405 {strides = array<i32>} : memref<294x256xf32, #tpu.memory_space<vmem>>, vector<6x256xf32>,
    %c0_400 = arith.constant 0 : index
    %c157_401 = arith.constant 157 : index
    %407 = vector.load %arg11[%c0_400, %c157_401] : memref<6x512xf32, #tpu.memory_space<vmem>>, vector<6x256xf32>
    %c0_402 = arith.constant 0 : index
    %c0_403 = arith.constant 0 : index
    %408 = vector.load %arg2[%c0_402, %c0_403] : memref<7x256xf32, #tpu.memory_space<vmem>>, vector<1x256xf32>
    %409 = vector.broadcast %408 : vector<1x256xf32> to vector<6x256xf32>
    %410 = arith.mulf %407, %409 : vector<6x256xf32>
    %c210 = arith.constant 210 : index
    %c0_404 = arith.constant 0 : index
    %411 = vector.load %arg13[%c210, %c0_404] : memref<294x256xf32, #tpu.memory_space<vmem>>, vector<6x256xf32>
    tpu.vector_store %arg13[%c210, %c0_404], %410 {strides = array<i32>} : memref<294x256xf32, #tpu.memory_space<vmem>>, vector<6x256xf32>,
    %c0_405 = arith.constant 0 : index
    %c158_406 = arith.constant 158 : index
    %412 = vector.load %arg11[%c0_405, %c158_406] : memref<6x512xf32, #tpu.memory_space<vmem>>, vector<6x256xf32>
    %c1_407 = arith.constant 1 : index
    %c0_408 = arith.constant 0 : index
    %413 = vector.load %arg2[%c1_407, %c0_408] : memref<7x256xf32, #tpu.memory_space<vmem>>, vector<1x256xf32>
    %414 = vector.broadcast %413 : vector<1x256xf32> to vector<6x256xf32>
    %415 = arith.mulf %412, %414 : vector<6x256xf32>
    %c216 = arith.constant 216 : index
    %c0_409 = arith.constant 0 : index
    %416 = vector.load %arg13[%c216, %c0_409] : memref<294x256xf32, #tpu.memory_space<vmem>>, vector<6x256xf32>
    tpu.vector_store %arg13[%c216, %c0_409], %415 {strides = array<i32>} : memref<294x256xf32, #tpu.memory_space<vmem>>, vector<6x256xf32>,
    %c0_410 = arith.constant 0 : index
    %c159_411 = arith.constant 159 : index
    %417 = vector.load %arg11[%c0_410, %c159_411] : memref<6x512xf32, #tpu.memory_space<vmem>>, vector<6x256xf32>
    %c2_412 = arith.constant 2 : index
    %c0_413 = arith.constant 0 : index
    %418 = vector.load %arg2[%c2_412, %c0_413] : memref<7x256xf32, #tpu.memory_space<vmem>>, vector<1x256xf32>
    %419 = vector.broadcast %418 : vector<1x256xf32> to vector<6x256xf32>
    %420 = arith.mulf %417, %419 : vector<6x256xf32>
    %c222 = arith.constant 222 : index
    %c0_414 = arith.constant 0 : index
    %421 = vector.load %arg13[%c222, %c0_414] : memref<294x256xf32, #tpu.memory_space<vmem>>, vector<6x256xf32>
    tpu.vector_store %arg13[%c222, %c0_414], %420 {strides = array<i32>} : memref<294x256xf32, #tpu.memory_space<vmem>>, vector<6x256xf32>,
    %c0_415 = arith.constant 0 : index
    %c160_416 = arith.constant 160 : index
    %422 = vector.load %arg11[%c0_415, %c160_416] : memref<6x512xf32, #tpu.memory_space<vmem>>, vector<6x256xf32>
    %c228 = arith.constant 228 : index
    %c0_417 = arith.constant 0 : index
    %423 = vector.load %arg13[%c228, %c0_417] : memref<294x256xf32, #tpu.memory_space<vmem>>, vector<6x256xf32>
    tpu.vector_store %arg13[%c228, %c0_417], %422 {strides = array<i32>} : memref<294x256xf32, #tpu.memory_space<vmem>>, vector<6x256xf32>,
    %c0_418 = arith.constant 0 : index
    %c161_419 = arith.constant 161 : index
    %424 = vector.load %arg11[%c0_418, %c161_419] : memref<6x512xf32, #tpu.memory_space<vmem>>, vector<6x256xf32>
    %c4_420 = arith.constant 4 : index
    %c0_421 = arith.constant 0 : index
    %425 = vector.load %arg2[%c4_420, %c0_421] : memref<7x256xf32, #tpu.memory_space<vmem>>, vector<1x256xf32>
    %426 = vector.broadcast %425 : vector<1x256xf32> to vector<6x256xf32>
    %427 = arith.mulf %424, %426 : vector<6x256xf32>
    %c234 = arith.constant 234 : index
    %c0_422 = arith.constant 0 : index
    %428 = vector.load %arg13[%c234, %c0_422] : memref<294x256xf32, #tpu.memory_space<vmem>>, vector<6x256xf32>
    tpu.vector_store %arg13[%c234, %c0_422], %427 {strides = array<i32>} : memref<294x256xf32, #tpu.memory_space<vmem>>, vector<6x256xf32>,
    %c0_423 = arith.constant 0 : index
    %c162_424 = arith.constant 162 : index
    %429 = vector.load %arg11[%c0_423, %c162_424] : memref<6x512xf32, #tpu.memory_space<vmem>>, vector<6x256xf32>
    %c5_425 = arith.constant 5 : index
    %c0_426 = arith.constant 0 : index
    %430 = vector.load %arg2[%c5_425, %c0_426] : memref<7x256xf32, #tpu.memory_space<vmem>>, vector<1x256xf32>
    %431 = vector.broadcast %430 : vector<1x256xf32> to vector<6x256xf32>
    %432 = arith.mulf %429, %431 : vector<6x256xf32>
    %c240 = arith.constant 240 : index
    %c0_427 = arith.constant 0 : index
    %433 = vector.load %arg13[%c240, %c0_427] : memref<294x256xf32, #tpu.memory_space<vmem>>, vector<6x256xf32>
    tpu.vector_store %arg13[%c240, %c0_427], %432 {strides = array<i32>} : memref<294x256xf32, #tpu.memory_space<vmem>>, vector<6x256xf32>,
    %c0_428 = arith.constant 0 : index
    %c163_429 = arith.constant 163 : index
    %434 = vector.load %arg11[%c0_428, %c163_429] : memref<6x512xf32, #tpu.memory_space<vmem>>, vector<6x256xf32>
    %c6_430 = arith.constant 6 : index
    %c0_431 = arith.constant 0 : index
    %435 = vector.load %arg2[%c6_430, %c0_431] : memref<7x256xf32, #tpu.memory_space<vmem>>, vector<1x256xf32>
    %436 = vector.broadcast %435 : vector<1x256xf32> to vector<6x256xf32>
    %437 = arith.mulf %434, %436 : vector<6x256xf32>
    %c246 = arith.constant 246 : index
    %c0_432 = arith.constant 0 : index
    %438 = vector.load %arg13[%c246, %c0_432] : memref<294x256xf32, #tpu.memory_space<vmem>>, vector<6x256xf32>
    tpu.vector_store %arg13[%c246, %c0_432], %437 {strides = array<i32>} : memref<294x256xf32, #tpu.memory_space<vmem>>, vector<6x256xf32>,
    %c0_433 = arith.constant 0 : index
    %c173_434 = arith.constant 173 : index
    %439 = vector.load %arg11[%c0_433, %c173_434] : memref<6x512xf32, #tpu.memory_space<vmem>>, vector<6x256xf32>
    %c0_435 = arith.constant 0 : index
    %c0_436 = arith.constant 0 : index
    %440 = vector.load %arg2[%c0_435, %c0_436] : memref<7x256xf32, #tpu.memory_space<vmem>>, vector<1x256xf32>
    %441 = vector.broadcast %440 : vector<1x256xf32> to vector<6x256xf32>
    %442 = arith.mulf %439, %441 : vector<6x256xf32>
    %c252 = arith.constant 252 : index
    %c0_437 = arith.constant 0 : index
    %443 = vector.load %arg13[%c252, %c0_437] : memref<294x256xf32, #tpu.memory_space<vmem>>, vector<6x256xf32>
    tpu.vector_store %arg13[%c252, %c0_437], %442 {strides = array<i32>} : memref<294x256xf32, #tpu.memory_space<vmem>>, vector<6x256xf32>,
    %c0_438 = arith.constant 0 : index
    %c174_439 = arith.constant 174 : index
    %444 = vector.load %arg11[%c0_438, %c174_439] : memref<6x512xf32, #tpu.memory_space<vmem>>, vector<6x256xf32>
    %c1_440 = arith.constant 1 : index
    %c0_441 = arith.constant 0 : index
    %445 = vector.load %arg2[%c1_440, %c0_441] : memref<7x256xf32, #tpu.memory_space<vmem>>, vector<1x256xf32>
    %446 = vector.broadcast %445 : vector<1x256xf32> to vector<6x256xf32>
    %447 = arith.mulf %444, %446 : vector<6x256xf32>
    %c258 = arith.constant 258 : index
    %c0_442 = arith.constant 0 : index
    %448 = vector.load %arg13[%c258, %c0_442] : memref<294x256xf32, #tpu.memory_space<vmem>>, vector<6x256xf32>
    tpu.vector_store %arg13[%c258, %c0_442], %447 {strides = array<i32>} : memref<294x256xf32, #tpu.memory_space<vmem>>, vector<6x256xf32>,
    %c0_443 = arith.constant 0 : index
    %c175_444 = arith.constant 175 : index
    %449 = vector.load %arg11[%c0_443, %c175_444] : memref<6x512xf32, #tpu.memory_space<vmem>>, vector<6x256xf32>
    %c2_445 = arith.constant 2 : index
    %c0_446 = arith.constant 0 : index
    %450 = vector.load %arg2[%c2_445, %c0_446] : memref<7x256xf32, #tpu.memory_space<vmem>>, vector<1x256xf32>
    %451 = vector.broadcast %450 : vector<1x256xf32> to vector<6x256xf32>
    %452 = arith.mulf %449, %451 : vector<6x256xf32>
    %c264 = arith.constant 264 : index
    %c0_447 = arith.constant 0 : index
    %453 = vector.load %arg13[%c264, %c0_447] : memref<294x256xf32, #tpu.memory_space<vmem>>, vector<6x256xf32>
    tpu.vector_store %arg13[%c264, %c0_447], %452 {strides = array<i32>} : memref<294x256xf32, #tpu.memory_space<vmem>>, vector<6x256xf32>,
    %c0_448 = arith.constant 0 : index
    %c176_449 = arith.constant 176 : index
    %454 = vector.load %arg11[%c0_448, %c176_449] : memref<6x512xf32, #tpu.memory_space<vmem>>, vector<6x256xf32>
    %c270 = arith.constant 270 : index
    %c0_450 = arith.constant 0 : index
    %455 = vector.load %arg13[%c270, %c0_450] : memref<294x256xf32, #tpu.memory_space<vmem>>, vector<6x256xf32>
    tpu.vector_store %arg13[%c270, %c0_450], %454 {strides = array<i32>} : memref<294x256xf32, #tpu.memory_space<vmem>>, vector<6x256xf32>,
    %c0_451 = arith.constant 0 : index
    %c177_452 = arith.constant 177 : index
    %456 = vector.load %arg11[%c0_451, %c177_452] : memref<6x512xf32, #tpu.memory_space<vmem>>, vector<6x256xf32>
    %c4_453 = arith.constant 4 : index
    %c0_454 = arith.constant 0 : index
    %457 = vector.load %arg2[%c4_453, %c0_454] : memref<7x256xf32, #tpu.memory_space<vmem>>, vector<1x256xf32>
    %458 = vector.broadcast %457 : vector<1x256xf32> to vector<6x256xf32>
    %459 = arith.mulf %456, %458 : vector<6x256xf32>
    %c276 = arith.constant 276 : index
    %c0_455 = arith.constant 0 : index
    %460 = vector.load %arg13[%c276, %c0_455] : memref<294x256xf32, #tpu.memory_space<vmem>>, vector<6x256xf32>
    tpu.vector_store %arg13[%c276, %c0_455], %459 {strides = array<i32>} : memref<294x256xf32, #tpu.memory_space<vmem>>, vector<6x256xf32>,
    %c0_456 = arith.constant 0 : index
    %c178_457 = arith.constant 178 : index
    %461 = vector.load %arg11[%c0_456, %c178_457] : memref<6x512xf32, #tpu.memory_space<vmem>>, vector<6x256xf32>
    %c5_458 = arith.constant 5 : index
    %c0_459 = arith.constant 0 : index
    %462 = vector.load %arg2[%c5_458, %c0_459] : memref<7x256xf32, #tpu.memory_space<vmem>>, vector<1x256xf32>
    %463 = vector.broadcast %462 : vector<1x256xf32> to vector<6x256xf32>
    %464 = arith.mulf %461, %463 : vector<6x256xf32>
    %c282 = arith.constant 282 : index
    %c0_460 = arith.constant 0 : index
    %465 = vector.load %arg13[%c282, %c0_460] : memref<294x256xf32, #tpu.memory_space<vmem>>, vector<6x256xf32>
    tpu.vector_store %arg13[%c282, %c0_460], %464 {strides = array<i32>} : memref<294x256xf32, #tpu.memory_space<vmem>>, vector<6x256xf32>,
    %c0_461 = arith.constant 0 : index
    %c179_462 = arith.constant 179 : index
    %466 = vector.load %arg11[%c0_461, %c179_462] : memref<6x512xf32, #tpu.memory_space<vmem>>, vector<6x256xf32>
    %c6_463 = arith.constant 6 : index
    %c0_464 = arith.constant 0 : index
    %467 = vector.load %arg2[%c6_463, %c0_464] : memref<7x256xf32, #tpu.memory_space<vmem>>, vector<1x256xf32>
    %468 = vector.broadcast %467 : vector<1x256xf32> to vector<6x256xf32>
    %469 = arith.mulf %466, %468 : vector<6x256xf32>
    %c288 = arith.constant 288 : index
    %c0_465 = arith.constant 0 : index
    %470 = vector.load %arg13[%c288, %c0_465] : memref<294x256xf32, #tpu.memory_space<vmem>>, vector<6x256xf32>
    tpu.vector_store %arg13[%c288, %c0_465], %469 {strides = array<i32>} : memref<294x256xf32, #tpu.memory_space<vmem>>, vector<6x256xf32>,
    %c0_466 = arith.constant 0 : index
    %c0_467 = arith.constant 0 : index
    %471 = vector.load %arg6[%c0_466, %c0_467] : memref<4x294xf32, #tpu.memory_space<vmem>>, vector<4x294xf32>
    %c0_468 = arith.constant 0 : index
    %c0_469 = arith.constant 0 : index
    %472 = vector.load %arg13[%c0_468, %c0_469] : memref<294x256xf32, #tpu.memory_space<vmem>>, vector<294x256xf32>
    %cst_470 = arith.constant dense<0.000000e+00> : vector<4x256xf32>
    %473 = tpu.matmul %471, %472, %cst_470 {dimension_numbers = #tpu.dot_dimension_numbers<[1], [0], [0], [1], [0, 0, 1, 1], [], []>} : vector<4x294xf32>, vector<294x256xf32>, vector<4x256xf32> -> vector<4x256xf32>
    %c0_471 = arith.constant 0 : index
    %c0_472 = arith.constant 0 : index
    %474 = vector.load %arg7[%c0_471, %c0_472] : memref<4x1xf32, #tpu.memory_space<vmem>>, vector<4x1xf32>
    %475 = vector.broadcast %474 : vector<4x1xf32> to vector<4x256xf32>
    %476 = arith.mulf %473, %475 : vector<4x256xf32>
    %c0_473 = arith.constant 0 : index
    %c0_474 = arith.constant 0 : index
    %477 = vector.load %arg8[%c0_473, %c0_474] : memref<4x1xf32, #tpu.memory_space<vmem>>, vector<4x1xf32>
    %478 = vector.broadcast %477 : vector<4x1xf32> to vector<4x256xf32>
    %479 = arith.addf %476, %478 : vector<4x256xf32>
    %cst_475 = arith.constant 0.000000e+00 : f32
    %480 = vector.broadcast %cst_475 : f32 to vector<4x256xf32>
    %481 = arith.maximumf %479, %480 : vector<4x256xf32>
    %cst_476 = arith.constant dense<0.000000e+00> : vector<4xf32>
    %482 = vector.multi_reduction <add>, %481, %cst_476 [1] : vector<4x256xf32> to vector<4xf32>
    %483 = vector.shape_cast %482 : vector<4xf32> to vector<4x1xf32>
    %cst_477 = arith.constant 2.560000e+02 : f32
    %484 = vector.broadcast %cst_477 : f32 to vector<4x1xf32>
    %485 = arith.divf %483, %484 : vector<4x1xf32>
    %c0_478 = arith.constant 0 : index
    %c0_479 = arith.constant 0 : index
    %c0_480 = arith.constant 0 : index
    %486 = vector.load %arg1[%c0_478, %c0_479, %c0_480] : memref<1x4x256xf32, #tpu.memory_space<vmem>>, vector<1x4x256xf32>
    %487 = vector.shape_cast %486 : vector<1x4x256xf32> to vector<4x256xf32>
    %488 = vector.broadcast %485 : vector<4x1xf32> to vector<4x256xf32>
    %489 = arith.mulf %487, %488 : vector<4x256xf32>
    %cst_481 = arith.constant dense<0.000000e+00> : vector<256xf32>
    %490 = vector.multi_reduction <add>, %489, %cst_481 [0] : vector<4x256xf32> to vector<256xf32>
    %491 = vector.shape_cast %490 : vector<256xf32> to vector<1x256xf32>
    %cst_482 = arith.constant 0.000000e+00 : f32
    %492 = vector.broadcast %cst_482 : f32 to vector<1x256xf32>
    %493 = arith.maximumf %491, %492 : vector<1x256xf32>
    %c0_483 = arith.constant 0 : index
    %c0_484 = arith.constant 0 : index
    %c0_485 = arith.constant 0 : index
    %494 = vector.load %arg9[%c0_483, %c0_484, %c0_485] : memref<1x1x256xf32, #tpu.memory_space<vmem>>, vector<1x1x256xf32>
    %495 = vector.shape_cast %494 : vector<1x1x256xf32> to vector<1x256xf32>
    %496 = vector.shape_cast %493 : vector<1x256xf32> to vector<1x1x256xf32>
    tpu.vector_store %arg9[%c0_483, %c0_484, %c0_485], %496 {strides = array<i32>} : memref<1x1x256xf32, #tpu.memory_space<vmem>>, vector<1x1x256xf32>,
    return
  }
  func.func @transform_0(%arg0: i32) -> (i32, i32, i32) {
    %c0_i32 = arith.constant 0 : i32
    %c0_i32_0 = arith.constant 0 : i32
    %c0_i32_1 = arith.constant 0 : i32
    return %arg0, %c0_i32, %c0_i32_0 : i32, i32, i32
  }
  func.func @transform_1(%arg0: i32) -> (i32, i32) {
    %c0_i32 = arith.constant 0 : i32
    %c0_i32_0 = arith.constant 0 : i32
    %c0_i32_1 = arith.constant 0 : i32
    return %c0_i32, %c0_i32_0 : i32, i32
  }
  func.func @transform_2(%arg0: i32) -> (i32, i32) {
    %c0_i32 = arith.constant 0 : i32
    %c0_i32_0 = arith.constant 0 : i32
    %c0_i32_1 = arith.constant 0 : i32
    return %c0_i32, %c0_i32_0 : i32, i32
  }
  func.func @transform_3(%arg0: i32) -> (i32, i32) {
    %c0_i32 = arith.constant 0 : i32
    %c0_i32_0 = arith.constant 0 : i32
    %c0_i32_1 = arith.constant 0 : i32
    return %c0_i32, %c0_i32_0 : i32, i32
  }
  func.func @transform_4(%arg0: i32) -> (i32, i32) {
    %c0_i32 = arith.constant 0 : i32
    %c0_i32_0 = arith.constant 0 : i32
    %c0_i32_1 = arith.constant 0 : i32
    return %c0_i32, %c0_i32_0 : i32, i32
  }
  func.func @transform_5(%arg0: i32) -> (i32, i32) {
    %c0_i32 = arith.constant 0 : i32
    %c0_i32_0 = arith.constant 0 : i32
    %c0_i32_1 = arith.constant 0 : i32
    return %c0_i32, %c0_i32_0 : i32, i32
  }
  func.func @transform_6(%arg0: i32) -> (i32, i32) {
    %c0_i32 = arith.constant 0 : i32
    %c0_i32_0 = arith.constant 0 : i32
    %c0_i32_1 = arith.constant 0 : i32
    return %c0_i32, %c0_i32_0 : i32, i32
  }
  func.func @transform_7(%arg0: i32) -> (i32, i32) {
    %c0_i32 = arith.constant 0 : i32
    %c0_i32_0 = arith.constant 0 : i32
    %c0_i32_1 = arith.constant 0 : i32
    return %c0_i32, %c0_i32_0 : i32, i32
  }
  func.func @transform_8(%arg0: i32) -> (i32, i32, i32) {
    %c0_i32 = arith.constant 0 : i32
    %c0_i32_0 = arith.constant 0 : i32
    %c0_i32_1 = arith.constant 0 : i32
    return %arg0, %c0_i32, %c0_i32_0 : i32, i32, i32
  }
}

</mosaic_0001>

<llo_original>
// kernel: fam_forward.3
$region0: #{fam_forward.3}
  #allocation0 [shape = 'u32[]', space=smem, size = 0x4, offset = 0x4, fixed_abs, tag = 'smem constant byte address 0x4 - core index']
  #allocation1 [shape = 'u32[144,128]{1,0:T(1,128)}', space=vmem, size = 0x12000, scoped, tag = 'internal scratch']
  %s0 = inlined_call_operand.vmem [shape: f32[2], index: 0, kind: input, shape index: {}]
  %s1 = inlined_call_operand.vmem [shape: f32[32,16], index: 1, kind: input, shape index: {}]
  %s2 = inlined_call_operand.vmem [shape: f32[224,16], index: 2, kind: input, shape index: {}]
  %s3 = inlined_call_operand.vmem [shape: f32[16,224], index: 3, kind: input, shape index: {}]
  %s4 = inlined_call_operand.hbm [shape: f32[32,16], index: 4, kind: output, shape index: {0}]
  %s5 = inlined_call_operand.hbm [shape: f32[448,224], index: 5, kind: output, shape index: {1}]
  %6 = xla_tuple %s4, %s5
  %s7 = sld [smem:[#allocation0]]
  $region61: #{fam_forward.3} parent=0
    _
  %s9 = ssub.s32 1, %s7
  %s10 = scalar_select 0, %s9, %s7
  $region1: #{fam_forward.3} parent=0
    #allocation2 [shape = 'u8[512]{0}', space=smem, size = 0x200, scoped, tag = 'input window, operand 0, single buffered']
    #allocation3 [shape = 's32[2]{0}', space=sflag, size = 0x8, scoped, tag = 'scoped memory for fam_forward.3']
    #allocation4 [shape = 's32[2]{0}', space=sflag, size = 0x8, scoped, tag = 'scoped memory for fam_forward.3']
    #allocation5 [shape = 'u8[16384]{0}', space=vmem, size = 0x4000, scoped, tag = 'output window, operand 0']
    #allocation6 [shape = 'u8[458752]{0}', space=vmem, size = 0x70000, scoped, tag = 'output window, operand 1']
    #allocation7 [shape = 's32[2]{0}', space=sflag, size = 0x8, scoped, tag = 'scoped memory for fam_forward.3']
    %11 = vsyncpa [#allocation4], 0
    %12 = vsyncpa [#allocation3], 0
    %s13 = scalar_lea.sflag [#allocation3], 1
    %14 = vsyncpa %s13, 0
    %15 = vsyncpa [#allocation7], 0
    %s16 = scalar_lea.sflag [#allocation7], 1
    %17 = vsyncpa %s16, 0
    loop: start=0, step=1, limit=4
    $region2: #{fam_forward.3} parent=1 // loop_pre_header
      _
    $region3: #{fam_forward.3} parent=1 // loop_header
      %s19 = sphi 0, %s23
      %p20 = scmp.ge.s32.totalorder %s19, 4
      %s27 = sphi 0, %s27
      %s29 = sphi 0, %s27
      %s30 = sphi 0, %s29
      %s44 = sphi 0, %s30
      %s50 = sphi 0, %s52
      %s53 = sphi 0, %s50
      %s54 = sphi 0, %s53
      %s70 = sphi 0, %s54
      %s74 = sphi 0, %s74
      %s76 = sphi 0, %s74
      %s77 = sphi 0, %s76
      %s91 = sphi 0, %s77
      %s95 = sphi 0, %s95
      %s97 = sphi 0, %s95
      %s98 = sphi 0, %s97
      %s112 = sphi 0, %s98
      %s118 = sphi 0, %s120
      %s121 = sphi 0, %s118
      %s122 = sphi 0, %s121
      %s138 = sphi 0, %s122
      %s144 = sphi 0, %s146
      %s147 = sphi 0, %s144
      %s148 = sphi 0, %s147
      %s164 = sphi 0, %s148
    $region4: #{fam_forward.3} parent=1 // loop_header_branch
      %22 = sbr.rel (%p20) target = $region8
    $region5: #{fam_forward.3} parent=1 // loop_body
      %s24 = ssub.s32 %s19, 1
      %s25 = ssub.s32 %s19, 2
      %s26 = sadd.s32 %s19, 1
      %s28 = sadd.s32 %s27, 1
      %p31 = scmp.eq.s32.totalorder %s19, 1
      %p32 = scmp.ne.s32.totalorder %s27, %s29
      %p33 = scmp.eq.s32.totalorder %s19, 0
      %p34 = por %p32, %p33
      %p35 = scmp.ne.s32.totalorder %s27, %s29
      %p36 = scmp.eq.s32.totalorder %s24, 1
      %p37 = por %p35, %p36
      %p38 = scmp.ne.s32.totalorder %s29, %s30
      %p39 = scmp.eq.s32.totalorder %s24, 0
      %p40 = por %p38, %p39
      %p41 = scmp.ne.s32.totalorder %s29, %s30
      %p42 = scmp.eq.s32.totalorder %s25, 1
      %p43 = por %p41, %p42
      %p45 = scmp.ne.s32.totalorder %s30, %s44
      %p46 = scmp.eq.s32.totalorder %s25, 0
      %p47 = por %p45, %p46
      %s48 = ssub.s32 %s19, %s26
      %p49 = scmp.eq.s32.totalorder %s48, 0
      %s51 = sadd.s32 %s50, 1
      %s52 = scalar_select %p49, %s50, %s51
      %p55 = pneg %p49
      %p56 = scmp.eq.s32.totalorder %s19, 1
      %p57 = por %p55, %p56
      %p58 = scmp.ne.s32.totalorder %s50, %s53
      %p59 = scmp.eq.s32.totalorder %s19, 0
      %p60 = por %p58, %p59
      %p61 = scmp.ne.s32.totalorder %s50, %s53
      %p62 = scmp.eq.s32.totalorder %s24, 1
      %p63 = por %p61, %p62
      %p64 = scmp.ne.s32.totalorder %s53, %s54
      %p65 = scmp.eq.s32.totalorder %s24, 0
      %p66 = por %p64, %p65
      %p67 = scmp.ne.s32.totalorder %s53, %s54
      %p68 = scmp.eq.s32.totalorder %s25, 1
      %p69 = por %p67, %p68
      %p71 = scmp.ne.s32.totalorder %s54, %s70
      %p72 = scmp.eq.s32.totalorder %s25, 0
      %p73 = por %p71, %p72
      %s75 = sadd.s32 %s74, 1
      %p78 = scmp.eq.s32.totalorder %s19, 1
      %p79 = scmp.ne.s32.totalorder %s74, %s76
      %p80 = scmp.eq.s32.totalorder %s19, 0
      %p81 = por %p79, %p80
      %p82 = scmp.ne.s32.totalorder %s74, %s76
      %p83 = scmp.eq.s32.totalorder %s24, 1
      %p84 = por %p82, %p83
      %p85 = scmp.ne.s32.totalorder %s76, %s77
      %p86 = scmp.eq.s32.totalorder %s24, 0
      %p87 = por %p85, %p86
      %p88 = scmp.ne.s32.totalorder %s76, %s77
      %p89 = scmp.eq.s32.totalorder %s25, 1
      %p90 = por %p88, %p89
      %p92 = scmp.ne.s32.totalorder %s77, %s91
      %p93 = scmp.eq.s32.totalorder %s25, 0
      %p94 = por %p92, %p93
      %s96 = sadd.s32 %s95, 1
      %p99 = scmp.eq.s32.totalorder %s19, 1
      %p100 = scmp.ne.s32.totalorder %s95, %s97
      %p101 = scmp.eq.s32.totalorder %s19, 0
      %p102 = por %p100, %p101
      %p103 = scmp.ne.s32.totalorder %s95, %s97
      %p104 = scmp.eq.s32.totalorder %s24, 1
      %p105 = por %p103, %p104
      %p106 = scmp.ne.s32.totalorder %s97, %s98
      %p107 = scmp.eq.s32.totalorder %s24, 0
      %p108 = por %p106, %p107
      %p109 = scmp.ne.s32.totalorder %s97, %s98
      %p110 = scmp.eq.s32.totalorder %s25, 1
      %p111 = por %p109, %p110
      %p113 = scmp.ne.s32.totalorder %s98, %s112
      %p114 = scmp.eq.s32.totalorder %s25, 0
      %p115 = por %p113, %p114
      %s116 = ssub.s32 %s19, %s26
      %p117 = scmp.eq.s32.totalorder %s116, 0
      %s119 = sadd.s32 %s118, 1
      %s120 = scalar_select %p117, %s118, %s119
      %p123 = pneg %p117
      %p124 = scmp.eq.s32.totalorder %s19, 1
      %p125 = por %p123, %p124
      %p126 = scmp.ne.s32.totalorder %s118, %s121
      %p127 = scmp.eq.s32.totalorder %s19, 0
      %p128 = por %p126, %p127
      %p129 = scmp.ne.s32.totalorder %s118, %s121
      %p130 = scmp.eq.s32.totalorder %s24, 1
      %p131 = por %p129, %p130
      %p132 = scmp.ne.s32.totalorder %s121, %s122
      %p133 = scmp.eq.s32.totalorder %s24, 0
      %p134 = por %p132, %p133
      %p135 = scmp.ne.s32.totalorder %s121, %s122
      %p136 = scmp.eq.s32.totalorder %s25, 1
      %p137 = por %p135, %p136
      %p139 = scmp.ne.s32.totalorder %s122, %s138
      %p140 = scmp.eq.s32.totalorder %s25, 0
      %p141 = por %p139, %p140
      %s142 = ssub.s32 %s19, %s26
      %p143 = scmp.eq.s32.totalorder %s142, 0
      %s145 = sadd.s32 %s144, 1
      %s146 = scalar_select %p143, %s144, %s145
      %p149 = pneg %p143
      %p150 = scmp.eq.s32.totalorder %s19, 1
      %p151 = por %p149, %p150
      %p152 = scmp.ne.s32.totalorder %s144, %s147
      %p153 = scmp.eq.s32.totalorder %s19, 0
      %p154 = por %p152, %p153
      %p155 = scmp.ne.s32.totalorder %s144, %s147
      %p156 = scmp.eq.s32.totalorder %s24, 1
      %p157 = por %p155, %p156
      %p158 = scmp.ne.s32.totalorder %s147, %s148
      %p159 = scmp.eq.s32.totalorder %s24, 0
      %p160 = por %p158, %p159
      %p161 = scmp.ne.s32.totalorder %s147, %s148
      %p162 = scmp.eq.s32.totalorder %s25, 1
      %p163 = por %p161, %p162
      %p165 = scmp.ne.s32.totalorder %s148, %s164
      %p166 = scmp.eq.s32.totalorder %s25, 0
      %p167 = por %p165, %p166
      %p168 = scmp.le.s32.totalorder 1, %s19
      %p169 = scmp.lt.s32.totalorder %s19, 3
      %p170 = pnand %p168, %p169
      %p171 = pneg %p170
      // Predicated region
      $region9: #{fam_forward.3} parent=5 // pred_check
        _
      $region10: #{fam_forward.3} parent=5 // pred_check_branch
        %173 = sbr.rel (%p170) target = $region12
      $region11: #{fam_forward.3} parent=5 // pred_region
        %s174 = ssub.s32 %s19, 1
        // Predicated region
        $region13: #{fam_forward.3} parent=11 // pred_check
          %p175 = pneg %p40
        $region14: #{fam_forward.3} parent=11 // pred_check_branch
          %177 = sbr.rel (%p175) target = $region16
        $region15: #{fam_forward.3} parent=11 // pred_region
          %s179 = ssub.s32 16, 16
          %180 = vsyncadd [#allocation4], %s179
          %s182 = sshll.u32 %s0, 4
          %s183 = int_to_ptr.vmem [resolvable:$true] %s182
          %185 = dma.vmem_to_smem %s183, 16, [#allocation2], [#allocation4]
        $region16: #{fam_forward.3} parent=11 // pred_fallthru
          _
        // Predicated region
        $region17: #{fam_forward.3} parent=11 // pred_check
          %p186 = pneg %p87
        $region18: #{fam_forward.3} parent=11 // pred_check_branch
          %188 = sbr.rel (%p186) target = $region20
        $region19: #{fam_forward.3} parent=11 // pred_region
          _
        $region20: #{fam_forward.3} parent=11 // pred_fallthru
          _
        // Predicated region
        $region21: #{fam_forward.3} parent=11 // pred_check
          %p189 = pneg %p108
        $region22: #{fam_forward.3} parent=11 // pred_check_branch
          %191 = sbr.rel (%p189) target = $region24
        $region23: #{fam_forward.3} parent=11 // pred_region
          _
        $region24: #{fam_forward.3} parent=11 // pred_fallthru
          _
      $region12: #{fam_forward.3} parent=5 // pred_fallthru
        _
      %p192 = scmp.lt.s32.totalorder %s19, 2
      // Predicated region
      $region25: #{fam_forward.3} parent=5 // pred_check
        %p193 = pneg %p192
      $region26: #{fam_forward.3} parent=5 // pred_check_branch
        %195 = sbr.rel (%p193) target = $region28
      $region27: #{fam_forward.3} parent=5 // pred_region
        // Predicated region
        $region29: #{fam_forward.3} parent=27 // pred_check
          %p196 = pneg %p60
        $region30: #{fam_forward.3} parent=27 // pred_check_branch
          %198 = sbr.rel (%p196) target = $region32
        $region31: #{fam_forward.3} parent=27 // pred_region
          %s199 = smul.u32 2, %s19
          %p200 = scmp.lt.s32.totalorder %s199, 3
          %s201 = scalar_select %p200, %s199, 3
          %s202 = smul.addr %s201, 8
          %s203 = scalar_lea.vmem %s1, %s202
          %s204 = smul.u32 2, %s19
        $region32: #{fam_forward.3} parent=27 // pred_fallthru
          _
      $region28: #{fam_forward.3} parent=5 // pred_fallthru
        _
      %p205 = scmp.le.s32.totalorder 1, %s19
      %p206 = scmp.lt.s32.totalorder %s19, 3
      %p207 = pnand %p205, %p206
      %p208 = pneg %p207
      // Predicated region
      $region33: #{fam_forward.3} parent=5 // pred_check
        _
      $region34: #{fam_forward.3} parent=5 // pred_check_branch
        %210 = sbr.rel (%p207) target = $region36
      $region35: #{fam_forward.3} parent=5 // pred_region
        %s211 = ssub.s32 %s19, 1
        // Predicated region
        $region37: #{fam_forward.3} parent=35 // pred_check
          %p212 = pneg %p40
        $region38: #{fam_forward.3} parent=35 // pred_check_branch
          %214 = sbr.rel (%p212) target = $region40
        $region39: #{fam_forward.3} parent=35 // pred_region
          %215 = dma.done [#allocation4], 16
        $region40: #{fam_forward.3} parent=35 // pred_fallthru
          _
        %216 = sfence
        %p217 = pneg %p40
        %p218 = pneg %p37
        %s219 = smul.u32 2, %s24
        %p220 = scmp.lt.s32.totalorder %s219, 3
        %s221 = scalar_select %p220, %s219, 3
        %s222 = smul.addr %s221, 8
        %s223 = scalar_lea.vmem %s1, %s222
        %p224 = pneg %p66
        %p225 = pneg %p63
        %p226 = pneg %p87
        %p227 = pneg %p84
        %p228 = pneg %p108
        %p229 = pneg %p105
        %p230 = pneg %p134
        %p231 = pneg %p131
        %s232 = sand.u32 %s121, 1
        %s233 = scalar_lea.sflag [#allocation3], %s232
        %s234 = sand.u32 %s121, 1
        %s235 = smul.addr %s234, 16
        %s236 = scalar_lea.vmem [#allocation5], %s235
        %p237 = pneg %p160
        %p238 = pneg %p157
        %s239 = sand.u32 %s147, 1
        %s240 = scalar_lea.sflag [#allocation7], %s239
        %s241 = sand.u32 %s147, 1
        %s242 = smul.addr %s241, 448
        %s243 = scalar_lea.vmem [#allocation6], %s242
        %s244 = smul.u32 2, %s24
        %p245 = scmp.lt.s32.totalorder %s244, 3
        %s246 = scalar_select %p245, %s244, 3
        %s247 = smul.addr %s246, 8
        %s248 = scalar_lea.vmem %s1, %s247
        %s249 = smul.u32 2, %s24
        %s250 = smul.u32 2, %s24
        %s251 = smul.u32 28, %s24
        %v252 = vld [vmem:[%s248] sm:$0xff]
        %v253 = vld [vmem:[%s248 + $0x8] sm:$0xff]
        %s254 = sld [smem:[#allocation2]]
        %v255 = vstv %s254
        %v256 = vsub.f32 %v252, %v255
        %v257 = vsub.f32 %v253, %v255
        %s258 = sld [smem:[#allocation2 + $0x1]]
        %v259 = vstv %s258
        %v260 = vmul.f32 %v256, %v259
        %v261 = vmul.f32 %v257, %v259
        %vm262 = vcmask 130048
        %263 = vst.msk [vmem:[%s236] sm:$0xff] %vm262, %v260
        %264 = vst.msk [vmem:[%s236 + $0x8] sm:$0xff] %vm262, %v261
        %v265 = vld [vmem:[%s2] sm:$0xff]
        %v266 = vld [vmem:[%s2 + $0x8] sm:$0xff]
        %v267 = vld [vmem:[%s2 + $0x10] sm:$0xff]
        %v268 = vld [vmem:[%s2 + $0x18] sm:$0xff]
        %v269 = vld [vmem:[%s2 + $0x20] sm:$0xff]
        %v270 = vld [vmem:[%s2 + $0x28] sm:$0xff]
        %v271 = vld [vmem:[%s2 + $0x30] sm:$0xff]
        %v272 = vld [vmem:[%s2 + $0x38] sm:$0xff]
        %v273 = vld [vmem:[%s2 + $0x40] sm:$0xff]
        %v274 = vld [vmem:[%s2 + $0x48] sm:$0xff]
        %v275 = vld [vmem:[%s2 + $0x50] sm:$0xff]
        %v276 = vld [vmem:[%s2 + $0x58] sm:$0xff]
        %v277 = vld [vmem:[%s2 + $0x60] sm:$0xff]
        %v278 = vld [vmem:[%s2 + $0x68] sm:$0xff]
        %v279 = vld [vmem:[%s2 + $0x70] sm:$0xff]
        %v280 = vld [vmem:[%s2 + $0x78] sm:$0xff]
        %v281 = vld [vmem:[%s2 + $0x80] sm:$0xff]
        %v282 = vld [vmem:[%s2 + $0x88] sm:$0xff]
        %v283 = vld [vmem:[%s2 + $0x90] sm:$0xff]
        %v284 = vld [vmem:[%s2 + $0x98] sm:$0xff]
        %v285 = vld [vmem:[%s2 + $0xa0] sm:$0xff]
        %v286 = vld [vmem:[%s2 + $0xa8] sm:$0xff]
        %v287 = vld [vmem:[%s2 + $0xb0] sm:$0xff]
        %v288 = vld [vmem:[%s2 + $0xb8] sm:$0xff]
        %v289 = vld [vmem:[%s2 + $0xc0] sm:$0xff]
        %v290 = vld [vmem:[%s2 + $0xc8] sm:$0xff]
        %v291 = vld [vmem:[%s2 + $0xd0] sm:$0xff]
        %v292 = vld [vmem:[%s2 + $0xd8] sm:$0xff]
        %v294 = vsel %vm262, %v265, 0
        %v297 = vsel %vm262, %v266, 0
        %v300 = vsel %vm262, %v267, 0
        %v303 = vsel %vm262, %v268, 0
        %v306 = vsel %vm262, %v269, 0
        %v309 = vsel %vm262, %v270, 0
        %v312 = vsel %vm262, %v271, 0
        %v315 = vsel %vm262, %v272, 0
        %v318 = vsel %vm262, %v273, 0
        %v321 = vsel %vm262, %v274, 0
        %v324 = vsel %vm262, %v275, 0
        %v327 = vsel %vm262, %v276, 0
        %v330 = vsel %vm262, %v277, 0
        %v333 = vsel %vm262, %v278, 0
        %v336 = vsel %vm262, %v279, 0
        %v339 = vsel %vm262, %v280, 0
        %v342 = vsel %vm262, %v281, 0
        %v345 = vsel %vm262, %v282, 0
        %v348 = vsel %vm262, %v283, 0
        %v351 = vsel %vm262, %v284, 0
        %v354 = vsel %vm262, %v285, 0
        %v357 = vsel %vm262, %v286, 0
        %v360 = vsel %vm262, %v287, 0
        %v363 = vsel %vm262, %v288, 0
        %v366 = vsel %vm262, %v289, 0
        %v369 = vsel %vm262, %v290, 0
        %v372 = vsel %vm262, %v291, 0
        %v375 = vsel %vm262, %v292, 0
        %377 = vmatprep.subr.mxu0 0.0
        %378 = vmatpush1.msra.mxu0 %v260
        %379 = vmatprep.subr.mxu0 0.0
        %380 = vmatpush1.msra.mxu0 %v261
        %381 = vmatprep.subr.mxu0 0.0
        %382 = vmatpush1.msra.mxu0 0.0
        %383 = vmatprep.subr.mxu0 0.0
        %384 = vmatpush1.msra.mxu0 0.0
        %385 = vmatprep.subr.mxu0 0.0
        %386 = vmatpush1.msra.mxu0 0.0
        %387 = vmatprep.subr.mxu0 0.0
        %388 = vmatpush1.msra.mxu0 0.0
        %389 = vmatprep.subr.mxu0 0.0
        %390 = vmatpush1.msra.mxu0 0.0
        %391 = vmatprep.subr.mxu0 0.0
        %392 = vmatpush1.msra.mxu0 0.0
        %393 = vmatprep.subr.mxu0 0.0
        %394 = vmatpush1.msra.mxu0 0.0
        %395 = vmatprep.subr.mxu0 0.0
        %396 = vmatpush1.msra.mxu0 0.0
        %397 = vmatprep.subr.mxu0 0.0
        %398 = vmatpush1.msra.mxu0 0.0
        %399 = vmatprep.subr.mxu0 0.0
        %400 = vmatpush1.msra.mxu0 0.0
        %401 = vmatprep.subr.mxu0 0.0
        %402 = vmatpush1.msra.mxu0 0.0
        %403 = vmatprep.subr.mxu0 0.0
        %404 = vmatpush1.msra.mxu0 0.0
        %405 = vmatprep.subr.mxu0 0.0
        %406 = vmatpush1.msra.mxu0 0.0
        %407 = vmatprep.subr.mxu0 0.0
        %408 = vmatpush1.msra.mxu0 0.0
        %409 = vmatprep.subr.mxu0 0.0
        %410 = vmatpush1.msra.mxu0 0.0
        %411 = vmatprep.subr.mxu0 0.0
        %412 = vmatpush1.msra.mxu0 0.0
        %413 = vmatprep.subr.mxu0 0.0
        %414 = vmatpush1.msra.mxu0 0.0
        %415 = vmatprep.subr.mxu0 0.0
        %416 = vmatpush1.msra.mxu0 0.0
        %417 = vmatprep.subr.mxu0 0.0
        %418 = vmatpush1.msra.mxu0 0.0
        %419 = vmatprep.subr.mxu0 0.0
        %420 = vmatpush1.msra.mxu0 0.0
        %421 = vmatprep.subr.mxu0 0.0
        %422 = vmatpush1.msra.mxu0 0.0
        %423 = vmatprep.subr.mxu0 0.0
        %424 = vmatpush1.msra.mxu0 0.0
        %425 = vmatprep.subr.mxu0 0.0
        %426 = vmatpush1.msra.mxu0 0.0
        %427 = vmatprep.subr.mxu0 0.0
        %428 = vmatpush1.msra.mxu0 0.0
        %429 = vmatprep.subr.mxu0 0.0
        %430 = vmatpush1.msra.mxu0 0.0
        %431 = vmatprep.subr.mxu0 0.0
        %432 = vmatpush1.msra.mxu0 0.0
        %433 = vmatprep.subr.mxu0 0.0
        %434 = vmatpush1.msra.mxu0 0.0
        %435 = vmatprep.subr.mxu0 0.0
        %436 = vmatpush1.msra.mxu0 0.0
        %437 = vmatprep.subr.mxu0 0.0
        %438 = vmatpush1.msra.mxu0 0.0
        %439 = vmatprep.subr.mxu0 0.0
        %440 = vmatpush1.msra.mxu0 0.0
        %441 = vmatprep.mubr.f32.mxu0 0.0
        %442 = vmatmul.mubr.f32.gmra.mrb[0].mxu0 %v294
        %v443 = vpop.f32.mrb[0].mxu0
        %v444 = vadd.f32 0.0, %v443
        %v445 = vpop.f32.mrb[0].mxu0
        %446 = vmatprep.mubr.f32.mxu0 0.0
        %447 = vmatmul.mubr.f32.gmra.mrb[0].mxu0 %v297
        %v448 = vpop.f32.mrb[0].mxu0
        %v449 = vadd.f32 0.0, %v448
        %v450 = vpop.f32.mrb[0].mxu0
        %451 = vmatprep.mubr.f32.mxu0 0.0
        %452 = vmatmul.mubr.f32.gmra.mrb[0].mxu0 %v300
        %v453 = vpop.f32.mrb[0].mxu0
        %v454 = vadd.f32 0.0, %v453
        %v455 = vpop.f32.mrb[0].mxu0
        %456 = vmatprep.mubr.f32.mxu0 0.0
        %457 = vmatmul.mubr.f32.gmra.mrb[0].mxu0 %v303
        %v458 = vpop.f32.mrb[0].mxu0
        %v459 = vadd.f32 0.0, %v458
        %v460 = vpop.f32.mrb[0].mxu0
        %461 = vmatprep.mubr.f32.mxu0 0.0
        %462 = vmatmul.mubr.f32.gmra.mrb[0].mxu0 %v306
        %v463 = vpop.f32.mrb[0].mxu0
        %v464 = vadd.f32 0.0, %v463
        %v465 = vpop.f32.mrb[0].mxu0
        %466 = vmatprep.mubr.f32.mxu0 0.0
        %467 = vmatmul.mubr.f32.gmra.mrb[0].mxu0 %v309
        %v468 = vpop.f32.mrb[0].mxu0
        %v469 = vadd.f32 0.0, %v468
        %v470 = vpop.f32.mrb[0].mxu0
        %471 = vmatprep.mubr.f32.mxu0 0.0
        %472 = vmatmul.mubr.f32.gmra.mrb[0].mxu0 %v312
        %v473 = vpop.f32.mrb[0].mxu0
        %v474 = vadd.f32 0.0, %v473
        %v475 = vpop.f32.mrb[0].mxu0
        %476 = vmatprep.mubr.f32.mxu0 0.0
        %477 = vmatmul.mubr.f32.gmra.mrb[0].mxu0 %v315
        %v478 = vpop.f32.mrb[0].mxu0
        %v479 = vadd.f32 0.0, %v478
        %v480 = vpop.f32.mrb[0].mxu0
        %481 = vmatprep.mubr.f32.mxu0 0.0
        %482 = vmatmul.mubr.f32.gmra.mrb[0].mxu0 %v318
        %v483 = vpop.f32.mrb[0].mxu0
        %v484 = vadd.f32 0.0, %v483
        %v485 = vpop.f32.mrb[0].mxu0
        %486 = vmatprep.mubr.f32.mxu0 0.0
        %487 = vmatmul.mubr.f32.gmra.mrb[0].mxu0 %v321
        %v488 = vpop.f32.mrb[0].mxu0
        %v489 = vadd.f32 0.0, %v488
        %v490 = vpop.f32.mrb[0].mxu0
        %491 = vmatprep.mubr.f32.mxu0 0.0
        %492 = vmatmul.mubr.f32.gmra.mrb[0].mxu0 %v324
        %v493 = vpop.f32.mrb[0].mxu0
        %v494 = vadd.f32 0.0, %v493
        %v495 = vpop.f32.mrb[0].mxu0
        %496 = vmatprep.mubr.f32.mxu0 0.0
        %497 = vmatmul.mubr.f32.gmra.mrb[0].mxu0 %v327
        %v498 = vpop.f32.mrb[0].mxu0
        %v499 = vadd.f32 0.0, %v498
        %v500 = vpop.f32.mrb[0].mxu0
        %501 = vmatprep.mubr.f32.mxu0 0.0
        %502 = vmatmul.mubr.f32.gmra.mrb[0].mxu0 %v330
        %v503 = vpop.f32.mrb[0].mxu0
        %v504 = vadd.f32 0.0, %v503
        %v505 = vpop.f32.mrb[0].mxu0
        %506 = vmatprep.mubr.f32.mxu0 0.0
        %507 = vmatmul.mubr.f32.gmra.mrb[0].mxu0 %v333
        %v508 = vpop.f32.mrb[0].mxu0
        %v509 = vadd.f32 0.0, %v508
        %v510 = vpop.f32.mrb[0].mxu0
        %511 = vmatprep.mubr.f32.mxu0 0.0
        %512 = vmatmul.mubr.f32.gmra.mrb[0].mxu0 %v336
        %v513 = vpop.f32.mrb[0].mxu0
        %v514 = vadd.f32 0.0, %v513
        %v515 = vpop.f32.mrb[0].mxu0
        %516 = vmatprep.mubr.f32.mxu0 0.0
        %517 = vmatmul.mubr.f32.gmra.mrb[0].mxu0 %v339
        %v518 = vpop.f32.mrb[0].mxu0
        %v519 = vadd.f32 0.0, %v518
        %v520 = vpop.f32.mrb[0].mxu0
        %521 = vmatprep.mubr.f32.mxu0 0.0
        %522 = vmatmul.mubr.f32.gmra.mrb[0].mxu0 %v342
        %v523 = vpop.f32.mrb[0].mxu0
        %v524 = vadd.f32 0.0, %v523
        %v525 = vpop.f32.mrb[0].mxu0
        %526 = vmatprep.mubr.f32.mxu0 0.0
        %527 = vmatmul.mubr.f32.gmra.mrb[0].mxu0 %v345
        %v528 = vpop.f32.mrb[0].mxu0
        %v529 = vadd.f32 0.0, %v528
        %v530 = vpop.f32.mrb[0].mxu0
        %531 = vmatprep.mubr.f32.mxu0 0.0
        %532 = vmatmul.mubr.f32.gmra.mrb[0].mxu0 %v348
        %v533 = vpop.f32.mrb[0].mxu0
        %v534 = vadd.f32 0.0, %v533
        %v535 = vpop.f32.mrb[0].mxu0
        %536 = vmatprep.mubr.f32.mxu0 0.0
        %537 = vmatmul.mubr.f32.gmra.mrb[0].mxu0 %v351
        %v538 = vpop.f32.mrb[0].mxu0
        %v539 = vadd.f32 0.0, %v538
        %v540 = vpop.f32.mrb[0].mxu0
        %541 = vmatprep.mubr.f32.mxu0 0.0
        %542 = vmatmul.mubr.f32.gmra.mrb[0].mxu0 %v354
        %v543 = vpop.f32.mrb[0].mxu0
        %v544 = vadd.f32 0.0, %v543
        %v545 = vpop.f32.mrb[0].mxu0
        %546 = vmatprep.mubr.f32.mxu0 0.0
        %547 = vmatmul.mubr.f32.gmra.mrb[0].mxu0 %v357
        %v548 = vpop.f32.mrb[0].mxu0
        %v549 = vadd.f32 0.0, %v548
        %v550 = vpop.f32.mrb[0].mxu0
        %551 = vmatprep.mubr.f32.mxu0 0.0
        %552 = vmatmul.mubr.f32.gmra.mrb[0].mxu0 %v360
        %v553 = vpop.f32.mrb[0].mxu0
        %v554 = vadd.f32 0.0, %v553
        %v555 = vpop.f32.mrb[0].mxu0
        %556 = vmatprep.mubr.f32.mxu0 0.0
        %557 = vmatmul.mubr.f32.gmra.mrb[0].mxu0 %v363
        %v558 = vpop.f32.mrb[0].mxu0
        %v559 = vadd.f32 0.0, %v558
        %v560 = vpop.f32.mrb[0].mxu0
        %561 = vmatprep.mubr.f32.mxu0 0.0
        %562 = vmatmul.mubr.f32.gmra.mrb[0].mxu0 %v366
        %v563 = vpop.f32.mrb[0].mxu0
        %v564 = vadd.f32 0.0, %v563
        %v565 = vpop.f32.mrb[0].mxu0
        %566 = vmatprep.mubr.f32.mxu0 0.0
        %567 = vmatmul.mubr.f32.gmra.mrb[0].mxu0 %v369
        %v568 = vpop.f32.mrb[0].mxu0
        %v569 = vadd.f32 0.0, %v568
        %v570 = vpop.f32.mrb[0].mxu0
        %571 = vmatprep.mubr.f32.mxu0 0.0
        %572 = vmatmul.mubr.f32.gmra.mrb[0].mxu0 %v372
        %v573 = vpop.f32.mrb[0].mxu0
        %v574 = vadd.f32 0.0, %v573
        %v575 = vpop.f32.mrb[0].mxu0
        %576 = vmatprep.mubr.f32.mxu0 0.0
        %577 = vmatmul.mubr.f32.gmra.mrb[0].mxu0 %v375
        %v578 = vpop.f32.mrb[0].mxu0
        %v579 = vadd.f32 0.0, %v578
        %v580 = vpop.f32.mrb[0].mxu0
        %581 = vdwg.mxu0
        %v582 = vld [vmem:[%s3] sm:$0xff]
        %v583 = vld [vmem:[%s3 + $0x8] sm:$0xff]
        %v584 = vld [vmem:[%s3 + $0x10] sm:$0xff]
        %v585 = vld [vmem:[%s3 + $0x18] sm:$0xff]
        %v587 = vsel %vm262, %v444, 0
        %v590 = vsel %vm262, %v449, 0
        %v593 = vsel %vm262, %v454, 0
        %v596 = vsel %vm262, %v459, 0
        %v599 = vsel %vm262, %v464, 0
        %v602 = vsel %vm262, %v469, 0
        %v605 = vsel %vm262, %v474, 0
        %v608 = vsel %vm262, %v479, 0
        %v611 = vsel %vm262, %v484, 0
        %v614 = vsel %vm262, %v489, 0
        %v617 = vsel %vm262, %v494, 0
        %v620 = vsel %vm262, %v499, 0
        %v623 = vsel %vm262, %v504, 0
        %v626 = vsel %vm262, %v509, 0
        %v629 = vsel %vm262, %v514, 0
        %v632 = vsel %vm262, %v519, 0
        %v635 = vsel %vm262, %v524, 0
        %v638 = vsel %vm262, %v529, 0
        %v641 = vsel %vm262, %v534, 0
        %v644 = vsel %vm262, %v539, 0
        %v647 = vsel %vm262, %v544, 0
        %v650 = vsel %vm262, %v549, 0
        %v653 = vsel %vm262, %v554, 0
        %v656 = vsel %vm262, %v559, 0
        %v659 = vsel %vm262, %v564, 0
        %v662 = vsel %vm262, %v569, 0
        %v665 = vsel %vm262, %v574, 0
        %v668 = vsel %vm262, %v579, 0
        %670 = vmatprep.subr.mxu0 %v583
        %671 = vmatpush1.msra.mxu0 %v582
        %672 = vmatprep.subr.mxu0 %v585
        %673 = vmatpush1.msra.mxu0 %v584
        %674 = vmatprep.subr.mxu0 0.0
        %675 = vmatpush1.msra.mxu0 0.0
        %676 = vmatprep.subr.mxu0 0.0
        %677 = vmatpush1.msra.mxu0 0.0
        %678 = vmatprep.subr.mxu0 0.0
        %679 = vmatpush1.msra.mxu0 0.0
        %680 = vmatprep.subr.mxu0 0.0
        %681 = vmatpush1.msra.mxu0 0.0
        %682 = vmatprep.subr.mxu0 0.0
        %683 = vmatpush1.msra.mxu0 0.0
        %684 = vmatprep.subr.mxu0 0.0
        %685 = vmatpush1.msra.mxu0 0.0
        %686 = vmatprep.subr.mxu0 0.0
        %687 = vmatpush1.msra.mxu0 0.0
        %688 = vmatprep.subr.mxu0 0.0
        %689 = vmatpush1.msra.mxu0 0.0
        %690 = vmatprep.subr.mxu0 0.0
        %691 = vmatpush1.msra.mxu0 0.0
        %692 = vmatprep.subr.mxu0 0.0
        %693 = vmatpush1.msra.mxu0 0.0
        %694 = vmatprep.subr.mxu0 0.0
        %695 = vmatpush1.msra.mxu0 0.0
        %696 = vmatprep.subr.mxu0 0.0
        %697 = vmatpush1.msra.mxu0 0.0
        %698 = vmatprep.subr.mxu0 0.0
        %699 = vmatpush1.msra.mxu0 0.0
        %700 = vmatprep.subr.mxu0 0.0
        %701 = vmatpush1.msra.mxu0 0.0
        %702 = vmatprep.subr.mxu0 0.0
        %703 = vmatpush1.msra.mxu0 0.0
        %704 = vmatprep.subr.mxu0 0.0
        %705 = vmatpush1.msra.mxu0 0.0
        %706 = vmatprep.subr.mxu0 0.0
        %707 = vmatpush1.msra.mxu0 0.0
        %708 = vmatprep.subr.mxu0 0.0
        %709 = vmatpush1.msra.mxu0 0.0
        %710 = vmatprep.subr.mxu0 0.0
        %711 = vmatpush1.msra.mxu0 0.0
        %712 = vmatprep.subr.mxu0 0.0
        %713 = vmatpush1.msra.mxu0 0.0
        %714 = vmatprep.subr.mxu0 0.0
        %715 = vmatpush1.msra.mxu0 0.0
        %716 = vmatprep.subr.mxu0 0.0
        %717 = vmatpush1.msra.mxu0 0.0
        %718 = vmatprep.subr.mxu0 0.0
        %719 = vmatpush1.msra.mxu0 0.0
        %720 = vmatprep.subr.mxu0 0.0
        %721 = vmatpush1.msra.mxu0 0.0
        %722 = vmatprep.subr.mxu0 0.0
        %723 = vmatpush1.msra.mxu0 0.0
        %724 = vmatprep.subr.mxu0 0.0
        %725 = vmatpush1.msra.mxu0 0.0
        %726 = vmatprep.subr.mxu0 0.0
        %727 = vmatpush1.msra.mxu0 0.0
        %728 = vmatprep.subr.mxu0 0.0
        %729 = vmatpush1.msra.mxu0 0.0
        %730 = vmatprep.subr.mxu0 0.0
        %731 = vmatpush1.msra.mxu0 0.0
        %732 = vmatprep.subr.mxu0 0.0
        %733 = vmatpush1.msra.mxu0 0.0
        %734 = vmatprep.mubr.f32.mxu0 0.0
        %735 = vmatmul.mubr.f32.gmra.mrb[0].mxu0 %v587
        %v736 = vpop.f32.mrb[0].mxu0
        %v737 = vadd.f32 0.0, %v736
        %v738 = vpop.f32.mrb[0].mxu0
        %v739 = vadd.f32 0.0, %v738
        %740 = vmatprep.mubr.f32.mxu0 0.0
        %741 = vmatmul.mubr.f32.gmra.mrb[0].mxu0 %v590
        %v742 = vpop.f32.mrb[0].mxu0
        %v743 = vadd.f32 0.0, %v742
        %v744 = vpop.f32.mrb[0].mxu0
        %v745 = vadd.f32 0.0, %v744
        %746 = vmatprep.mubr.f32.mxu0 0.0
        %747 = vmatmul.mubr.f32.gmra.mrb[0].mxu0 %v593
        %v748 = vpop.f32.mrb[0].mxu0
        %v749 = vadd.f32 0.0, %v748
        %v750 = vpop.f32.mrb[0].mxu0
        %v751 = vadd.f32 0.0, %v750
        %752 = vmatprep.mubr.f32.mxu0 0.0
        %753 = vmatmul.mubr.f32.gmra.mrb[0].mxu0 %v596
        %v754 = vpop.f32.mrb[0].mxu0
        %v755 = vadd.f32 0.0, %v754
        %v756 = vpop.f32.mrb[0].mxu0
        %v757 = vadd.f32 0.0, %v756
        %758 = vmatprep.mubr.f32.mxu0 0.0
        %759 = vmatmul.mubr.f32.gmra.mrb[0].mxu0 %v599
        %v760 = vpop.f32.mrb[0].mxu0
        %v761 = vadd.f32 0.0, %v760
        %v762 = vpop.f32.mrb[0].mxu0
        %v763 = vadd.f32 0.0, %v762
        %764 = vmatprep.mubr.f32.mxu0 0.0
        %765 = vmatmul.mubr.f32.gmra.mrb[0].mxu0 %v602
        %v766 = vpop.f32.mrb[0].mxu0
        %v767 = vadd.f32 0.0, %v766
        %v768 = vpop.f32.mrb[0].mxu0
        %v769 = vadd.f32 0.0, %v768
        %770 = vmatprep.mubr.f32.mxu0 0.0
        %771 = vmatmul.mubr.f32.gmra.mrb[0].mxu0 %v605
        %v772 = vpop.f32.mrb[0].mxu0
        %v773 = vadd.f32 0.0, %v772
        %v774 = vpop.f32.mrb[0].mxu0
        %v775 = vadd.f32 0.0, %v774
        %776 = vmatprep.mubr.f32.mxu0 0.0
        %777 = vmatmul.mubr.f32.gmra.mrb[0].mxu0 %v608
        %v778 = vpop.f32.mrb[0].mxu0
        %v779 = vadd.f32 0.0, %v778
        %v780 = vpop.f32.mrb[0].mxu0
        %v781 = vadd.f32 0.0, %v780
        %782 = vmatprep.mubr.f32.mxu0 0.0
        %783 = vmatmul.mubr.f32.gmra.mrb[0].mxu0 %v611
        %v784 = vpop.f32.mrb[0].mxu0
        %v785 = vadd.f32 0.0, %v784
        %v786 = vpop.f32.mrb[0].mxu0
        %v787 = vadd.f32 0.0, %v786
        %788 = vmatprep.mubr.f32.mxu0 0.0
        %789 = vmatmul.mubr.f32.gmra.mrb[0].mxu0 %v614
        %v790 = vpop.f32.mrb[0].mxu0
        %v791 = vadd.f32 0.0, %v790
        %v792 = vpop.f32.mrb[0].mxu0
        %v793 = vadd.f32 0.0, %v792
        %794 = vmatprep.mubr.f32.mxu0 0.0
        %795 = vmatmul.mubr.f32.gmra.mrb[0].mxu0 %v617
        %v796 = vpop.f32.mrb[0].mxu0
        %v797 = vadd.f32 0.0, %v796
        %v798 = vpop.f32.mrb[0].mxu0
        %v799 = vadd.f32 0.0, %v798
        %800 = vmatprep.mubr.f32.mxu0 0.0
        %801 = vmatmul.mubr.f32.gmra.mrb[0].mxu0 %v620
        %v802 = vpop.f32.mrb[0].mxu0
        %v803 = vadd.f32 0.0, %v802
        %v804 = vpop.f32.mrb[0].mxu0
        %v805 = vadd.f32 0.0, %v804
        %806 = vmatprep.mubr.f32.mxu0 0.0
        %807 = vmatmul.mubr.f32.gmra.mrb[0].mxu0 %v623
        %v808 = vpop.f32.mrb[0].mxu0
        %v809 = vadd.f32 0.0, %v808
        %v810 = vpop.f32.mrb[0].mxu0
        %v811 = vadd.f32 0.0, %v810
        %812 = vmatprep.mubr.f32.mxu0 0.0
        %813 = vmatmul.mubr.f32.gmra.mrb[0].mxu0 %v626
        %v814 = vpop.f32.mrb[0].mxu0
        %v815 = vadd.f32 0.0, %v814
        %v816 = vpop.f32.mrb[0].mxu0
        %v817 = vadd.f32 0.0, %v816
        %818 = vmatprep.mubr.f32.mxu0 0.0
        %819 = vmatmul.mubr.f32.gmra.mrb[0].mxu0 %v629
        %v820 = vpop.f32.mrb[0].mxu0
        %v821 = vadd.f32 0.0, %v820
        %v822 = vpop.f32.mrb[0].mxu0
        %v823 = vadd.f32 0.0, %v822
        %824 = vmatprep.mubr.f32.mxu0 0.0
        %825 = vmatmul.mubr.f32.gmra.mrb[0].mxu0 %v632
        %v826 = vpop.f32.mrb[0].mxu0
        %v827 = vadd.f32 0.0, %v826
        %v828 = vpop.f32.mrb[0].mxu0
        %v829 = vadd.f32 0.0, %v828
        %830 = vmatprep.mubr.f32.mxu0 0.0
        %831 = vmatmul.mubr.f32.gmra.mrb[0].mxu0 %v635
        %v832 = vpop.f32.mrb[0].mxu0
        %v833 = vadd.f32 0.0, %v832
        %v834 = vpop.f32.mrb[0].mxu0
        %v835 = vadd.f32 0.0, %v834
        %836 = vmatprep.mubr.f32.mxu0 0.0
        %837 = vmatmul.mubr.f32.gmra.mrb[0].mxu0 %v638
        %v838 = vpop.f32.mrb[0].mxu0
        %v839 = vadd.f32 0.0, %v838
        %v840 = vpop.f32.mrb[0].mxu0
        %v841 = vadd.f32 0.0, %v840
        %842 = vmatprep.mubr.f32.mxu0 0.0
        %843 = vmatmul.mubr.f32.gmra.mrb[0].mxu0 %v641
        %v844 = vpop.f32.mrb[0].mxu0
        %v845 = vadd.f32 0.0, %v844
        %v846 = vpop.f32.mrb[0].mxu0
        %v847 = vadd.f32 0.0, %v846
        %848 = vmatprep.mubr.f32.mxu0 0.0
        %849 = vmatmul.mubr.f32.gmra.mrb[0].mxu0 %v644
        %v850 = vpop.f32.mrb[0].mxu0
        %v851 = vadd.f32 0.0, %v850
        %v852 = vpop.f32.mrb[0].mxu0
        %v853 = vadd.f32 0.0, %v852
        %854 = vmatprep.mubr.f32.mxu0 0.0
        %855 = vmatmul.mubr.f32.gmra.mrb[0].mxu0 %v647
        %v856 = vpop.f32.mrb[0].mxu0
        %v857 = vadd.f32 0.0, %v856
        %v858 = vpop.f32.mrb[0].mxu0
        %v859 = vadd.f32 0.0, %v858
        %860 = vmatprep.mubr.f32.mxu0 0.0
        %861 = vmatmul.mubr.f32.gmra.mrb[0].mxu0 %v650
        %v862 = vpop.f32.mrb[0].mxu0
        %v863 = vadd.f32 0.0, %v862
        %v864 = vpop.f32.mrb[0].mxu0
        %v865 = vadd.f32 0.0, %v864
        %866 = vmatprep.mubr.f32.mxu0 0.0
        %867 = vmatmul.mubr.f32.gmra.mrb[0].mxu0 %v653
        %v868 = vpop.f32.mrb[0].mxu0
        %v869 = vadd.f32 0.0, %v868
        %v870 = vpop.f32.mrb[0].mxu0
        %v871 = vadd.f32 0.0, %v870
        %872 = vmatprep.mubr.f32.mxu0 0.0
        %873 = vmatmul.mubr.f32.gmra.mrb[0].mxu0 %v656
        %v874 = vpop.f32.mrb[0].mxu0
        %v875 = vadd.f32 0.0, %v874
        %v876 = vpop.f32.mrb[0].mxu0
        %v877 = vadd.f32 0.0, %v876
        %878 = vmatprep.mubr.f32.mxu0 0.0
        %879 = vmatmul.mubr.f32.gmra.mrb[0].mxu0 %v659
        %v880 = vpop.f32.mrb[0].mxu0
        %v881 = vadd.f32 0.0, %v880
        %v882 = vpop.f32.mrb[0].mxu0
        %v883 = vadd.f32 0.0, %v882
        %884 = vmatprep.mubr.f32.mxu0 0.0
        %885 = vmatmul.mubr.f32.gmra.mrb[0].mxu0 %v662
        %v886 = vpop.f32.mrb[0].mxu0
        %v887 = vadd.f32 0.0, %v886
        %v888 = vpop.f32.mrb[0].mxu0
        %v889 = vadd.f32 0.0, %v888
        %890 = vmatprep.mubr.f32.mxu0 0.0
        %891 = vmatmul.mubr.f32.gmra.mrb[0].mxu0 %v665
        %v892 = vpop.f32.mrb[0].mxu0
        %v893 = vadd.f32 0.0, %v892
        %v894 = vpop.f32.mrb[0].mxu0
        %v895 = vadd.f32 0.0, %v894
        %896 = vmatprep.mubr.f32.mxu0 0.0
        %897 = vmatmul.mubr.f32.gmra.mrb[0].mxu0 %v668
        %v898 = vpop.f32.mrb[0].mxu0
        %v899 = vadd.f32 0.0, %v898
        %v900 = vpop.f32.mrb[0].mxu0
        %v901 = vadd.f32 0.0, %v900
        %902 = vdwg.mxu0
        %903 = vst [vmem:[%s243] sm:$0xff] %v737
        %vm904 = vcmask 785408
        %905 = vst.msk [vmem:[%s243 + $0x8] sm:$0xff] %vm904, %v739
        %906 = vst [vmem:[%s243 + $0x10] sm:$0xff] %v743
        %907 = vst.msk [vmem:[%s243 + $0x18] sm:$0xff] %vm904, %v745
        %908 = vst [vmem:[%s243 + $0x20] sm:$0xff] %v749
        %909 = vst.msk [vmem:[%s243 + $0x28] sm:$0xff] %vm904, %v751
        %910 = vst [vmem:[%s243 + $0x30] sm:$0xff] %v755
        %911 = vst.msk [vmem:[%s243 + $0x38] sm:$0xff] %vm904, %v757
        %912 = vst [vmem:[%s243 + $0x40] sm:$0xff] %v761
        %913 = vst.msk [vmem:[%s243 + $0x48] sm:$0xff] %vm904, %v763
        %914 = vst [vmem:[%s243 + $0x50] sm:$0xff] %v767
        %915 = vst.msk [vmem:[%s243 + $0x58] sm:$0xff] %vm904, %v769
        %916 = vst [vmem:[%s243 + $0x60] sm:$0xff] %v773
        %917 = vst.msk [vmem:[%s243 + $0x68] sm:$0xff] %vm904, %v775
        %918 = vst [vmem:[%s243 + $0x70] sm:$0xff] %v779
        %919 = vst.msk [vmem:[%s243 + $0x78] sm:$0xff] %vm904, %v781
        %920 = vst [vmem:[%s243 + $0x80] sm:$0xff] %v785
        %921 = vst.msk [vmem:[%s243 + $0x88] sm:$0xff] %vm904, %v787
        %922 = vst [vmem:[%s243 + $0x90] sm:$0xff] %v791
        %923 = vst.msk [vmem:[%s243 + $0x98] sm:$0xff] %vm904, %v793
        %924 = vst [vmem:[%s243 + $0xa0] sm:$0xff] %v797
        %925 = vst.msk [vmem:[%s243 + $0xa8] sm:$0xff] %vm904, %v799
        %926 = vst [vmem:[%s243 + $0xb0] sm:$0xff] %v803
        %927 = vst.msk [vmem:[%s243 + $0xb8] sm:$0xff] %vm904, %v805
        %928 = vst [vmem:[%s243 + $0xc0] sm:$0xff] %v809
        %929 = vst.msk [vmem:[%s243 + $0xc8] sm:$0xff] %vm904, %v811
        %930 = vst [vmem:[%s243 + $0xd0] sm:$0xff] %v815
        %931 = vst.msk [vmem:[%s243 + $0xd8] sm:$0xff] %vm904, %v817
        %932 = vst [vmem:[%s243 + $0xe0] sm:$0xff] %v821
        %933 = vst.msk [vmem:[%s243 + $0xe8] sm:$0xff] %vm904, %v823
        %934 = vst [vmem:[%s243 + $0xf0] sm:$0xff] %v827
        %935 = vst.msk [vmem:[%s243 + $0xf8] sm:$0xff] %vm904, %v829
        %936 = vst [vmem:[%s243 + $0x100] sm:$0xff] %v833
        %937 = vst.msk [vmem:[%s243 + $0x108] sm:$0xff] %vm904, %v835
        %938 = vst [vmem:[%s243 + $0x110] sm:$0xff] %v839
        %939 = vst.msk [vmem:[%s243 + $0x118] sm:$0xff] %vm904, %v841
        %940 = vst [vmem:[%s243 + $0x120] sm:$0xff] %v845
        %941 = vst.msk [vmem:[%s243 + $0x128] sm:$0xff] %vm904, %v847
        %942 = vst [vmem:[%s243 + $0x130] sm:$0xff] %v851
        %943 = vst.msk [vmem:[%s243 + $0x138] sm:$0xff] %vm904, %v853
        %944 = vst [vmem:[%s243 + $0x140] sm:$0xff] %v857
        %945 = vst.msk [vmem:[%s243 + $0x148] sm:$0xff] %vm904, %v859
        %946 = vst [vmem:[%s243 + $0x150] sm:$0xff] %v863
        %947 = vst.msk [vmem:[%s243 + $0x158] sm:$0xff] %vm904, %v865
        %948 = vst [vmem:[%s243 + $0x160] sm:$0xff] %v869
        %949 = vst.msk [vmem:[%s243 + $0x168] sm:$0xff] %vm904, %v871
        %950 = vst [vmem:[%s243 + $0x170] sm:$0xff] %v875
        %951 = vst.msk [vmem:[%s243 + $0x178] sm:$0xff] %vm904, %v877
        %952 = vst [vmem:[%s243 + $0x180] sm:$0xff] %v881
        %953 = vst.msk [vmem:[%s243 + $0x188] sm:$0xff] %vm904, %v883
        %954 = vst [vmem:[%s243 + $0x190] sm:$0xff] %v887
        %955 = vst.msk [vmem:[%s243 + $0x198] sm:$0xff] %vm904, %v889
        %956 = vst [vmem:[%s243 + $0x1a0] sm:$0xff] %v893
        %957 = vst.msk [vmem:[%s243 + $0x1a8] sm:$0xff] %vm904, %v895
        %958 = vst [vmem:[%s243 + $0x1b0] sm:$0xff] %v899
        %959 = vst.msk [vmem:[%s243 + $0x1b8] sm:$0xff] %vm904, %v901
        %s960 = sand.u32 %s121, 1
        %s961 = scalar_lea.sflag [#allocation3], %s960
        %s962 = sand.u32 %s121, 1
        %s963 = smul.addr %s962, 16
        %s964 = scalar_lea.vmem [#allocation5], %s963
        %s965 = sand.u32 %s147, 1
        %s966 = scalar_lea.sflag [#allocation7], %s965
        %s967 = sand.u32 %s147, 1
        %s968 = smul.addr %s967, 448
        %s969 = scalar_lea.vmem [#allocation6], %s968
        // Predicated region
        $region41: #{fam_forward.3} parent=35 // pred_check
          %p970 = pneg %p131
        $region42: #{fam_forward.3} parent=35 // pred_check_branch
          %972 = sbr.rel (%p970) target = $region44
        $region43: #{fam_forward.3} parent=35 // pred_region
          %s973 = smul.u32 2, %s24
          %s975 = ssub.s32 256, 256
          %976 = vsyncadd %s961, %s975
          %s977 = smul.addr %s973, 128
          %s978 = scalar_lea.hbm %s4, %s977
          %s979 = sshll.u32 %s964, 4
          %s980 = int_to_ptr.vmem [resolvable:$true] %s979
          %985 = dma.vmem_to_hbm [thread:$0]  %s980, 256, %s978, %s961, 128, 128, 8
        $region44: #{fam_forward.3} parent=35 // pred_fallthru
          _
        // Predicated region
        $region45: #{fam_forward.3} parent=35 // pred_check
          %p986 = pneg %p157
        $region46: #{fam_forward.3} parent=35 // pred_check_branch
          %988 = sbr.rel (%p986) target = $region48
        $region47: #{fam_forward.3} parent=35 // pred_region
          %s989 = smul.u32 28, %s24
          %s991 = ssub.s32 7168, 7168
          %992 = vsyncadd %s966, %s991
          %s993 = smul.addr %s989, 2
          %s994 = smul.addr %s993, 128
          %s995 = scalar_lea.hbm %s5, %s994
          %s996 = sshll.u32 %s969, 4
          %s997 = int_to_ptr.vmem [resolvable:$true] %s996
          %1002 = dma.vmem_to_hbm [thread:$0]  %s997, 7168, %s995, %s966, 256, 256, 16
        $region48: #{fam_forward.3} parent=35 // pred_fallthru
          _
      $region36: #{fam_forward.3} parent=5 // pred_fallthru
        _
      %p1003 = scmp.le.s32.totalorder 2, %s19
      // Predicated region
      $region49: #{fam_forward.3} parent=5 // pred_check
        %p1004 = pneg %p1003
      $region50: #{fam_forward.3} parent=5 // pred_check_branch
        %1006 = sbr.rel (%p1004) target = $region52
      $region51: #{fam_forward.3} parent=5 // pred_region
        %s1007 = ssub.s32 %s19, 2
        // Predicated region
        $region53: #{fam_forward.3} parent=51 // pred_check
          %p1008 = pneg %p137
        $region54: #{fam_forward.3} parent=51 // pred_check_branch
          %1010 = sbr.rel (%p1008) target = $region56
        $region55: #{fam_forward.3} parent=51 // pred_region
          %s1011 = sand.u32 %s122, 1
          %s1012 = scalar_lea.sflag [#allocation3], %s1011
          %s1013 = sand.u32 %s122, 1
          %s1014 = smul.addr %s1013, 16
          %s1015 = scalar_lea.vmem [#allocation5], %s1014
          %1016 = dma.done %s1012, 256
        $region56: #{fam_forward.3} parent=51 // pred_fallthru
          _
        // Predicated region
        $region57: #{fam_forward.3} parent=51 // pred_check
          %p1017 = pneg %p163
        $region58: #{fam_forward.3} parent=51 // pred_check_branch
          %1019 = sbr.rel (%p1017) target = $region60
        $region59: #{fam_forward.3} parent=51 // pred_region
          %s1020 = sand.u32 %s148, 1
          %s1021 = scalar_lea.sflag [#allocation7], %s1020
          %s1022 = sand.u32 %s148, 1
          %s1023 = smul.addr %s1022, 448
          %s1024 = scalar_lea.vmem [#allocation6], %s1023
          %1025 = dma.done %s1021, 7168
        $region60: #{fam_forward.3} parent=51 // pred_fallthru
          _
      $region52: #{fam_forward.3} parent=5 // pred_fallthru
        _
    $region6: #{fam_forward.3} parent=1 // loop_footer
      %s23 = sadd.s32 1, %s19
    $region7: #{fam_forward.3} parent=1 // loop_footer_branch
      %18 = sbr.rel target = $region3
    $region8: #{fam_forward.3} parent=1 // loop_exit
      _
    %1026 = vsyncpa [#allocation3], 1
    %s1027 = scalar_lea.sflag [#allocation3], 1
    %1028 = vsyncpa %s1027, 1
    %1029 = vsyncpa [#allocation7], 1
    %s1030 = scalar_lea.sflag [#allocation7], 1
    %1031 = vsyncpa %s1030, 1
    %1032 = vsyncpa [#allocation4], 1
    %s1033 = scalar_lea.sflag [#allocation4], 1
    %1034 = vsyncpa %s1033, 1

// kernel: fam_forward.2
$region0: #{fam_forward.2}
  #allocation0 [shape = 'u32[]', space=smem, size = 0x4, offset = 0x4, fixed_abs, tag = 'smem constant byte address 0x4 - core index']
  #allocation1 [shape = 'u32[144,128]{1,0:T(1,128)}', space=vmem, size = 0x12000, scoped, tag = 'internal scratch']
  #allocation2 [shape = 'f32[4,512]{1,0:T(4,128)}', space=vmem, size = 0x2000, scoped, tag = 'scratch operand']
  #allocation3 [shape = 'f32[6,512]{1,0:T(8,128)}', space=vmem, size = 0x4000, scoped, tag = 'scratch operand']
  #allocation4 [shape = 'f32[196,256]{1,0:T(8,128)}', space=vmem, size = 0x32000, scoped, tag = 'scratch operand']
  #allocation5 [shape = 'f32[294,256]{1,0:T(8,128)}', space=vmem, size = 0x4a000, scoped, tag = 'scratch operand']
  %s0 = inlined_call_operand.vmem [shape: f32[2,4,256], index: 0, kind: input, shape index: {}]
  %s1 = inlined_call_operand.vmem [shape: f32[7,256], index: 1, kind: input, shape index: {}]
  %s2 = inlined_call_operand.vmem [shape: f32[6,196], index: 2, kind: input, shape index: {}]
  %s3 = inlined_call_operand.vmem [shape: f32[6,1], index: 3, kind: input, shape index: {}]
  %s4 = inlined_call_operand.vmem [shape: f32[6,1], index: 4, kind: input, shape index: {}]
  %s5 = inlined_call_operand.vmem [shape: f32[4,294], index: 5, kind: input, shape index: {}]
  %s6 = inlined_call_operand.vmem [shape: f32[4,1], index: 6, kind: input, shape index: {}]
  %s7 = inlined_call_operand.vmem [shape: f32[4,1], index: 7, kind: input, shape index: {}]
  %s8 = inlined_call_operand.vmem [shape: f32[2,1,256], index: 8, kind: output, shape index: {}]
  %s9 = sld [smem:[#allocation0]]
  $region65: #{fam_forward.2} parent=0
    _
  %s11 = ssub.s32 1, %s9
  %s12 = scalar_select 0, %s11, %s9
  loop: start=0, step=1, limit=4
  $region2: #{fam_forward.2} parent=0 // loop_pre_header
    _
  $region3: #{fam_forward.2} parent=0 // loop_header
    %s14 = sphi 0, %s18
    %p15 = scmp.ge.s32.totalorder %s14, 4
    %s24 = sphi 0, %s26
    %s27 = sphi 0, %s24
    %s28 = sphi 0, %s27
    %s44 = sphi 0, %s28
    %s48 = sphi 0, %s48
    %s50 = sphi 0, %s48
    %s51 = sphi 0, %s50
    %s65 = sphi 0, %s51
    %s69 = sphi 0, %s69
    %s71 = sphi 0, %s69
    %s72 = sphi 0, %s71
    %s86 = sphi 0, %s72
    %s90 = sphi 0, %s90
    %s92 = sphi 0, %s90
    %s93 = sphi 0, %s92
    %s107 = sphi 0, %s93
    %s111 = sphi 0, %s111
    %s113 = sphi 0, %s111
    %s114 = sphi 0, %s113
    %s128 = sphi 0, %s114
    %s132 = sphi 0, %s132
    %s134 = sphi 0, %s132
    %s135 = sphi 0, %s134
    %s149 = sphi 0, %s135
    %s153 = sphi 0, %s153
    %s155 = sphi 0, %s153
    %s156 = sphi 0, %s155
    %s170 = sphi 0, %s156
    %s174 = sphi 0, %s174
    %s176 = sphi 0, %s174
    %s177 = sphi 0, %s176
    %s191 = sphi 0, %s177
    %s197 = sphi 0, %s199
    %s200 = sphi 0, %s197
    %s201 = sphi 0, %s200
    %s217 = sphi 0, %s201
  $region4: #{fam_forward.2} parent=0 // loop_header_branch
    %17 = sbr.rel (%p15) target = $region8
  $region5: #{fam_forward.2} parent=0 // loop_body
    %s19 = ssub.s32 %s14, 1
    %s20 = ssub.s32 %s14, 2
    %s21 = sadd.s32 %s14, 1
    %s22 = ssub.s32 %s14, %s21
    %p23 = scmp.eq.s32.totalorder %s22, 0
    %s25 = sadd.s32 %s24, 1
    %s26 = scalar_select %p23, %s24, %s25
    %p29 = pneg %p23
    %p30 = scmp.eq.s32.totalorder %s14, 1
    %p31 = por %p29, %p30
    %p32 = scmp.ne.s32.totalorder %s24, %s27
    %p33 = scmp.eq.s32.totalorder %s14, 0
    %p34 = por %p32, %p33
    %p35 = scmp.ne.s32.totalorder %s24, %s27
    %p36 = scmp.eq.s32.totalorder %s19, 1
    %p37 = por %p35, %p36
    %p38 = scmp.ne.s32.totalorder %s27, %s28
    %p39 = scmp.eq.s32.totalorder %s19, 0
    %p40 = por %p38, %p39
    %p41 = scmp.ne.s32.totalorder %s27, %s28
    %p42 = scmp.eq.s32.totalorder %s20, 1
    %p43 = por %p41, %p42
    %p45 = scmp.ne.s32.totalorder %s28, %s44
    %p46 = scmp.eq.s32.totalorder %s20, 0
    %p47 = por %p45, %p46
    %s49 = sadd.s32 %s48, 1
    %p52 = scmp.eq.s32.totalorder %s14, 1
    %p53 = scmp.ne.s32.totalorder %s48, %s50
    %p54 = scmp.eq.s32.totalorder %s14, 0
    %p55 = por %p53, %p54
    %p56 = scmp.ne.s32.totalorder %s48, %s50
    %p57 = scmp.eq.s32.totalorder %s19, 1
    %p58 = por %p56, %p57
    %p59 = scmp.ne.s32.totalorder %s50, %s51
    %p60 = scmp.eq.s32.totalorder %s19, 0
    %p61 = por %p59, %p60
    %p62 = scmp.ne.s32.totalorder %s50, %s51
    %p63 = scmp.eq.s32.totalorder %s20, 1
    %p64 = por %p62, %p63
    %p66 = scmp.ne.s32.totalorder %s51, %s65
    %p67 = scmp.eq.s32.totalorder %s20, 0
    %p68 = por %p66, %p67
    %s70 = sadd.s32 %s69, 1
    %p73 = scmp.eq.s32.totalorder %s14, 1
    %p74 = scmp.ne.s32.totalorder %s69, %s71
    %p75 = scmp.eq.s32.totalorder %s14, 0
    %p76 = por %p74, %p75
    %p77 = scmp.ne.s32.totalorder %s69, %s71
    %p78 = scmp.eq.s32.totalorder %s19, 1
    %p79 = por %p77, %p78
    %p80 = scmp.ne.s32.totalorder %s71, %s72
    %p81 = scmp.eq.s32.totalorder %s19, 0
    %p82 = por %p80, %p81
    %p83 = scmp.ne.s32.totalorder %s71, %s72
    %p84 = scmp.eq.s32.totalorder %s20, 1
    %p85 = por %p83, %p84
    %p87 = scmp.ne.s32.totalorder %s72, %s86
    %p88 = scmp.eq.s32.totalorder %s20, 0
    %p89 = por %p87, %p88
    %s91 = sadd.s32 %s90, 1
    %p94 = scmp.eq.s32.totalorder %s14, 1
    %p95 = scmp.ne.s32.totalorder %s90, %s92
    %p96 = scmp.eq.s32.totalorder %s14, 0
    %p97 = por %p95, %p96
    %p98 = scmp.ne.s32.totalorder %s90, %s92
    %p99 = scmp.eq.s32.totalorder %s19, 1
    %p100 = por %p98, %p99
    %p101 = scmp.ne.s32.totalorder %s92, %s93
    %p102 = scmp.eq.s32.totalorder %s19, 0
    %p103 = por %p101, %p102
    %p104 = scmp.ne.s32.totalorder %s92, %s93
    %p105 = scmp.eq.s32.totalorder %s20, 1
    %p106 = por %p104, %p105
    %p108 = scmp.ne.s32.totalorder %s93, %s107
    %p109 = scmp.eq.s32.totalorder %s20, 0
    %p110 = por %p108, %p109
    %s112 = sadd.s32 %s111, 1
    %p115 = scmp.eq.s32.totalorder %s14, 1
    %p116 = scmp.ne.s32.totalorder %s111, %s113
    %p117 = scmp.eq.s32.totalorder %s14, 0
    %p118 = por %p116, %p117
    %p119 = scmp.ne.s32.totalorder %s111, %s113
    %p120 = scmp.eq.s32.totalorder %s19, 1
    %p121 = por %p119, %p120
    %p122 = scmp.ne.s32.totalorder %s113, %s114
    %p123 = scmp.eq.s32.totalorder %s19, 0
    %p124 = por %p122, %p123
    %p125 = scmp.ne.s32.totalorder %s113, %s114
    %p126 = scmp.eq.s32.totalorder %s20, 1
    %p127 = por %p125, %p126
    %p129 = scmp.ne.s32.totalorder %s114, %s128
    %p130 = scmp.eq.s32.totalorder %s20, 0
    %p131 = por %p129, %p130
    %s133 = sadd.s32 %s132, 1
    %p136 = scmp.eq.s32.totalorder %s14, 1
    %p137 = scmp.ne.s32.totalorder %s132, %s134
    %p138 = scmp.eq.s32.totalorder %s14, 0
    %p139 = por %p137, %p138
    %p140 = scmp.ne.s32.totalorder %s132, %s134
    %p141 = scmp.eq.s32.totalorder %s19, 1
    %p142 = por %p140, %p141
    %p143 = scmp.ne.s32.totalorder %s134, %s135
    %p144 = scmp.eq.s32.totalorder %s19, 0
    %p145 = por %p143, %p144
    %p146 = scmp.ne.s32.totalorder %s134, %s135
    %p147 = scmp.eq.s32.totalorder %s20, 1
    %p148 = por %p146, %p147
    %p150 = scmp.ne.s32.totalorder %s135, %s149
    %p151 = scmp.eq.s32.totalorder %s20, 0
    %p152 = por %p150, %p151
    %s154 = sadd.s32 %s153, 1
    %p157 = scmp.eq.s32.totalorder %s14, 1
    %p158 = scmp.ne.s32.totalorder %s153, %s155
    %p159 = scmp.eq.s32.totalorder %s14, 0
    %p160 = por %p158, %p159
    %p161 = scmp.ne.s32.totalorder %s153, %s155
    %p162 = scmp.eq.s32.totalorder %s19, 1
    %p163 = por %p161, %p162
    %p164 = scmp.ne.s32.totalorder %s155, %s156
    %p165 = scmp.eq.s32.totalorder %s19, 0
    %p166 = por %p164, %p165
    %p167 = scmp.ne.s32.totalorder %s155, %s156
    %p168 = scmp.eq.s32.totalorder %s20, 1
    %p169 = por %p167, %p168
    %p171 = scmp.ne.s32.totalorder %s156, %s170
    %p172 = scmp.eq.s32.totalorder %s20, 0
    %p173 = por %p171, %p172
    %s175 = sadd.s32 %s174, 1
    %p178 = scmp.eq.s32.totalorder %s14, 1
    %p179 = scmp.ne.s32.totalorder %s174, %s176
    %p180 = scmp.eq.s32.totalorder %s14, 0
    %p181 = por %p179, %p180
    %p182 = scmp.ne.s32.totalorder %s174, %s176
    %p183 = scmp.eq.s32.totalorder %s19, 1
    %p184 = por %p182, %p183
    %p185 = scmp.ne.s32.totalorder %s176, %s177
    %p186 = scmp.eq.s32.totalorder %s19, 0
    %p187 = por %p185, %p186
    %p188 = scmp.ne.s32.totalorder %s176, %s177
    %p189 = scmp.eq.s32.totalorder %s20, 1
    %p190 = por %p188, %p189
    %p192 = scmp.ne.s32.totalorder %s177, %s191
    %p193 = scmp.eq.s32.totalorder %s20, 0
    %p194 = por %p192, %p193
    %s195 = ssub.s32 %s14, %s21
    %p196 = scmp.eq.s32.totalorder %s195, 0
    %s198 = sadd.s32 %s197, 1
    %s199 = scalar_select %p196, %s197, %s198
    %p202 = pneg %p196
    %p203 = scmp.eq.s32.totalorder %s14, 1
    %p204 = por %p202, %p203
    %p205 = scmp.ne.s32.totalorder %s197, %s200
    %p206 = scmp.eq.s32.totalorder %s14, 0
    %p207 = por %p205, %p206
    %p208 = scmp.ne.s32.totalorder %s197, %s200
    %p209 = scmp.eq.s32.totalorder %s19, 1
    %p210 = por %p208, %p209
    %p211 = scmp.ne.s32.totalorder %s200, %s201
    %p212 = scmp.eq.s32.totalorder %s19, 0
    %p213 = por %p211, %p212
    %p214 = scmp.ne.s32.totalorder %s200, %s201
    %p215 = scmp.eq.s32.totalorder %s20, 1
    %p216 = por %p214, %p215
    %p218 = scmp.ne.s32.totalorder %s201, %s217
    %p219 = scmp.eq.s32.totalorder %s20, 0
    %p220 = por %p218, %p219
    %p221 = scmp.le.s32.totalorder 1, %s14
    %p222 = scmp.lt.s32.totalorder %s14, 3
    %p223 = pnand %p221, %p222
    %p224 = pneg %p223
    // Predicated region
    $region9: #{fam_forward.2} parent=5 // pred_check
      _
    $region10: #{fam_forward.2} parent=5 // pred_check_branch
      %226 = sbr.rel (%p223) target = $region12
    $region11: #{fam_forward.2} parent=5 // pred_region
      %s227 = ssub.s32 %s14, 1
      // Predicated region
      $region13: #{fam_forward.2} parent=11 // pred_check
        %p228 = pneg %p61
      $region14: #{fam_forward.2} parent=11 // pred_check_branch
        %230 = sbr.rel (%p228) target = $region16
      $region15: #{fam_forward.2} parent=11 // pred_region
        _
      $region16: #{fam_forward.2} parent=11 // pred_fallthru
        _
      // Predicated region
      $region17: #{fam_forward.2} parent=11 // pred_check
        %p231 = pneg %p82
      $region18: #{fam_forward.2} parent=11 // pred_check_branch
        %233 = sbr.rel (%p231) target = $region20
      $region19: #{fam_forward.2} parent=11 // pred_region
        _
      $region20: #{fam_forward.2} parent=11 // pred_fallthru
        _
      // Predicated region
      $region21: #{fam_forward.2} parent=11 // pred_check
        %p234 = pneg %p103
      $region22: #{fam_forward.2} parent=11 // pred_check_branch
        %236 = sbr.rel (%p234) target = $region24
      $region23: #{fam_forward.2} parent=11 // pred_region
        _
      $region24: #{fam_forward.2} parent=11 // pred_fallthru
        _
      // Predicated region
      $region25: #{fam_forward.2} parent=11 // pred_check
        %p237 = pneg %p124
      $region26: #{fam_forward.2} parent=11 // pred_check_branch
        %239 = sbr.rel (%p237) target = $region28
      $region27: #{fam_forward.2} parent=11 // pred_region
        _
      $region28: #{fam_forward.2} parent=11 // pred_fallthru
        _
      // Predicated region
      $region29: #{fam_forward.2} parent=11 // pred_check
        %p240 = pneg %p145
      $region30: #{fam_forward.2} parent=11 // pred_check_branch
        %242 = sbr.rel (%p240) target = $region32
      $region31: #{fam_forward.2} parent=11 // pred_region
        _
      $region32: #{fam_forward.2} parent=11 // pred_fallthru
        _
      // Predicated region
      $region33: #{fam_forward.2} parent=11 // pred_check
        %p243 = pneg %p166
      $region34: #{fam_forward.2} parent=11 // pred_check_branch
        %245 = sbr.rel (%p243) target = $region36
      $region35: #{fam_forward.2} parent=11 // pred_region
        _
      $region36: #{fam_forward.2} parent=11 // pred_fallthru
        _
      // Predicated region
      $region37: #{fam_forward.2} parent=11 // pred_check
        %p246 = pneg %p187
      $region38: #{fam_forward.2} parent=11 // pred_check_branch
        %248 = sbr.rel (%p246) target = $region40
      $region39: #{fam_forward.2} parent=11 // pred_region
        _
      $region40: #{fam_forward.2} parent=11 // pred_fallthru
        _
    $region12: #{fam_forward.2} parent=5 // pred_fallthru
      _
    %p249 = scmp.lt.s32.totalorder %s14, 2
    // Predicated region
    $region41: #{fam_forward.2} parent=5 // pred_check
      %p250 = pneg %p249
    $region42: #{fam_forward.2} parent=5 // pred_check_branch
      %252 = sbr.rel (%p250) target = $region44
    $region43: #{fam_forward.2} parent=5 // pred_region
      // Predicated region
      $region45: #{fam_forward.2} parent=43 // pred_check
        %p253 = pneg %p34
      $region46: #{fam_forward.2} parent=43 // pred_check_branch
        %255 = sbr.rel (%p253) target = $region48
      $region47: #{fam_forward.2} parent=43 // pred_region
        %p256 = scmp.lt.s32.totalorder %s14, 1
        %s257 = scalar_select %p256, %s14, 1
        %s258 = smul.addr %s257, 2
        %s259 = smul.addr %s258, 4
        %s260 = scalar_lea.vmem %s0, %s259
      $region48: #{fam_forward.2} parent=43 // pred_fallthru
        _
    $region44: #{fam_forward.2} parent=5 // pred_fallthru
      _
    %p261 = scmp.le.s32.totalorder 1, %s14
    %p262 = scmp.lt.s32.totalorder %s14, 3
    %p263 = pnand %p261, %p262
    %p264 = pneg %p263
    // Predicated region
    $region49: #{fam_forward.2} parent=5 // pred_check
      _
    $region50: #{fam_forward.2} parent=5 // pred_check_branch
      %266 = sbr.rel (%p263) target = $region52
    $region51: #{fam_forward.2} parent=5 // pred_region
      %s267 = ssub.s32 %s14, 1
      %p268 = scmp.lt.s32.totalorder %s19, 1
      %s269 = scalar_select %p268, %s19, 1
      %s270 = smul.addr %s269, 2
      %s271 = smul.addr %s270, 4
      %s272 = scalar_lea.vmem %s0, %s271
      %p273 = pneg %p40
      %p274 = pneg %p37
      %p275 = pneg %p61
      %p276 = pneg %p58
      %p277 = pneg %p82
      %p278 = pneg %p79
      %p279 = pneg %p103
      %p280 = pneg %p100
      %p281 = pneg %p124
      %p282 = pneg %p121
      %p283 = pneg %p145
      %p284 = pneg %p142
      %p285 = pneg %p166
      %p286 = pneg %p163
      %p287 = pneg %p187
      %p288 = pneg %p184
      %p289 = pneg %p213
      %p290 = pneg %p210
      %p291 = scmp.lt.s32.totalorder %s19, 1
      %s292 = scalar_select %p291, %s19, 1
      %s293 = smul.addr %s292, 2
      %s294 = scalar_lea.vmem %s8, %s293
      %p295 = scmp.lt.s32.totalorder %s19, 1
      %s296 = scalar_select %p295, %s19, 1
      %s297 = smul.addr %s296, 2
      %s298 = smul.addr %s297, 4
      %s299 = scalar_lea.vmem %s0, %s298
      %p300 = scmp.lt.s32.totalorder %s19, 1
      %s301 = scalar_select %p300, %s19, 1
      %s302 = smul.addr %s301, 2
      %s303 = scalar_lea.vmem %s8, %s302
      %304 = vst [vmem:[#allocation2] sm:$0xf] 0.0
      %305 = vst [vmem:[#allocation2 + $0xc] sm:$0xf] 0.0
      %306 = vst [vmem:[#allocation3] sm:$0x3f] 0.0
      %307 = vst [vmem:[#allocation3 + $0x18] sm:$0x3f] 0.0
      %v308 = vld [vmem:[%s299] sm:$0xff]
      %309 = vst [vmem:[#allocation2 + $0x4] sm:$0xff] %v308
      %v310 = vld [vmem:[#allocation2] sm:$0xff]
      %v311 = vld [vmem:[#allocation2 + $0x8] sm:$0xf]
      %v312 = vld [vmem:[%s1] ss:$8 sm:$0x3]
      %v314 = vlaneseq
      %v315 = vshrl.u32 %v314, 7
      %v316 = vsub.s32 0, %v315
      %v317 = vrot.slane %v312, %v316
      %v318 = vlaneseq
      %v319 = vshrl.u32 %v318, 7
      %v320 = vsub.s32 1, %v319
      %v321 = vrot.slane %v312, %v320
      %v322 = vcombine.low %v317, %v321
      %323 = vrot.lane.b32.xlu0 %v322, 77
      %v324 = vpop.permute.xlu0 %323
      %v325 = vrot.slane %v324, 4
      %vm326 = vcmask 629760
      %v327 = vsel %vm326, %v325, %v324
      %v330 = vmul.f32 %v310, %v327
      %v331 = vmul.f32 %v311, %v325
      %v334 = vcombine.high %v330, %v330
      %335 = vrot.lane.b32.xlu0 %v330, 51
      %v336 = vpop.permute.xlu0 %335
      %337 = vrot.lane.b32.xlu0 %v334, 51
      %v338 = vpop.permute.xlu0 %337
      %339 = vrot.lane.b32.xlu0 %v331, 51
      %v340 = vpop.permute.xlu0 %339
      %vm341 = vcmask 416768
      %v342 = vsel %vm341, %v336, %v338
      %v343 = vsel %vm341, %v338, %v340
      %346 = vst [vmem:[#allocation4] sm:$0xf] %v342
      %347 = vst [vmem:[#allocation4 + $0x8] sm:$0xf] %v343
      %v348 = vld [vmem:[#allocation2] sm:$0xff]
      %v349 = vld [vmem:[#allocation2 + $0x8] sm:$0xf]
      %s350 = scalar_lea.vmem %s1, 1
      %v351 = vld [vmem:[%s350] ss:$8 sm:$0x3]
      %v353 = vlaneseq
      %v354 = vshrl.u32 %v353, 7
      %v355 = vsub.s32 0, %v354
      %v356 = vrot.slane %v351, %v355
      %v357 = vlaneseq
      %v358 = vshrl.u32 %v357, 7
      %v359 = vsub.s32 1, %v358
      %v360 = vrot.slane %v351, %v359
      %v361 = vcombine.low %v356, %v360
      %362 = vrot.lane.b32.xlu0 %v361, 78
      %v363 = vpop.permute.xlu0 %362
      %v364 = vrot.slane %v363, 4
      %vm365 = vcmask 637952
      %v366 = vsel %vm365, %v364, %v363
      %v369 = vmul.f32 %v348, %v366
      %v370 = vmul.f32 %v349, %v364
      %v373 = vcombine.low %v369, %v369
      %v374 = vcombine.low %v370, %v370
      %375 = vrot.lane.b32.xlu0 %v373, 50
      %v376 = vpop.permute.xlu0 %375
      %377 = vrot.lane.b32.xlu0 %v369, 50
      %v378 = vpop.permute.xlu0 %377
      %379 = vrot.lane.b32.xlu0 %v374, 50
      %v380 = vpop.permute.xlu0 %379
      %vm381 = vcmask 408576
      %v382 = vsel %vm381, %v376, %v378
      %v383 = vsel %vm381, %v378, %v380
      %386 = vst [vmem:[#allocation4] sm:$0xf0] %v382
      %387 = vst [vmem:[#allocation4 + $0x8] sm:$0xf0] %v383
      %v388 = vld [vmem:[#allocation2] sm:$0xff]
      %v389 = vld [vmem:[#allocation2 + $0x8] sm:$0xf]
      %s390 = scalar_lea.vmem %s1, 2
      %v391 = vld [vmem:[%s390] ss:$8 sm:$0x3]
      %v393 = vlaneseq
      %v394 = vshrl.u32 %v393, 7
      %v395 = vsub.s32 0, %v394
      %v396 = vrot.slane %v391, %v395
      %v397 = vlaneseq
      %v398 = vshrl.u32 %v397, 7
      %v399 = vsub.s32 1, %v398
      %v400 = vrot.slane %v391, %v399
      %v401 = vcombine.low %v396, %v400
      %402 = vrot.lane.b32.xlu0 %v401, 79
      %v403 = vpop.permute.xlu0 %402
      %v404 = vrot.slane %v403, 4
      %vm405 = vcmask 646144
      %v406 = vsel %vm405, %v404, %v403
      %v409 = vmul.f32 %v388, %v406
      %v410 = vmul.f32 %v389, %v404
      %v413 = vcombine.high %v409, %v409
      %414 = vrot.lane.b32.xlu0 %v409, 49
      %v415 = vpop.permute.xlu0 %414
      %416 = vrot.lane.b32.xlu0 %v413, 49
      %v417 = vpop.permute.xlu0 %416
      %418 = vrot.lane.b32.xlu0 %v410, 49
      %v419 = vpop.permute.xlu0 %418
      %vm420 = vcmask 400384
      %v421 = vsel %vm420, %v415, %v417
      %v422 = vsel %vm420, %v417, %v419
      %425 = vst [vmem:[#allocation4 + $0x10] sm:$0xf] %v421
      %426 = vst [vmem:[#allocation4 + $0x18] sm:$0xf] %v422
      %v427 = vld [vmem:[#allocation2] sm:$0xff]
      %v428 = vld [vmem:[#allocation2 + $0x8] sm:$0xf]
      %v431 = vcombine.low %v427, %v427
      %v432 = vcombine.low %v428, %v428
      %433 = vrot.lane.b32.xlu0 %v431, 48
      %v434 = vpop.permute.xlu0 %433
      %435 = vrot.lane.b32.xlu0 %v427, 48
      %v436 = vpop.permute.xlu0 %435
      %437 = vrot.lane.b32.xlu0 %v432, 48
      %v438 = vpop.permute.xlu0 %437
      %vm439 = vcmask 392192
      %v440 = vsel %vm439, %v434, %v436
      %v441 = vsel %vm439, %v436, %v438
      %444 = vst [vmem:[#allocation4 + $0x10] sm:$0xf0] %v440
      %445 = vst [vmem:[#allocation4 + $0x18] sm:$0xf0] %v441
      %v446 = vld [vmem:[#allocation2] sm:$0xff]
      %v447 = vld [vmem:[#allocation2 + $0x8] sm:$0xf]
      %s448 = scalar_lea.vmem %s1, 4
      %v449 = vld [vmem:[%s448] ss:$8 sm:$0x3]
      %v451 = vlaneseq
      %v452 = vshrl.u32 %v451, 7
      %v453 = vsub.s32 0, %v452
      %v454 = vrot.slane %v449, %v453
      %v455 = vlaneseq
      %v456 = vshrl.u32 %v455, 7
      %v457 = vsub.s32 1, %v456
      %v458 = vrot.slane %v449, %v457
      %v459 = vcombine.low %v454, %v458
      %460 = vrot.lane.b32.xlu0 %v459, 81
      %v461 = vpop.permute.xlu0 %460
      %v462 = vrot.slane %v461, 4
      %vm463 = vcmask 662528
      %v464 = vsel %vm463, %v462, %v461
      %v467 = vmul.f32 %v446, %v464
      %v468 = vmul.f32 %v447, %v462
      %v471 = vcombine.high %v467, %v467
      %472 = vrot.lane.b32.xlu0 %v467, 47
      %v473 = vpop.permute.xlu0 %472
      %474 = vrot.lane.b32.xlu0 %v471, 47
      %v475 = vpop.permute.xlu0 %474
      %476 = vrot.lane.b32.xlu0 %v468, 47
      %v477 = vpop.permute.xlu0 %476
      %vm478 = vcmask 384000
      %v479 = vsel %vm478, %v473, %v475
      %v480 = vsel %vm478, %v475, %v477
      %483 = vst [vmem:[#allocation4 + $0x20] sm:$0xf] %v479
      %484 = vst [vmem:[#allocation4 + $0x28] sm:$0xf] %v480
      %v485 = vld [vmem:[#allocation2] sm:$0xff]
      %v486 = vld [vmem:[#allocation2 + $0x8] sm:$0xf]
      %s487 = scalar_lea.vmem %s1, 5
      %v488 = vld [vmem:[%s487] ss:$8 sm:$0x3]
      %v490 = vlaneseq
      %v491 = vshrl.u32 %v490, 7
      %v492 = vsub.s32 0, %v491
      %v493 = vrot.slane %v488, %v492
      %v494 = vlaneseq
      %v495 = vshrl.u32 %v494, 7
      %v496 = vsub.s32 1, %v495
      %v497 = vrot.slane %v488, %v496
      %v498 = vcombine.low %v493, %v497
      %499 = vrot.lane.b32.xlu0 %v498, 82
      %v500 = vpop.permute.xlu0 %499
      %v501 = vrot.slane %v500, 4
      %vm502 = vcmask 670720
      %v503 = vsel %vm502, %v501, %v500
      %v506 = vmul.f32 %v485, %v503
      %v507 = vmul.f32 %v486, %v501
      %v510 = vcombine.low %v506, %v506
      %v511 = vcombine.low %v507, %v507
      %512 = vrot.lane.b32.xlu0 %v510, 46
      %v513 = vpop.permute.xlu0 %512
      %514 = vrot.lane.b32.xlu0 %v506, 46
      %v515 = vpop.permute.xlu0 %514
      %516 = vrot.lane.b32.xlu0 %v511, 46
      %v517 = vpop.permute.xlu0 %516
      %vm518 = vcmask 375808
      %v519 = vsel %vm518, %v513, %v515
      %v520 = vsel %vm518, %v515, %v517
      %523 = vst [vmem:[#allocation4 + $0x20] sm:$0xf0] %v519
      %524 = vst [vmem:[#allocation4 + $0x28] sm:$0xf0] %v520
      %v525 = vld [vmem:[#allocation2] sm:$0xff]
      %v526 = vld [vmem:[#allocation2 + $0x8] sm:$0xf]
      %s527 = scalar_lea.vmem %s1, 6
      %v528 = vld [vmem:[%s527] ss:$8 sm:$0x3]
      %v530 = vlaneseq
      %v531 = vshrl.u32 %v530, 7
      %v532 = vsub.s32 0, %v531
      %v533 = vrot.slane %v528, %v532
      %v534 = vlaneseq
      %v535 = vshrl.u32 %v534, 7
      %v536 = vsub.s32 1, %v535
      %v537 = vrot.slane %v528, %v536
      %v538 = vcombine.low %v533, %v537
      %539 = vrot.lane.b32.xlu0 %v538, 83
      %v540 = vpop.permute.xlu0 %539
      %v541 = vrot.slane %v540, 4
      %vm542 = vcmask 678912
      %v543 = vsel %vm542, %v541, %v540
      %v546 = vmul.f32 %v525, %v543
      %v547 = vmul.f32 %v526, %v541
      %v550 = vcombine.high %v546, %v546
      %551 = vrot.lane.b32.xlu0 %v546, 45
      %v552 = vpop.permute.xlu0 %551
      %553 = vrot.lane.b32.xlu0 %v550, 45
      %v554 = vpop.permute.xlu0 %553
      %555 = vrot.lane.b32.xlu0 %v547, 45
      %v556 = vpop.permute.xlu0 %555
      %vm557 = vcmask 367616
      %v558 = vsel %vm557, %v552, %v554
      %v559 = vsel %vm557, %v554, %v556
      %562 = vst [vmem:[#allocation4 + $0x30] sm:$0xf] %v558
      %563 = vst [vmem:[#allocation4 + $0x38] sm:$0xf] %v559
      %v564 = vld [vmem:[#allocation2] sm:$0xff]
      %v565 = vld [vmem:[#allocation2 + $0x8] sm:$0xf]
      %v566 = vld [vmem:[%s1] ss:$8 sm:$0x3]
      %v568 = vlaneseq
      %v569 = vshrl.u32 %v568, 7
      %v570 = vsub.s32 0, %v569
      %v571 = vrot.slane %v566, %v570
      %v572 = vlaneseq
      %v573 = vshrl.u32 %v572, 7
      %v574 = vsub.s32 1, %v573
      %v575 = vrot.slane %v566, %v574
      %v576 = vcombine.low %v571, %v575
      %577 = vrot.lane.b32.xlu0 %v576, 93
      %v578 = vpop.permute.xlu0 %577
      %v579 = vrot.slane %v578, 4
      %vm580 = vcmask 760832
      %v581 = vsel %vm580, %v579, %v578
      %v584 = vmul.f32 %v564, %v581
      %v585 = vmul.f32 %v565, %v579
      %v588 = vcombine.low %v584, %v584
      %v589 = vcombine.low %v585, %v585
      %590 = vrot.lane.b32.xlu0 %v588, 35
      %v591 = vpop.permute.xlu0 %590
      %592 = vrot.lane.b32.xlu0 %v584, 35
      %v593 = vpop.permute.xlu0 %592
      %594 = vrot.lane.b32.xlu0 %v589, 35
      %v595 = vpop.permute.xlu0 %594
      %vm596 = vcmask 285696
      %v597 = vsel %vm596, %v591, %v593
      %v598 = vsel %vm596, %v593, %v595
      %601 = vst [vmem:[#allocation4 + $0x30] sm:$0xf0] %v597
      %602 = vst [vmem:[#allocation4 + $0x38] sm:$0xf0] %v598
      %v603 = vld [vmem:[#allocation2] sm:$0xff]
      %v604 = vld [vmem:[#allocation2 + $0x8] sm:$0xf]
      %v605 = vld [vmem:[%s350] ss:$8 sm:$0x3]
      %v607 = vlaneseq
      %v608 = vshrl.u32 %v607, 7
      %v609 = vsub.s32 0, %v608
      %v610 = vrot.slane %v605, %v609
      %v611 = vlaneseq
      %v612 = vshrl.u32 %v611, 7
      %v613 = vsub.s32 1, %v612
      %v614 = vrot.slane %v605, %v613
      %v615 = vcombine.low %v610, %v614
      %616 = vrot.lane.b32.xlu0 %v615, 94
      %v617 = vpop.permute.xlu0 %616
      %v618 = vrot.slane %v617, 4
      %vm619 = vcmask 769024
      %v620 = vsel %vm619, %v618, %v617
      %v623 = vmul.f32 %v603, %v620
      %v624 = vmul.f32 %v604, %v618
      %v627 = vcombine.high %v623, %v623
      %628 = vrot.lane.b32.xlu0 %v623, 34
      %v629 = vpop.permute.xlu0 %628
      %630 = vrot.lane.b32.xlu0 %v627, 34
      %v631 = vpop.permute.xlu0 %630
      %632 = vrot.lane.b32.xlu0 %v624, 34
      %v633 = vpop.permute.xlu0 %632
      %vm634 = vcmask 277504
      %v635 = vsel %vm634, %v629, %v631
      %v636 = vsel %vm634, %v631, %v633
      %639 = vst [vmem:[#allocation4 + $0x40] sm:$0xf] %v635
      %640 = vst [vmem:[#allocation4 + $0x48] sm:$0xf] %v636
      %v641 = vld [vmem:[#allocation2] sm:$0xff]
      %v642 = vld [vmem:[#allocation2 + $0x8] sm:$0xf]
      %v643 = vld [vmem:[%s390] ss:$8 sm:$0x3]
      %v645 = vlaneseq
      %v646 = vshrl.u32 %v645, 7
      %v647 = vsub.s32 0, %v646
      %v648 = vrot.slane %v643, %v647
      %v649 = vlaneseq
      %v650 = vshrl.u32 %v649, 7
      %v651 = vsub.s32 1, %v650
      %v652 = vrot.slane %v643, %v651
      %v653 = vcombine.low %v648, %v652
      %654 = vrot.lane.b32.xlu0 %v653, 95
      %v655 = vpop.permute.xlu0 %654
      %v656 = vrot.slane %v655, 4
      %vm657 = vcmask 777216
      %v658 = vsel %vm657, %v656, %v655
      %v661 = vmul.f32 %v641, %v658
      %v662 = vmul.f32 %v642, %v656
      %v665 = vcombine.low %v661, %v661
      %v666 = vcombine.low %v662, %v662
      %667 = vrot.lane.b32.xlu0 %v665, 33
      %v668 = vpop.permute.xlu0 %667
      %669 = vrot.lane.b32.xlu0 %v661, 33
      %v670 = vpop.permute.xlu0 %669
      %671 = vrot.lane.b32.xlu0 %v666, 33
      %v672 = vpop.permute.xlu0 %671
      %vm673 = vcmask 269312
      %v674 = vsel %vm673, %v668, %v670
      %v675 = vsel %vm673, %v670, %v672
      %678 = vst [vmem:[#allocation4 + $0x40] sm:$0xf0] %v674
      %679 = vst [vmem:[#allocation4 + $0x48] sm:$0xf0] %v675
      %v680 = vld [vmem:[#allocation2] sm:$0xff]
      %v681 = vld [vmem:[#allocation2 + $0x8] sm:$0xf]
      %v684 = vcombine.high %v680, %v680
      %685 = vrot.lane.b32.xlu0 %v680, 32
      %v686 = vpop.permute.xlu0 %685
      %687 = vrot.lane.b32.xlu0 %v684, 32
      %v688 = vpop.permute.xlu0 %687
      %689 = vrot.lane.b32.xlu0 %v681, 32
      %v690 = vpop.permute.xlu0 %689
      %vm691 = vcmask 261120
      %v692 = vsel %vm691, %v686, %v688
      %v693 = vsel %vm691, %v688, %v690
      %696 = vst [vmem:[#allocation4 + $0x50] sm:$0xf] %v692
      %697 = vst [vmem:[#allocation4 + $0x58] sm:$0xf] %v693
      %v698 = vld [vmem:[#allocation2] sm:$0xff]
      %v699 = vld [vmem:[#allocation2 + $0x8] sm:$0xf]
      %v700 = vld [vmem:[%s448] ss:$8 sm:$0x3]
      %v702 = vlaneseq
      %v703 = vshrl.u32 %v702, 7
      %v704 = vsub.s32 0, %v703
      %v705 = vrot.slane %v700, %v704
      %v706 = vlaneseq
      %v707 = vshrl.u32 %v706, 7
      %v708 = vsub.s32 1, %v707
      %v709 = vrot.slane %v700, %v708
      %v710 = vcombine.low %v705, %v709
      %711 = vrot.lane.b32.xlu0 %v710, 97
      %v712 = vpop.permute.xlu0 %711
      %v713 = vrot.slane %v712, 4
      %vm714 = vcmask 793600
      %v715 = vsel %vm714, %v713, %v712
      %v718 = vmul.f32 %v698, %v715
      %v719 = vmul.f32 %v699, %v713
      %v722 = vcombine.low %v718, %v718
      %v723 = vcombine.low %v719, %v719
      %724 = vrot.lane.b32.xlu0 %v722, 31
      %v725 = vpop.permute.xlu0 %724
      %726 = vrot.lane.b32.xlu0 %v718, 31
      %v727 = vpop.permute.xlu0 %726
      %728 = vrot.lane.b32.xlu0 %v723, 31
      %v729 = vpop.permute.xlu0 %728
      %vm730 = vcmask 252928
      %v731 = vsel %vm730, %v725, %v727
      %v732 = vsel %vm730, %v727, %v729
      %735 = vst [vmem:[#allocation4 + $0x50] sm:$0xf0] %v731
      %736 = vst [vmem:[#allocation4 + $0x58] sm:$0xf0] %v732
      %v737 = vld [vmem:[#allocation2] sm:$0xff]
      %v738 = vld [vmem:[#allocation2 + $0x8] sm:$0xf]
      %v739 = vld [vmem:[%s487] ss:$8 sm:$0x3]
      %v741 = vlaneseq
      %v742 = vshrl.u32 %v741, 7
      %v743 = vsub.s32 0, %v742
      %v744 = vrot.slane %v739, %v743
      %v745 = vlaneseq
      %v746 = vshrl.u32 %v745, 7
      %v747 = vsub.s32 1, %v746
      %v748 = vrot.slane %v739, %v747
      %v749 = vcombine.low %v744, %v748
      %750 = vrot.lane.b32.xlu0 %v749, 98
      %v751 = vpop.permute.xlu0 %750
      %v752 = vrot.slane %v751, 4
      %vm753 = vcmask 801792
      %v754 = vsel %vm753, %v752, %v751
      %v757 = vmul.f32 %v737, %v754
      %v758 = vmul.f32 %v738, %v752
      %v761 = vcombine.high %v757, %v757
      %762 = vrot.lane.b32.xlu0 %v757, 30
      %v763 = vpop.permute.xlu0 %762
      %764 = vrot.lane.b32.xlu0 %v761, 30
      %v765 = vpop.permute.xlu0 %764
      %766 = vrot.lane.b32.xlu0 %v758, 30
      %v767 = vpop.permute.xlu0 %766
      %vm768 = vcmask 244736
      %v769 = vsel %vm768, %v763, %v765
      %v770 = vsel %vm768, %v765, %v767
      %773 = vst [vmem:[#allocation4 + $0x60] sm:$0xf] %v769
      %774 = vst [vmem:[#allocation4 + $0x68] sm:$0xf] %v770
      %v775 = vld [vmem:[#allocation2] sm:$0xff]
      %v776 = vld [vmem:[#allocation2 + $0x8] sm:$0xf]
      %v777 = vld [vmem:[%s527] ss:$8 sm:$0x3]
      %v779 = vlaneseq
      %v780 = vshrl.u32 %v779, 7
      %v781 = vsub.s32 0, %v780
      %v782 = vrot.slane %v777, %v781
      %v783 = vlaneseq
      %v784 = vshrl.u32 %v783, 7
      %v785 = vsub.s32 1, %v784
      %v786 = vrot.slane %v777, %v785
      %v787 = vcombine.low %v782, %v786
      %788 = vrot.lane.b32.xlu0 %v787, 99
      %v789 = vpop.permute.xlu0 %788
      %v790 = vrot.slane %v789, 4
      %vm791 = vcmask 809984
      %v792 = vsel %vm791, %v790, %v789
      %v795 = vmul.f32 %v775, %v792
      %v796 = vmul.f32 %v776, %v790
      %v799 = vcombine.low %v795, %v795
      %v800 = vcombine.low %v796, %v796
      %801 = vrot.lane.b32.xlu0 %v799, 29
      %v802 = vpop.permute.xlu0 %801
      %803 = vrot.lane.b32.xlu0 %v795, 29
      %v804 = vpop.permute.xlu0 %803
      %805 = vrot.lane.b32.xlu0 %v800, 29
      %v806 = vpop.permute.xlu0 %805
      %vm807 = vcmask 236544
      %v808 = vsel %vm807, %v802, %v804
      %v809 = vsel %vm807, %v804, %v806
      %812 = vst [vmem:[#allocation4 + $0x60] sm:$0xf0] %v808
      %813 = vst [vmem:[#allocation4 + $0x68] sm:$0xf0] %v809
      %v814 = vld [vmem:[#allocation2] sm:$0xff]
      %v815 = vld [vmem:[#allocation2 + $0x8] sm:$0xf]
      %v816 = vld [vmem:[%s1] ss:$8 sm:$0x3]
      %v818 = vlaneseq
      %v819 = vshrl.u32 %v818, 7
      %v820 = vsub.s32 0, %v819
      %v821 = vrot.slane %v816, %v820
      %v822 = vlaneseq
      %v823 = vshrl.u32 %v822, 7
      %v824 = vsub.s32 1, %v823
      %v825 = vrot.slane %v816, %v824
      %v826 = vcombine.low %v821, %v825
      %827 = vrot.lane.b32.xlu0 %v826, 109
      %v828 = vpop.permute.xlu0 %827
      %v829 = vrot.slane %v828, 4
      %vm830 = vcmask 891904
      %v831 = vsel %vm830, %v829, %v828
      %v834 = vmul.f32 %v814, %v831
      %v835 = vmul.f32 %v815, %v829
      %v838 = vcombine.high %v834, %v834
      %839 = vrot.lane.b32.xlu0 %v834, 19
      %v840 = vpop.permute.xlu0 %839
      %841 = vrot.lane.b32.xlu0 %v838, 19
      %v842 = vpop.permute.xlu0 %841
      %843 = vrot.lane.b32.xlu0 %v835, 19
      %v844 = vpop.permute.xlu0 %843
      %vm845 = vcmask 154624
      %v846 = vsel %vm845, %v840, %v842
      %v847 = vsel %vm845, %v842, %v844
      %850 = vst [vmem:[#allocation4 + $0x70] sm:$0xf] %v846
      %851 = vst [vmem:[#allocation4 + $0x78] sm:$0xf] %v847
      %v852 = vld [vmem:[#allocation2] sm:$0xff]
      %v853 = vld [vmem:[#allocation2 + $0x8] sm:$0xf]
      %v854 = vld [vmem:[%s350] ss:$8 sm:$0x3]
      %v856 = vlaneseq
      %v857 = vshrl.u32 %v856, 7
      %v858 = vsub.s32 0, %v857
      %v859 = vrot.slane %v854, %v858
      %v860 = vlaneseq
      %v861 = vshrl.u32 %v860, 7
      %v862 = vsub.s32 1, %v861
      %v863 = vrot.slane %v854, %v862
      %v864 = vcombine.low %v859, %v863
      %865 = vrot.lane.b32.xlu0 %v864, 110
      %v866 = vpop.permute.xlu0 %865
      %v867 = vrot.slane %v866, 4
      %vm868 = vcmask 900096
      %v869 = vsel %vm868, %v867, %v866
      %v872 = vmul.f32 %v852, %v869
      %v873 = vmul.f32 %v853, %v867
      %v876 = vcombine.low %v872, %v872
      %v877 = vcombine.low %v873, %v873
      %878 = vrot.lane.b32.xlu0 %v876, 18
      %v879 = vpop.permute.xlu0 %878
      %880 = vrot.lane.b32.xlu0 %v872, 18
      %v881 = vpop.permute.xlu0 %880
      %882 = vrot.lane.b32.xlu0 %v877, 18
      %v883 = vpop.permute.xlu0 %882
      %vm884 = vcmask 146432
      %v885 = vsel %vm884, %v879, %v881
      %v886 = vsel %vm884, %v881, %v883
      %889 = vst [vmem:[#allocation4 + $0x70] sm:$0xf0] %v885
      %890 = vst [vmem:[#allocation4 + $0x78] sm:$0xf0] %v886
      %v891 = vld [vmem:[#allocation2] sm:$0xff]
      %v892 = vld [vmem:[#allocation2 + $0x8] sm:$0xf]
      %v893 = vld [vmem:[%s390] ss:$8 sm:$0x3]
      %v895 = vlaneseq
      %v896 = vshrl.u32 %v895, 7
      %v897 = vsub.s32 0, %v896
      %v898 = vrot.slane %v893, %v897
      %v899 = vlaneseq
      %v900 = vshrl.u32 %v899, 7
      %v901 = vsub.s32 1, %v900
      %v902 = vrot.slane %v893, %v901
      %v903 = vcombine.low %v898, %v902
      %904 = vrot.lane.b32.xlu0 %v903, 111
      %v905 = vpop.permute.xlu0 %904
      %v906 = vrot.slane %v905, 4
      %vm907 = vcmask 908288
      %v908 = vsel %vm907, %v906, %v905
      %v911 = vmul.f32 %v891, %v908
      %v912 = vmul.f32 %v892, %v906
      %v915 = vcombine.high %v911, %v911
      %916 = vrot.lane.b32.xlu0 %v911, 17
      %v917 = vpop.permute.xlu0 %916
      %918 = vrot.lane.b32.xlu0 %v915, 17
      %v919 = vpop.permute.xlu0 %918
      %920 = vrot.lane.b32.xlu0 %v912, 17
      %v921 = vpop.permute.xlu0 %920
      %vm922 = vcmask 138240
      %v923 = vsel %vm922, %v917, %v919
      %v924 = vsel %vm922, %v919, %v921
      %927 = vst [vmem:[#allocation4 + $0x80] sm:$0xf] %v923
      %928 = vst [vmem:[#allocation4 + $0x88] sm:$0xf] %v924
      %v929 = vld [vmem:[#allocation2] sm:$0xff]
      %v930 = vld [vmem:[#allocation2 + $0x8] sm:$0xf]
      %v933 = vcombine.low %v929, %v929
      %v934 = vcombine.low %v930, %v930
      %935 = vrot.lane.b32.xlu0 %v933, 16
      %v936 = vpop.permute.xlu0 %935
      %937 = vrot.lane.b32.xlu0 %v929, 16
      %v938 = vpop.permute.xlu0 %937
      %939 = vrot.lane.b32.xlu0 %v934, 16
      %v940 = vpop.permute.xlu0 %939
      %vm941 = vcmask 130048
      %v942 = vsel %vm941, %v936, %v938
      %v943 = vsel %vm941, %v938, %v940
      %946 = vst [vmem:[#allocation4 + $0x80] sm:$0xf0] %v942
      %947 = vst [vmem:[#allocation4 + $0x88] sm:$0xf0] %v943
      %v948 = vld [vmem:[#allocation2] sm:$0xff]
      %v949 = vld [vmem:[#allocation2 + $0x8] sm:$0xf]
      %v950 = vld [vmem:[%s448] ss:$8 sm:$0x3]
      %v952 = vlaneseq
      %v953 = vshrl.u32 %v952, 7
      %v954 = vsub.s32 0, %v953
      %v955 = vrot.slane %v950, %v954
      %v956 = vlaneseq
      %v957 = vshrl.u32 %v956, 7
      %v958 = vsub.s32 1, %v957
      %v959 = vrot.slane %v950, %v958
      %v960 = vcombine.low %v955, %v959
      %961 = vrot.lane.b32.xlu0 %v960, 113
      %v962 = vpop.permute.xlu0 %961
      %v963 = vrot.slane %v962, 4
      %vm964 = vcmask 924672
      %v965 = vsel %vm964, %v963, %v962
      %v968 = vmul.f32 %v948, %v965
      %v969 = vmul.f32 %v949, %v963
      %v972 = vcombine.high %v968, %v968
      %973 = vrot.lane.b32.xlu0 %v968, 15
      %v974 = vpop.permute.xlu0 %973
      %975 = vrot.lane.b32.xlu0 %v972, 15
      %v976 = vpop.permute.xlu0 %975
      %977 = vrot.lane.b32.xlu0 %v969, 15
      %v978 = vpop.permute.xlu0 %977
      %vm979 = vcmask 121856
      %v980 = vsel %vm979, %v974, %v976
      %v981 = vsel %vm979, %v976, %v978
      %984 = vst [vmem:[#allocation4 + $0x90] sm:$0xf] %v980
      %985 = vst [vmem:[#allocation4 + $0x98] sm:$0xf] %v981
      %v986 = vld [vmem:[#allocation2] sm:$0xff]
      %v987 = vld [vmem:[#allocation2 + $0x8] sm:$0xf]
      %v988 = vld [vmem:[%s487] ss:$8 sm:$0x3]
      %v990 = vlaneseq
      %v991 = vshrl.u32 %v990, 7
      %v992 = vsub.s32 0, %v991
      %v993 = vrot.slane %v988, %v992
      %v994 = vlaneseq
      %v995 = vshrl.u32 %v994, 7
      %v996 = vsub.s32 1, %v995
      %v997 = vrot.slane %v988, %v996
      %v998 = vcombine.low %v993, %v997
      %999 = vrot.lane.b32.xlu0 %v998, 114
      %v1000 = vpop.permute.xlu0 %999
      %v1001 = vrot.slane %v1000, 4
      %vm1002 = vcmask 932864
      %v1003 = vsel %vm1002, %v1001, %v1000
      %v1006 = vmul.f32 %v986, %v1003
      %v1007 = vmul.f32 %v987, %v1001
      %v1010 = vcombine.low %v1006, %v1006
      %v1011 = vcombine.low %v1007, %v1007
      %1012 = vrot.lane.b32.xlu0 %v1010, 14
      %v1013 = vpop.permute.xlu0 %1012
      %1014 = vrot.lane.b32.xlu0 %v1006, 14
      %v1015 = vpop.permute.xlu0 %1014
      %1016 = vrot.lane.b32.xlu0 %v1011, 14
      %v1017 = vpop.permute.xlu0 %1016
      %vm1018 = vcmask 113664
      %v1019 = vsel %vm1018, %v1013, %v1015
      %v1020 = vsel %vm1018, %v1015, %v1017
      %1023 = vst [vmem:[#allocation4 + $0x90] sm:$0xf0] %v1019
      %1024 = vst [vmem:[#allocation4 + $0x98] sm:$0xf0] %v1020
      %v1025 = vld [vmem:[#allocation2] sm:$0xff]
      %v1026 = vld [vmem:[#allocation2 + $0x8] sm:$0xf]
      %v1027 = vld [vmem:[%s527] ss:$8 sm:$0x3]
      %v1029 = vlaneseq
      %v1030 = vshrl.u32 %v1029, 7
      %v1031 = vsub.s32 0, %v1030
      %v1032 = vrot.slane %v1027, %v1031
      %v1033 = vlaneseq
      %v1034 = vshrl.u32 %v1033, 7
      %v1035 = vsub.s32 1, %v1034
      %v1036 = vrot.slane %v1027, %v1035
      %v1037 = vcombine.low %v1032, %v1036
      %1038 = vrot.lane.b32.xlu0 %v1037, 115
      %v1039 = vpop.permute.xlu0 %1038
      %v1040 = vrot.slane %v1039, 4
      %vm1041 = vcmask 941056
      %v1042 = vsel %vm1041, %v1040, %v1039
      %v1045 = vmul.f32 %v1025, %v1042
      %v1046 = vmul.f32 %v1026, %v1040
      %v1049 = vcombine.high %v1045, %v1045
      %1050 = vrot.lane.b32.xlu0 %v1045, 13
      %v1051 = vpop.permute.xlu0 %1050
      %1052 = vrot.lane.b32.xlu0 %v1049, 13
      %v1053 = vpop.permute.xlu0 %1052
      %1054 = vrot.lane.b32.xlu0 %v1046, 13
      %v1055 = vpop.permute.xlu0 %1054
      %vm1056 = vcmask 105472
      %v1057 = vsel %vm1056, %v1051, %v1053
      %v1058 = vsel %vm1056, %v1053, %v1055
      %1061 = vst [vmem:[#allocation4 + $0xa0] sm:$0xf] %v1057
      %1062 = vst [vmem:[#allocation4 + $0xa8] sm:$0xf] %v1058
      %v1063 = vld [vmem:[#allocation2] sm:$0xff]
      %v1064 = vld [vmem:[#allocation2 + $0x8] sm:$0xf]
      %v1065 = vld [vmem:[%s1] ss:$8 sm:$0x3]
      %v1067 = vlaneseq
      %v1068 = vshrl.u32 %v1067, 7
      %v1069 = vsub.s32 0, %v1068
      %v1070 = vrot.slane %v1065, %v1069
      %v1071 = vlaneseq
      %v1072 = vshrl.u32 %v1071, 7
      %v1073 = vsub.s32 1, %v1072
      %v1074 = vrot.slane %v1065, %v1073
      %v1075 = vcombine.low %v1070, %v1074
      %1076 = vrot.lane.b32.xlu0 %v1075, 125
      %v1077 = vpop.permute.xlu0 %1076
      %v1078 = vrot.slane %v1077, 4
      %vm1079 = vcmask 1022976
      %v1080 = vsel %vm1079, %v1078, %v1077
      %v1083 = vmul.f32 %v1063, %v1080
      %v1084 = vmul.f32 %v1064, %v1078
      %v1087 = vcombine.low %v1083, %v1083
      %v1088 = vcombine.low %v1084, %v1084
      %1089 = vrot.lane.b32.xlu0 %v1087, 3
      %v1090 = vpop.permute.xlu0 %1089
      %1091 = vrot.lane.b32.xlu0 %v1083, 3
      %v1092 = vpop.permute.xlu0 %1091
      %1093 = vrot.lane.b32.xlu0 %v1088, 3
      %v1094 = vpop.permute.xlu0 %1093
      %vm1095 = vcmask 23552
      %v1096 = vsel %vm1095, %v1090, %v1092
      %v1097 = vsel %vm1095, %v1092, %v1094
      %1100 = vst [vmem:[#allocation4 + $0xa0] sm:$0xf0] %v1096
      %1101 = vst [vmem:[#allocation4 + $0xa8] sm:$0xf0] %v1097
      %v1102 = vld [vmem:[#allocation2] sm:$0xff]
      %v1103 = vld [vmem:[#allocation2 + $0x8] sm:$0xf]
      %v1104 = vld [vmem:[%s350] ss:$8 sm:$0x3]
      %v1106 = vlaneseq
      %v1107 = vshrl.u32 %v1106, 7
      %v1108 = vsub.s32 0, %v1107
      %v1109 = vrot.slane %v1104, %v1108
      %v1110 = vlaneseq
      %v1111 = vshrl.u32 %v1110, 7
      %v1112 = vsub.s32 1, %v1111
      %v1113 = vrot.slane %v1104, %v1112
      %v1114 = vcombine.low %v1109, %v1113
      %1115 = vrot.lane.b32.xlu0 %v1114, 126
      %v1116 = vpop.permute.xlu0 %1115
      %v1117 = vrot.slane %v1116, 4
      %vm1118 = vcmask 1031168
      %v1119 = vsel %vm1118, %v1117, %v1116
      %v1122 = vmul.f32 %v1102, %v1119
      %v1123 = vmul.f32 %v1103, %v1117
      %v1126 = vcombine.high %v1122, %v1122
      %1127 = vrot.lane.b32.xlu0 %v1122, 2
      %v1128 = vpop.permute.xlu0 %1127
      %1129 = vrot.lane.b32.xlu0 %v1126, 2
      %v1130 = vpop.permute.xlu0 %1129
      %1131 = vrot.lane.b32.xlu0 %v1123, 2
      %v1132 = vpop.permute.xlu0 %1131
      %vm1133 = vcmask 15360
      %v1134 = vsel %vm1133, %v1128, %v1130
      %v1135 = vsel %vm1133, %v1130, %v1132
      %1138 = vst [vmem:[#allocation4 + $0xb0] sm:$0xf] %v1134
      %1139 = vst [vmem:[#allocation4 + $0xb8] sm:$0xf] %v1135
      %v1140 = vld [vmem:[#allocation2] sm:$0xff]
      %v1141 = vld [vmem:[#allocation2 + $0x8] sm:$0xf]
      %v1142 = vld [vmem:[%s390] ss:$8 sm:$0x3]
      %v1144 = vlaneseq
      %v1145 = vshrl.u32 %v1144, 7
      %v1146 = vsub.s32 0, %v1145
      %v1147 = vrot.slane %v1142, %v1146
      %v1148 = vlaneseq
      %v1149 = vshrl.u32 %v1148, 7
      %v1150 = vsub.s32 1, %v1149
      %v1151 = vrot.slane %v1142, %v1150
      %v1152 = vcombine.low %v1147, %v1151
      %1153 = vrot.lane.b32.xlu0 %v1152, 127
      %v1154 = vpop.permute.xlu0 %1153
      %v1155 = vrot.slane %v1154, 4
      %vm1156 = vcmask 1039360
      %v1157 = vsel %vm1156, %v1155, %v1154
      %v1160 = vmul.f32 %v1140, %v1157
      %v1161 = vmul.f32 %v1141, %v1155
      %v1164 = vcombine.low %v1160, %v1160
      %v1165 = vcombine.low %v1161, %v1161
      %1166 = vrot.lane.b32.xlu0 %v1164, 1
      %v1167 = vpop.permute.xlu0 %1166
      %1168 = vrot.lane.b32.xlu0 %v1160, 1
      %v1169 = vpop.permute.xlu0 %1168
      %1170 = vrot.lane.b32.xlu0 %v1165, 1
      %v1171 = vpop.permute.xlu0 %1170
      %vm1172 = vcmask 7168
      %v1173 = vsel %vm1172, %v1167, %v1169
      %v1174 = vsel %vm1172, %v1169, %v1171
      %1177 = vst [vmem:[#allocation4 + $0xb0] sm:$0xf0] %v1173
      %1178 = vst [vmem:[#allocation4 + $0xb8] sm:$0xf0] %v1174
      %v1179 = vld [vmem:[#allocation2 + $0x4] sm:$0xff]
      %v1181 = vcombine.high %v1179, %v1179
      %1183 = vst [vmem:[#allocation4 + $0xc0] sm:$0xf] %v1179
      %1184 = vst [vmem:[#allocation4 + $0xc8] sm:$0xf] %v1181
      %v1185 = vld [vmem:[#allocation2 + $0x4] sm:$0xff]
      %v1186 = vld [vmem:[#allocation2 + $0xc] sm:$0xf]
      %v1187 = vld [vmem:[%s448] ss:$8 sm:$0x3]
      %v1189 = vlaneseq
      %v1190 = vshrl.u32 %v1189, 7
      %v1191 = vsub.s32 0, %v1190
      %v1192 = vrot.slane %v1187, %v1191
      %v1193 = vlaneseq
      %v1194 = vshrl.u32 %v1193, 7
      %v1195 = vsub.s32 1, %v1194
      %v1196 = vrot.slane %v1187, %v1195
      %v1197 = vcombine.low %v1192, %v1196
      %1198 = vrot.lane.b32.xlu0 %v1197, 1
      %v1199 = vpop.permute.xlu0 %1198
      %v1200 = vrot.slane %v1199, 4
      %v1201 = vsel %vm1172, %v1200, %v1199
      %v1204 = vmul.f32 %v1185, %v1201
      %v1205 = vmul.f32 %v1186, %v1200
      %v1208 = vcombine.low %v1204, %v1204
      %v1209 = vcombine.low %v1205, %v1205
      %1210 = vrot.lane.b32.xlu0 %v1208, 127
      %v1211 = vpop.permute.xlu0 %1210
      %1212 = vrot.lane.b32.xlu0 %v1204, 127
      %v1213 = vpop.permute.xlu0 %1212
      %1214 = vrot.lane.b32.xlu0 %v1209, 127
      %v1215 = vpop.permute.xlu0 %1214
      %v1216 = vsel %vm1156, %v1211, %v1213
      %v1217 = vsel %vm1156, %v1213, %v1215
      %1220 = vst [vmem:[#allocation4 + $0xc0] sm:$0xf0] %v1216
      %1221 = vst [vmem:[#allocation4 + $0xc8] sm:$0xf0] %v1217
      %v1222 = vld [vmem:[#allocation2 + $0x4] sm:$0xff]
      %v1223 = vld [vmem:[#allocation2 + $0xc] sm:$0xf]
      %v1224 = vld [vmem:[%s487] ss:$8 sm:$0x3]
      %v1226 = vlaneseq
      %v1227 = vshrl.u32 %v1226, 7
      %v1228 = vsub.s32 0, %v1227
      %v1229 = vrot.slane %v1224, %v1228
      %v1230 = vlaneseq
      %v1231 = vshrl.u32 %v1230, 7
      %v1232 = vsub.s32 1, %v1231
      %v1233 = vrot.slane %v1224, %v1232
      %v1234 = vcombine.low %v1229, %v1233
      %1235 = vrot.lane.b32.xlu0 %v1234, 2
      %v1236 = vpop.permute.xlu0 %1235
      %v1237 = vrot.slane %v1236, 4
      %v1238 = vsel %vm1133, %v1237, %v1236
      %v1241 = vmul.f32 %v1222, %v1238
      %v1242 = vmul.f32 %v1223, %v1237
      %v1245 = vcombine.high %v1241, %v1241
      %1246 = vrot.lane.b32.xlu0 %v1241, 126
      %v1247 = vpop.permute.xlu0 %1246
      %1248 = vrot.lane.b32.xlu0 %v1245, 126
      %v1249 = vpop.permute.xlu0 %1248
      %1250 = vrot.lane.b32.xlu0 %v1242, 126
      %v1251 = vpop.permute.xlu0 %1250
      %v1252 = vsel %vm1118, %v1247, %v1249
      %v1253 = vsel %vm1118, %v1249, %v1251
      %1256 = vst [vmem:[#allocation4 + $0xd0] sm:$0xf] %v1252
      %1257 = vst [vmem:[#allocation4 + $0xd8] sm:$0xf] %v1253
      %v1258 = vld [vmem:[#allocation2 + $0x4] sm:$0xff]
      %v1259 = vld [vmem:[#allocation2 + $0xc] sm:$0xf]
      %v1260 = vld [vmem:[%s527] ss:$8 sm:$0x3]
      %v1262 = vlaneseq
      %v1263 = vshrl.u32 %v1262, 7
      %v1264 = vsub.s32 0, %v1263
      %v1265 = vrot.slane %v1260, %v1264
      %v1266 = vlaneseq
      %v1267 = vshrl.u32 %v1266, 7
      %v1268 = vsub.s32 1, %v1267
      %v1269 = vrot.slane %v1260, %v1268
      %v1270 = vcombine.low %v1265, %v1269
      %1271 = vrot.lane.b32.xlu0 %v1270, 3
      %v1272 = vpop.permute.xlu0 %1271
      %v1273 = vrot.slane %v1272, 4
      %v1274 = vsel %vm1095, %v1273, %v1272
      %v1277 = vmul.f32 %v1258, %v1274
      %v1278 = vmul.f32 %v1259, %v1273
      %v1281 = vcombine.low %v1277, %v1277
      %v1282 = vcombine.low %v1278, %v1278
      %1283 = vrot.lane.b32.xlu0 %v1281, 125
      %v1284 = vpop.permute.xlu0 %1283
      %1285 = vrot.lane.b32.xlu0 %v1277, 125
      %v1286 = vpop.permute.xlu0 %1285
      %1287 = vrot.lane.b32.xlu0 %v1282, 125
      %v1288 = vpop.permute.xlu0 %1287
      %v1289 = vsel %vm1079, %v1284, %v1286
      %v1290 = vsel %vm1079, %v1286, %v1288
      %1293 = vst [vmem:[#allocation4 + $0xd0] sm:$0xf0] %v1289
      %1294 = vst [vmem:[#allocation4 + $0xd8] sm:$0xf0] %v1290
      %v1295 = vld [vmem:[#allocation2 + $0x4] sm:$0xff]
      %v1296 = vld [vmem:[#allocation2 + $0xc] sm:$0xf]
      %v1297 = vld [vmem:[%s1] ss:$8 sm:$0x3]
      %v1299 = vlaneseq
      %v1300 = vshrl.u32 %v1299, 7
      %v1301 = vsub.s32 0, %v1300
      %v1302 = vrot.slane %v1297, %v1301
      %v1303 = vlaneseq
      %v1304 = vshrl.u32 %v1303, 7
      %v1305 = vsub.s32 1, %v1304
      %v1306 = vrot.slane %v1297, %v1305
      %v1307 = vcombine.low %v1302, %v1306
      %1308 = vrot.lane.b32.xlu0 %v1307, 13
      %v1309 = vpop.permute.xlu0 %1308
      %v1310 = vrot.slane %v1309, 4
      %v1311 = vsel %vm1056, %v1310, %v1309
      %v1314 = vmul.f32 %v1295, %v1311
      %v1315 = vmul.f32 %v1296, %v1310
      %v1318 = vcombine.high %v1314, %v1314
      %1319 = vrot.lane.b32.xlu0 %v1314, 115
      %v1320 = vpop.permute.xlu0 %1319
      %1321 = vrot.lane.b32.xlu0 %v1318, 115
      %v1322 = vpop.permute.xlu0 %1321
      %1323 = vrot.lane.b32.xlu0 %v1315, 115
      %v1324 = vpop.permute.xlu0 %1323
      %v1325 = vsel %vm1041, %v1320, %v1322
      %v1326 = vsel %vm1041, %v1322, %v1324
      %1329 = vst [vmem:[#allocation4 + $0xe0] sm:$0xf] %v1325
      %1330 = vst [vmem:[#allocation4 + $0xe8] sm:$0xf] %v1326
      %v1331 = vld [vmem:[#allocation2 + $0x4] sm:$0xff]
      %v1332 = vld [vmem:[#allocation2 + $0xc] sm:$0xf]
      %v1333 = vld [vmem:[%s350] ss:$8 sm:$0x3]
      %v1335 = vlaneseq
      %v1336 = vshrl.u32 %v1335, 7
      %v1337 = vsub.s32 0, %v1336
      %v1338 = vrot.slane %v1333, %v1337
      %v1339 = vlaneseq
      %v1340 = vshrl.u32 %v1339, 7
      %v1341 = vsub.s32 1, %v1340
      %v1342 = vrot.slane %v1333, %v1341
      %v1343 = vcombine.low %v1338, %v1342
      %1344 = vrot.lane.b32.xlu0 %v1343, 14
      %v1345 = vpop.permute.xlu0 %1344
      %v1346 = vrot.slane %v1345, 4
      %v1347 = vsel %vm1018, %v1346, %v1345
      %v1350 = vmul.f32 %v1331, %v1347
      %v1351 = vmul.f32 %v1332, %v1346
      %v1354 = vcombine.low %v1350, %v1350
      %v1355 = vcombine.low %v1351, %v1351
      %1356 = vrot.lane.b32.xlu0 %v1354, 114
      %v1357 = vpop.permute.xlu0 %1356
      %1358 = vrot.lane.b32.xlu0 %v1350, 114
      %v1359 = vpop.permute.xlu0 %1358
      %1360 = vrot.lane.b32.xlu0 %v1355, 114
      %v1361 = vpop.permute.xlu0 %1360
      %v1362 = vsel %vm1002, %v1357, %v1359
      %v1363 = vsel %vm1002, %v1359, %v1361
      %1366 = vst [vmem:[#allocation4 + $0xe0] sm:$0xf0] %v1362
      %1367 = vst [vmem:[#allocation4 + $0xe8] sm:$0xf0] %v1363
      %v1368 = vld [vmem:[#allocation2 + $0x4] sm:$0xff]
      %v1369 = vld [vmem:[#allocation2 + $0xc] sm:$0xf]
      %v1370 = vld [vmem:[%s390] ss:$8 sm:$0x3]
      %v1372 = vlaneseq
      %v1373 = vshrl.u32 %v1372, 7
      %v1374 = vsub.s32 0, %v1373
      %v1375 = vrot.slane %v1370, %v1374
      %v1376 = vlaneseq
      %v1377 = vshrl.u32 %v1376, 7
      %v1378 = vsub.s32 1, %v1377
      %v1379 = vrot.slane %v1370, %v1378
      %v1380 = vcombine.low %v1375, %v1379
      %1381 = vrot.lane.b32.xlu0 %v1380, 15
      %v1382 = vpop.permute.xlu0 %1381
      %v1383 = vrot.slane %v1382, 4
      %v1384 = vsel %vm979, %v1383, %v1382
      %v1387 = vmul.f32 %v1368, %v1384
      %v1388 = vmul.f32 %v1369, %v1383
      %v1391 = vcombine.high %v1387, %v1387
      %1392 = vrot.lane.b32.xlu0 %v1387, 113
      %v1393 = vpop.permute.xlu0 %1392
      %1394 = vrot.lane.b32.xlu0 %v1391, 113
      %v1395 = vpop.permute.xlu0 %1394
      %1396 = vrot.lane.b32.xlu0 %v1388, 113
      %v1397 = vpop.permute.xlu0 %1396
      %v1398 = vsel %vm964, %v1393, %v1395
      %v1399 = vsel %vm964, %v1395, %v1397
      %1402 = vst [vmem:[#allocation4 + $0xf0] sm:$0xf] %v1398
      %1403 = vst [vmem:[#allocation4 + $0xf8] sm:$0xf] %v1399
      %v1404 = vld [vmem:[#allocation2 + $0x4] sm:$0xff]
      %v1405 = vld [vmem:[#allocation2 + $0xc] sm:$0xf]
      %v1408 = vcombine.low %v1404, %v1404
      %v1409 = vcombine.low %v1405, %v1405
      %1410 = vrot.lane.b32.xlu0 %v1408, 112
      %v1411 = vpop.permute.xlu0 %1410
      %1412 = vrot.lane.b32.xlu0 %v1404, 112
      %v1413 = vpop.permute.xlu0 %1412
      %1414 = vrot.lane.b32.xlu0 %v1409, 112
      %v1415 = vpop.permute.xlu0 %1414
      %vm1416 = vcmask 916480
      %v1417 = vsel %vm1416, %v1411, %v1413
      %v1418 = vsel %vm1416, %v1413, %v1415
      %1421 = vst [vmem:[#allocation4 + $0xf0] sm:$0xf0] %v1417
      %1422 = vst [vmem:[#allocation4 + $0xf8] sm:$0xf0] %v1418
      %v1423 = vld [vmem:[#allocation2 + $0x4] sm:$0xff]
      %v1424 = vld [vmem:[#allocation2 + $0xc] sm:$0xf]
      %v1425 = vld [vmem:[%s448] ss:$8 sm:$0x3]
      %v1427 = vlaneseq
      %v1428 = vshrl.u32 %v1427, 7
      %v1429 = vsub.s32 0, %v1428
      %v1430 = vrot.slane %v1425, %v1429
      %v1431 = vlaneseq
      %v1432 = vshrl.u32 %v1431, 7
      %v1433 = vsub.s32 1, %v1432
      %v1434 = vrot.slane %v1425, %v1433
      %v1435 = vcombine.low %v1430, %v1434
      %1436 = vrot.lane.b32.xlu0 %v1435, 17
      %v1437 = vpop.permute.xlu0 %1436
      %v1438 = vrot.slane %v1437, 4
      %v1439 = vsel %vm922, %v1438, %v1437
      %v1442 = vmul.f32 %v1423, %v1439
      %v1443 = vmul.f32 %v1424, %v1438
      %v1446 = vcombine.high %v1442, %v1442
      %1447 = vrot.lane.b32.xlu0 %v1442, 111
      %v1448 = vpop.permute.xlu0 %1447
      %1449 = vrot.lane.b32.xlu0 %v1446, 111
      %v1450 = vpop.permute.xlu0 %1449
      %1451 = vrot.lane.b32.xlu0 %v1443, 111
      %v1452 = vpop.permute.xlu0 %1451
      %v1453 = vsel %vm907, %v1448, %v1450
      %v1454 = vsel %vm907, %v1450, %v1452
      %1457 = vst [vmem:[#allocation4 + $0x100] sm:$0xf] %v1453
      %1458 = vst [vmem:[#allocation4 + $0x108] sm:$0xf] %v1454
      %v1459 = vld [vmem:[#allocation2 + $0x4] sm:$0xff]
      %v1460 = vld [vmem:[#allocation2 + $0xc] sm:$0xf]
      %v1461 = vld [vmem:[%s487] ss:$8 sm:$0x3]
      %v1463 = vlaneseq
      %v1464 = vshrl.u32 %v1463, 7
      %v1465 = vsub.s32 0, %v1464
      %v1466 = vrot.slane %v1461, %v1465
      %v1467 = vlaneseq
      %v1468 = vshrl.u32 %v1467, 7
      %v1469 = vsub.s32 1, %v1468
      %v1470 = vrot.slane %v1461, %v1469
      %v1471 = vcombine.low %v1466, %v1470
      %1472 = vrot.lane.b32.xlu0 %v1471, 18
      %v1473 = vpop.permute.xlu0 %1472
      %v1474 = vrot.slane %v1473, 4
      %v1475 = vsel %vm884, %v1474, %v1473
      %v1478 = vmul.f32 %v1459, %v1475
      %v1479 = vmul.f32 %v1460, %v1474
      %v1482 = vcombine.low %v1478, %v1478
      %v1483 = vcombine.low %v1479, %v1479
      %1484 = vrot.lane.b32.xlu0 %v1482, 110
      %v1485 = vpop.permute.xlu0 %1484
      %1486 = vrot.lane.b32.xlu0 %v1478, 110
      %v1487 = vpop.permute.xlu0 %1486
      %1488 = vrot.lane.b32.xlu0 %v1483, 110
      %v1489 = vpop.permute.xlu0 %1488
      %v1490 = vsel %vm868, %v1485, %v1487
      %v1491 = vsel %vm868, %v1487, %v1489
      %1494 = vst [vmem:[#allocation4 + $0x100] sm:$0xf0] %v1490
      %1495 = vst [vmem:[#allocation4 + $0x108] sm:$0xf0] %v1491
      %v1496 = vld [vmem:[#allocation2 + $0x4] sm:$0xff]
      %v1497 = vld [vmem:[#allocation2 + $0xc] sm:$0xf]
      %v1498 = vld [vmem:[%s527] ss:$8 sm:$0x3]
      %v1500 = vlaneseq
      %v1501 = vshrl.u32 %v1500, 7
      %v1502 = vsub.s32 0, %v1501
      %v1503 = vrot.slane %v1498, %v1502
      %v1504 = vlaneseq
      %v1505 = vshrl.u32 %v1504, 7
      %v1506 = vsub.s32 1, %v1505
      %v1507 = vrot.slane %v1498, %v1506
      %v1508 = vcombine.low %v1503, %v1507
      %1509 = vrot.lane.b32.xlu0 %v1508, 19
      %v1510 = vpop.permute.xlu0 %1509
      %v1511 = vrot.slane %v1510, 4
      %v1512 = vsel %vm845, %v1511, %v1510
      %v1515 = vmul.f32 %v1496, %v1512
      %v1516 = vmul.f32 %v1497, %v1511
      %v1519 = vcombine.high %v1515, %v1515
      %1520 = vrot.lane.b32.xlu0 %v1515, 109
      %v1521 = vpop.permute.xlu0 %1520
      %1522 = vrot.lane.b32.xlu0 %v1519, 109
      %v1523 = vpop.permute.xlu0 %1522
      %1524 = vrot.lane.b32.xlu0 %v1516, 109
      %v1525 = vpop.permute.xlu0 %1524
      %v1526 = vsel %vm830, %v1521, %v1523
      %v1527 = vsel %vm830, %v1523, %v1525
      %1530 = vst [vmem:[#allocation4 + $0x110] sm:$0xf] %v1526
      %1531 = vst [vmem:[#allocation4 + $0x118] sm:$0xf] %v1527
      %v1532 = vld [vmem:[#allocation2 + $0x4] sm:$0xff]
      %v1533 = vld [vmem:[#allocation2 + $0xc] sm:$0xf]
      %v1534 = vld [vmem:[%s1] ss:$8 sm:$0x3]
      %v1536 = vlaneseq
      %v1537 = vshrl.u32 %v1536, 7
      %v1538 = vsub.s32 0, %v1537
      %v1539 = vrot.slane %v1534, %v1538
      %v1540 = vlaneseq
      %v1541 = vshrl.u32 %v1540, 7
      %v1542 = vsub.s32 1, %v1541
      %v1543 = vrot.slane %v1534, %v1542
      %v1544 = vcombine.low %v1539, %v1543
      %1545 = vrot.lane.b32.xlu0 %v1544, 29
      %v1546 = vpop.permute.xlu0 %1545
      %v1547 = vrot.slane %v1546, 4
      %v1548 = vsel %vm807, %v1547, %v1546
      %v1551 = vmul.f32 %v1532, %v1548
      %v1552 = vmul.f32 %v1533, %v1547
      %v1555 = vcombine.low %v1551, %v1551
      %v1556 = vcombine.low %v1552, %v1552
      %1557 = vrot.lane.b32.xlu0 %v1555, 99
      %v1558 = vpop.permute.xlu0 %1557
      %1559 = vrot.lane.b32.xlu0 %v1551, 99
      %v1560 = vpop.permute.xlu0 %1559
      %1561 = vrot.lane.b32.xlu0 %v1556, 99
      %v1562 = vpop.permute.xlu0 %1561
      %v1563 = vsel %vm791, %v1558, %v1560
      %v1564 = vsel %vm791, %v1560, %v1562
      %1567 = vst [vmem:[#allocation4 + $0x110] sm:$0xf0] %v1563
      %1568 = vst [vmem:[#allocation4 + $0x118] sm:$0xf0] %v1564
      %v1569 = vld [vmem:[#allocation2 + $0x4] sm:$0xff]
      %v1570 = vld [vmem:[#allocation2 + $0xc] sm:$0xf]
      %v1571 = vld [vmem:[%s350] ss:$8 sm:$0x3]
      %v1573 = vlaneseq
      %v1574 = vshrl.u32 %v1573, 7
      %v1575 = vsub.s32 0, %v1574
      %v1576 = vrot.slane %v1571, %v1575
      %v1577 = vlaneseq
      %v1578 = vshrl.u32 %v1577, 7
      %v1579 = vsub.s32 1, %v1578
      %v1580 = vrot.slane %v1571, %v1579
      %v1581 = vcombine.low %v1576, %v1580
      %1582 = vrot.lane.b32.xlu0 %v1581, 30
      %v1583 = vpop.permute.xlu0 %1582
      %v1584 = vrot.slane %v1583, 4
      %v1585 = vsel %vm768, %v1584, %v1583
      %v1588 = vmul.f32 %v1569, %v1585
      %v1589 = vmul.f32 %v1570, %v1584
      %v1592 = vcombine.high %v1588, %v1588
      %1593 = vrot.lane.b32.xlu0 %v1588, 98
      %v1594 = vpop.permute.xlu0 %1593
      %1595 = vrot.lane.b32.xlu0 %v1592, 98
      %v1596 = vpop.permute.xlu0 %1595
      %1597 = vrot.lane.b32.xlu0 %v1589, 98
      %v1598 = vpop.permute.xlu0 %1597
      %v1599 = vsel %vm753, %v1594, %v1596
      %v1600 = vsel %vm753, %v1596, %v1598
      %1603 = vst [vmem:[#allocation4 + $0x120] sm:$0xf] %v1599
      %1604 = vst [vmem:[#allocation4 + $0x128] sm:$0xf] %v1600
      %v1605 = vld [vmem:[#allocation2 + $0x4] sm:$0xff]
      %v1606 = vld [vmem:[#allocation2 + $0xc] sm:$0xf]
      %v1607 = vld [vmem:[%s390] ss:$8 sm:$0x3]
      %v1609 = vlaneseq
      %v1610 = vshrl.u32 %v1609, 7
      %v1611 = vsub.s32 0, %v1610
      %v1612 = vrot.slane %v1607, %v1611
      %v1613 = vlaneseq
      %v1614 = vshrl.u32 %v1613, 7
      %v1615 = vsub.s32 1, %v1614
      %v1616 = vrot.slane %v1607, %v1615
      %v1617 = vcombine.low %v1612, %v1616
      %1618 = vrot.lane.b32.xlu0 %v1617, 31
      %v1619 = vpop.permute.xlu0 %1618
      %v1620 = vrot.slane %v1619, 4
      %v1621 = vsel %vm730, %v1620, %v1619
      %v1624 = vmul.f32 %v1605, %v1621
      %v1625 = vmul.f32 %v1606, %v1620
      %v1628 = vcombine.low %v1624, %v1624
      %v1629 = vcombine.low %v1625, %v1625
      %1630 = vrot.lane.b32.xlu0 %v1628, 97
      %v1631 = vpop.permute.xlu0 %1630
      %1632 = vrot.lane.b32.xlu0 %v1624, 97
      %v1633 = vpop.permute.xlu0 %1632
      %1634 = vrot.lane.b32.xlu0 %v1629, 97
      %v1635 = vpop.permute.xlu0 %1634
      %v1636 = vsel %vm714, %v1631, %v1633
      %v1637 = vsel %vm714, %v1633, %v1635
      %1640 = vst [vmem:[#allocation4 + $0x120] sm:$0xf0] %v1636
      %1641 = vst [vmem:[#allocation4 + $0x128] sm:$0xf0] %v1637
      %v1642 = vld [vmem:[#allocation2 + $0x4] sm:$0xff]
      %v1643 = vld [vmem:[#allocation2 + $0xc] sm:$0xf]
      %v1646 = vcombine.high %v1642, %v1642
      %1647 = vrot.lane.b32.xlu0 %v1642, 96
      %v1648 = vpop.permute.xlu0 %1647
      %1649 = vrot.lane.b32.xlu0 %v1646, 96
      %v1650 = vpop.permute.xlu0 %1649
      %1651 = vrot.lane.b32.xlu0 %v1643, 96
      %v1652 = vpop.permute.xlu0 %1651
      %vm1653 = vcmask 785408
      %v1654 = vsel %vm1653, %v1648, %v1650
      %v1655 = vsel %vm1653, %v1650, %v1652
      %1658 = vst [vmem:[#allocation4 + $0x130] sm:$0xf] %v1654
      %1659 = vst [vmem:[#allocation4 + $0x138] sm:$0xf] %v1655
      %v1660 = vld [vmem:[#allocation2 + $0x4] sm:$0xff]
      %v1661 = vld [vmem:[#allocation2 + $0xc] sm:$0xf]
      %v1662 = vld [vmem:[%s448] ss:$8 sm:$0x3]
      %v1664 = vlaneseq
      %v1665 = vshrl.u32 %v1664, 7
      %v1666 = vsub.s32 0, %v1665
      %v1667 = vrot.slane %v1662, %v1666
      %v1668 = vlaneseq
      %v1669 = vshrl.u32 %v1668, 7
      %v1670 = vsub.s32 1, %v1669
      %v1671 = vrot.slane %v1662, %v1670
      %v1672 = vcombine.low %v1667, %v1671
      %1673 = vrot.lane.b32.xlu0 %v1672, 33
      %v1674 = vpop.permute.xlu0 %1673
      %v1675 = vrot.slane %v1674, 4
      %v1676 = vsel %vm673, %v1675, %v1674
      %v1679 = vmul.f32 %v1660, %v1676
      %v1680 = vmul.f32 %v1661, %v1675
      %v1683 = vcombine.low %v1679, %v1679
      %v1684 = vcombine.low %v1680, %v1680
      %1685 = vrot.lane.b32.xlu0 %v1683, 95
      %v1686 = vpop.permute.xlu0 %1685
      %1687 = vrot.lane.b32.xlu0 %v1679, 95
      %v1688 = vpop.permute.xlu0 %1687
      %1689 = vrot.lane.b32.xlu0 %v1684, 95
      %v1690 = vpop.permute.xlu0 %1689
      %v1691 = vsel %vm657, %v1686, %v1688
      %v1692 = vsel %vm657, %v1688, %v1690
      %1695 = vst [vmem:[#allocation4 + $0x130] sm:$0xf0] %v1691
      %1696 = vst [vmem:[#allocation4 + $0x138] sm:$0xf0] %v1692
      %v1697 = vld [vmem:[#allocation2 + $0x4] sm:$0xff]
      %v1698 = vld [vmem:[#allocation2 + $0xc] sm:$0xf]
      %v1699 = vld [vmem:[%s487] ss:$8 sm:$0x3]
      %v1701 = vlaneseq
      %v1702 = vshrl.u32 %v1701, 7
      %v1703 = vsub.s32 0, %v1702
      %v1704 = vrot.slane %v1699, %v1703
      %v1705 = vlaneseq
      %v1706 = vshrl.u32 %v1705, 7
      %v1707 = vsub.s32 1, %v1706
      %v1708 = vrot.slane %v1699, %v1707
      %v1709 = vcombine.low %v1704, %v1708
      %1710 = vrot.lane.b32.xlu0 %v1709, 34
      %v1711 = vpop.permute.xlu0 %1710
      %v1712 = vrot.slane %v1711, 4
      %v1713 = vsel %vm634, %v1712, %v1711
      %v1716 = vmul.f32 %v1697, %v1713
      %v1717 = vmul.f32 %v1698, %v1712
      %v1720 = vcombine.high %v1716, %v1716
      %1721 = vrot.lane.b32.xlu0 %v1716, 94
      %v1722 = vpop.permute.xlu0 %1721
      %1723 = vrot.lane.b32.xlu0 %v1720, 94
      %v1724 = vpop.permute.xlu0 %1723
      %1725 = vrot.lane.b32.xlu0 %v1717, 94
      %v1726 = vpop.permute.xlu0 %1725
      %v1727 = vsel %vm619, %v1722, %v1724
      %v1728 = vsel %vm619, %v1724, %v1726
      %1731 = vst [vmem:[#allocation4 + $0x140] sm:$0xf] %v1727
      %1732 = vst [vmem:[#allocation4 + $0x148] sm:$0xf] %v1728
      %v1733 = vld [vmem:[#allocation2 + $0x4] sm:$0xff]
      %v1734 = vld [vmem:[#allocation2 + $0xc] sm:$0xf]
      %v1735 = vld [vmem:[%s527] ss:$8 sm:$0x3]
      %v1737 = vlaneseq
      %v1738 = vshrl.u32 %v1737, 7
      %v1739 = vsub.s32 0, %v1738
      %v1740 = vrot.slane %v1735, %v1739
      %v1741 = vlaneseq
      %v1742 = vshrl.u32 %v1741, 7
      %v1743 = vsub.s32 1, %v1742
      %v1744 = vrot.slane %v1735, %v1743
      %v1745 = vcombine.low %v1740, %v1744
      %1746 = vrot.lane.b32.xlu0 %v1745, 35
      %v1747 = vpop.permute.xlu0 %1746
      %v1748 = vrot.slane %v1747, 4
      %v1749 = vsel %vm596, %v1748, %v1747
      %v1752 = vmul.f32 %v1733, %v1749
      %v1753 = vmul.f32 %v1734, %v1748
      %v1756 = vcombine.low %v1752, %v1752
      %v1757 = vcombine.low %v1753, %v1753
      %1758 = vrot.lane.b32.xlu0 %v1756, 93
      %v1759 = vpop.permute.xlu0 %1758
      %1760 = vrot.lane.b32.xlu0 %v1752, 93
      %v1761 = vpop.permute.xlu0 %1760
      %1762 = vrot.lane.b32.xlu0 %v1757, 93
      %v1763 = vpop.permute.xlu0 %1762
      %v1764 = vsel %vm580, %v1759, %v1761
      %v1765 = vsel %vm580, %v1761, %v1763
      %1768 = vst [vmem:[#allocation4 + $0x140] sm:$0xf0] %v1764
      %1769 = vst [vmem:[#allocation4 + $0x148] sm:$0xf0] %v1765
      %v1770 = vld [vmem:[#allocation2 + $0x4] sm:$0xff]
      %v1771 = vld [vmem:[#allocation2 + $0xc] sm:$0xf]
      %v1772 = vld [vmem:[%s1] ss:$8 sm:$0x3]
      %v1774 = vlaneseq
      %v1775 = vshrl.u32 %v1774, 7
      %v1776 = vsub.s32 0, %v1775
      %v1777 = vrot.slane %v1772, %v1776
      %v1778 = vlaneseq
      %v1779 = vshrl.u32 %v1778, 7
      %v1780 = vsub.s32 1, %v1779
      %v1781 = vrot.slane %v1772, %v1780
      %v1782 = vcombine.low %v1777, %v1781
      %1783 = vrot.lane.b32.xlu0 %v1782, 45
      %v1784 = vpop.permute.xlu0 %1783
      %v1785 = vrot.slane %v1784, 4
      %v1786 = vsel %vm557, %v1785, %v1784
      %v1789 = vmul.f32 %v1770, %v1786
      %v1790 = vmul.f32 %v1771, %v1785
      %v1793 = vcombine.high %v1789, %v1789
      %1794 = vrot.lane.b32.xlu0 %v1789, 83
      %v1795 = vpop.permute.xlu0 %1794
      %1796 = vrot.lane.b32.xlu0 %v1793, 83
      %v1797 = vpop.permute.xlu0 %1796
      %1798 = vrot.lane.b32.xlu0 %v1790, 83
      %v1799 = vpop.permute.xlu0 %1798
      %v1800 = vsel %vm542, %v1795, %v1797
      %v1801 = vsel %vm542, %v1797, %v1799
      %1804 = vst [vmem:[#allocation4 + $0x150] sm:$0xf] %v1800
      %1805 = vst [vmem:[#allocation4 + $0x158] sm:$0xf] %v1801
      %v1806 = vld [vmem:[#allocation2 + $0x4] sm:$0xff]
      %v1807 = vld [vmem:[#allocation2 + $0xc] sm:$0xf]
      %v1808 = vld [vmem:[%s350] ss:$8 sm:$0x3]
      %v1810 = vlaneseq
      %v1811 = vshrl.u32 %v1810, 7
      %v1812 = vsub.s32 0, %v1811
      %v1813 = vrot.slane %v1808, %v1812
      %v1814 = vlaneseq
      %v1815 = vshrl.u32 %v1814, 7
      %v1816 = vsub.s32 1, %v1815
      %v1817 = vrot.slane %v1808, %v1816
      %v1818 = vcombine.low %v1813, %v1817
      %1819 = vrot.lane.b32.xlu0 %v1818, 46
      %v1820 = vpop.permute.xlu0 %1819
      %v1821 = vrot.slane %v1820, 4
      %v1822 = vsel %vm518, %v1821, %v1820
      %v1825 = vmul.f32 %v1806, %v1822
      %v1826 = vmul.f32 %v1807, %v1821
      %v1829 = vcombine.low %v1825, %v1825
      %v1830 = vcombine.low %v1826, %v1826
      %1831 = vrot.lane.b32.xlu0 %v1829, 82
      %v1832 = vpop.permute.xlu0 %1831
      %1833 = vrot.lane.b32.xlu0 %v1825, 82
      %v1834 = vpop.permute.xlu0 %1833
      %1835 = vrot.lane.b32.xlu0 %v1830, 82
      %v1836 = vpop.permute.xlu0 %1835
      %v1837 = vsel %vm502, %v1832, %v1834
      %v1838 = vsel %vm502, %v1834, %v1836
      %1841 = vst [vmem:[#allocation4 + $0x150] sm:$0xf0] %v1837
      %1842 = vst [vmem:[#allocation4 + $0x158] sm:$0xf0] %v1838
      %v1843 = vld [vmem:[#allocation2 + $0x4] sm:$0xff]
      %v1844 = vld [vmem:[#allocation2 + $0xc] sm:$0xf]
      %v1845 = vld [vmem:[%s390] ss:$8 sm:$0x3]
      %v1847 = vlaneseq
      %v1848 = vshrl.u32 %v1847, 7
      %v1849 = vsub.s32 0, %v1848
      %v1850 = vrot.slane %v1845, %v1849
      %v1851 = vlaneseq
      %v1852 = vshrl.u32 %v1851, 7
      %v1853 = vsub.s32 1, %v1852
      %v1854 = vrot.slane %v1845, %v1853
      %v1855 = vcombine.low %v1850, %v1854
      %1856 = vrot.lane.b32.xlu0 %v1855, 47
      %v1857 = vpop.permute.xlu0 %1856
      %v1858 = vrot.slane %v1857, 4
      %v1859 = vsel %vm478, %v1858, %v1857
      %v1862 = vmul.f32 %v1843, %v1859
      %v1863 = vmul.f32 %v1844, %v1858
      %v1866 = vcombine.high %v1862, %v1862
      %1867 = vrot.lane.b32.xlu0 %v1862, 81
      %v1868 = vpop.permute.xlu0 %1867
      %1869 = vrot.lane.b32.xlu0 %v1866, 81
      %v1870 = vpop.permute.xlu0 %1869
      %1871 = vrot.lane.b32.xlu0 %v1863, 81
      %v1872 = vpop.permute.xlu0 %1871
      %v1873 = vsel %vm463, %v1868, %v1870
      %v1874 = vsel %vm463, %v1870, %v1872
      %1877 = vst [vmem:[#allocation4 + $0x160] sm:$0xf] %v1873
      %1878 = vst [vmem:[#allocation4 + $0x168] sm:$0xf] %v1874
      %v1879 = vld [vmem:[#allocation2 + $0x4] sm:$0xff]
      %v1880 = vld [vmem:[#allocation2 + $0xc] sm:$0xf]
      %v1883 = vcombine.low %v1879, %v1879
      %v1884 = vcombine.low %v1880, %v1880
      %1885 = vrot.lane.b32.xlu0 %v1883, 80
      %v1886 = vpop.permute.xlu0 %1885
      %1887 = vrot.lane.b32.xlu0 %v1879, 80
      %v1888 = vpop.permute.xlu0 %1887
      %1889 = vrot.lane.b32.xlu0 %v1884, 80
      %v1890 = vpop.permute.xlu0 %1889
      %vm1891 = vcmask 654336
      %v1892 = vsel %vm1891, %v1886, %v1888
      %v1893 = vsel %vm1891, %v1888, %v1890
      %1896 = vst [vmem:[#allocation4 + $0x160] sm:$0xf0] %v1892
      %1897 = vst [vmem:[#allocation4 + $0x168] sm:$0xf0] %v1893
      %v1898 = vld [vmem:[#allocation2 + $0x4] sm:$0xff]
      %v1899 = vld [vmem:[#allocation2 + $0xc] sm:$0xf]
      %v1900 = vld [vmem:[%s448] ss:$8 sm:$0x3]
      %v1902 = vlaneseq
      %v1903 = vshrl.u32 %v1902, 7
      %v1904 = vsub.s32 0, %v1903
      %v1905 = vrot.slane %v1900, %v1904
      %v1906 = vlaneseq
      %v1907 = vshrl.u32 %v1906, 7
      %v1908 = vsub.s32 1, %v1907
      %v1909 = vrot.slane %v1900, %v1908
      %v1910 = vcombine.low %v1905, %v1909
      %1911 = vrot.lane.b32.xlu0 %v1910, 49
      %v1912 = vpop.permute.xlu0 %1911
      %v1913 = vrot.slane %v1912, 4
      %v1914 = vsel %vm420, %v1913, %v1912
      %v1917 = vmul.f32 %v1898, %v1914
      %v1918 = vmul.f32 %v1899, %v1913
      %v1921 = vcombine.high %v1917, %v1917
      %1922 = vrot.lane.b32.xlu0 %v1917, 79
      %v1923 = vpop.permute.xlu0 %1922
      %1924 = vrot.lane.b32.xlu0 %v1921, 79
      %v1925 = vpop.permute.xlu0 %1924
      %1926 = vrot.lane.b32.xlu0 %v1918, 79
      %v1927 = vpop.permute.xlu0 %1926
      %v1928 = vsel %vm405, %v1923, %v1925
      %v1929 = vsel %vm405, %v1925, %v1927
      %1932 = vst [vmem:[#allocation4 + $0x170] sm:$0xf] %v1928
      %1933 = vst [vmem:[#allocation4 + $0x178] sm:$0xf] %v1929
      %v1934 = vld [vmem:[#allocation2 + $0x4] sm:$0xff]
      %v1935 = vld [vmem:[#allocation2 + $0xc] sm:$0xf]
      %v1936 = vld [vmem:[%s487] ss:$8 sm:$0x3]
      %v1938 = vlaneseq
      %v1939 = vshrl.u32 %v1938, 7
      %v1940 = vsub.s32 0, %v1939
      %v1941 = vrot.slane %v1936, %v1940
      %v1942 = vlaneseq
      %v1943 = vshrl.u32 %v1942, 7
      %v1944 = vsub.s32 1, %v1943
      %v1945 = vrot.slane %v1936, %v1944
      %v1946 = vcombine.low %v1941, %v1945
      %1947 = vrot.lane.b32.xlu0 %v1946, 50
      %v1948 = vpop.permute.xlu0 %1947
      %v1949 = vrot.slane %v1948, 4
      %v1950 = vsel %vm381, %v1949, %v1948
      %v1953 = vmul.f32 %v1934, %v1950
      %v1954 = vmul.f32 %v1935, %v1949
      %v1957 = vcombine.low %v1953, %v1953
      %v1958 = vcombine.low %v1954, %v1954
      %1959 = vrot.lane.b32.xlu0 %v1957, 78
      %v1960 = vpop.permute.xlu0 %1959
      %1961 = vrot.lane.b32.xlu0 %v1953, 78
      %v1962 = vpop.permute.xlu0 %1961
      %1963 = vrot.lane.b32.xlu0 %v1958, 78
      %v1964 = vpop.permute.xlu0 %1963
      %v1965 = vsel %vm365, %v1960, %v1962
      %v1966 = vsel %vm365, %v1962, %v1964
      %1969 = vst [vmem:[#allocation4 + $0x170] sm:$0xf0] %v1965
      %1970 = vst [vmem:[#allocation4 + $0x178] sm:$0xf0] %v1966
      %v1971 = vld [vmem:[#allocation2 + $0x4] sm:$0xff]
      %v1972 = vld [vmem:[#allocation2 + $0xc] sm:$0xf]
      %v1973 = vld [vmem:[%s527] ss:$8 sm:$0x3]
      %v1975 = vlaneseq
      %v1976 = vshrl.u32 %v1975, 7
      %v1977 = vsub.s32 0, %v1976
      %v1978 = vrot.slane %v1973, %v1977
      %v1979 = vlaneseq
      %v1980 = vshrl.u32 %v1979, 7
      %v1981 = vsub.s32 1, %v1980
      %v1982 = vrot.slane %v1973, %v1981
      %v1983 = vcombine.low %v1978, %v1982
      %1984 = vrot.lane.b32.xlu0 %v1983, 51
      %v1985 = vpop.permute.xlu0 %1984
      %v1986 = vrot.slane %v1985, 4
      %v1987 = vsel %vm341, %v1986, %v1985
      %v1990 = vmul.f32 %v1971, %v1987
      %v1991 = vmul.f32 %v1972, %v1986
      %v1994 = vcombine.high %v1990, %v1990
      %1995 = vrot.lane.b32.xlu0 %v1990, 77
      %v1996 = vpop.permute.xlu0 %1995
      %1997 = vrot.lane.b32.xlu0 %v1994, 77
      %v1998 = vpop.permute.xlu0 %1997
      %1999 = vrot.lane.b32.xlu0 %v1991, 77
      %v2000 = vpop.permute.xlu0 %1999
      %v2001 = vsel %vm326, %v1996, %v1998
      %v2002 = vsel %vm326, %v1998, %v2000
      %2005 = vst [vmem:[#allocation4 + $0x180] sm:$0xf] %v2001
      %2006 = vst [vmem:[#allocation4 + $0x188] sm:$0xf] %v2002
      %v2007 = vld [vmem:[%s2] sm:$0x3f]
      %v2008 = vld [vmem:[%s2 + $0x8] sm:$0x3f]
      %v2009 = vld [vmem:[#allocation4] sm:$0xff]
      %v2010 = vld [vmem:[#allocation4 + $0x8] sm:$0xff]
      %v2011 = vld [vmem:[#allocation4 + $0x10] sm:$0xff]
      %v2012 = vld [vmem:[#allocation4 + $0x18] sm:$0xff]
      %v2013 = vld [vmem:[#allocation4 + $0x20] sm:$0xff]
      %v2014 = vld [vmem:[#allocation4 + $0x28] sm:$0xff]
      %v2015 = vld [vmem:[#allocation4 + $0x30] sm:$0xff]
      %v2016 = vld [vmem:[#allocation4 + $0x38] sm:$0xff]
      %v2017 = vld [vmem:[#allocation4 + $0x40] sm:$0xff]
      %v2018 = vld [vmem:[#allocation4 + $0x48] sm:$0xff]
      %v2019 = vld [vmem:[#allocation4 + $0x50] sm:$0xff]
      %v2020 = vld [vmem:[#allocation4 + $0x58] sm:$0xff]
      %v2021 = vld [vmem:[#allocation4 + $0x60] sm:$0xff]
      %v2022 = vld [vmem:[#allocation4 + $0x68] sm:$0xff]
      %v2023 = vld [vmem:[#allocation4 + $0x70] sm:$0xff]
      %v2024 = vld [vmem:[#allocation4 + $0x78] sm:$0xff]
      %v2025 = vld [vmem:[#allocation4 + $0x80] sm:$0xff]
      %v2026 = vld [vmem:[#allocation4 + $0x88] sm:$0xff]
      %v2027 = vld [vmem:[#allocation4 + $0x90] sm:$0xff]
      %v2028 = vld [vmem:[#allocation4 + $0x98] sm:$0xff]
      %v2029 = vld [vmem:[#allocation4 + $0xa0] sm:$0xff]
      %v2030 = vld [vmem:[#allocation4 + $0xa8] sm:$0xff]
      %v2031 = vld [vmem:[#allocation4 + $0xb0] sm:$0xff]
      %v2032 = vld [vmem:[#allocation4 + $0xb8] sm:$0xff]
      %v2033 = vld [vmem:[#allocation4 + $0xc0] sm:$0xff]
      %v2034 = vld [vmem:[#allocation4 + $0xc8] sm:$0xff]
      %v2035 = vld [vmem:[#allocation4 + $0xd0] sm:$0xff]
      %v2036 = vld [vmem:[#allocation4 + $0xd8] sm:$0xff]
      %v2037 = vld [vmem:[#allocation4 + $0xe0] sm:$0xff]
      %v2038 = vld [vmem:[#allocation4 + $0xe8] sm:$0xff]
      %v2039 = vld [vmem:[#allocation4 + $0xf0] sm:$0xff]
      %v2040 = vld [vmem:[#allocation4 + $0xf8] sm:$0xff]
      %v2041 = vld [vmem:[#allocation4 + $0x100] sm:$0xff]
      %v2042 = vld [vmem:[#allocation4 + $0x108] sm:$0xff]
      %v2043 = vld [vmem:[#allocation4 + $0x110] sm:$0xff]
      %v2044 = vld [vmem:[#allocation4 + $0x118] sm:$0xff]
      %v2045 = vld [vmem:[#allocation4 + $0x120] sm:$0xff]
      %v2046 = vld [vmem:[#allocation4 + $0x128] sm:$0xff]
      %v2047 = vld [vmem:[#allocation4 + $0x130] sm:$0xff]
      %v2048 = vld [vmem:[#allocation4 + $0x138] sm:$0xff]
      %v2049 = vld [vmem:[#allocation4 + $0x140] sm:$0xff]
      %v2050 = vld [vmem:[#allocation4 + $0x148] sm:$0xff]
      %v2051 = vld [vmem:[#allocation4 + $0x150] sm:$0xff]
      %v2052 = vld [vmem:[#allocation4 + $0x158] sm:$0xff]
      %v2053 = vld [vmem:[#allocation4 + $0x160] sm:$0xff]
      %v2054 = vld [vmem:[#allocation4 + $0x168] sm:$0xff]
      %v2055 = vld [vmem:[#allocation4 + $0x170] sm:$0xff]
      %v2056 = vld [vmem:[#allocation4 + $0x178] sm:$0xff]
      %v2057 = vld [vmem:[#allocation4 + $0x180] sm:$0xf]
      %v2058 = vld [vmem:[#allocation4 + $0x188] sm:$0xf]
      %vm2059 = vcmask 556032
      %v2061 = vsel %vm2059, %v2008, 0
      %vm2063 = vcmask 1043456
      %v2065 = vsel %vm2063, %v2057, 0
      %v2068 = vsel %vm2063, %v2058, 0
      %2070 = vmatprep.subr.mxu0 %v2010
      %2071 = vmatpush1.msra.mxu0 %v2009
      %2072 = vmatprep.subr.mxu0 %v2012
      %2073 = vmatpush1.msra.mxu0 %v2011
      %2074 = vmatprep.subr.mxu0 %v2014
      %2075 = vmatpush1.msra.mxu0 %v2013
      %2076 = vmatprep.subr.mxu0 %v2016
      %2077 = vmatpush1.msra.mxu0 %v2015
      %2078 = vmatprep.subr.mxu0 %v2018
      %2079 = vmatpush1.msra.mxu0 %v2017
      %2080 = vmatprep.subr.mxu0 %v2020
      %2081 = vmatpush1.msra.mxu0 %v2019
      %2082 = vmatprep.subr.mxu0 %v2022
      %2083 = vmatpush1.msra.mxu0 %v2021
      %2084 = vmatprep.subr.mxu0 %v2024
      %2085 = vmatpush1.msra.mxu0 %v2023
      %2086 = vmatprep.subr.mxu0 %v2026
      %2087 = vmatpush1.msra.mxu0 %v2025
      %2088 = vmatprep.subr.mxu0 %v2028
      %2089 = vmatpush1.msra.mxu0 %v2027
      %2090 = vmatprep.subr.mxu0 %v2030
      %2091 = vmatpush1.msra.mxu0 %v2029
      %2092 = vmatprep.subr.mxu0 %v2032
      %2093 = vmatpush1.msra.mxu0 %v2031
      %2094 = vmatprep.subr.mxu0 %v2034
      %2095 = vmatpush1.msra.mxu0 %v2033
      %2096 = vmatprep.subr.mxu0 %v2036
      %2097 = vmatpush1.msra.mxu0 %v2035
      %2098 = vmatprep.subr.mxu0 %v2038
      %2099 = vmatpush1.msra.mxu0 %v2037
      %2100 = vmatprep.subr.mxu0 %v2040
      %2101 = vmatpush1.msra.mxu0 %v2039
      %2102 = vmatprep.subr.mxu0 %v2042
      %2103 = vmatpush1.msra.mxu0 %v2041
      %2104 = vmatprep.subr.mxu0 %v2044
      %2105 = vmatpush1.msra.mxu0 %v2043
      %2106 = vmatprep.subr.mxu0 %v2046
      %2107 = vmatpush1.msra.mxu0 %v2045
      %2108 = vmatprep.subr.mxu0 %v2048
      %2109 = vmatpush1.msra.mxu0 %v2047
      %2110 = vmatprep.subr.mxu0 %v2050
      %2111 = vmatpush1.msra.mxu0 %v2049
      %2112 = vmatprep.subr.mxu0 %v2052
      %2113 = vmatpush1.msra.mxu0 %v2051
      %2114 = vmatprep.subr.mxu0 %v2054
      %2115 = vmatpush1.msra.mxu0 %v2053
      %2116 = vmatprep.subr.mxu0 %v2056
      %2117 = vmatpush1.msra.mxu0 %v2055
      %2118 = vmatprep.subr.mxu0 %v2068
      %2119 = vmatpush1.msra.mxu0 %v2065
      %2120 = vmatprep.subr.mxu0 0.0
      %2121 = vmatpush1.msra.mxu0 0.0
      %2122 = vmatprep.subr.mxu0 0.0
      %2123 = vmatpush1.msra.mxu0 0.0
      %2124 = vmatprep.subr.mxu0 0.0
      %2125 = vmatpush1.msra.mxu0 0.0
      %2126 = vmatprep.subr.mxu0 0.0
      %2127 = vmatpush1.msra.mxu0 0.0
      %2128 = vmatprep.subr.mxu0 0.0
      %2129 = vmatpush1.msra.mxu0 0.0
      %2130 = vmatprep.subr.mxu0 0.0
      %2131 = vmatpush1.msra.mxu0 0.0
      %2132 = vmatprep.subr.mxu0 0.0
      %2133 = vmatpush1.msra.mxu0 0.0
      %2134 = vmatprep.mubr.f32.mxu0 %v2061
      %2135 = vmatmul.mubr.f32.gmra.mrb[0].mxu0 %v2007
      %v2136 = vpop.f32.mrb[0].mxu0
      %v2137 = vadd.f32 0.0, %v2136
      %v2138 = vpop.f32.mrb[0].mxu0
      %v2139 = vadd.f32 0.0, %v2138
      %2140 = vdwg.mxu0
      %v2141 = vld [vmem:[%s3] sm:$0x3f]
      %2143 = vset.pattern.permute.xlu0 0
      %2144 = vperm.xlu0 %2143, %v2141
      %v2145 = vpop.permute.xlu0 %2144
      %v2147 = vmul.f32 %v2137, %v2145
      %v2148 = vmul.f32 %v2139, %v2145
      %v2149 = vld [vmem:[%s4] sm:$0x3f]
      %2151 = vset.pattern.permute.xlu0 0
      %2152 = vperm.xlu0 %2151, %v2149
      %v2153 = vpop.permute.xlu0 %2152
      %v2155 = vadd.f32 %v2147, %v2153
      %v2156 = vadd.f32 %v2148, %v2153
      %v2157 = vmax.f32 %v2155, 0.0
      %v2158 = vmax.f32 %v2156, 0.0
      %2159 = vst [vmem:[#allocation3 + $0x8] sm:$0x3f] %v2157
      %2160 = vst [vmem:[#allocation3 + $0x10] sm:$0x3f] %v2158
      %v2161 = vld [vmem:[#allocation3] sm:$0x3f]
      %v2162 = vld [vmem:[#allocation3 + $0x8] sm:$0x3f]
      %v2163 = vld [vmem:[#allocation3 + $0x10] sm:$0x3f]
      %v2164 = vld [vmem:[%s1] ss:$8 sm:$0x3]
      %v2166 = vlaneseq
      %v2167 = vshrl.u32 %v2166, 7
      %v2168 = vsub.s32 0, %v2167
      %v2169 = vrot.slane %v2164, %v2168
      %v2170 = vlaneseq
      %v2171 = vshrl.u32 %v2170, 7
      %v2172 = vsub.s32 1, %v2171
      %v2173 = vrot.slane %v2164, %v2172
      %2174 = vrot.lane.b32.xlu0 %v2169, 77
      %v2175 = vpop.permute.xlu0 %2174
      %2176 = vrot.lane.b32.xlu0 %v2173, 77
      %v2177 = vpop.permute.xlu0 %2176
      %v2178 = vsel %vm326, %v2175, %v2177
      %v2182 = vmul.f32 %v2161, %v2175
      %v2183 = vmul.f32 %v2162, %v2178
      %v2184 = vmul.f32 %v2163, %v2177
      %2188 = vrot.lane.b32.xlu0 %v2182, 51
      %v2189 = vpop.permute.xlu0 %2188
      %2190 = vrot.lane.b32.xlu0 %v2183, 51
      %v2191 = vpop.permute.xlu0 %2190
      %2192 = vrot.lane.b32.xlu0 %v2184, 51
      %v2193 = vpop.permute.xlu0 %2192
      %v2194 = vsel %vm341, %v2189, %v2191
      %v2195 = vsel %vm341, %v2191, %v2193
      %2198 = vst [vmem:[#allocation5] sm:$0x3f] %v2194
      %2199 = vst [vmem:[#allocation5 + $0x8] sm:$0x3f] %v2195
      %v2200 = vld [vmem:[#allocation3] sm:$0x3f]
      %v2201 = vld [vmem:[#allocation3 + $0x8] sm:$0x3f]
      %v2202 = vld [vmem:[#allocation3 + $0x10] sm:$0x3f]
      %v2203 = vld [vmem:[%s350] ss:$8 sm:$0x3]
      %v2205 = vlaneseq
      %v2206 = vshrl.u32 %v2205, 7
      %v2207 = vsub.s32 0, %v2206
      %v2208 = vrot.slane %v2203, %v2207
      %v2209 = vlaneseq
      %v2210 = vshrl.u32 %v2209, 7
      %v2211 = vsub.s32 1, %v2210
      %v2212 = vrot.slane %v2203, %v2211
      %2213 = vrot.lane.b32.xlu0 %v2208, 78
      %v2214 = vpop.permute.xlu0 %2213
      %2215 = vrot.lane.b32.xlu0 %v2212, 78
      %v2216 = vpop.permute.xlu0 %2215
      %v2217 = vsel %vm365, %v2214, %v2216
      %v2221 = vmul.f32 %v2200, %v2214
      %v2222 = vmul.f32 %v2201, %v2217
      %v2223 = vmul.f32 %v2202, %v2216
      %v2227 = vrot.slane %v2221, 2
      %v2228 = vrot.slane %v2222, 2
      %v2229 = vrot.slane %v2223, 2
      %2230 = vrot.lane.b32.xlu0 %v2227, 50
      %v2231 = vpop.permute.xlu0 %2230
      %2232 = vrot.lane.b32.xlu0 %v2228, 50
      %v2233 = vpop.permute.xlu0 %2232
      %2234 = vrot.lane.b32.xlu0 %v2229, 50
      %v2235 = vpop.permute.xlu0 %2234
      %v2236 = vsel %vm381, %v2231, %v2233
      %v2237 = vsel %vm381, %v2233, %v2235
      %2240 = vst [vmem:[#allocation5] sm:$0xc0] %v2236
      %2241 = vst [vmem:[#allocation5 + $0x8] sm:$0xc0] %v2237
      %2242 = vst [vmem:[#allocation5 + $0x10] sm:$0xf] %v2236
      %2243 = vst [vmem:[#allocation5 + $0x18] sm:$0xf] %v2237
      %v2244 = vld [vmem:[#allocation3] sm:$0x3f]
      %v2245 = vld [vmem:[#allocation3 + $0x8] sm:$0x3f]
      %v2246 = vld [vmem:[#allocation3 + $0x10] sm:$0x3f]
      %v2247 = vld [vmem:[%s390] ss:$8 sm:$0x3]
      %v2249 = vlaneseq
      %v2250 = vshrl.u32 %v2249, 7
      %v2251 = vsub.s32 0, %v2250
      %v2252 = vrot.slane %v2247, %v2251
      %v2253 = vlaneseq
      %v2254 = vshrl.u32 %v2253, 7
      %v2255 = vsub.s32 1, %v2254
      %v2256 = vrot.slane %v2247, %v2255
      %2257 = vrot.lane.b32.xlu0 %v2252, 79
      %v2258 = vpop.permute.xlu0 %2257
      %2259 = vrot.lane.b32.xlu0 %v2256, 79
      %v2260 = vpop.permute.xlu0 %2259
      %v2261 = vsel %vm405, %v2258, %v2260
      %v2265 = vmul.f32 %v2244, %v2258
      %v2266 = vmul.f32 %v2245, %v2261
      %v2267 = vmul.f32 %v2246, %v2260
      %v2271 = vrot.slane %v2265, 4
      %v2272 = vrot.slane %v2266, 4
      %v2273 = vrot.slane %v2267, 4
      %2274 = vrot.lane.b32.xlu0 %v2271, 49
      %v2275 = vpop.permute.xlu0 %2274
      %2276 = vrot.lane.b32.xlu0 %v2272, 49
      %v2277 = vpop.permute.xlu0 %2276
      %2278 = vrot.lane.b32.xlu0 %v2273, 49
      %v2279 = vpop.permute.xlu0 %2278
      %v2280 = vsel %vm420, %v2275, %v2277
      %v2281 = vsel %vm420, %v2277, %v2279
      %2284 = vst [vmem:[#allocation5 + $0x10] sm:$0xf0] %v2280
      %2285 = vst [vmem:[#allocation5 + $0x18] sm:$0xf0] %v2281
      %2286 = vst [vmem:[#allocation5 + $0x20] sm:$0x3] %v2280
      %2287 = vst [vmem:[#allocation5 + $0x28] sm:$0x3] %v2281
      %v2288 = vld [vmem:[#allocation3] sm:$0x3f]
      %v2289 = vld [vmem:[#allocation3 + $0x8] sm:$0x3f]
      %v2290 = vld [vmem:[#allocation3 + $0x10] sm:$0x3f]
      %v2294 = vrot.slane %v2288, 6
      %v2295 = vrot.slane %v2289, 6
      %v2296 = vrot.slane %v2290, 6
      %2297 = vrot.lane.b32.xlu0 %v2294, 48
      %v2298 = vpop.permute.xlu0 %2297
      %2299 = vrot.lane.b32.xlu0 %v2295, 48
      %v2300 = vpop.permute.xlu0 %2299
      %2301 = vrot.lane.b32.xlu0 %v2296, 48
      %v2302 = vpop.permute.xlu0 %2301
      %v2303 = vsel %vm439, %v2298, %v2300
      %v2304 = vsel %vm439, %v2300, %v2302
      %2307 = vst [vmem:[#allocation5 + $0x20] sm:$0xfc] %v2303
      %2308 = vst [vmem:[#allocation5 + $0x28] sm:$0xfc] %v2304
      %v2309 = vld [vmem:[#allocation3] sm:$0x3f]
      %v2310 = vld [vmem:[#allocation3 + $0x8] sm:$0x3f]
      %v2311 = vld [vmem:[#allocation3 + $0x10] sm:$0x3f]
      %v2312 = vld [vmem:[%s448] ss:$8 sm:$0x3]
      %v2314 = vlaneseq
      %v2315 = vshrl.u32 %v2314, 7
      %v2316 = vsub.s32 0, %v2315
      %v2317 = vrot.slane %v2312, %v2316
      %v2318 = vlaneseq
      %v2319 = vshrl.u32 %v2318, 7
      %v2320 = vsub.s32 1, %v2319
      %v2321 = vrot.slane %v2312, %v2320
      %2322 = vrot.lane.b32.xlu0 %v2317, 81
      %v2323 = vpop.permute.xlu0 %2322
      %2324 = vrot.lane.b32.xlu0 %v2321, 81
      %v2325 = vpop.permute.xlu0 %2324
      %v2326 = vsel %vm463, %v2323, %v2325
      %v2330 = vmul.f32 %v2309, %v2323
      %v2331 = vmul.f32 %v2310, %v2326
      %v2332 = vmul.f32 %v2311, %v2325
      %2336 = vrot.lane.b32.xlu0 %v2330, 47
      %v2337 = vpop.permute.xlu0 %2336
      %2338 = vrot.lane.b32.xlu0 %v2331, 47
      %v2339 = vpop.permute.xlu0 %2338
      %2340 = vrot.lane.b32.xlu0 %v2332, 47
      %v2341 = vpop.permute.xlu0 %2340
      %v2342 = vsel %vm478, %v2337, %v2339
      %v2343 = vsel %vm478, %v2339, %v2341
      %2346 = vst [vmem:[#allocation5 + $0x30] sm:$0x3f] %v2342
      %2347 = vst [vmem:[#allocation5 + $0x38] sm:$0x3f] %v2343
      %v2348 = vld [vmem:[#allocation3] sm:$0x3f]
      %v2349 = vld [vmem:[#allocation3 + $0x8] sm:$0x3f]
      %v2350 = vld [vmem:[#allocation3 + $0x10] sm:$0x3f]
      %v2351 = vld [vmem:[%s487] ss:$8 sm:$0x3]
      %v2353 = vlaneseq
      %v2354 = vshrl.u32 %v2353, 7
      %v2355 = vsub.s32 0, %v2354
      %v2356 = vrot.slane %v2351, %v2355
      %v2357 = vlaneseq
      %v2358 = vshrl.u32 %v2357, 7
      %v2359 = vsub.s32 1, %v2358
      %v2360 = vrot.slane %v2351, %v2359
      %2361 = vrot.lane.b32.xlu0 %v2356, 82
      %v2362 = vpop.permute.xlu0 %2361
      %2363 = vrot.lane.b32.xlu0 %v2360, 82
      %v2364 = vpop.permute.xlu0 %2363
      %v2365 = vsel %vm502, %v2362, %v2364
      %v2369 = vmul.f32 %v2348, %v2362
      %v2370 = vmul.f32 %v2349, %v2365
      %v2371 = vmul.f32 %v2350, %v2364
      %v2375 = vrot.slane %v2369, 2
      %v2376 = vrot.slane %v2370, 2
      %v2377 = vrot.slane %v2371, 2
      %2378 = vrot.lane.b32.xlu0 %v2375, 46
      %v2379 = vpop.permute.xlu0 %2378
      %2380 = vrot.lane.b32.xlu0 %v2376, 46
      %v2381 = vpop.permute.xlu0 %2380
      %2382 = vrot.lane.b32.xlu0 %v2377, 46
      %v2383 = vpop.permute.xlu0 %2382
      %v2384 = vsel %vm518, %v2379, %v2381
      %v2385 = vsel %vm518, %v2381, %v2383
      %2388 = vst [vmem:[#allocation5 + $0x30] sm:$0xc0] %v2384
      %2389 = vst [vmem:[#allocation5 + $0x38] sm:$0xc0] %v2385
      %2390 = vst [vmem:[#allocation5 + $0x40] sm:$0xf] %v2384
      %2391 = vst [vmem:[#allocation5 + $0x48] sm:$0xf] %v2385
      %v2392 = vld [vmem:[#allocation3] sm:$0x3f]
      %v2393 = vld [vmem:[#allocation3 + $0x8] sm:$0x3f]
      %v2394 = vld [vmem:[#allocation3 + $0x10] sm:$0x3f]
      %v2395 = vld [vmem:[%s527] ss:$8 sm:$0x3]
      %v2397 = vlaneseq
      %v2398 = vshrl.u32 %v2397, 7
      %v2399 = vsub.s32 0, %v2398
      %v2400 = vrot.slane %v2395, %v2399
      %v2401 = vlaneseq
      %v2402 = vshrl.u32 %v2401, 7
      %v2403 = vsub.s32 1, %v2402
      %v2404 = vrot.slane %v2395, %v2403
      %2405 = vrot.lane.b32.xlu0 %v2400, 83
      %v2406 = vpop.permute.xlu0 %2405
      %2407 = vrot.lane.b32.xlu0 %v2404, 83
      %v2408 = vpop.permute.xlu0 %2407
      %v2409 = vsel %vm542, %v2406, %v2408
      %v2413 = vmul.f32 %v2392, %v2406
      %v2414 = vmul.f32 %v2393, %v2409
      %v2415 = vmul.f32 %v2394, %v2408
      %v2419 = vrot.slane %v2413, 4
      %v2420 = vrot.slane %v2414, 4
      %v2421 = vrot.slane %v2415, 4
      %2422 = vrot.lane.b32.xlu0 %v2419, 45
      %v2423 = vpop.permute.xlu0 %2422
      %2424 = vrot.lane.b32.xlu0 %v2420, 45
      %v2425 = vpop.permute.xlu0 %2424
      %2426 = vrot.lane.b32.xlu0 %v2421, 45
      %v2427 = vpop.permute.xlu0 %2426
      %v2428 = vsel %vm557, %v2423, %v2425
      %v2429 = vsel %vm557, %v2425, %v2427
      %2432 = vst [vmem:[#allocation5 + $0x40] sm:$0xf0] %v2428
      %2433 = vst [vmem:[#allocation5 + $0x48] sm:$0xf0] %v2429
      %2434 = vst [vmem:[#allocation5 + $0x50] sm:$0x3] %v2428
      %2435 = vst [vmem:[#allocation5 + $0x58] sm:$0x3] %v2429
      %v2436 = vld [vmem:[#allocation3] sm:$0x3f]
      %v2437 = vld [vmem:[#allocation3 + $0x8] sm:$0x3f]
      %v2438 = vld [vmem:[#allocation3 + $0x10] sm:$0x3f]
      %v2439 = vld [vmem:[%s1] ss:$8 sm:$0x3]
      %v2441 = vlaneseq
      %v2442 = vshrl.u32 %v2441, 7
      %v2443 = vsub.s32 0, %v2442
      %v2444 = vrot.slane %v2439, %v2443
      %v2445 = vlaneseq
      %v2446 = vshrl.u32 %v2445, 7
      %v2447 = vsub.s32 1, %v2446
      %v2448 = vrot.slane %v2439, %v2447
      %2449 = vrot.lane.b32.xlu0 %v2444, 93
      %v2450 = vpop.permute.xlu0 %2449
      %2451 = vrot.lane.b32.xlu0 %v2448, 93
      %v2452 = vpop.permute.xlu0 %2451
      %v2453 = vsel %vm580, %v2450, %v2452
      %v2457 = vmul.f32 %v2436, %v2450
      %v2458 = vmul.f32 %v2437, %v2453
      %v2459 = vmul.f32 %v2438, %v2452
      %v2463 = vrot.slane %v2457, 6
      %v2464 = vrot.slane %v2458, 6
      %v2465 = vrot.slane %v2459, 6
      %2466 = vrot.lane.b32.xlu0 %v2463, 35
      %v2467 = vpop.permute.xlu0 %2466
      %2468 = vrot.lane.b32.xlu0 %v2464, 35
      %v2469 = vpop.permute.xlu0 %2468
      %2470 = vrot.lane.b32.xlu0 %v2465, 35
      %v2471 = vpop.permute.xlu0 %2470
      %v2472 = vsel %vm596, %v2467, %v2469
      %v2473 = vsel %vm596, %v2469, %v2471
      %2476 = vst [vmem:[#allocation5 + $0x50] sm:$0xfc] %v2472
      %2477 = vst [vmem:[#allocation5 + $0x58] sm:$0xfc] %v2473
      %v2478 = vld [vmem:[#allocation3] sm:$0x3f]
      %v2479 = vld [vmem:[#allocation3 + $0x8] sm:$0x3f]
      %v2480 = vld [vmem:[#allocation3 + $0x10] sm:$0x3f]
      %v2481 = vld [vmem:[%s350] ss:$8 sm:$0x3]
      %v2483 = vlaneseq
      %v2484 = vshrl.u32 %v2483, 7
      %v2485 = vsub.s32 0, %v2484
      %v2486 = vrot.slane %v2481, %v2485
      %v2487 = vlaneseq
      %v2488 = vshrl.u32 %v2487, 7
      %v2489 = vsub.s32 1, %v2488
      %v2490 = vrot.slane %v2481, %v2489
      %2491 = vrot.lane.b32.xlu0 %v2486, 94
      %v2492 = vpop.permute.xlu0 %2491
      %2493 = vrot.lane.b32.xlu0 %v2490, 94
      %v2494 = vpop.permute.xlu0 %2493
      %v2495 = vsel %vm619, %v2492, %v2494
      %v2499 = vmul.f32 %v2478, %v2492
      %v2500 = vmul.f32 %v2479, %v2495
      %v2501 = vmul.f32 %v2480, %v2494
      %2505 = vrot.lane.b32.xlu0 %v2499, 34
      %v2506 = vpop.permute.xlu0 %2505
      %2507 = vrot.lane.b32.xlu0 %v2500, 34
      %v2508 = vpop.permute.xlu0 %2507
      %2509 = vrot.lane.b32.xlu0 %v2501, 34
      %v2510 = vpop.permute.xlu0 %2509
      %v2511 = vsel %vm634, %v2506, %v2508
      %v2512 = vsel %vm634, %v2508, %v2510
      %2515 = vst [vmem:[#allocation5 + $0x60] sm:$0x3f] %v2511
      %2516 = vst [vmem:[#allocation5 + $0x68] sm:$0x3f] %v2512
      %v2517 = vld [vmem:[#allocation3] sm:$0x3f]
      %v2518 = vld [vmem:[#allocation3 + $0x8] sm:$0x3f]
      %v2519 = vld [vmem:[#allocation3 + $0x10] sm:$0x3f]
      %v2520 = vld [vmem:[%s390] ss:$8 sm:$0x3]
      %v2522 = vlaneseq
      %v2523 = vshrl.u32 %v2522, 7
      %v2524 = vsub.s32 0, %v2523
      %v2525 = vrot.slane %v2520, %v2524
      %v2526 = vlaneseq
      %v2527 = vshrl.u32 %v2526, 7
      %v2528 = vsub.s32 1, %v2527
      %v2529 = vrot.slane %v2520, %v2528
      %2530 = vrot.lane.b32.xlu0 %v2525, 95
      %v2531 = vpop.permute.xlu0 %2530
      %2532 = vrot.lane.b32.xlu0 %v2529, 95
      %v2533 = vpop.permute.xlu0 %2532
      %v2534 = vsel %vm657, %v2531, %v2533
      %v2538 = vmul.f32 %v2517, %v2531
      %v2539 = vmul.f32 %v2518, %v2534
      %v2540 = vmul.f32 %v2519, %v2533
      %v2544 = vrot.slane %v2538, 2
      %v2545 = vrot.slane %v2539, 2
      %v2546 = vrot.slane %v2540, 2
      %2547 = vrot.lane.b32.xlu0 %v2544, 33
      %v2548 = vpop.permute.xlu0 %2547
      %2549 = vrot.lane.b32.xlu0 %v2545, 33
      %v2550 = vpop.permute.xlu0 %2549
      %2551 = vrot.lane.b32.xlu0 %v2546, 33
      %v2552 = vpop.permute.xlu0 %2551
      %v2553 = vsel %vm673, %v2548, %v2550
      %v2554 = vsel %vm673, %v2550, %v2552
      %2557 = vst [vmem:[#allocation5 + $0x60] sm:$0xc0] %v2553
      %2558 = vst [vmem:[#allocation5 + $0x68] sm:$0xc0] %v2554
      %2559 = vst [vmem:[#allocation5 + $0x70] sm:$0xf] %v2553
      %2560 = vst [vmem:[#allocation5 + $0x78] sm:$0xf] %v2554
      %v2561 = vld [vmem:[#allocation3] sm:$0x3f]
      %v2562 = vld [vmem:[#allocation3 + $0x8] sm:$0x3f]
      %v2563 = vld [vmem:[#allocation3 + $0x10] sm:$0x3f]
      %v2567 = vrot.slane %v2561, 4
      %v2568 = vrot.slane %v2562, 4
      %v2569 = vrot.slane %v2563, 4
      %2570 = vrot.lane.b32.xlu0 %v2567, 32
      %v2571 = vpop.permute.xlu0 %2570
      %2572 = vrot.lane.b32.xlu0 %v2568, 32
      %v2573 = vpop.permute.xlu0 %2572
      %2574 = vrot.lane.b32.xlu0 %v2569, 32
      %v2575 = vpop.permute.xlu0 %2574
      %v2576 = vsel %vm691, %v2571, %v2573
      %v2577 = vsel %vm691, %v2573, %v2575
      %2580 = vst [vmem:[#allocation5 + $0x70] sm:$0xf0] %v2576
      %2581 = vst [vmem:[#allocation5 + $0x78] sm:$0xf0] %v2577
      %2582 = vst [vmem:[#allocation5 + $0x80] sm:$0x3] %v2576
      %2583 = vst [vmem:[#allocation5 + $0x88] sm:$0x3] %v2577
      %v2584 = vld [vmem:[#allocation3] sm:$0x3f]
      %v2585 = vld [vmem:[#allocation3 + $0x8] sm:$0x3f]
      %v2586 = vld [vmem:[#allocation3 + $0x10] sm:$0x3f]
      %v2587 = vld [vmem:[%s448] ss:$8 sm:$0x3]
      %v2589 = vlaneseq
      %v2590 = vshrl.u32 %v2589, 7
      %v2591 = vsub.s32 0, %v2590
      %v2592 = vrot.slane %v2587, %v2591
      %v2593 = vlaneseq
      %v2594 = vshrl.u32 %v2593, 7
      %v2595 = vsub.s32 1, %v2594
      %v2596 = vrot.slane %v2587, %v2595
      %2597 = vrot.lane.b32.xlu0 %v2592, 97
      %v2598 = vpop.permute.xlu0 %2597
      %2599 = vrot.lane.b32.xlu0 %v2596, 97
      %v2600 = vpop.permute.xlu0 %2599
      %v2601 = vsel %vm714, %v2598, %v2600
      %v2605 = vmul.f32 %v2584, %v2598
      %v2606 = vmul.f32 %v2585, %v2601
      %v2607 = vmul.f32 %v2586, %v2600
      %v2611 = vrot.slane %v2605, 6
      %v2612 = vrot.slane %v2606, 6
      %v2613 = vrot.slane %v2607, 6
      %2614 = vrot.lane.b32.xlu0 %v2611, 31
      %v2615 = vpop.permute.xlu0 %2614
      %2616 = vrot.lane.b32.xlu0 %v2612, 31
      %v2617 = vpop.permute.xlu0 %2616
      %2618 = vrot.lane.b32.xlu0 %v2613, 31
      %v2619 = vpop.permute.xlu0 %2618
      %v2620 = vsel %vm730, %v2615, %v2617
      %v2621 = vsel %vm730, %v2617, %v2619
      %2624 = vst [vmem:[#allocation5 + $0x80] sm:$0xfc] %v2620
      %2625 = vst [vmem:[#allocation5 + $0x88] sm:$0xfc] %v2621
      %v2626 = vld [vmem:[#allocation3] sm:$0x3f]
      %v2627 = vld [vmem:[#allocation3 + $0x8] sm:$0x3f]
      %v2628 = vld [vmem:[#allocation3 + $0x10] sm:$0x3f]
      %v2629 = vld [vmem:[%s487] ss:$8 sm:$0x3]
      %v2631 = vlaneseq
      %v2632 = vshrl.u32 %v2631, 7
      %v2633 = vsub.s32 0, %v2632
      %v2634 = vrot.slane %v2629, %v2633
      %v2635 = vlaneseq
      %v2636 = vshrl.u32 %v2635, 7
      %v2637 = vsub.s32 1, %v2636
      %v2638 = vrot.slane %v2629, %v2637
      %2639 = vrot.lane.b32.xlu0 %v2634, 98
      %v2640 = vpop.permute.xlu0 %2639
      %2641 = vrot.lane.b32.xlu0 %v2638, 98
      %v2642 = vpop.permute.xlu0 %2641
      %v2643 = vsel %vm753, %v2640, %v2642
      %v2647 = vmul.f32 %v2626, %v2640
      %v2648 = vmul.f32 %v2627, %v2643
      %v2649 = vmul.f32 %v2628, %v2642
      %2653 = vrot.lane.b32.xlu0 %v2647, 30
      %v2654 = vpop.permute.xlu0 %2653
      %2655 = vrot.lane.b32.xlu0 %v2648, 30
      %v2656 = vpop.permute.xlu0 %2655
      %2657 = vrot.lane.b32.xlu0 %v2649, 30
      %v2658 = vpop.permute.xlu0 %2657
      %v2659 = vsel %vm768, %v2654, %v2656
      %v2660 = vsel %vm768, %v2656, %v2658
      %2663 = vst [vmem:[#allocation5 + $0x90] sm:$0x3f] %v2659
      %2664 = vst [vmem:[#allocation5 + $0x98] sm:$0x3f] %v2660
      %v2665 = vld [vmem:[#allocation3] sm:$0x3f]
      %v2666 = vld [vmem:[#allocation3 + $0x8] sm:$0x3f]
      %v2667 = vld [vmem:[#allocation3 + $0x10] sm:$0x3f]
      %v2668 = vld [vmem:[%s527] ss:$8 sm:$0x3]
      %v2670 = vlaneseq
      %v2671 = vshrl.u32 %v2670, 7
      %v2672 = vsub.s32 0, %v2671
      %v2673 = vrot.slane %v2668, %v2672
      %v2674 = vlaneseq
      %v2675 = vshrl.u32 %v2674, 7
      %v2676 = vsub.s32 1, %v2675
      %v2677 = vrot.slane %v2668, %v2676
      %2678 = vrot.lane.b32.xlu0 %v2673, 99
      %v2679 = vpop.permute.xlu0 %2678
      %2680 = vrot.lane.b32.xlu0 %v2677, 99
      %v2681 = vpop.permute.xlu0 %2680
      %v2682 = vsel %vm791, %v2679, %v2681
      %v2686 = vmul.f32 %v2665, %v2679
      %v2687 = vmul.f32 %v2666, %v2682
      %v2688 = vmul.f32 %v2667, %v2681
      %v2692 = vrot.slane %v2686, 2
      %v2693 = vrot.slane %v2687, 2
      %v2694 = vrot.slane %v2688, 2
      %2695 = vrot.lane.b32.xlu0 %v2692, 29
      %v2696 = vpop.permute.xlu0 %2695
      %2697 = vrot.lane.b32.xlu0 %v2693, 29
      %v2698 = vpop.permute.xlu0 %2697
      %2699 = vrot.lane.b32.xlu0 %v2694, 29
      %v2700 = vpop.permute.xlu0 %2699
      %v2701 = vsel %vm807, %v2696, %v2698
      %v2702 = vsel %vm807, %v2698, %v2700
      %2705 = vst [vmem:[#allocation5 + $0x90] sm:$0xc0] %v2701
      %2706 = vst [vmem:[#allocation5 + $0x98] sm:$0xc0] %v2702
      %2707 = vst [vmem:[#allocation5 + $0xa0] sm:$0xf] %v2701
      %2708 = vst [vmem:[#allocation5 + $0xa8] sm:$0xf] %v2702
      %v2709 = vld [vmem:[#allocation3] sm:$0x3f]
      %v2710 = vld [vmem:[#allocation3 + $0x8] sm:$0x3f]
      %v2711 = vld [vmem:[#allocation3 + $0x10] sm:$0x3f]
      %v2712 = vld [vmem:[%s1] ss:$8 sm:$0x3]
      %v2714 = vlaneseq
      %v2715 = vshrl.u32 %v2714, 7
      %v2716 = vsub.s32 0, %v2715
      %v2717 = vrot.slane %v2712, %v2716
      %v2718 = vlaneseq
      %v2719 = vshrl.u32 %v2718, 7
      %v2720 = vsub.s32 1, %v2719
      %v2721 = vrot.slane %v2712, %v2720
      %2722 = vrot.lane.b32.xlu0 %v2717, 109
      %v2723 = vpop.permute.xlu0 %2722
      %2724 = vrot.lane.b32.xlu0 %v2721, 109
      %v2725 = vpop.permute.xlu0 %2724
      %v2726 = vsel %vm830, %v2723, %v2725
      %v2730 = vmul.f32 %v2709, %v2723
      %v2731 = vmul.f32 %v2710, %v2726
      %v2732 = vmul.f32 %v2711, %v2725
      %v2736 = vrot.slane %v2730, 4
      %v2737 = vrot.slane %v2731, 4
      %v2738 = vrot.slane %v2732, 4
      %2739 = vrot.lane.b32.xlu0 %v2736, 19
      %v2740 = vpop.permute.xlu0 %2739
      %2741 = vrot.lane.b32.xlu0 %v2737, 19
      %v2742 = vpop.permute.xlu0 %2741
      %2743 = vrot.lane.b32.xlu0 %v2738, 19
      %v2744 = vpop.permute.xlu0 %2743
      %v2745 = vsel %vm845, %v2740, %v2742
      %v2746 = vsel %vm845, %v2742, %v2744
      %2749 = vst [vmem:[#allocation5 + $0xa0] sm:$0xf0] %v2745
      %2750 = vst [vmem:[#allocation5 + $0xa8] sm:$0xf0] %v2746
      %2751 = vst [vmem:[#allocation5 + $0xb0] sm:$0x3] %v2745
      %2752 = vst [vmem:[#allocation5 + $0xb8] sm:$0x3] %v2746
      %v2753 = vld [vmem:[#allocation3] sm:$0x3f]
      %v2754 = vld [vmem:[#allocation3 + $0x8] sm:$0x3f]
      %v2755 = vld [vmem:[#allocation3 + $0x10] sm:$0x3f]
      %v2756 = vld [vmem:[%s350] ss:$8 sm:$0x3]
      %v2758 = vlaneseq
      %v2759 = vshrl.u32 %v2758, 7
      %v2760 = vsub.s32 0, %v2759
      %v2761 = vrot.slane %v2756, %v2760
      %v2762 = vlaneseq
      %v2763 = vshrl.u32 %v2762, 7
      %v2764 = vsub.s32 1, %v2763
      %v2765 = vrot.slane %v2756, %v2764
      %2766 = vrot.lane.b32.xlu0 %v2761, 110
      %v2767 = vpop.permute.xlu0 %2766
      %2768 = vrot.lane.b32.xlu0 %v2765, 110
      %v2769 = vpop.permute.xlu0 %2768
      %v2770 = vsel %vm868, %v2767, %v2769
      %v2774 = vmul.f32 %v2753, %v2767
      %v2775 = vmul.f32 %v2754, %v2770
      %v2776 = vmul.f32 %v2755, %v2769
      %v2780 = vrot.slane %v2774, 6
      %v2781 = vrot.slane %v2775, 6
      %v2782 = vrot.slane %v2776, 6
      %2783 = vrot.lane.b32.xlu0 %v2780, 18
      %v2784 = vpop.permute.xlu0 %2783
      %2785 = vrot.lane.b32.xlu0 %v2781, 18
      %v2786 = vpop.permute.xlu0 %2785
      %2787 = vrot.lane.b32.xlu0 %v2782, 18
      %v2788 = vpop.permute.xlu0 %2787
      %v2789 = vsel %vm884, %v2784, %v2786
      %v2790 = vsel %vm884, %v2786, %v2788
      %2793 = vst [vmem:[#allocation5 + $0xb0] sm:$0xfc] %v2789
      %2794 = vst [vmem:[#allocation5 + $0xb8] sm:$0xfc] %v2790
      %v2795 = vld [vmem:[#allocation3] sm:$0x3f]
      %v2796 = vld [vmem:[#allocation3 + $0x8] sm:$0x3f]
      %v2797 = vld [vmem:[#allocation3 + $0x10] sm:$0x3f]
      %v2798 = vld [vmem:[%s390] ss:$8 sm:$0x3]
      %v2800 = vlaneseq
      %v2801 = vshrl.u32 %v2800, 7
      %v2802 = vsub.s32 0, %v2801
      %v2803 = vrot.slane %v2798, %v2802
      %v2804 = vlaneseq
      %v2805 = vshrl.u32 %v2804, 7
      %v2806 = vsub.s32 1, %v2805
      %v2807 = vrot.slane %v2798, %v2806
      %2808 = vrot.lane.b32.xlu0 %v2803, 111
      %v2809 = vpop.permute.xlu0 %2808
      %2810 = vrot.lane.b32.xlu0 %v2807, 111
      %v2811 = vpop.permute.xlu0 %2810
      %v2812 = vsel %vm907, %v2809, %v2811
      %v2816 = vmul.f32 %v2795, %v2809
      %v2817 = vmul.f32 %v2796, %v2812
      %v2818 = vmul.f32 %v2797, %v2811
      %2822 = vrot.lane.b32.xlu0 %v2816, 17
      %v2823 = vpop.permute.xlu0 %2822
      %2824 = vrot.lane.b32.xlu0 %v2817, 17
      %v2825 = vpop.permute.xlu0 %2824
      %2826 = vrot.lane.b32.xlu0 %v2818, 17
      %v2827 = vpop.permute.xlu0 %2826
      %v2828 = vsel %vm922, %v2823, %v2825
      %v2829 = vsel %vm922, %v2825, %v2827
      %2832 = vst [vmem:[#allocation5 + $0xc0] sm:$0x3f] %v2828
      %2833 = vst [vmem:[#allocation5 + $0xc8] sm:$0x3f] %v2829
      %v2834 = vld [vmem:[#allocation3] sm:$0x3f]
      %v2835 = vld [vmem:[#allocation3 + $0x8] sm:$0x3f]
      %v2836 = vld [vmem:[#allocation3 + $0x10] sm:$0x3f]
      %v2840 = vrot.slane %v2834, 2
      %v2841 = vrot.slane %v2835, 2
      %v2842 = vrot.slane %v2836, 2
      %2843 = vrot.lane.b32.xlu0 %v2840, 16
      %v2844 = vpop.permute.xlu0 %2843
      %2845 = vrot.lane.b32.xlu0 %v2841, 16
      %v2846 = vpop.permute.xlu0 %2845
      %2847 = vrot.lane.b32.xlu0 %v2842, 16
      %v2848 = vpop.permute.xlu0 %2847
      %v2849 = vsel %vm941, %v2844, %v2846
      %v2850 = vsel %vm941, %v2846, %v2848
      %2853 = vst [vmem:[#allocation5 + $0xc0] sm:$0xc0] %v2849
      %2854 = vst [vmem:[#allocation5 + $0xc8] sm:$0xc0] %v2850
      %2855 = vst [vmem:[#allocation5 + $0xd0] sm:$0xf] %v2849
      %2856 = vst [vmem:[#allocation5 + $0xd8] sm:$0xf] %v2850
      %v2857 = vld [vmem:[#allocation3] sm:$0x3f]
      %v2858 = vld [vmem:[#allocation3 + $0x8] sm:$0x3f]
      %v2859 = vld [vmem:[#allocation3 + $0x10] sm:$0x3f]
      %v2860 = vld [vmem:[%s448] ss:$8 sm:$0x3]
      %v2862 = vlaneseq
      %v2863 = vshrl.u32 %v2862, 7
      %v2864 = vsub.s32 0, %v2863
      %v2865 = vrot.slane %v2860, %v2864
      %v2866 = vlaneseq
      %v2867 = vshrl.u32 %v2866, 7
      %v2868 = vsub.s32 1, %v2867
      %v2869 = vrot.slane %v2860, %v2868
      %2870 = vrot.lane.b32.xlu0 %v2865, 113
      %v2871 = vpop.permute.xlu0 %2870
      %2872 = vrot.lane.b32.xlu0 %v2869, 113
      %v2873 = vpop.permute.xlu0 %2872
      %v2874 = vsel %vm964, %v2871, %v2873
      %v2878 = vmul.f32 %v2857, %v2871
      %v2879 = vmul.f32 %v2858, %v2874
      %v2880 = vmul.f32 %v2859, %v2873
      %v2884 = vrot.slane %v2878, 4
      %v2885 = vrot.slane %v2879, 4
      %v2886 = vrot.slane %v2880, 4
      %2887 = vrot.lane.b32.xlu0 %v2884, 15
      %v2888 = vpop.permute.xlu0 %2887
      %2889 = vrot.lane.b32.xlu0 %v2885, 15
      %v2890 = vpop.permute.xlu0 %2889
      %2891 = vrot.lane.b32.xlu0 %v2886, 15
      %v2892 = vpop.permute.xlu0 %2891
      %v2893 = vsel %vm979, %v2888, %v2890
      %v2894 = vsel %vm979, %v2890, %v2892
      %2897 = vst [vmem:[#allocation5 + $0xd0] sm:$0xf0] %v2893
      %2898 = vst [vmem:[#allocation5 + $0xd8] sm:$0xf0] %v2894
      %2899 = vst [vmem:[#allocation5 + $0xe0] sm:$0x3] %v2893
      %2900 = vst [vmem:[#allocation5 + $0xe8] sm:$0x3] %v2894
      %v2901 = vld [vmem:[#allocation3] sm:$0x3f]
      %v2902 = vld [vmem:[#allocation3 + $0x8] sm:$0x3f]
      %v2903 = vld [vmem:[#allocation3 + $0x10] sm:$0x3f]
      %v2904 = vld [vmem:[%s487] ss:$8 sm:$0x3]
      %v2906 = vlaneseq
      %v2907 = vshrl.u32 %v2906, 7
      %v2908 = vsub.s32 0, %v2907
      %v2909 = vrot.slane %v2904, %v2908
      %v2910 = vlaneseq
      %v2911 = vshrl.u32 %v2910, 7
      %v2912 = vsub.s32 1, %v2911
      %v2913 = vrot.slane %v2904, %v2912
      %2914 = vrot.lane.b32.xlu0 %v2909, 114
      %v2915 = vpop.permute.xlu0 %2914
      %2916 = vrot.lane.b32.xlu0 %v2913, 114
      %v2917 = vpop.permute.xlu0 %2916
      %v2918 = vsel %vm1002, %v2915, %v2917
      %v2922 = vmul.f32 %v2901, %v2915
      %v2923 = vmul.f32 %v2902, %v2918
      %v2924 = vmul.f32 %v2903, %v2917
      %v2928 = vrot.slane %v2922, 6
      %v2929 = vrot.slane %v2923, 6
      %v2930 = vrot.slane %v2924, 6
      %2931 = vrot.lane.b32.xlu0 %v2928, 14
      %v2932 = vpop.permute.xlu0 %2931
      %2933 = vrot.lane.b32.xlu0 %v2929, 14
      %v2934 = vpop.permute.xlu0 %2933
      %2935 = vrot.lane.b32.xlu0 %v2930, 14
      %v2936 = vpop.permute.xlu0 %2935
      %v2937 = vsel %vm1018, %v2932, %v2934
      %v2938 = vsel %vm1018, %v2934, %v2936
      %2941 = vst [vmem:[#allocation5 + $0xe0] sm:$0xfc] %v2937
      %2942 = vst [vmem:[#allocation5 + $0xe8] sm:$0xfc] %v2938
      %v2943 = vld [vmem:[#allocation3] sm:$0x3f]
      %v2944 = vld [vmem:[#allocation3 + $0x8] sm:$0x3f]
      %v2945 = vld [vmem:[#allocation3 + $0x10] sm:$0x3f]
      %v2946 = vld [vmem:[%s527] ss:$8 sm:$0x3]
      %v2948 = vlaneseq
      %v2949 = vshrl.u32 %v2948, 7
      %v2950 = vsub.s32 0, %v2949
      %v2951 = vrot.slane %v2946, %v2950
      %v2952 = vlaneseq
      %v2953 = vshrl.u32 %v2952, 7
      %v2954 = vsub.s32 1, %v2953
      %v2955 = vrot.slane %v2946, %v2954
      %2956 = vrot.lane.b32.xlu0 %v2951, 115
      %v2957 = vpop.permute.xlu0 %2956
      %2958 = vrot.lane.b32.xlu0 %v2955, 115
      %v2959 = vpop.permute.xlu0 %2958
      %v2960 = vsel %vm1041, %v2957, %v2959
      %v2964 = vmul.f32 %v2943, %v2957
      %v2965 = vmul.f32 %v2944, %v2960
      %v2966 = vmul.f32 %v2945, %v2959
      %2970 = vrot.lane.b32.xlu0 %v2964, 13
      %v2971 = vpop.permute.xlu0 %2970
      %2972 = vrot.lane.b32.xlu0 %v2965, 13
      %v2973 = vpop.permute.xlu0 %2972
      %2974 = vrot.lane.b32.xlu0 %v2966, 13
      %v2975 = vpop.permute.xlu0 %2974
      %v2976 = vsel %vm1056, %v2971, %v2973
      %v2977 = vsel %vm1056, %v2973, %v2975
      %2980 = vst [vmem:[#allocation5 + $0xf0] sm:$0x3f] %v2976
      %2981 = vst [vmem:[#allocation5 + $0xf8] sm:$0x3f] %v2977
      %v2982 = vld [vmem:[#allocation3] sm:$0x3f]
      %v2983 = vld [vmem:[#allocation3 + $0x8] sm:$0x3f]
      %v2984 = vld [vmem:[#allocation3 + $0x10] sm:$0x3f]
      %v2985 = vld [vmem:[%s1] ss:$8 sm:$0x3]
      %v2987 = vlaneseq
      %v2988 = vshrl.u32 %v2987, 7
      %v2989 = vsub.s32 0, %v2988
      %v2990 = vrot.slane %v2985, %v2989
      %v2991 = vlaneseq
      %v2992 = vshrl.u32 %v2991, 7
      %v2993 = vsub.s32 1, %v2992
      %v2994 = vrot.slane %v2985, %v2993
      %2995 = vrot.lane.b32.xlu0 %v2990, 125
      %v2996 = vpop.permute.xlu0 %2995
      %2997 = vrot.lane.b32.xlu0 %v2994, 125
      %v2998 = vpop.permute.xlu0 %2997
      %v2999 = vsel %vm1079, %v2996, %v2998
      %v3003 = vmul.f32 %v2982, %v2996
      %v3004 = vmul.f32 %v2983, %v2999
      %v3005 = vmul.f32 %v2984, %v2998
      %v3009 = vrot.slane %v3003, 2
      %v3010 = vrot.slane %v3004, 2
      %v3011 = vrot.slane %v3005, 2
      %3012 = vrot.lane.b32.xlu0 %v3009, 3
      %v3013 = vpop.permute.xlu0 %3012
      %3014 = vrot.lane.b32.xlu0 %v3010, 3
      %v3015 = vpop.permute.xlu0 %3014
      %3016 = vrot.lane.b32.xlu0 %v3011, 3
      %v3017 = vpop.permute.xlu0 %3016
      %v3018 = vsel %vm1095, %v3013, %v3015
      %v3019 = vsel %vm1095, %v3015, %v3017
      %3022 = vst [vmem:[#allocation5 + $0xf0] sm:$0xc0] %v3018
      %3023 = vst [vmem:[#allocation5 + $0xf8] sm:$0xc0] %v3019
      %3024 = vst [vmem:[#allocation5 + $0x100] sm:$0xf] %v3018
      %3025 = vst [vmem:[#allocation5 + $0x108] sm:$0xf] %v3019
      %v3026 = vld [vmem:[#allocation3] sm:$0x3f]
      %v3027 = vld [vmem:[#allocation3 + $0x8] sm:$0x3f]
      %v3028 = vld [vmem:[#allocation3 + $0x10] sm:$0x3f]
      %v3029 = vld [vmem:[%s350] ss:$8 sm:$0x3]
      %v3031 = vlaneseq
      %v3032 = vshrl.u32 %v3031, 7
      %v3033 = vsub.s32 0, %v3032
      %v3034 = vrot.slane %v3029, %v3033
      %v3035 = vlaneseq
      %v3036 = vshrl.u32 %v3035, 7
      %v3037 = vsub.s32 1, %v3036
      %v3038 = vrot.slane %v3029, %v3037
      %3039 = vrot.lane.b32.xlu0 %v3034, 126
      %v3040 = vpop.permute.xlu0 %3039
      %3041 = vrot.lane.b32.xlu0 %v3038, 126
      %v3042 = vpop.permute.xlu0 %3041
      %v3043 = vsel %vm1118, %v3040, %v3042
      %v3047 = vmul.f32 %v3026, %v3040
      %v3048 = vmul.f32 %v3027, %v3043
      %v3049 = vmul.f32 %v3028, %v3042
      %v3053 = vrot.slane %v3047, 4
      %v3054 = vrot.slane %v3048, 4
      %v3055 = vrot.slane %v3049, 4
      %3056 = vrot.lane.b32.xlu0 %v3053, 2
      %v3057 = vpop.permute.xlu0 %3056
      %3058 = vrot.lane.b32.xlu0 %v3054, 2
      %v3059 = vpop.permute.xlu0 %3058
      %3060 = vrot.lane.b32.xlu0 %v3055, 2
      %v3061 = vpop.permute.xlu0 %3060
      %v3062 = vsel %vm1133, %v3057, %v3059
      %v3063 = vsel %vm1133, %v3059, %v3061
      %3066 = vst [vmem:[#allocation5 + $0x100] sm:$0xf0] %v3062
      %3067 = vst [vmem:[#allocation5 + $0x108] sm:$0xf0] %v3063
      %3068 = vst [vmem:[#allocation5 + $0x110] sm:$0x3] %v3062
      %3069 = vst [vmem:[#allocation5 + $0x118] sm:$0x3] %v3063
      %v3070 = vld [vmem:[#allocation3] sm:$0x3f]
      %v3071 = vld [vmem:[#allocation3 + $0x8] sm:$0x3f]
      %v3072 = vld [vmem:[#allocation3 + $0x10] sm:$0x3f]
      %v3073 = vld [vmem:[%s390] ss:$8 sm:$0x3]
      %v3075 = vlaneseq
      %v3076 = vshrl.u32 %v3075, 7
      %v3077 = vsub.s32 0, %v3076
      %v3078 = vrot.slane %v3073, %v3077
      %v3079 = vlaneseq
      %v3080 = vshrl.u32 %v3079, 7
      %v3081 = vsub.s32 1, %v3080
      %v3082 = vrot.slane %v3073, %v3081
      %3083 = vrot.lane.b32.xlu0 %v3078, 127
      %v3084 = vpop.permute.xlu0 %3083
      %3085 = vrot.lane.b32.xlu0 %v3082, 127
      %v3086 = vpop.permute.xlu0 %3085
      %v3087 = vsel %vm1156, %v3084, %v3086
      %v3091 = vmul.f32 %v3070, %v3084
      %v3092 = vmul.f32 %v3071, %v3087
      %v3093 = vmul.f32 %v3072, %v3086
      %v3097 = vrot.slane %v3091, 6
      %v3098 = vrot.slane %v3092, 6
      %v3099 = vrot.slane %v3093, 6
      %3100 = vrot.lane.b32.xlu0 %v3097, 1
      %v3101 = vpop.permute.xlu0 %3100
      %3102 = vrot.lane.b32.xlu0 %v3098, 1
      %v3103 = vpop.permute.xlu0 %3102
      %3104 = vrot.lane.b32.xlu0 %v3099, 1
      %v3105 = vpop.permute.xlu0 %3104
      %v3106 = vsel %vm1172, %v3101, %v3103
      %v3107 = vsel %vm1172, %v3103, %v3105
      %3110 = vst [vmem:[#allocation5 + $0x110] sm:$0xfc] %v3106
      %3111 = vst [vmem:[#allocation5 + $0x118] sm:$0xfc] %v3107
      %v3112 = vld [vmem:[#allocation3 + $0x8] sm:$0x3f]
      %v3113 = vld [vmem:[#allocation3 + $0x10] sm:$0x3f]
      %3114 = vst [vmem:[#allocation5 + $0x120] sm:$0x3f] %v3112
      %3115 = vst [vmem:[#allocation5 + $0x128] sm:$0x3f] %v3113
      %v3116 = vld [vmem:[#allocation3 + $0x8] sm:$0x3f]
      %v3117 = vld [vmem:[#allocation3 + $0x10] sm:$0x3f]
      %v3118 = vld [vmem:[#allocation3 + $0x18] sm:$0x3f]
      %v3119 = vld [vmem:[%s448] ss:$8 sm:$0x3]
      %v3121 = vlaneseq
      %v3122 = vshrl.u32 %v3121, 7
      %v3123 = vsub.s32 0, %v3122
      %v3124 = vrot.slane %v3119, %v3123
      %v3125 = vlaneseq
      %v3126 = vshrl.u32 %v3125, 7
      %v3127 = vsub.s32 1, %v3126
      %v3128 = vrot.slane %v3119, %v3127
      %3129 = vrot.lane.b32.xlu0 %v3124, 1
      %v3130 = vpop.permute.xlu0 %3129
      %3131 = vrot.lane.b32.xlu0 %v3128, 1
      %v3132 = vpop.permute.xlu0 %3131
      %v3133 = vsel %vm1172, %v3130, %v3132
      %v3137 = vmul.f32 %v3116, %v3130
      %v3138 = vmul.f32 %v3117, %v3133
      %v3139 = vmul.f32 %v3118, %v3132
      %v3143 = vrot.slane %v3137, 2
      %v3144 = vrot.slane %v3138, 2
      %v3145 = vrot.slane %v3139, 2
      %3146 = vrot.lane.b32.xlu0 %v3143, 127
      %v3147 = vpop.permute.xlu0 %3146
      %3148 = vrot.lane.b32.xlu0 %v3144, 127
      %v3149 = vpop.permute.xlu0 %3148
      %3150 = vrot.lane.b32.xlu0 %v3145, 127
      %v3151 = vpop.permute.xlu0 %3150
      %v3152 = vsel %vm1156, %v3147, %v3149
      %v3153 = vsel %vm1156, %v3149, %v3151
      %3156 = vst [vmem:[#allocation5 + $0x120] sm:$0xc0] %v3152
      %3157 = vst [vmem:[#allocation5 + $0x128] sm:$0xc0] %v3153
      %3158 = vst [vmem:[#allocation5 + $0x130] sm:$0xf] %v3152
      %3159 = vst [vmem:[#allocation5 + $0x138] sm:$0xf] %v3153
      %v3160 = vld [vmem:[#allocation3 + $0x8] sm:$0x3f]
      %v3161 = vld [vmem:[#allocation3 + $0x10] sm:$0x3f]
      %v3162 = vld [vmem:[#allocation3 + $0x18] sm:$0x3f]
      %v3163 = vld [vmem:[%s487] ss:$8 sm:$0x3]
      %v3165 = vlaneseq
      %v3166 = vshrl.u32 %v3165, 7
      %v3167 = vsub.s32 0, %v3166
      %v3168 = vrot.slane %v3163, %v3167
      %v3169 = vlaneseq
      %v3170 = vshrl.u32 %v3169, 7
      %v3171 = vsub.s32 1, %v3170
      %v3172 = vrot.slane %v3163, %v3171
      %3173 = vrot.lane.b32.xlu0 %v3168, 2
      %v3174 = vpop.permute.xlu0 %3173
      %3175 = vrot.lane.b32.xlu0 %v3172, 2
      %v3176 = vpop.permute.xlu0 %3175
      %v3177 = vsel %vm1133, %v3174, %v3176
      %v3181 = vmul.f32 %v3160, %v3174
      %v3182 = vmul.f32 %v3161, %v3177
      %v3183 = vmul.f32 %v3162, %v3176
      %v3187 = vrot.slane %v3181, 4
      %v3188 = vrot.slane %v3182, 4
      %v3189 = vrot.slane %v3183, 4
      %3190 = vrot.lane.b32.xlu0 %v3187, 126
      %v3191 = vpop.permute.xlu0 %3190
      %3192 = vrot.lane.b32.xlu0 %v3188, 126
      %v3193 = vpop.permute.xlu0 %3192
      %3194 = vrot.lane.b32.xlu0 %v3189, 126
      %v3195 = vpop.permute.xlu0 %3194
      %v3196 = vsel %vm1118, %v3191, %v3193
      %v3197 = vsel %vm1118, %v3193, %v3195
      %3200 = vst [vmem:[#allocation5 + $0x130] sm:$0xf0] %v3196
      %3201 = vst [vmem:[#allocation5 + $0x138] sm:$0xf0] %v3197
      %3202 = vst [vmem:[#allocation5 + $0x140] sm:$0x3] %v3196
      %3203 = vst [vmem:[#allocation5 + $0x148] sm:$0x3] %v3197
      %v3204 = vld [vmem:[#allocation3 + $0x8] sm:$0x3f]
      %v3205 = vld [vmem:[#allocation3 + $0x10] sm:$0x3f]
      %v3206 = vld [vmem:[#allocation3 + $0x18] sm:$0x3f]
      %v3207 = vld [vmem:[%s527] ss:$8 sm:$0x3]
      %v3209 = vlaneseq
      %v3210 = vshrl.u32 %v3209, 7
      %v3211 = vsub.s32 0, %v3210
      %v3212 = vrot.slane %v3207, %v3211
      %v3213 = vlaneseq
      %v3214 = vshrl.u32 %v3213, 7
      %v3215 = vsub.s32 1, %v3214
      %v3216 = vrot.slane %v3207, %v3215
      %3217 = vrot.lane.b32.xlu0 %v3212, 3
      %v3218 = vpop.permute.xlu0 %3217
      %3219 = vrot.lane.b32.xlu0 %v3216, 3
      %v3220 = vpop.permute.xlu0 %3219
      %v3221 = vsel %vm1095, %v3218, %v3220
      %v3225 = vmul.f32 %v3204, %v3218
      %v3226 = vmul.f32 %v3205, %v3221
      %v3227 = vmul.f32 %v3206, %v3220
      %v3231 = vrot.slane %v3225, 6
      %v3232 = vrot.slane %v3226, 6
      %v3233 = vrot.slane %v3227, 6
      %3234 = vrot.lane.b32.xlu0 %v3231, 125
      %v3235 = vpop.permute.xlu0 %3234
      %3236 = vrot.lane.b32.xlu0 %v3232, 125
      %v3237 = vpop.permute.xlu0 %3236
      %3238 = vrot.lane.b32.xlu0 %v3233, 125
      %v3239 = vpop.permute.xlu0 %3238
      %v3240 = vsel %vm1079, %v3235, %v3237
      %v3241 = vsel %vm1079, %v3237, %v3239
      %3244 = vst [vmem:[#allocation5 + $0x140] sm:$0xfc] %v3240
      %3245 = vst [vmem:[#allocation5 + $0x148] sm:$0xfc] %v3241
      %v3246 = vld [vmem:[#allocation3 + $0x8] sm:$0x3f]
      %v3247 = vld [vmem:[#allocation3 + $0x10] sm:$0x3f]
      %v3248 = vld [vmem:[#allocation3 + $0x18] sm:$0x3f]
      %v3249 = vld [vmem:[%s1] ss:$8 sm:$0x3]
      %v3251 = vlaneseq
      %v3252 = vshrl.u32 %v3251, 7
      %v3253 = vsub.s32 0, %v3252
      %v3254 = vrot.slane %v3249, %v3253
      %v3255 = vlaneseq
      %v3256 = vshrl.u32 %v3255, 7
      %v3257 = vsub.s32 1, %v3256
      %v3258 = vrot.slane %v3249, %v3257
      %3259 = vrot.lane.b32.xlu0 %v3254, 13
      %v3260 = vpop.permute.xlu0 %3259
      %3261 = vrot.lane.b32.xlu0 %v3258, 13
      %v3262 = vpop.permute.xlu0 %3261
      %v3263 = vsel %vm1056, %v3260, %v3262
      %v3267 = vmul.f32 %v3246, %v3260
      %v3268 = vmul.f32 %v3247, %v3263
      %v3269 = vmul.f32 %v3248, %v3262
      %3273 = vrot.lane.b32.xlu0 %v3267, 115
      %v3274 = vpop.permute.xlu0 %3273
      %3275 = vrot.lane.b32.xlu0 %v3268, 115
      %v3276 = vpop.permute.xlu0 %3275
      %3277 = vrot.lane.b32.xlu0 %v3269, 115
      %v3278 = vpop.permute.xlu0 %3277
      %v3279 = vsel %vm1041, %v3274, %v3276
      %v3280 = vsel %vm1041, %v3276, %v3278
      %3283 = vst [vmem:[#allocation5 + $0x150] sm:$0x3f] %v3279
      %3284 = vst [vmem:[#allocation5 + $0x158] sm:$0x3f] %v3280
      %v3285 = vld [vmem:[#allocation3 + $0x8] sm:$0x3f]
      %v3286 = vld [vmem:[#allocation3 + $0x10] sm:$0x3f]
      %v3287 = vld [vmem:[#allocation3 + $0x18] sm:$0x3f]
      %v3288 = vld [vmem:[%s350] ss:$8 sm:$0x3]
      %v3290 = vlaneseq
      %v3291 = vshrl.u32 %v3290, 7
      %v3292 = vsub.s32 0, %v3291
      %v3293 = vrot.slane %v3288, %v3292
      %v3294 = vlaneseq
      %v3295 = vshrl.u32 %v3294, 7
      %v3296 = vsub.s32 1, %v3295
      %v3297 = vrot.slane %v3288, %v3296
      %3298 = vrot.lane.b32.xlu0 %v3293, 14
      %v3299 = vpop.permute.xlu0 %3298
      %3300 = vrot.lane.b32.xlu0 %v3297, 14
      %v3301 = vpop.permute.xlu0 %3300
      %v3302 = vsel %vm1018, %v3299, %v3301
      %v3306 = vmul.f32 %v3285, %v3299
      %v3307 = vmul.f32 %v3286, %v3302
      %v3308 = vmul.f32 %v3287, %v3301
      %v3312 = vrot.slane %v3306, 2
      %v3313 = vrot.slane %v3307, 2
      %v3314 = vrot.slane %v3308, 2
      %3315 = vrot.lane.b32.xlu0 %v3312, 114
      %v3316 = vpop.permute.xlu0 %3315
      %3317 = vrot.lane.b32.xlu0 %v3313, 114
      %v3318 = vpop.permute.xlu0 %3317
      %3319 = vrot.lane.b32.xlu0 %v3314, 114
      %v3320 = vpop.permute.xlu0 %3319
      %v3321 = vsel %vm1002, %v3316, %v3318
      %v3322 = vsel %vm1002, %v3318, %v3320
      %3325 = vst [vmem:[#allocation5 + $0x150] sm:$0xc0] %v3321
      %3326 = vst [vmem:[#allocation5 + $0x158] sm:$0xc0] %v3322
      %3327 = vst [vmem:[#allocation5 + $0x160] sm:$0xf] %v3321
      %3328 = vst [vmem:[#allocation5 + $0x168] sm:$0xf] %v3322
      %v3329 = vld [vmem:[#allocation3 + $0x8] sm:$0x3f]
      %v3330 = vld [vmem:[#allocation3 + $0x10] sm:$0x3f]
      %v3331 = vld [vmem:[#allocation3 + $0x18] sm:$0x3f]
      %v3332 = vld [vmem:[%s390] ss:$8 sm:$0x3]
      %v3334 = vlaneseq
      %v3335 = vshrl.u32 %v3334, 7
      %v3336 = vsub.s32 0, %v3335
      %v3337 = vrot.slane %v3332, %v3336
      %v3338 = vlaneseq
      %v3339 = vshrl.u32 %v3338, 7
      %v3340 = vsub.s32 1, %v3339
      %v3341 = vrot.slane %v3332, %v3340
      %3342 = vrot.lane.b32.xlu0 %v3337, 15
      %v3343 = vpop.permute.xlu0 %3342
      %3344 = vrot.lane.b32.xlu0 %v3341, 15
      %v3345 = vpop.permute.xlu0 %3344
      %v3346 = vsel %vm979, %v3343, %v3345
      %v3350 = vmul.f32 %v3329, %v3343
      %v3351 = vmul.f32 %v3330, %v3346
      %v3352 = vmul.f32 %v3331, %v3345
      %v3356 = vrot.slane %v3350, 4
      %v3357 = vrot.slane %v3351, 4
      %v3358 = vrot.slane %v3352, 4
      %3359 = vrot.lane.b32.xlu0 %v3356, 113
      %v3360 = vpop.permute.xlu0 %3359
      %3361 = vrot.lane.b32.xlu0 %v3357, 113
      %v3362 = vpop.permute.xlu0 %3361
      %3363 = vrot.lane.b32.xlu0 %v3358, 113
      %v3364 = vpop.permute.xlu0 %3363
      %v3365 = vsel %vm964, %v3360, %v3362
      %v3366 = vsel %vm964, %v3362, %v3364
      %3369 = vst [vmem:[#allocation5 + $0x160] sm:$0xf0] %v3365
      %3370 = vst [vmem:[#allocation5 + $0x168] sm:$0xf0] %v3366
      %3371 = vst [vmem:[#allocation5 + $0x170] sm:$0x3] %v3365
      %3372 = vst [vmem:[#allocation5 + $0x178] sm:$0x3] %v3366
      %v3373 = vld [vmem:[#allocation3 + $0x8] sm:$0x3f]
      %v3374 = vld [vmem:[#allocation3 + $0x10] sm:$0x3f]
      %v3375 = vld [vmem:[#allocation3 + $0x18] sm:$0x3f]
      %v3379 = vrot.slane %v3373, 6
      %v3380 = vrot.slane %v3374, 6
      %v3381 = vrot.slane %v3375, 6
      %3382 = vrot.lane.b32.xlu0 %v3379, 112
      %v3383 = vpop.permute.xlu0 %3382
      %3384 = vrot.lane.b32.xlu0 %v3380, 112
      %v3385 = vpop.permute.xlu0 %3384
      %3386 = vrot.lane.b32.xlu0 %v3381, 112
      %v3387 = vpop.permute.xlu0 %3386
      %v3388 = vsel %vm1416, %v3383, %v3385
      %v3389 = vsel %vm1416, %v3385, %v3387
      %3392 = vst [vmem:[#allocation5 + $0x170] sm:$0xfc] %v3388
      %3393 = vst [vmem:[#allocation5 + $0x178] sm:$0xfc] %v3389
      %v3394 = vld [vmem:[#allocation3 + $0x8] sm:$0x3f]
      %v3395 = vld [vmem:[#allocation3 + $0x10] sm:$0x3f]
      %v3396 = vld [vmem:[#allocation3 + $0x18] sm:$0x3f]
      %v3397 = vld [vmem:[%s448] ss:$8 sm:$0x3]
      %v3399 = vlaneseq
      %v3400 = vshrl.u32 %v3399, 7
      %v3401 = vsub.s32 0, %v3400
      %v3402 = vrot.slane %v3397, %v3401
      %v3403 = vlaneseq
      %v3404 = vshrl.u32 %v3403, 7
      %v3405 = vsub.s32 1, %v3404
      %v3406 = vrot.slane %v3397, %v3405
      %3407 = vrot.lane.b32.xlu0 %v3402, 17
      %v3408 = vpop.permute.xlu0 %3407
      %3409 = vrot.lane.b32.xlu0 %v3406, 17
      %v3410 = vpop.permute.xlu0 %3409
      %v3411 = vsel %vm922, %v3408, %v3410
      %v3415 = vmul.f32 %v3394, %v3408
      %v3416 = vmul.f32 %v3395, %v3411
      %v3417 = vmul.f32 %v3396, %v3410
      %3421 = vrot.lane.b32.xlu0 %v3415, 111
      %v3422 = vpop.permute.xlu0 %3421
      %3423 = vrot.lane.b32.xlu0 %v3416, 111
      %v3424 = vpop.permute.xlu0 %3423
      %3425 = vrot.lane.b32.xlu0 %v3417, 111
      %v3426 = vpop.permute.xlu0 %3425
      %v3427 = vsel %vm907, %v3422, %v3424
      %v3428 = vsel %vm907, %v3424, %v3426
      %3431 = vst [vmem:[#allocation5 + $0x180] sm:$0x3f] %v3427
      %3432 = vst [vmem:[#allocation5 + $0x188] sm:$0x3f] %v3428
      %v3433 = vld [vmem:[#allocation3 + $0x8] sm:$0x3f]
      %v3434 = vld [vmem:[#allocation3 + $0x10] sm:$0x3f]
      %v3435 = vld [vmem:[#allocation3 + $0x18] sm:$0x3f]
      %v3436 = vld [vmem:[%s487] ss:$8 sm:$0x3]
      %v3438 = vlaneseq
      %v3439 = vshrl.u32 %v3438, 7
      %v3440 = vsub.s32 0, %v3439
      %v3441 = vrot.slane %v3436, %v3440
      %v3442 = vlaneseq
      %v3443 = vshrl.u32 %v3442, 7
      %v3444 = vsub.s32 1, %v3443
      %v3445 = vrot.slane %v3436, %v3444
      %3446 = vrot.lane.b32.xlu0 %v3441, 18
      %v3447 = vpop.permute.xlu0 %3446
      %3448 = vrot.lane.b32.xlu0 %v3445, 18
      %v3449 = vpop.permute.xlu0 %3448
      %v3450 = vsel %vm884, %v3447, %v3449
      %v3454 = vmul.f32 %v3433, %v3447
      %v3455 = vmul.f32 %v3434, %v3450
      %v3456 = vmul.f32 %v3435, %v3449
      %v3460 = vrot.slane %v3454, 2
      %v3461 = vrot.slane %v3455, 2
      %v3462 = vrot.slane %v3456, 2
      %3463 = vrot.lane.b32.xlu0 %v3460, 110
      %v3464 = vpop.permute.xlu0 %3463
      %3465 = vrot.lane.b32.xlu0 %v3461, 110
      %v3466 = vpop.permute.xlu0 %3465
      %3467 = vrot.lane.b32.xlu0 %v3462, 110
      %v3468 = vpop.permute.xlu0 %3467
      %v3469 = vsel %vm868, %v3464, %v3466
      %v3470 = vsel %vm868, %v3466, %v3468
      %3473 = vst [vmem:[#allocation5 + $0x180] sm:$0xc0] %v3469
      %3474 = vst [vmem:[#allocation5 + $0x188] sm:$0xc0] %v3470
      %3475 = vst [vmem:[#allocation5 + $0x190] sm:$0xf] %v3469
      %3476 = vst [vmem:[#allocation5 + $0x198] sm:$0xf] %v3470
      %v3477 = vld [vmem:[#allocation3 + $0x8] sm:$0x3f]
      %v3478 = vld [vmem:[#allocation3 + $0x10] sm:$0x3f]
      %v3479 = vld [vmem:[#allocation3 + $0x18] sm:$0x3f]
      %v3480 = vld [vmem:[%s527] ss:$8 sm:$0x3]
      %v3482 = vlaneseq
      %v3483 = vshrl.u32 %v3482, 7
      %v3484 = vsub.s32 0, %v3483
      %v3485 = vrot.slane %v3480, %v3484
      %v3486 = vlaneseq
      %v3487 = vshrl.u32 %v3486, 7
      %v3488 = vsub.s32 1, %v3487
      %v3489 = vrot.slane %v3480, %v3488
      %3490 = vrot.lane.b32.xlu0 %v3485, 19
      %v3491 = vpop.permute.xlu0 %3490
      %3492 = vrot.lane.b32.xlu0 %v3489, 19
      %v3493 = vpop.permute.xlu0 %3492
      %v3494 = vsel %vm845, %v3491, %v3493
      %v3498 = vmul.f32 %v3477, %v3491
      %v3499 = vmul.f32 %v3478, %v3494
      %v3500 = vmul.f32 %v3479, %v3493
      %v3504 = vrot.slane %v3498, 4
      %v3505 = vrot.slane %v3499, 4
      %v3506 = vrot.slane %v3500, 4
      %3507 = vrot.lane.b32.xlu0 %v3504, 109
      %v3508 = vpop.permute.xlu0 %3507
      %3509 = vrot.lane.b32.xlu0 %v3505, 109
      %v3510 = vpop.permute.xlu0 %3509
      %3511 = vrot.lane.b32.xlu0 %v3506, 109
      %v3512 = vpop.permute.xlu0 %3511
      %v3513 = vsel %vm830, %v3508, %v3510
      %v3514 = vsel %vm830, %v3510, %v3512
      %3517 = vst [vmem:[#allocation5 + $0x190] sm:$0xf0] %v3513
      %3518 = vst [vmem:[#allocation5 + $0x198] sm:$0xf0] %v3514
      %3519 = vst [vmem:[#allocation5 + $0x1a0] sm:$0x3] %v3513
      %3520 = vst [vmem:[#allocation5 + $0x1a8] sm:$0x3] %v3514
      %v3521 = vld [vmem:[#allocation3 + $0x8] sm:$0x3f]
      %v3522 = vld [vmem:[#allocation3 + $0x10] sm:$0x3f]
      %v3523 = vld [vmem:[#allocation3 + $0x18] sm:$0x3f]
      %v3524 = vld [vmem:[%s1] ss:$8 sm:$0x3]
      %v3526 = vlaneseq
      %v3527 = vshrl.u32 %v3526, 7
      %v3528 = vsub.s32 0, %v3527
      %v3529 = vrot.slane %v3524, %v3528
      %v3530 = vlaneseq
      %v3531 = vshrl.u32 %v3530, 7
      %v3532 = vsub.s32 1, %v3531
      %v3533 = vrot.slane %v3524, %v3532
      %3534 = vrot.lane.b32.xlu0 %v3529, 29
      %v3535 = vpop.permute.xlu0 %3534
      %3536 = vrot.lane.b32.xlu0 %v3533, 29
      %v3537 = vpop.permute.xlu0 %3536
      %v3538 = vsel %vm807, %v3535, %v3537
      %v3542 = vmul.f32 %v3521, %v3535
      %v3543 = vmul.f32 %v3522, %v3538
      %v3544 = vmul.f32 %v3523, %v3537
      %v3548 = vrot.slane %v3542, 6
      %v3549 = vrot.slane %v3543, 6
      %v3550 = vrot.slane %v3544, 6
      %3551 = vrot.lane.b32.xlu0 %v3548, 99
      %v3552 = vpop.permute.xlu0 %3551
      %3553 = vrot.lane.b32.xlu0 %v3549, 99
      %v3554 = vpop.permute.xlu0 %3553
      %3555 = vrot.lane.b32.xlu0 %v3550, 99
      %v3556 = vpop.permute.xlu0 %3555
      %v3557 = vsel %vm791, %v3552, %v3554
      %v3558 = vsel %vm791, %v3554, %v3556
      %3561 = vst [vmem:[#allocation5 + $0x1a0] sm:$0xfc] %v3557
      %3562 = vst [vmem:[#allocation5 + $0x1a8] sm:$0xfc] %v3558
      %v3563 = vld [vmem:[#allocation3 + $0x8] sm:$0x3f]
      %v3564 = vld [vmem:[#allocation3 + $0x10] sm:$0x3f]
      %v3565 = vld [vmem:[#allocation3 + $0x18] sm:$0x3f]
      %v3566 = vld [vmem:[%s350] ss:$8 sm:$0x3]
      %v3568 = vlaneseq
      %v3569 = vshrl.u32 %v3568, 7
      %v3570 = vsub.s32 0, %v3569
      %v3571 = vrot.slane %v3566, %v3570
      %v3572 = vlaneseq
      %v3573 = vshrl.u32 %v3572, 7
      %v3574 = vsub.s32 1, %v3573
      %v3575 = vrot.slane %v3566, %v3574
      %3576 = vrot.lane.b32.xlu0 %v3571, 30
      %v3577 = vpop.permute.xlu0 %3576
      %3578 = vrot.lane.b32.xlu0 %v3575, 30
      %v3579 = vpop.permute.xlu0 %3578
      %v3580 = vsel %vm768, %v3577, %v3579
      %v3584 = vmul.f32 %v3563, %v3577
      %v3585 = vmul.f32 %v3564, %v3580
      %v3586 = vmul.f32 %v3565, %v3579
      %3590 = vrot.lane.b32.xlu0 %v3584, 98
      %v3591 = vpop.permute.xlu0 %3590
      %3592 = vrot.lane.b32.xlu0 %v3585, 98
      %v3593 = vpop.permute.xlu0 %3592
      %3594 = vrot.lane.b32.xlu0 %v3586, 98
      %v3595 = vpop.permute.xlu0 %3594
      %v3596 = vsel %vm753, %v3591, %v3593
      %v3597 = vsel %vm753, %v3593, %v3595
      %3600 = vst [vmem:[#allocation5 + $0x1b0] sm:$0x3f] %v3596
      %3601 = vst [vmem:[#allocation5 + $0x1b8] sm:$0x3f] %v3597
      %v3602 = vld [vmem:[#allocation3 + $0x8] sm:$0x3f]
      %v3603 = vld [vmem:[#allocation3 + $0x10] sm:$0x3f]
      %v3604 = vld [vmem:[#allocation3 + $0x18] sm:$0x3f]
      %v3605 = vld [vmem:[%s390] ss:$8 sm:$0x3]
      %v3607 = vlaneseq
      %v3608 = vshrl.u32 %v3607, 7
      %v3609 = vsub.s32 0, %v3608
      %v3610 = vrot.slane %v3605, %v3609
      %v3611 = vlaneseq
      %v3612 = vshrl.u32 %v3611, 7
      %v3613 = vsub.s32 1, %v3612
      %v3614 = vrot.slane %v3605, %v3613
      %3615 = vrot.lane.b32.xlu0 %v3610, 31
      %v3616 = vpop.permute.xlu0 %3615
      %3617 = vrot.lane.b32.xlu0 %v3614, 31
      %v3618 = vpop.permute.xlu0 %3617
      %v3619 = vsel %vm730, %v3616, %v3618
      %v3623 = vmul.f32 %v3602, %v3616
      %v3624 = vmul.f32 %v3603, %v3619
      %v3625 = vmul.f32 %v3604, %v3618
      %v3629 = vrot.slane %v3623, 2
      %v3630 = vrot.slane %v3624, 2
      %v3631 = vrot.slane %v3625, 2
      %3632 = vrot.lane.b32.xlu0 %v3629, 97
      %v3633 = vpop.permute.xlu0 %3632
      %3634 = vrot.lane.b32.xlu0 %v3630, 97
      %v3635 = vpop.permute.xlu0 %3634
      %3636 = vrot.lane.b32.xlu0 %v3631, 97
      %v3637 = vpop.permute.xlu0 %3636
      %v3638 = vsel %vm714, %v3633, %v3635
      %v3639 = vsel %vm714, %v3635, %v3637
      %3642 = vst [vmem:[#allocation5 + $0x1b0] sm:$0xc0] %v3638
      %3643 = vst [vmem:[#allocation5 + $0x1b8] sm:$0xc0] %v3639
      %3644 = vst [vmem:[#allocation5 + $0x1c0] sm:$0xf] %v3638
      %3645 = vst [vmem:[#allocation5 + $0x1c8] sm:$0xf] %v3639
      %v3646 = vld [vmem:[#allocation3 + $0x8] sm:$0x3f]
      %v3647 = vld [vmem:[#allocation3 + $0x10] sm:$0x3f]
      %v3648 = vld [vmem:[#allocation3 + $0x18] sm:$0x3f]
      %v3652 = vrot.slane %v3646, 4
      %v3653 = vrot.slane %v3647, 4
      %v3654 = vrot.slane %v3648, 4
      %3655 = vrot.lane.b32.xlu0 %v3652, 96
      %v3656 = vpop.permute.xlu0 %3655
      %3657 = vrot.lane.b32.xlu0 %v3653, 96
      %v3658 = vpop.permute.xlu0 %3657
      %3659 = vrot.lane.b32.xlu0 %v3654, 96
      %v3660 = vpop.permute.xlu0 %3659
      %v3661 = vsel %vm1653, %v3656, %v3658
      %v3662 = vsel %vm1653, %v3658, %v3660
      %3665 = vst [vmem:[#allocation5 + $0x1c0] sm:$0xf0] %v3661
      %3666 = vst [vmem:[#allocation5 + $0x1c8] sm:$0xf0] %v3662
      %3667 = vst [vmem:[#allocation5 + $0x1d0] sm:$0x3] %v3661
      %3668 = vst [vmem:[#allocation5 + $0x1d8] sm:$0x3] %v3662
      %v3669 = vld [vmem:[#allocation3 + $0x8] sm:$0x3f]
      %v3670 = vld [vmem:[#allocation3 + $0x10] sm:$0x3f]
      %v3671 = vld [vmem:[#allocation3 + $0x18] sm:$0x3f]
      %v3672 = vld [vmem:[%s448] ss:$8 sm:$0x3]
      %v3674 = vlaneseq
      %v3675 = vshrl.u32 %v3674, 7
      %v3676 = vsub.s32 0, %v3675
      %v3677 = vrot.slane %v3672, %v3676
      %v3678 = vlaneseq
      %v3679 = vshrl.u32 %v3678, 7
      %v3680 = vsub.s32 1, %v3679
      %v3681 = vrot.slane %v3672, %v3680
      %3682 = vrot.lane.b32.xlu0 %v3677, 33
      %v3683 = vpop.permute.xlu0 %3682
      %3684 = vrot.lane.b32.xlu0 %v3681, 33
      %v3685 = vpop.permute.xlu0 %3684
      %v3686 = vsel %vm673, %v3683, %v3685
      %v3690 = vmul.f32 %v3669, %v3683
      %v3691 = vmul.f32 %v3670, %v3686
      %v3692 = vmul.f32 %v3671, %v3685
      %v3696 = vrot.slane %v3690, 6
      %v3697 = vrot.slane %v3691, 6
      %v3698 = vrot.slane %v3692, 6
      %3699 = vrot.lane.b32.xlu0 %v3696, 95
      %v3700 = vpop.permute.xlu0 %3699
      %3701 = vrot.lane.b32.xlu0 %v3697, 95
      %v3702 = vpop.permute.xlu0 %3701
      %3703 = vrot.lane.b32.xlu0 %v3698, 95
      %v3704 = vpop.permute.xlu0 %3703
      %v3705 = vsel %vm657, %v3700, %v3702
      %v3706 = vsel %vm657, %v3702, %v3704
      %3709 = vst [vmem:[#allocation5 + $0x1d0] sm:$0xfc] %v3705
      %3710 = vst [vmem:[#allocation5 + $0x1d8] sm:$0xfc] %v3706
      %v3711 = vld [vmem:[#allocation3 + $0x8] sm:$0x3f]
      %v3712 = vld [vmem:[#allocation3 + $0x10] sm:$0x3f]
      %v3713 = vld [vmem:[#allocation3 + $0x18] sm:$0x3f]
      %v3714 = vld [vmem:[%s487] ss:$8 sm:$0x3]
      %v3716 = vlaneseq
      %v3717 = vshrl.u32 %v3716, 7
      %v3718 = vsub.s32 0, %v3717
      %v3719 = vrot.slane %v3714, %v3718
      %v3720 = vlaneseq
      %v3721 = vshrl.u32 %v3720, 7
      %v3722 = vsub.s32 1, %v3721
      %v3723 = vrot.slane %v3714, %v3722
      %3724 = vrot.lane.b32.xlu0 %v3719, 34
      %v3725 = vpop.permute.xlu0 %3724
      %3726 = vrot.lane.b32.xlu0 %v3723, 34
      %v3727 = vpop.permute.xlu0 %3726
      %v3728 = vsel %vm634, %v3725, %v3727
      %v3732 = vmul.f32 %v3711, %v3725
      %v3733 = vmul.f32 %v3712, %v3728
      %v3734 = vmul.f32 %v3713, %v3727
      %3738 = vrot.lane.b32.xlu0 %v3732, 94
      %v3739 = vpop.permute.xlu0 %3738
      %3740 = vrot.lane.b32.xlu0 %v3733, 94
      %v3741 = vpop.permute.xlu0 %3740
      %3742 = vrot.lane.b32.xlu0 %v3734, 94
      %v3743 = vpop.permute.xlu0 %3742
      %v3744 = vsel %vm619, %v3739, %v3741
      %v3745 = vsel %vm619, %v3741, %v3743
      %3748 = vst [vmem:[#allocation5 + $0x1e0] sm:$0x3f] %v3744
      %3749 = vst [vmem:[#allocation5 + $0x1e8] sm:$0x3f] %v3745
      %v3750 = vld [vmem:[#allocation3 + $0x8] sm:$0x3f]
      %v3751 = vld [vmem:[#allocation3 + $0x10] sm:$0x3f]
      %v3752 = vld [vmem:[#allocation3 + $0x18] sm:$0x3f]
      %v3753 = vld [vmem:[%s527] ss:$8 sm:$0x3]
      %v3755 = vlaneseq
      %v3756 = vshrl.u32 %v3755, 7
      %v3757 = vsub.s32 0, %v3756
      %v3758 = vrot.slane %v3753, %v3757
      %v3759 = vlaneseq
      %v3760 = vshrl.u32 %v3759, 7
      %v3761 = vsub.s32 1, %v3760
      %v3762 = vrot.slane %v3753, %v3761
      %3763 = vrot.lane.b32.xlu0 %v3758, 35
      %v3764 = vpop.permute.xlu0 %3763
      %3765 = vrot.lane.b32.xlu0 %v3762, 35
      %v3766 = vpop.permute.xlu0 %3765
      %v3767 = vsel %vm596, %v3764, %v3766
      %v3771 = vmul.f32 %v3750, %v3764
      %v3772 = vmul.f32 %v3751, %v3767
      %v3773 = vmul.f32 %v3752, %v3766
      %v3777 = vrot.slane %v3771, 2
      %v3778 = vrot.slane %v3772, 2
      %v3779 = vrot.slane %v3773, 2
      %3780 = vrot.lane.b32.xlu0 %v3777, 93
      %v3781 = vpop.permute.xlu0 %3780
      %3782 = vrot.lane.b32.xlu0 %v3778, 93
      %v3783 = vpop.permute.xlu0 %3782
      %3784 = vrot.lane.b32.xlu0 %v3779, 93
      %v3785 = vpop.permute.xlu0 %3784
      %v3786 = vsel %vm580, %v3781, %v3783
      %v3787 = vsel %vm580, %v3783, %v3785
      %3790 = vst [vmem:[#allocation5 + $0x1e0] sm:$0xc0] %v3786
      %3791 = vst [vmem:[#allocation5 + $0x1e8] sm:$0xc0] %v3787
      %3792 = vst [vmem:[#allocation5 + $0x1f0] sm:$0xf] %v3786
      %3793 = vst [vmem:[#allocation5 + $0x1f8] sm:$0xf] %v3787
      %v3794 = vld [vmem:[#allocation3 + $0x8] sm:$0x3f]
      %v3795 = vld [vmem:[#allocation3 + $0x10] sm:$0x3f]
      %v3796 = vld [vmem:[#allocation3 + $0x18] sm:$0x3f]
      %v3797 = vld [vmem:[%s1] ss:$8 sm:$0x3]
      %v3799 = vlaneseq
      %v3800 = vshrl.u32 %v3799, 7
      %v3801 = vsub.s32 0, %v3800
      %v3802 = vrot.slane %v3797, %v3801
      %v3803 = vlaneseq
      %v3804 = vshrl.u32 %v3803, 7
      %v3805 = vsub.s32 1, %v3804
      %v3806 = vrot.slane %v3797, %v3805
      %3807 = vrot.lane.b32.xlu0 %v3802, 45
      %v3808 = vpop.permute.xlu0 %3807
      %3809 = vrot.lane.b32.xlu0 %v3806, 45
      %v3810 = vpop.permute.xlu0 %3809
      %v3811 = vsel %vm557, %v3808, %v3810
      %v3815 = vmul.f32 %v3794, %v3808
      %v3816 = vmul.f32 %v3795, %v3811
      %v3817 = vmul.f32 %v3796, %v3810
      %v3821 = vrot.slane %v3815, 4
      %v3822 = vrot.slane %v3816, 4
      %v3823 = vrot.slane %v3817, 4
      %3824 = vrot.lane.b32.xlu0 %v3821, 83
      %v3825 = vpop.permute.xlu0 %3824
      %3826 = vrot.lane.b32.xlu0 %v3822, 83
      %v3827 = vpop.permute.xlu0 %3826
      %3828 = vrot.lane.b32.xlu0 %v3823, 83
      %v3829 = vpop.permute.xlu0 %3828
      %v3830 = vsel %vm542, %v3825, %v3827
      %v3831 = vsel %vm542, %v3827, %v3829
      %3834 = vst [vmem:[#allocation5 + $0x1f0] sm:$0xf0] %v3830
      %3835 = vst [vmem:[#allocation5 + $0x1f8] sm:$0xf0] %v3831
      %3836 = vst [vmem:[#allocation5 + $0x200] sm:$0x3] %v3830
      %3837 = vst [vmem:[#allocation5 + $0x208] sm:$0x3] %v3831
      %v3838 = vld [vmem:[#allocation3 + $0x8] sm:$0x3f]
      %v3839 = vld [vmem:[#allocation3 + $0x10] sm:$0x3f]
      %v3840 = vld [vmem:[#allocation3 + $0x18] sm:$0x3f]
      %v3841 = vld [vmem:[%s350] ss:$8 sm:$0x3]
      %v3843 = vlaneseq
      %v3844 = vshrl.u32 %v3843, 7
      %v3845 = vsub.s32 0, %v3844
      %v3846 = vrot.slane %v3841, %v3845
      %v3847 = vlaneseq
      %v3848 = vshrl.u32 %v3847, 7
      %v3849 = vsub.s32 1, %v3848
      %v3850 = vrot.slane %v3841, %v3849
      %3851 = vrot.lane.b32.xlu0 %v3846, 46
      %v3852 = vpop.permute.xlu0 %3851
      %3853 = vrot.lane.b32.xlu0 %v3850, 46
      %v3854 = vpop.permute.xlu0 %3853
      %v3855 = vsel %vm518, %v3852, %v3854
      %v3859 = vmul.f32 %v3838, %v3852
      %v3860 = vmul.f32 %v3839, %v3855
      %v3861 = vmul.f32 %v3840, %v3854
      %v3865 = vrot.slane %v3859, 6
      %v3866 = vrot.slane %v3860, 6
      %v3867 = vrot.slane %v3861, 6
      %3868 = vrot.lane.b32.xlu0 %v3865, 82
      %v3869 = vpop.permute.xlu0 %3868
      %3870 = vrot.lane.b32.xlu0 %v3866, 82
      %v3871 = vpop.permute.xlu0 %3870
      %3872 = vrot.lane.b32.xlu0 %v3867, 82
      %v3873 = vpop.permute.xlu0 %3872
      %v3874 = vsel %vm502, %v3869, %v3871
      %v3875 = vsel %vm502, %v3871, %v3873
      %3878 = vst [vmem:[#allocation5 + $0x200] sm:$0xfc] %v3874
      %3879 = vst [vmem:[#allocation5 + $0x208] sm:$0xfc] %v3875
      %v3880 = vld [vmem:[#allocation3 + $0x8] sm:$0x3f]
      %v3881 = vld [vmem:[#allocation3 + $0x10] sm:$0x3f]
      %v3882 = vld [vmem:[#allocation3 + $0x18] sm:$0x3f]
      %v3883 = vld [vmem:[%s390] ss:$8 sm:$0x3]
      %v3885 = vlaneseq
      %v3886 = vshrl.u32 %v3885, 7
      %v3887 = vsub.s32 0, %v3886
      %v3888 = vrot.slane %v3883, %v3887
      %v3889 = vlaneseq
      %v3890 = vshrl.u32 %v3889, 7
      %v3891 = vsub.s32 1, %v3890
      %v3892 = vrot.slane %v3883, %v3891
      %3893 = vrot.lane.b32.xlu0 %v3888, 47
      %v3894 = vpop.permute.xlu0 %3893
      %3895 = vrot.lane.b32.xlu0 %v3892, 47
      %v3896 = vpop.permute.xlu0 %3895
      %v3897 = vsel %vm478, %v3894, %v3896
      %v3901 = vmul.f32 %v3880, %v3894
      %v3902 = vmul.f32 %v3881, %v3897
      %v3903 = vmul.f32 %v3882, %v3896
      %3907 = vrot.lane.b32.xlu0 %v3901, 81
      %v3908 = vpop.permute.xlu0 %3907
      %3909 = vrot.lane.b32.xlu0 %v3902, 81
      %v3910 = vpop.permute.xlu0 %3909
      %3911 = vrot.lane.b32.xlu0 %v3903, 81
      %v3912 = vpop.permute.xlu0 %3911
      %v3913 = vsel %vm463, %v3908, %v3910
      %v3914 = vsel %vm463, %v3910, %v3912
      %3917 = vst [vmem:[#allocation5 + $0x210] sm:$0x3f] %v3913
      %3918 = vst [vmem:[#allocation5 + $0x218] sm:$0x3f] %v3914
      %v3919 = vld [vmem:[#allocation3 + $0x8] sm:$0x3f]
      %v3920 = vld [vmem:[#allocation3 + $0x10] sm:$0x3f]
      %v3921 = vld [vmem:[#allocation3 + $0x18] sm:$0x3f]
      %v3925 = vrot.slane %v3919, 2
      %v3926 = vrot.slane %v3920, 2
      %v3927 = vrot.slane %v3921, 2
      %3928 = vrot.lane.b32.xlu0 %v3925, 80
      %v3929 = vpop.permute.xlu0 %3928
      %3930 = vrot.lane.b32.xlu0 %v3926, 80
      %v3931 = vpop.permute.xlu0 %3930
      %3932 = vrot.lane.b32.xlu0 %v3927, 80
      %v3933 = vpop.permute.xlu0 %3932
      %v3934 = vsel %vm1891, %v3929, %v3931
      %v3935 = vsel %vm1891, %v3931, %v3933
      %3938 = vst [vmem:[#allocation5 + $0x210] sm:$0xc0] %v3934
      %3939 = vst [vmem:[#allocation5 + $0x218] sm:$0xc0] %v3935
      %3940 = vst [vmem:[#allocation5 + $0x220] sm:$0xf] %v3934
      %3941 = vst [vmem:[#allocation5 + $0x228] sm:$0xf] %v3935
      %v3942 = vld [vmem:[#allocation3 + $0x8] sm:$0x3f]
      %v3943 = vld [vmem:[#allocation3 + $0x10] sm:$0x3f]
      %v3944 = vld [vmem:[#allocation3 + $0x18] sm:$0x3f]
      %v3945 = vld [vmem:[%s448] ss:$8 sm:$0x3]
      %v3947 = vlaneseq
      %v3948 = vshrl.u32 %v3947, 7
      %v3949 = vsub.s32 0, %v3948
      %v3950 = vrot.slane %v3945, %v3949
      %v3951 = vlaneseq
      %v3952 = vshrl.u32 %v3951, 7
      %v3953 = vsub.s32 1, %v3952
      %v3954 = vrot.slane %v3945, %v3953
      %3955 = vrot.lane.b32.xlu0 %v3950, 49
      %v3956 = vpop.permute.xlu0 %3955
      %3957 = vrot.lane.b32.xlu0 %v3954, 49
      %v3958 = vpop.permute.xlu0 %3957
      %v3959 = vsel %vm420, %v3956, %v3958
      %v3963 = vmul.f32 %v3942, %v3956
      %v3964 = vmul.f32 %v3943, %v3959
      %v3965 = vmul.f32 %v3944, %v3958
      %v3969 = vrot.slane %v3963, 4
      %v3970 = vrot.slane %v3964, 4
      %v3971 = vrot.slane %v3965, 4
      %3972 = vrot.lane.b32.xlu0 %v3969, 79
      %v3973 = vpop.permute.xlu0 %3972
      %3974 = vrot.lane.b32.xlu0 %v3970, 79
      %v3975 = vpop.permute.xlu0 %3974
      %3976 = vrot.lane.b32.xlu0 %v3971, 79
      %v3977 = vpop.permute.xlu0 %3976
      %v3978 = vsel %vm405, %v3973, %v3975
      %v3979 = vsel %vm405, %v3975, %v3977
      %3982 = vst [vmem:[#allocation5 + $0x220] sm:$0xf0] %v3978
      %3983 = vst [vmem:[#allocation5 + $0x228] sm:$0xf0] %v3979
      %3984 = vst [vmem:[#allocation5 + $0x230] sm:$0x3] %v3978
      %3985 = vst [vmem:[#allocation5 + $0x238] sm:$0x3] %v3979
      %v3986 = vld [vmem:[#allocation3 + $0x8] sm:$0x3f]
      %v3987 = vld [vmem:[#allocation3 + $0x10] sm:$0x3f]
      %v3988 = vld [vmem:[#allocation3 + $0x18] sm:$0x3f]
      %v3989 = vld [vmem:[%s487] ss:$8 sm:$0x3]
      %v3991 = vlaneseq
      %v3992 = vshrl.u32 %v3991, 7
      %v3993 = vsub.s32 0, %v3992
      %v3994 = vrot.slane %v3989, %v3993
      %v3995 = vlaneseq
      %v3996 = vshrl.u32 %v3995, 7
      %v3997 = vsub.s32 1, %v3996
      %v3998 = vrot.slane %v3989, %v3997
      %3999 = vrot.lane.b32.xlu0 %v3994, 50
      %v4000 = vpop.permute.xlu0 %3999
      %4001 = vrot.lane.b32.xlu0 %v3998, 50
      %v4002 = vpop.permute.xlu0 %4001
      %v4003 = vsel %vm381, %v4000, %v4002
      %v4007 = vmul.f32 %v3986, %v4000
      %v4008 = vmul.f32 %v3987, %v4003
      %v4009 = vmul.f32 %v3988, %v4002
      %v4013 = vrot.slane %v4007, 6
      %v4014 = vrot.slane %v4008, 6
      %v4015 = vrot.slane %v4009, 6
      %4016 = vrot.lane.b32.xlu0 %v4013, 78
      %v4017 = vpop.permute.xlu0 %4016
      %4018 = vrot.lane.b32.xlu0 %v4014, 78
      %v4019 = vpop.permute.xlu0 %4018
      %4020 = vrot.lane.b32.xlu0 %v4015, 78
      %v4021 = vpop.permute.xlu0 %4020
      %v4022 = vsel %vm365, %v4017, %v4019
      %v4023 = vsel %vm365, %v4019, %v4021
      %4026 = vst [vmem:[#allocation5 + $0x230] sm:$0xfc] %v4022
      %4027 = vst [vmem:[#allocation5 + $0x238] sm:$0xfc] %v4023
      %v4028 = vld [vmem:[#allocation3 + $0x8] sm:$0x3f]
      %v4029 = vld [vmem:[#allocation3 + $0x10] sm:$0x3f]
      %v4030 = vld [vmem:[#allocation3 + $0x18] sm:$0x3f]
      %v4031 = vld [vmem:[%s527] ss:$8 sm:$0x3]
      %v4033 = vlaneseq
      %v4034 = vshrl.u32 %v4033, 7
      %v4035 = vsub.s32 0, %v4034
      %v4036 = vrot.slane %v4031, %v4035
      %v4037 = vlaneseq
      %v4038 = vshrl.u32 %v4037, 7
      %v4039 = vsub.s32 1, %v4038
      %v4040 = vrot.slane %v4031, %v4039
      %4041 = vrot.lane.b32.xlu0 %v4036, 51
      %v4042 = vpop.permute.xlu0 %4041
      %4043 = vrot.lane.b32.xlu0 %v4040, 51
      %v4044 = vpop.permute.xlu0 %4043
      %v4045 = vsel %vm341, %v4042, %v4044
      %v4049 = vmul.f32 %v4028, %v4042
      %v4050 = vmul.f32 %v4029, %v4045
      %v4051 = vmul.f32 %v4030, %v4044
      %4055 = vrot.lane.b32.xlu0 %v4049, 77
      %v4056 = vpop.permute.xlu0 %4055
      %4057 = vrot.lane.b32.xlu0 %v4050, 77
      %v4058 = vpop.permute.xlu0 %4057
      %4059 = vrot.lane.b32.xlu0 %v4051, 77
      %v4060 = vpop.permute.xlu0 %4059
      %v4061 = vsel %vm326, %v4056, %v4058
      %v4062 = vsel %vm326, %v4058, %v4060
      %4065 = vst [vmem:[#allocation5 + $0x240] sm:$0x3f] %v4061
      %4066 = vst [vmem:[#allocation5 + $0x248] sm:$0x3f] %v4062
      %v4067 = vld [vmem:[%s5] sm:$0xff]
      %v4068 = vld [vmem:[%s5 + $0x8] sm:$0xf]
      %v4069 = vld [vmem:[#allocation5] sm:$0xff]
      %v4070 = vld [vmem:[#allocation5 + $0x8] sm:$0xff]
      %v4071 = vld [vmem:[#allocation5 + $0x10] sm:$0xff]
      %v4072 = vld [vmem:[#allocation5 + $0x18] sm:$0xff]
      %v4073 = vld [vmem:[#allocation5 + $0x20] sm:$0xff]
      %v4074 = vld [vmem:[#allocation5 + $0x28] sm:$0xff]
      %v4075 = vld [vmem:[#allocation5 + $0x30] sm:$0xff]
      %v4076 = vld [vmem:[#allocation5 + $0x38] sm:$0xff]
      %v4077 = vld [vmem:[#allocation5 + $0x40] sm:$0xff]
      %v4078 = vld [vmem:[#allocation5 + $0x48] sm:$0xff]
      %v4079 = vld [vmem:[#allocation5 + $0x50] sm:$0xff]
      %v4080 = vld [vmem:[#allocation5 + $0x58] sm:$0xff]
      %v4081 = vld [vmem:[#allocation5 + $0x60] sm:$0xff]
      %v4082 = vld [vmem:[#allocation5 + $0x68] sm:$0xff]
      %v4083 = vld [vmem:[#allocation5 + $0x70] sm:$0xff]
      %v4084 = vld [vmem:[#allocation5 + $0x78] sm:$0xff]
      %v4085 = vld [vmem:[#allocation5 + $0x80] sm:$0xff]
      %v4086 = vld [vmem:[#allocation5 + $0x88] sm:$0xff]
      %v4087 = vld [vmem:[#allocation5 + $0x90] sm:$0xff]
      %v4088 = vld [vmem:[#allocation5 + $0x98] sm:$0xff]
      %v4089 = vld [vmem:[#allocation5 + $0xa0] sm:$0xff]
      %v4090 = vld [vmem:[#allocation5 + $0xa8] sm:$0xff]
      %v4091 = vld [vmem:[#allocation5 + $0xb0] sm:$0xff]
      %v4092 = vld [vmem:[#allocation5 + $0xb8] sm:$0xff]
      %v4093 = vld [vmem:[#allocation5 + $0xc0] sm:$0xff]
      %v4094 = vld [vmem:[#allocation5 + $0xc8] sm:$0xff]
      %v4095 = vld [vmem:[#allocation5 + $0xd0] sm:$0xff]
      %v4096 = vld [vmem:[#allocation5 + $0xd8] sm:$0xff]
      %v4097 = vld [vmem:[#allocation5 + $0xe0] sm:$0xff]
      %v4098 = vld [vmem:[#allocation5 + $0xe8] sm:$0xff]
      %v4099 = vld [vmem:[#allocation5 + $0xf0] sm:$0xff]
      %v4100 = vld [vmem:[#allocation5 + $0xf8] sm:$0xff]
      %v4101 = vld [vmem:[#allocation5 + $0x100] sm:$0xff]
      %v4102 = vld [vmem:[#allocation5 + $0x108] sm:$0xff]
      %v4103 = vld [vmem:[#allocation5 + $0x110] sm:$0xff]
      %v4104 = vld [vmem:[#allocation5 + $0x118] sm:$0xff]
      %v4105 = vld [vmem:[#allocation5 + $0x120] sm:$0xff]
      %v4106 = vld [vmem:[#allocation5 + $0x128] sm:$0xff]
      %v4107 = vld [vmem:[#allocation5 + $0x130] sm:$0xff]
      %v4108 = vld [vmem:[#allocation5 + $0x138] sm:$0xff]
      %v4109 = vld [vmem:[#allocation5 + $0x140] sm:$0xff]
      %v4110 = vld [vmem:[#allocation5 + $0x148] sm:$0xff]
      %v4111 = vld [vmem:[#allocation5 + $0x150] sm:$0xff]
      %v4112 = vld [vmem:[#allocation5 + $0x158] sm:$0xff]
      %v4113 = vld [vmem:[#allocation5 + $0x160] sm:$0xff]
      %v4114 = vld [vmem:[#allocation5 + $0x168] sm:$0xff]
      %v4115 = vld [vmem:[#allocation5 + $0x170] sm:$0xff]
      %v4116 = vld [vmem:[#allocation5 + $0x178] sm:$0xff]
      %v4117 = vld [vmem:[#allocation5 + $0x180] sm:$0xff]
      %v4118 = vld [vmem:[#allocation5 + $0x188] sm:$0xff]
      %v4119 = vld [vmem:[#allocation5 + $0x190] sm:$0xff]
      %v4120 = vld [vmem:[#allocation5 + $0x198] sm:$0xff]
      %v4121 = vld [vmem:[#allocation5 + $0x1a0] sm:$0xff]
      %v4122 = vld [vmem:[#allocation5 + $0x1a8] sm:$0xff]
      %v4123 = vld [vmem:[#allocation5 + $0x1b0] sm:$0xff]
      %v4124 = vld [vmem:[#allocation5 + $0x1b8] sm:$0xff]
      %v4125 = vld [vmem:[#allocation5 + $0x1c0] sm:$0xff]
      %v4126 = vld [vmem:[#allocation5 + $0x1c8] sm:$0xff]
      %v4127 = vld [vmem:[#allocation5 + $0x1d0] sm:$0xff]
      %v4128 = vld [vmem:[#allocation5 + $0x1d8] sm:$0xff]
      %v4129 = vld [vmem:[#allocation5 + $0x1e0] sm:$0xff]
      %v4130 = vld [vmem:[#allocation5 + $0x1e8] sm:$0xff]
      %v4131 = vld [vmem:[#allocation5 + $0x1f0] sm:$0xff]
      %v4132 = vld [vmem:[#allocation5 + $0x1f8] sm:$0xff]
      %v4133 = vld [vmem:[#allocation5 + $0x200] sm:$0xff]
      %v4134 = vld [vmem:[#allocation5 + $0x208] sm:$0xff]
      %v4135 = vld [vmem:[#allocation5 + $0x210] sm:$0xff]
      %v4136 = vld [vmem:[#allocation5 + $0x218] sm:$0xff]
      %v4137 = vld [vmem:[#allocation5 + $0x220] sm:$0xff]
      %v4138 = vld [vmem:[#allocation5 + $0x228] sm:$0xff]
      %v4139 = vld [vmem:[#allocation5 + $0x230] sm:$0xff]
      %v4140 = vld [vmem:[#allocation5 + $0x238] sm:$0xff]
      %v4141 = vld [vmem:[#allocation5 + $0x240] sm:$0x3f]
      %v4142 = vld [vmem:[#allocation5 + $0x248] sm:$0x3f]
      %v4145 = vcombine.high %v4067, %v4067
      %vm4147 = vcmask 310272
      %v4148 = vsel %vm4147, %v4068, 0
      %vm4150 = vcmask 1045504
      %v4152 = vsel %vm4150, %v4141, 0
      %v4155 = vsel %vm4150, %v4142, 0
      %4157 = vmatprep.subr.mxu0 %v4070
      %4158 = vmatpush1.msra.mxu0 %v4069
      %4159 = vmatprep.subr.mxu0 %v4072
      %4160 = vmatpush1.msra.mxu0 %v4071
      %4161 = vmatprep.subr.mxu0 %v4074
      %4162 = vmatpush1.msra.mxu0 %v4073
      %4163 = vmatprep.subr.mxu0 %v4076
      %4164 = vmatpush1.msra.mxu0 %v4075
      %4165 = vmatprep.subr.mxu0 %v4078
      %4166 = vmatpush1.msra.mxu0 %v4077
      %4167 = vmatprep.subr.mxu0 %v4080
      %4168 = vmatpush1.msra.mxu0 %v4079
      %4169 = vmatprep.subr.mxu0 %v4082
      %4170 = vmatpush1.msra.mxu0 %v4081
      %4171 = vmatprep.subr.mxu0 %v4084
      %4172 = vmatpush1.msra.mxu0 %v4083
      %4173 = vmatprep.subr.mxu0 %v4086
      %4174 = vmatpush1.msra.mxu0 %v4085
      %4175 = vmatprep.subr.mxu0 %v4088
      %4176 = vmatpush1.msra.mxu0 %v4087
      %4177 = vmatprep.subr.mxu0 %v4090
      %4178 = vmatpush1.msra.mxu0 %v4089
      %4179 = vmatprep.subr.mxu0 %v4092
      %4180 = vmatpush1.msra.mxu0 %v4091
      %4181 = vmatprep.subr.mxu0 %v4094
      %4182 = vmatpush1.msra.mxu0 %v4093
      %4183 = vmatprep.subr.mxu0 %v4096
      %4184 = vmatpush1.msra.mxu0 %v4095
      %4185 = vmatprep.subr.mxu0 %v4098
      %4186 = vmatpush1.msra.mxu0 %v4097
      %4187 = vmatprep.subr.mxu0 %v4100
      %4188 = vmatpush1.msra.mxu0 %v4099
      %4189 = vmatprep.subr.mxu0 %v4102
      %4190 = vmatpush1.msra.mxu0 %v4101
      %4191 = vmatprep.subr.mxu0 %v4104
      %4192 = vmatpush1.msra.mxu0 %v4103
      %4193 = vmatprep.subr.mxu0 %v4106
      %4194 = vmatpush1.msra.mxu0 %v4105
      %4195 = vmatprep.subr.mxu0 %v4108
      %4196 = vmatpush1.msra.mxu0 %v4107
      %4197 = vmatprep.subr.mxu0 %v4110
      %4198 = vmatpush1.msra.mxu0 %v4109
      %4199 = vmatprep.subr.mxu0 %v4112
      %4200 = vmatpush1.msra.mxu0 %v4111
      %4201 = vmatprep.subr.mxu0 %v4114
      %4202 = vmatpush1.msra.mxu0 %v4113
      %4203 = vmatprep.subr.mxu0 %v4116
      %4204 = vmatpush1.msra.mxu0 %v4115
      %4205 = vmatprep.subr.mxu0 %v4118
      %4206 = vmatpush1.msra.mxu0 %v4117
      %4207 = vmatprep.subr.mxu0 %v4120
      %4208 = vmatpush1.msra.mxu0 %v4119
      %4209 = vmatprep.subr.mxu0 %v4122
      %4210 = vmatpush1.msra.mxu0 %v4121
      %4211 = vmatprep.subr.mxu0 %v4124
      %4212 = vmatpush1.msra.mxu0 %v4123
      %4213 = vmatprep.subr.mxu0 %v4126
      %4214 = vmatpush1.msra.mxu0 %v4125
      %4215 = vmatprep.subr.mxu0 %v4128
      %4216 = vmatpush1.msra.mxu0 %v4127
      %4217 = vmatprep.subr.mxu0 %v4130
      %4218 = vmatpush1.msra.mxu0 %v4129
      %4219 = vmatprep.subr.mxu0 %v4132
      %4220 = vmatpush1.msra.mxu0 %v4131
      %4221 = vmatprep.mubr.f32.mxu0 %v4145
      %4222 = vmatmul.mubr.f32.gmra.mrb[0].mxu0 %v4067
      %v4223 = vpop.f32.mrb[0].mxu0
      %v4224 = vadd.f32 0.0, %v4223
      %v4225 = vpop.f32.mrb[0].mxu0
      %v4226 = vadd.f32 0.0, %v4225
      %4227 = vdwg.mxu0
      %4228 = vmatprep.subr.mxu0 %v4134
      %4229 = vmatpush1.msra.mxu0 %v4133
      %4230 = vmatprep.subr.mxu0 %v4136
      %4231 = vmatpush1.msra.mxu0 %v4135
      %4232 = vmatprep.subr.mxu0 %v4138
      %4233 = vmatpush1.msra.mxu0 %v4137
      %4234 = vmatprep.subr.mxu0 %v4140
      %4235 = vmatpush1.msra.mxu0 %v4139
      %4236 = vmatprep.subr.mxu0 %v4155
      %4237 = vmatpush1.msra.mxu0 %v4152
      %4238 = vmatprep.subr.mxu0 0.0
      %4239 = vmatpush1.msra.mxu0 0.0
      %4240 = vmatprep.subr.mxu0 0.0
      %4241 = vmatpush1.msra.mxu0 0.0
      %4242 = vmatprep.subr.mxu0 0.0
      %4243 = vmatpush1.msra.mxu0 0.0
      %4244 = vmatprep.subr.mxu0 0.0
      %4245 = vmatpush1.msra.mxu0 0.0
      %4246 = vmatprep.subr.mxu0 0.0
      %4247 = vmatpush1.msra.mxu0 0.0
      %4248 = vmatprep.subr.mxu0 0.0
      %4249 = vmatpush1.msra.mxu0 0.0
      %4250 = vmatprep.subr.mxu0 0.0
      %4251 = vmatpush1.msra.mxu0 0.0
      %4252 = vmatprep.subr.mxu0 0.0
      %4253 = vmatpush1.msra.mxu0 0.0
      %4254 = vmatprep.subr.mxu0 0.0
      %4255 = vmatpush1.msra.mxu0 0.0
      %4256 = vmatprep.subr.mxu0 0.0
      %4257 = vmatpush1.msra.mxu0 0.0
      %4258 = vmatprep.subr.mxu0 0.0
      %4259 = vmatpush1.msra.mxu0 0.0
      %4260 = vmatprep.subr.mxu0 0.0
      %4261 = vmatpush1.msra.mxu0 0.0
      %4262 = vmatprep.subr.mxu0 0.0
      %4263 = vmatpush1.msra.mxu0 0.0
      %4264 = vmatprep.subr.mxu0 0.0
      %4265 = vmatpush1.msra.mxu0 0.0
      %4266 = vmatprep.subr.mxu0 0.0
      %4267 = vmatpush1.msra.mxu0 0.0
      %4268 = vmatprep.subr.mxu0 0.0
      %4269 = vmatpush1.msra.mxu0 0.0
      %4270 = vmatprep.subr.mxu0 0.0
      %4271 = vmatpush1.msra.mxu0 0.0
      %4272 = vmatprep.subr.mxu0 0.0
      %4273 = vmatpush1.msra.mxu0 0.0
      %4274 = vmatprep.subr.mxu0 0.0
      %4275 = vmatpush1.msra.mxu0 0.0
      %4276 = vmatprep.subr.mxu0 0.0
      %4277 = vmatpush1.msra.mxu0 0.0
      %4278 = vmatprep.subr.mxu0 0.0
      %4279 = vmatpush1.msra.mxu0 0.0
      %4280 = vmatprep.subr.mxu0 0.0
      %4281 = vmatpush1.msra.mxu0 0.0
      %4282 = vmatprep.subr.mxu0 0.0
      %4283 = vmatpush1.msra.mxu0 0.0
      %4284 = vmatprep.subr.mxu0 0.0
      %4285 = vmatpush1.msra.mxu0 0.0
      %4286 = vmatprep.subr.mxu0 0.0
      %4287 = vmatpush1.msra.mxu0 0.0
      %4288 = vmatprep.subr.mxu0 0.0
      %4289 = vmatpush1.msra.mxu0 0.0
      %4290 = vmatprep.subr.mxu0 0.0
      %4291 = vmatpush1.msra.mxu0 0.0
      %4292 = vmatprep.mubr.f32.mxu0 0.0
      %4293 = vmatmul.mubr.f32.gmra.mrb[0].mxu0 %v4148
      %v4294 = vpop.f32.mrb[0].mxu0
      %v4295 = vadd.f32 %v4224, %v4294
      %v4296 = vpop.f32.mrb[0].mxu0
      %v4297 = vadd.f32 %v4226, %v4296
      %4298 = vdwg.mxu0
      %v4299 = vld [vmem:[%s6] sm:$0xf]
      %4301 = vset.pattern.permute.xlu0 0
      %4302 = vperm.xlu0 %4301, %v4299
      %v4303 = vpop.permute.xlu0 %4302
      %v4305 = vmul.f32 %v4295, %v4303
      %v4306 = vmul.f32 %v4297, %v4303
      %v4307 = vld [vmem:[%s7] sm:$0xf]
      %4309 = vset.pattern.permute.xlu0 0
      %4310 = vperm.xlu0 %4309, %v4307
      %v4311 = vpop.permute.xlu0 %4310
      %v4313 = vadd.f32 %v4305, %v4311
      %v4314 = vadd.f32 %v4306, %v4311
      %v4315 = vmax.f32 %v4313, 0.0
      %v4316 = vmax.f32 %v4314, 0.0
      %v4317 = vsel %vm2063, %v4315, 0.0
      %v4318 = vsel %vm2063, %v4316, 0.0
      %v4319 = vadd.f32 %v4317, %v4318
      %4320 = vadd.xlane.f32.xlu0 %v4319
      %v4321 = vpop.xlane.xlu0 %4320
      %v4322 = vrcp.pop 256.0
      %v4323 = vmul.f32 %v4321, %v4322
      %v4324 = vld [vmem:[%s299] sm:$0xff]
      %v4327 = vunpack.c.l.s4 839922192
      %v4328 = vunpack.c.0.s8 %v4327
      %v4329 = vlaneseq
      %v4330 = vshrl.u32 %v4329, 7
      %v4331 = vsub.s32 %v4328, %v4330
      %v4332 = vrot.slane %v4323, %v4331
      %v4334 = vmul.f32 %v4324, %v4332
      %v4336 = vcombine.high %v4334, %v4334
      %v4338 = vsel %vm2063, %v4334, 0.0
      %v4339 = vrot.slane %v4338, 4
      %v4340 = vadd.f32 %v4338, %v4339
      %v4341 = vrot.slane %v4340, 2
      %v4342 = vadd.f32 %v4340, %v4341
      %v4343 = vrot.slane %v4342, 1
      %v4344 = vadd.f32 %v4342, %v4343
      %v4345 = vsel %vm2063, %v4336, 0.0
      %v4346 = vrot.slane %v4345, 4
      %v4347 = vadd.f32 %v4345, %v4346
      %v4348 = vrot.slane %v4347, 2
      %v4349 = vadd.f32 %v4347, %v4348
      %v4350 = vrot.slane %v4349, 1
      %v4351 = vadd.f32 %v4349, %v4350
      %v4352 = vmax.f32 %v4344, 0.0
      %v4353 = vmax.f32 %v4351, 0.0
      %v4356 = vcombine.low %v4352, %v4353
      %v4358 = vunpack.c.l.s4 1966171168
      %v4359 = vunpack.c.0.s8 %v4358
      %v4360 = vlaneseq
      %v4361 = vshrl.u32 %v4360, 7
      %v4362 = vsub.s32 %v4359, %v4361
      %v4363 = vrot.slane %v4356, %v4362
      %v4365 = vunpack.c.l.s4 1966171168
      %v4366 = vunpack.c.0.s8 %v4365
      %v4367 = vlaneseq
      %v4368 = vshrl.u32 %v4367, 7
      %v4369 = vsub.s32 %v4366, %v4368
      %v4370 = vrot.slane %v4363, %v4369
      %v4372 = vlaneseq
      %vm4373 = vcmp.ge.s32.totalorder %v4372, 0
      %vm4374 = vcmp.lt.s32.totalorder %v4372, 256
      %vm4375 = vmand %vm4373, %vm4374
      %4376 = vst.msk [vmem:[%s303] sm:$0x3] %vm4375, %v4370
      %p4377 = scmp.lt.s32.totalorder %s19, 1
      %s4378 = scalar_select %p4377, %s19, 1
      %s4379 = smul.addr %s4378, 2
      %s4380 = scalar_lea.vmem %s8, %s4379
      // Predicated region
      $region53: #{fam_forward.2} parent=51 // pred_check
        %p4381 = pneg %p210
      $region54: #{fam_forward.2} parent=51 // pred_check_branch
        %4383 = sbr.rel (%p4381) target = $region56
      $region55: #{fam_forward.2} parent=51 // pred_region
        _
      $region56: #{fam_forward.2} parent=51 // pred_fallthru
        _
    $region52: #{fam_forward.2} parent=5 // pred_fallthru
      _
    %p4384 = scmp.le.s32.totalorder 2, %s14
    // Predicated region
    $region57: #{fam_forward.2} parent=5 // pred_check
      %p4385 = pneg %p4384
    $region58: #{fam_forward.2} parent=5 // pred_check_branch
      %4387 = sbr.rel (%p4385) target = $region60
    $region59: #{fam_forward.2} parent=5 // pred_region
      %s4388 = ssub.s32 %s14, 2
      // Predicated region
      $region61: #{fam_forward.2} parent=59 // pred_check
        %p4389 = pneg %p216
      $region62: #{fam_forward.2} parent=59 // pred_check_branch
        %4391 = sbr.rel (%p4389) target = $region64
      $region63: #{fam_forward.2} parent=59 // pred_region
        %p4392 = scmp.lt.s32.totalorder %s20, 1
        %s4393 = scalar_select %p4392, %s20, 1
        %s4394 = smul.addr %s4393, 2
        %s4395 = scalar_lea.vmem %s8, %s4394
      $region64: #{fam_forward.2} parent=59 // pred_fallthru
        _
    $region60: #{fam_forward.2} parent=5 // pred_fallthru
      _
  $region6: #{fam_forward.2} parent=0 // loop_footer
    %s18 = sadd.s32 1, %s14
  $region7: #{fam_forward.2} parent=0 // loop_footer_branch
    %13 = sbr.rel target = $region3
  $region8: #{fam_forward.2} parent=0 // loop_exit
    _

</llo_original>
